<compile_context>
chip_gen: v7x
topology: tpu7x:2x2x1
jax: 0.10.0
libtpu: 0.0.40
codegen_flags: <defaults>
</compile_context>

<pallas_src>
import math
from functools import partial

import jax
import jax.numpy as jnp
from jax.experimental import pallas as pl
from jax.experimental.pallas import tpu as pltpu


def _round_up(v, m):
    return ((v + m - 1) // m) * m


# ----------------------- Conv3d (1,3,3), padding (0,1,1) ---------------------

def _conv_tap_kernel(xa_ref, xb_ref, w_ref, b_ref, o_ref, xwin_ref,
                     *, tap_offsets, cin, tr, tail):
    # Stage the contiguous input-row window [i*TR, i*TR + TR + TAIL) in VMEM
    # as f32, so the nine sublane-offset tap slices below take the plain
    # 32-bit path (no packed-sublane relayout on odd offsets).
    xwin_ref[0:tr, :] = xa_ref[...].astype(jnp.float32)
    xwin_ref[tr:tr + tail, :] = xb_ref[...].astype(jnp.float32)

    # Nine statically-unrolled taps: bf16 MXU matmuls, f32 accumulation.
    acc = None
    for t, off in enumerate(tap_offsets):
        xs = xwin_ref[off:off + tr, :].astype(jnp.bfloat16)        # (TR, Cin)
        wt = w_ref[t * cin:(t + 1) * cin, :]                       # (Cin, Cout)
        d = jnp.dot(xs, wt, preferred_element_type=jnp.float32)
        acc = d if acc is None else acc + d

    # Fused bias add + single lane-dense store of the output block.
    o_ref[...] = acc + b_ref[...]


def conv3d_133_pallas(x, w, b, *, tr_target=512):
    """PyTorch-style Conv3d, kernel (1,3,3), stride 1, padding (0,1,1).

    x: (B, Cin, F, H, W) f32;  w: (Cout, Cin, 1, 3, 3);  b: (Cout,)
    Returns the conv output channels-last: (B, F, H, W, Cout) f32.
    """
    B, Cin, Fr, H, W = x.shape
    Cout = w.shape[0]
    Hp, Wp = H + 2, W + 2
    padr = Wp + 1                               # max |row offset| of any tap
    tail = max(64, _round_up(2 * padr, 8))      # rows needed past each block
    rp = B * Fr * Hp * Wp                       # rows of the padded grid
    tr = _round_up(min(tr_target, rp), tail)    # output rows per grid step
    rp_pad = _round_up(rp, tr)
    rbig = rp_pad + tail

    # Channels-last (bf16 for cheap DMA), zero-pad H/W, flatten padded grid.
    x_cl = jnp.transpose(x, (0, 2, 3, 4, 1)).astype(jnp.bfloat16)
    x_cl = x_cl.reshape(B * Fr, H, W, Cin)
    x_pad = jnp.pad(x_cl, ((0, 0), (1, 1), (1, 1), (0, 0)))
    x_big = jnp.pad(x_pad.reshape(rp, Cin),
                    ((padr, rbig - rp - padr), (0, 0)))            # (rbig, Cin)

    # Tap t = dy*3+dx reads x_big[row + padr + (dy-1)*Wp + (dx-1)].
    tap_w, tap_off = [], []
    for dy in range(3):
        for dx in range(3):
            tap_w.append(jnp.transpose(w[:, :, 0, dy, dx], (1, 0)))  # (Cin,Cout)
            tap_off.append(padr + (dy - 1) * Wp + (dx - 1))
    w_stack = jnp.concatenate(tap_w, axis=0).astype(jnp.bfloat16)    # (9*Cin,Cout)
    bias = b.reshape(1, Cout).astype(jnp.float32)

    nb = rp_pad // tr
    blocks_per_tr = tr // tail
    kern = partial(_conv_tap_kernel, tap_offsets=tuple(tap_off),
                   cin=Cin, tr=tr, tail=tail)
    # TODO(synk): for huge M the two x_big specs could be replaced by a manual
    # double-buffered window DMA; at these sizes BlockSpec pipelining suffices.
    out_padded = pl.pallas_call(
        kern,
        grid=(nb,),
        out_shape=jax.ShapeDtypeStruct((rp_pad, Cout), jnp.float32),
        in_specs=[
            pl.BlockSpec((tr, Cin), lambda i: (i, 0)),
            pl.BlockSpec((tail, Cin), lambda i: ((i + 1) * blocks_per_tr, 0)),
            pl.BlockSpec((9 * Cin, Cout), lambda i: (0, 0)),
            pl.BlockSpec((1, Cout), lambda i: (0, 0)),
        ],
        out_specs=pl.BlockSpec((tr, Cout), lambda i: (i, 0)),
        scratch_shapes=[pltpu.VMEM((tr + tail, Cin), jnp.float32)],
        compiler_params=pltpu.CompilerParams(
            dimension_semantics=("parallel",)),
    )(x_big, x_big, w_stack, bias)

    # Drop the padded-grid border rows (cross-image garbage) and the M-padding
    # tail; keep the valid interior only.
    out = out_padded[:rp].reshape(B * Fr, Hp, Wp, Cout)[:, 1:H + 1, 1:W + 1, :]
    return out.reshape(B, Fr, H, W, Cout)


# ------------------ fused GroupNorm + scale_shift + SiLU ---------------------

def _groupnorm_ss_silu_kernel(x_ref, p_ref, g_ref, b_ref, sc_ref, sh_ref,
                              o_ref, *, eps, inv_n):
    x = x_ref[0]                                       # (S, C) f32
    # Per-group statistics.  p is the (C, C) 0/1 "same group" matrix, so a
    # (1,C) @ (C,C) matmul both aggregates each group's sum and scatters it
    # back to every channel of that group.
    csum = jnp.sum(x, axis=0, keepdims=True)           # (1, C)
    mean = jnp.dot(csum, p_ref[...],
                   preferred_element_type=jnp.float32) * inv_n
    d = x - mean
    csq = jnp.sum(d * d, axis=0, keepdims=True)
    var = jnp.dot(csq, p_ref[...],
                  preferred_element_type=jnp.float32) * inv_n       # biased var
    rstd = jax.lax.rsqrt(var + eps)
    y = d * (rstd * g_ref[0]) + b_ref[0]               # GroupNorm affine
    y = y * (sc_ref[0] + 1.0) + sh_ref[0]              # scale_shift
    o_ref[0] = y * jax.nn.sigmoid(y)                   # SiLU


def groupnorm_scale_shift_silu_pallas(h, gamma, beta, scale, shift,
                                      groups, eps=1e-5):
    """h: (B, F, H, W, C) channels-last f32 -> same shape, f32."""
    B, Fr, H, W, C = h.shape
    S = Fr * H * W
    cg = C // groups
    x = h.reshape(B, S, C)
    gid = jnp.arange(C, dtype=jnp.int32) // cg
    p = (gid[:, None] == gid[None, :]).astype(jnp.float32)          # (C, C)
    kern = partial(_groupnorm_ss_silu_kernel, eps=eps,
                   inv_n=1.0 / float(cg * S))
    # TODO(synk): for very large F*H*W this keeps a full (S, C) per-sample slab
    # in VMEM; a two-pass row-tiled variant would be needed there.
    out = pl.pallas_call(
        kern,
        grid=(B,),
        out_shape=jax.ShapeDtypeStruct((B, S, C), jnp.float32),
        in_specs=[
            pl.BlockSpec((1, S, C), lambda i: (i, 0, 0)),
            pl.BlockSpec((C, C), lambda i: (0, 0)),
            pl.BlockSpec((1, 1, C), lambda i: (0, 0, 0)),
            pl.BlockSpec((1, 1, C), lambda i: (0, 0, 0)),
            pl.BlockSpec((1, 1, C), lambda i: (i, 0, 0)),
            pl.BlockSpec((1, 1, C), lambda i: (i, 0, 0)),
        ],
        out_specs=pl.BlockSpec((1, S, C), lambda i: (i, 0, 0)),
        compiler_params=pltpu.CompilerParams(
            dimension_semantics=("parallel",)),
    )(x, p,
      gamma.reshape(1, 1, C).astype(jnp.float32),
      beta.reshape(1, 1, C).astype(jnp.float32),
      scale.reshape(B, 1, C).astype(jnp.float32),
      shift.reshape(B, 1, C).astype(jnp.float32))
    return out.reshape(B, Fr, H, W, C)


# ------------------------------ Block forward --------------------------------

def block_forward(params, x, scale_shift=None, *, groups=8):
    """Pallas forward of the PyTorch `Block` module (NCDHW in / NCDHW out)."""
    w, b = params['proj_w'], params['proj_b']
    B = x.shape[0]
    Cout = w.shape[0]
    h = conv3d_133_pallas(x, w, b)                    # (B, F, H, W, Cout)
    if scale_shift is not None:
        scale, shift = scale_shift
        scale = scale.reshape(B, Cout)
        shift = shift.reshape(B, Cout)
    else:
        scale = jnp.zeros((B, Cout), jnp.float32)
        shift = jnp.zeros((B, Cout), jnp.float32)
    y = groupnorm_scale_shift_silu_pallas(
        h, params['norm_w'], params['norm_b'], scale, shift, groups)
    return jnp.transpose(y, (0, 4, 1, 2, 3))          # back to NCDHW


# ----------------------------- pure-JAX reference ----------------------------

def block_reference(params, x, scale_shift=None, *, groups=8, eps=1e-5):
    out = jax.lax.conv_general_dilated(
        x, params['proj_w'], window_strides=(1, 1, 1),
        padding=((0, 0), (1, 1), (1, 1)),
        dimension_numbers=('NCDHW', 'OIDHW', 'NCDHW'))
    out = out + params['proj_b'][None, :, None, None, None]
    B, C, Fr, H, W = out.shape
    xg = out.reshape(B, groups, C // groups, Fr, H, W)
    mean = jnp.mean(xg, axis=(2, 3, 4, 5), keepdims=True)
    var = jnp.mean(jnp.square(xg - mean), axis=(2, 3, 4, 5), keepdims=True)
    xn = ((xg - mean) / jnp.sqrt(var + eps)).reshape(B, C, Fr, H, W)
    xn = (xn * params['norm_w'][None, :, None, None, None]
          + params['norm_b'][None, :, None, None, None])
    if scale_shift is not None:
        scale, shift = scale_shift
        xn = xn * (scale + 1.0) + shift
    return xn * jax.nn.sigmoid(xn)


# ---------------------------------- main -------------------------------------

if __name__ == "__main__":
    key = jax.random.PRNGKey(0)
    k_x, k_w, k_b, k_g, k_bt, k_sc, k_sh = jax.random.split(key, 7)

    B, DIM, DIM_OUT, GROUPS = 2, 64, 128, 8
    Fr, H, W = 4, 16, 16

    fan_in = DIM * 1 * 3 * 3
    bound = 1.0 / math.sqrt(fan_in)
    params = {
        'proj_w': jax.random.uniform(k_w, (DIM_OUT, DIM, 1, 3, 3),
                                     jnp.float32, -bound, bound),
        'proj_b': jax.random.uniform(k_b, (DIM_OUT,), jnp.float32,
                                     -bound, bound),
        'norm_w': 1.0 + 0.1 * jax.random.normal(k_g, (DIM_OUT,), jnp.float32),
        'norm_b': 0.1 * jax.random.normal(k_bt, (DIM_OUT,), jnp.float32),
    }
    x = jax.random.normal(k_x, (B, DIM, Fr, H, W), jnp.float32)
    scale = 0.1 * jax.random.normal(k_sc, (B, DIM_OUT, 1, 1, 1), jnp.float32)
    shift = 0.1 * jax.random.normal(k_sh, (B, DIM_OUT, 1, 1, 1), jnp.float32)

    fwd = jax.jit(partial(block_forward, groups=GROUPS))
    out = fwd(params, x, (scale, shift))
    out = jax.block_until_ready(out)

    assert out.shape == (B, DIM_OUT, Fr, H, W), out.shape
    assert bool(jnp.all(jnp.isfinite(out)))

    ref = block_reference(params, x, (scale, shift), groups=GROUPS)
    max_err = float(jnp.max(jnp.abs(out - ref)))
    assert max_err < 5e-2, f"max abs error vs reference: {max_err}"

    print("KERNEL_OK")
</pallas_src>

<mosaic_0001>
module attributes {stable_mosaic.version = 11 : i64} {
  func.func @_conv_tap_kernel(%arg0: i32, %arg1: memref<512x64xbf16, #tpu.memory_space<vmem>>, %arg2: memref<64x64xbf16, #tpu.memory_space<vmem>>, %arg3: memref<576x128xbf16, #tpu.memory_space<vmem>>, %arg4: memref<1x128xf32, #tpu.memory_space<vmem>>, %arg5: memref<512x128xf32, #tpu.memory_space<vmem>>, %arg6: memref<576x64xf32, #tpu.memory_space<vmem>>) attributes {dimension_semantics = [#tpu.dimension_semantics<parallel>], iteration_bounds = array<i64: 6>, scalar_prefetch = 0 : i64, scratch_operands = 1 : i64, tpu.core_type = #tpu.core_type<tc>, window_params = [{transform_indices = @transform_0, window_bounds = array<i64: 512, 64>}, {transform_indices = @transform_1, window_bounds = array<i64: 64, 64>}, {pipeline_mode = #tpu.pipeline_mode<synchronous>, transform_indices = @transform_2, window_bounds = array<i64: 576, 128>}, {pipeline_mode = #tpu.pipeline_mode<synchronous>, transform_indices = @transform_3, window_bounds = array<i64: 1, 128>}, {transform_indices = @transform_4, window_bounds = array<i64: 512, 128>}]} {
    %c0 = arith.constant 0 : index
    %c0_0 = arith.constant 0 : index
    %0 = vector.load %arg1[%c0, %c0_0] : memref<512x64xbf16, #tpu.memory_space<vmem>>, vector<512x64xbf16>
    %1 = arith.extf %0 : vector<512x64xbf16> to vector<512x64xf32>
    %c0_1 = arith.constant 0 : index
    %c0_2 = arith.constant 0 : index
    %2 = vector.load %arg6[%c0_1, %c0_2] : memref<576x64xf32, #tpu.memory_space<vmem>>, vector<512x64xf32>
    tpu.vector_store %arg6[%c0_1, %c0_2], %1 {strides = array<i32>} : memref<576x64xf32, #tpu.memory_space<vmem>>, vector<512x64xf32>,
    %c0_3 = arith.constant 0 : index
    %c0_4 = arith.constant 0 : index
    %3 = vector.load %arg2[%c0_3, %c0_4] : memref<64x64xbf16, #tpu.memory_space<vmem>>, vector<64x64xbf16>
    %4 = arith.extf %3 : vector<64x64xbf16> to vector<64x64xf32>
    %c512 = arith.constant 512 : index
    %c0_5 = arith.constant 0 : index
    %5 = vector.load %arg6[%c512, %c0_5] : memref<576x64xf32, #tpu.memory_space<vmem>>, vector<64x64xf32>
    tpu.vector_store %arg6[%c512, %c0_5], %4 {strides = array<i32>} : memref<576x64xf32, #tpu.memory_space<vmem>>, vector<64x64xf32>,
    %c0_6 = arith.constant 0 : index
    %c0_7 = arith.constant 0 : index
    %6 = vector.load %arg6[%c0_6, %c0_7] : memref<576x64xf32, #tpu.memory_space<vmem>>, vector<512x64xf32>
    %7 = arith.truncf %6 : vector<512x64xf32> to vector<512x64xbf16>
    %c0_8 = arith.constant 0 : index
    %c0_9 = arith.constant 0 : index
    %8 = vector.load %arg3[%c0_8, %c0_9] : memref<576x128xbf16, #tpu.memory_space<vmem>>, vector<64x128xbf16>
    %cst = arith.constant dense<0.000000e+00> : vector<512x128xf32>
    %9 = tpu.matmul %7, %8, %cst {dimension_numbers = #tpu.dot_dimension_numbers<[1], [0], [0], [1], [0, 0, 1, 1], [], []>} : vector<512x64xbf16>, vector<64x128xbf16>, vector<512x128xf32> -> vector<512x128xf32>
    %c1 = arith.constant 1 : index
    %c0_10 = arith.constant 0 : index
    %10 = vector.load %arg6[%c1, %c0_10] : memref<576x64xf32, #tpu.memory_space<vmem>>, vector<512x64xf32>
    %11 = arith.truncf %10 : vector<512x64xf32> to vector<512x64xbf16>
    %c64 = arith.constant 64 : index
    %c0_11 = arith.constant 0 : index
    %12 = vector.load %arg3[%c64, %c0_11] : memref<576x128xbf16, #tpu.memory_space<vmem>>, vector<64x128xbf16>
    %cst_12 = arith.constant dense<0.000000e+00> : vector<512x128xf32>
    %13 = tpu.matmul %11, %12, %cst_12 {dimension_numbers = #tpu.dot_dimension_numbers<[1], [0], [0], [1], [0, 0, 1, 1], [], []>} : vector<512x64xbf16>, vector<64x128xbf16>, vector<512x128xf32> -> vector<512x128xf32>
    %14 = arith.addf %9, %13 : vector<512x128xf32>
    %c2 = arith.constant 2 : index
    %c0_13 = arith.constant 0 : index
    %15 = vector.load %arg6[%c2, %c0_13] : memref<576x64xf32, #tpu.memory_space<vmem>>, vector<512x64xf32>
    %16 = arith.truncf %15 : vector<512x64xf32> to vector<512x64xbf16>
    %c128 = arith.constant 128 : index
    %c0_14 = arith.constant 0 : index
    %17 = vector.load %arg3[%c128, %c0_14] : memref<576x128xbf16, #tpu.memory_space<vmem>>, vector<64x128xbf16>
    %cst_15 = arith.constant dense<0.000000e+00> : vector<512x128xf32>
    %18 = tpu.matmul %16, %17, %cst_15 {dimension_numbers = #tpu.dot_dimension_numbers<[1], [0], [0], [1], [0, 0, 1, 1], [], []>} : vector<512x64xbf16>, vector<64x128xbf16>, vector<512x128xf32> -> vector<512x128xf32>
    %19 = arith.addf %14, %18 : vector<512x128xf32>
    %c18 = arith.constant 18 : index
    %c0_16 = arith.constant 0 : index
    %20 = vector.load %arg6[%c18, %c0_16] : memref<576x64xf32, #tpu.memory_space<vmem>>, vector<512x64xf32>
    %21 = arith.truncf %20 : vector<512x64xf32> to vector<512x64xbf16>
    %c192 = arith.constant 192 : index
    %c0_17 = arith.constant 0 : index
    %22 = vector.load %arg3[%c192, %c0_17] : memref<576x128xbf16, #tpu.memory_space<vmem>>, vector<64x128xbf16>
    %cst_18 = arith.constant dense<0.000000e+00> : vector<512x128xf32>
    %23 = tpu.matmul %21, %22, %cst_18 {dimension_numbers = #tpu.dot_dimension_numbers<[1], [0], [0], [1], [0, 0, 1, 1], [], []>} : vector<512x64xbf16>, vector<64x128xbf16>, vector<512x128xf32> -> vector<512x128xf32>
    %24 = arith.addf %19, %23 : vector<512x128xf32>
    %c19 = arith.constant 19 : index
    %c0_19 = arith.constant 0 : index
    %25 = vector.load %arg6[%c19, %c0_19] : memref<576x64xf32, #tpu.memory_space<vmem>>, vector<512x64xf32>
    %26 = arith.truncf %25 : vector<512x64xf32> to vector<512x64xbf16>
    %c256 = arith.constant 256 : index
    %c0_20 = arith.constant 0 : index
    %27 = vector.load %arg3[%c256, %c0_20] : memref<576x128xbf16, #tpu.memory_space<vmem>>, vector<64x128xbf16>
    %cst_21 = arith.constant dense<0.000000e+00> : vector<512x128xf32>
    %28 = tpu.matmul %26, %27, %cst_21 {dimension_numbers = #tpu.dot_dimension_numbers<[1], [0], [0], [1], [0, 0, 1, 1], [], []>} : vector<512x64xbf16>, vector<64x128xbf16>, vector<512x128xf32> -> vector<512x128xf32>
    %29 = arith.addf %24, %28 : vector<512x128xf32>
    %c20 = arith.constant 20 : index
    %c0_22 = arith.constant 0 : index
    %30 = vector.load %arg6[%c20, %c0_22] : memref<576x64xf32, #tpu.memory_space<vmem>>, vector<512x64xf32>
    %31 = arith.truncf %30 : vector<512x64xf32> to vector<512x64xbf16>
    %c320 = arith.constant 320 : index
    %c0_23 = arith.constant 0 : index
    %32 = vector.load %arg3[%c320, %c0_23] : memref<576x128xbf16, #tpu.memory_space<vmem>>, vector<64x128xbf16>
    %cst_24 = arith.constant dense<0.000000e+00> : vector<512x128xf32>
    %33 = tpu.matmul %31, %32, %cst_24 {dimension_numbers = #tpu.dot_dimension_numbers<[1], [0], [0], [1], [0, 0, 1, 1], [], []>} : vector<512x64xbf16>, vector<64x128xbf16>, vector<512x128xf32> -> vector<512x128xf32>
    %34 = arith.addf %29, %33 : vector<512x128xf32>
    %c36 = arith.constant 36 : index
    %c0_25 = arith.constant 0 : index
    %35 = vector.load %arg6[%c36, %c0_25] : memref<576x64xf32, #tpu.memory_space<vmem>>, vector<512x64xf32>
    %36 = arith.truncf %35 : vector<512x64xf32> to vector<512x64xbf16>
    %c384 = arith.constant 384 : index
    %c0_26 = arith.constant 0 : index
    %37 = vector.load %arg3[%c384, %c0_26] : memref<576x128xbf16, #tpu.memory_space<vmem>>, vector<64x128xbf16>
    %cst_27 = arith.constant dense<0.000000e+00> : vector<512x128xf32>
    %38 = tpu.matmul %36, %37, %cst_27 {dimension_numbers = #tpu.dot_dimension_numbers<[1], [0], [0], [1], [0, 0, 1, 1], [], []>} : vector<512x64xbf16>, vector<64x128xbf16>, vector<512x128xf32> -> vector<512x128xf32>
    %39 = arith.addf %34, %38 : vector<512x128xf32>
    %c37 = arith.constant 37 : index
    %c0_28 = arith.constant 0 : index
    %40 = vector.load %arg6[%c37, %c0_28] : memref<576x64xf32, #tpu.memory_space<vmem>>, vector<512x64xf32>
    %41 = arith.truncf %40 : vector<512x64xf32> to vector<512x64xbf16>
    %c448 = arith.constant 448 : index
    %c0_29 = arith.constant 0 : index
    %42 = vector.load %arg3[%c448, %c0_29] : memref<576x128xbf16, #tpu.memory_space<vmem>>, vector<64x128xbf16>
    %cst_30 = arith.constant dense<0.000000e+00> : vector<512x128xf32>
    %43 = tpu.matmul %41, %42, %cst_30 {dimension_numbers = #tpu.dot_dimension_numbers<[1], [0], [0], [1], [0, 0, 1, 1], [], []>} : vector<512x64xbf16>, vector<64x128xbf16>, vector<512x128xf32> -> vector<512x128xf32>
    %44 = arith.addf %39, %43 : vector<512x128xf32>
    %c38 = arith.constant 38 : index
    %c0_31 = arith.constant 0 : index
    %45 = vector.load %arg6[%c38, %c0_31] : memref<576x64xf32, #tpu.memory_space<vmem>>, vector<512x64xf32>
    %46 = arith.truncf %45 : vector<512x64xf32> to vector<512x64xbf16>
    %c512_32 = arith.constant 512 : index
    %c0_33 = arith.constant 0 : index
    %47 = vector.load %arg3[%c512_32, %c0_33] : memref<576x128xbf16, #tpu.memory_space<vmem>>, vector<64x128xbf16>
    %cst_34 = arith.constant dense<0.000000e+00> : vector<512x128xf32>
    %48 = tpu.matmul %46, %47, %cst_34 {dimension_numbers = #tpu.dot_dimension_numbers<[1], [0], [0], [1], [0, 0, 1, 1], [], []>} : vector<512x64xbf16>, vector<64x128xbf16>, vector<512x128xf32> -> vector<512x128xf32>
    %49 = arith.addf %44, %48 : vector<512x128xf32>
    %c0_35 = arith.constant 0 : index
    %c0_36 = arith.constant 0 : index
    %50 = vector.load %arg4[%c0_35, %c0_36] : memref<1x128xf32, #tpu.memory_space<vmem>>, vector<1x128xf32>
    %51 = vector.broadcast %50 : vector<1x128xf32> to vector<512x128xf32>
    %52 = arith.addf %49, %51 : vector<512x128xf32>
    %c0_37 = arith.constant 0 : index
    %c0_38 = arith.constant 0 : index
    %53 = vector.load %arg5[%c0_37, %c0_38] : memref<512x128xf32, #tpu.memory_space<vmem>>, vector<512x128xf32>
    tpu.vector_store %arg5[%c0_37, %c0_38], %52 {strides = array<i32>} : memref<512x128xf32, #tpu.memory_space<vmem>>, vector<512x128xf32>,
    return
  }
  func.func @transform_0(%arg0: i32) -> (i32, i32) {
    %c0_i32 = arith.constant 0 : i32
    %c0_i32_0 = arith.constant 0 : i32
    return %arg0, %c0_i32 : i32, i32
  }
  func.func @transform_1(%arg0: i32) -> (i32, i32) {
    %c1_i32 = arith.constant 1 : i32
    %0 = arith.addi %arg0, %c1_i32 : i32
    %c8_i32 = arith.constant 8 : i32
    %1 = arith.muli %0, %c8_i32 : i32
    %c0_i32 = arith.constant 0 : i32
    %c0_i32_0 = arith.constant 0 : i32
    return %1, %c0_i32 : i32, i32
  }
  func.func @transform_2(%arg0: i32) -> (i32, i32) {
    %c0_i32 = arith.constant 0 : i32
    %c0_i32_0 = arith.constant 0 : i32
    %c0_i32_1 = arith.constant 0 : i32
    return %c0_i32, %c0_i32_0 : i32, i32
  }
  func.func @transform_3(%arg0: i32) -> (i32, i32) {
    %c0_i32 = arith.constant 0 : i32
    %c0_i32_0 = arith.constant 0 : i32
    %c0_i32_1 = arith.constant 0 : i32
    return %c0_i32, %c0_i32_0 : i32, i32
  }
  func.func @transform_4(%arg0: i32) -> (i32, i32) {
    %c0_i32 = arith.constant 0 : i32
    %c0_i32_0 = arith.constant 0 : i32
    return %arg0, %c0_i32 : i32, i32
  }
}

module attributes {stable_mosaic.version = 11 : i64} {
  func.func @_groupnorm_ss_silu_kernel(%arg0: i32, %arg1: memref<1x1024x128xf32, #tpu.memory_space<vmem>>, %arg2: memref<128x128xf32, #tpu.memory_space<vmem>>, %arg3: memref<1x1x128xf32, #tpu.memory_space<vmem>>, %arg4: memref<1x1x128xf32, #tpu.memory_space<vmem>>, %arg5: memref<1x1x128xf32, #tpu.memory_space<vmem>>, %arg6: memref<1x1x128xf32, #tpu.memory_space<vmem>>, %arg7: memref<1x1024x128xf32, #tpu.memory_space<vmem>>) attributes {dimension_semantics = [#tpu.dimension_semantics<parallel>], iteration_bounds = array<i64: 2>, scalar_prefetch = 0 : i64, scratch_operands = 0 : i64, tpu.core_type = #tpu.core_type<tc>, window_params = [{transform_indices = @transform_0, window_bounds = array<i64: 1, 1024, 128>}, {pipeline_mode = #tpu.pipeline_mode<synchronous>, transform_indices = @transform_1, window_bounds = array<i64: 128, 128>}, {pipeline_mode = #tpu.pipeline_mode<synchronous>, transform_indices = @transform_2, window_bounds = array<i64: 1, 1, 128>}, {pipeline_mode = #tpu.pipeline_mode<synchronous>, transform_indices = @transform_3, window_bounds = array<i64: 1, 1, 128>}, {transform_indices = @transform_4, window_bounds = array<i64: 1, 1, 128>}, {transform_indices = @transform_5, window_bounds = array<i64: 1, 1, 128>}, {transform_indices = @transform_6, window_bounds = array<i64: 1, 1024, 128>}]} {
    %c0 = arith.constant 0 : index
    %c0_0 = arith.constant 0 : index
    %c0_1 = arith.constant 0 : index
    %0 = vector.load %arg1[%c0, %c0_0, %c0_1] : memref<1x1024x128xf32, #tpu.memory_space<vmem>>, vector<1x1024x128xf32>
    %1 = vector.shape_cast %0 : vector<1x1024x128xf32> to vector<1024x128xf32>
    %cst = arith.constant dense<0.000000e+00> : vector<128xf32>
    %2 = vector.multi_reduction <add>, %1, %cst [0] : vector<1024x128xf32> to vector<128xf32>
    %3 = vector.shape_cast %2 : vector<128xf32> to vector<1x128xf32>
    %c0_2 = arith.constant 0 : index
    %c0_3 = arith.constant 0 : index
    %4 = vector.load %arg2[%c0_2, %c0_3] : memref<128x128xf32, #tpu.memory_space<vmem>>, vector<128x128xf32>
    %cst_4 = arith.constant dense<0.000000e+00> : vector<1x128xf32>
    %5 = tpu.matmul %3, %4, %cst_4 {dimension_numbers = #tpu.dot_dimension_numbers<[1], [0], [0], [1], [0, 0, 1, 1], [], []>} : vector<1x128xf32>, vector<128x128xf32>, vector<1x128xf32> -> vector<1x128xf32>
    %cst_5 = arith.constant 6.10351563E-5 : f32
    %6 = vector.broadcast %cst_5 : f32 to vector<1x128xf32>
    %7 = arith.mulf %5, %6 : vector<1x128xf32>
    %8 = vector.broadcast %7 : vector<1x128xf32> to vector<1024x128xf32>
    %9 = arith.subf %1, %8 : vector<1024x128xf32>
    %10 = arith.mulf %9, %9 : vector<1024x128xf32>
    %cst_6 = arith.constant dense<0.000000e+00> : vector<128xf32>
    %11 = vector.multi_reduction <add>, %10, %cst_6 [0] : vector<1024x128xf32> to vector<128xf32>
    %12 = vector.shape_cast %11 : vector<128xf32> to vector<1x128xf32>
    %c0_7 = arith.constant 0 : index
    %c0_8 = arith.constant 0 : index
    %13 = vector.load %arg2[%c0_7, %c0_8] : memref<128x128xf32, #tpu.memory_space<vmem>>, vector<128x128xf32>
    %cst_9 = arith.constant dense<0.000000e+00> : vector<1x128xf32>
    %14 = tpu.matmul %12, %13, %cst_9 {dimension_numbers = #tpu.dot_dimension_numbers<[1], [0], [0], [1], [0, 0, 1, 1], [], []>} : vector<1x128xf32>, vector<128x128xf32>, vector<1x128xf32> -> vector<1x128xf32>
    %cst_10 = arith.constant 6.10351563E-5 : f32
    %15 = vector.broadcast %cst_10 : f32 to vector<1x128xf32>
    %16 = arith.mulf %14, %15 : vector<1x128xf32>
    %cst_11 = arith.constant 9.99999974E-6 : f32
    %17 = vector.broadcast %cst_11 : f32 to vector<1x128xf32>
    %18 = arith.addf %16, %17 : vector<1x128xf32>
    %19 = math.rsqrt %18 : vector<1x128xf32>
    %c0_12 = arith.constant 0 : index
    %c0_13 = arith.constant 0 : index
    %c0_14 = arith.constant 0 : index
    %20 = vector.load %arg3[%c0_12, %c0_13, %c0_14] : memref<1x1x128xf32, #tpu.memory_space<vmem>>, vector<1x1x128xf32>
    %21 = vector.shape_cast %20 : vector<1x1x128xf32> to vector<1x128xf32>
    %22 = arith.mulf %19, %21 : vector<1x128xf32>
    %23 = vector.broadcast %22 : vector<1x128xf32> to vector<1024x128xf32>
    %24 = arith.mulf %9, %23 : vector<1024x128xf32>
    %c0_15 = arith.constant 0 : index
    %c0_16 = arith.constant 0 : index
    %c0_17 = arith.constant 0 : index
    %25 = vector.load %arg4[%c0_15, %c0_16, %c0_17] : memref<1x1x128xf32, #tpu.memory_space<vmem>>, vector<1x1x128xf32>
    %26 = vector.shape_cast %25 : vector<1x1x128xf32> to vector<1x128xf32>
    %27 = vector.broadcast %26 : vector<1x128xf32> to vector<1024x128xf32>
    %28 = arith.addf %24, %27 : vector<1024x128xf32>
    %c0_18 = arith.constant 0 : index
    %c0_19 = arith.constant 0 : index
    %c0_20 = arith.constant 0 : index
    %29 = vector.load %arg5[%c0_18, %c0_19, %c0_20] : memref<1x1x128xf32, #tpu.memory_space<vmem>>, vector<1x1x128xf32>
    %30 = vector.shape_cast %29 : vector<1x1x128xf32> to vector<1x128xf32>
    %cst_21 = arith.constant 1.000000e+00 : f32
    %31 = vector.broadcast %cst_21 : f32 to vector<1x128xf32>
    %32 = arith.addf %30, %31 : vector<1x128xf32>
    %33 = vector.broadcast %32 : vector<1x128xf32> to vector<1024x128xf32>
    %34 = arith.mulf %28, %33 : vector<1024x128xf32>
    %c0_22 = arith.constant 0 : index
    %c0_23 = arith.constant 0 : index
    %c0_24 = arith.constant 0 : index
    %35 = vector.load %arg6[%c0_22, %c0_23, %c0_24] : memref<1x1x128xf32, #tpu.memory_space<vmem>>, vector<1x1x128xf32>
    %36 = vector.shape_cast %35 : vector<1x1x128xf32> to vector<1x128xf32>
    %37 = vector.broadcast %36 : vector<1x128xf32> to vector<1024x128xf32>
    %38 = arith.addf %34, %37 : vector<1024x128xf32>
    %39 = arith.negf %38 : vector<1024x128xf32>
    %40 = math.exp %39 : vector<1024x128xf32>
    %cst_25 = arith.constant 1.000000e+00 : f32
    %41 = vector.broadcast %cst_25 : f32 to vector<1024x128xf32>
    %42 = arith.addf %41, %40 : vector<1024x128xf32>
    %43 = arith.divf %41, %42 : vector<1024x128xf32>
    %44 = arith.mulf %38, %43 : vector<1024x128xf32>
    %c0_26 = arith.constant 0 : index
    %c0_27 = arith.constant 0 : index
    %c0_28 = arith.constant 0 : index
    %45 = vector.load %arg7[%c0_26, %c0_27, %c0_28] : memref<1x1024x128xf32, #tpu.memory_space<vmem>>, vector<1x1024x128xf32>
    %46 = vector.shape_cast %45 : vector<1x1024x128xf32> to vector<1024x128xf32>
    %47 = vector.shape_cast %44 : vector<1024x128xf32> to vector<1x1024x128xf32>
    tpu.vector_store %arg7[%c0_26, %c0_27, %c0_28], %47 {strides = array<i32>} : memref<1x1024x128xf32, #tpu.memory_space<vmem>>, vector<1x1024x128xf32>,
    return
  }
  func.func @transform_0(%arg0: i32) -> (i32, i32, i32) {
    %c0_i32 = arith.constant 0 : i32
    %c0_i32_0 = arith.constant 0 : i32
    %c0_i32_1 = arith.constant 0 : i32
    return %arg0, %c0_i32, %c0_i32_0 : i32, i32, i32
  }
  func.func @transform_1(%arg0: i32) -> (i32, i32) {
    %c0_i32 = arith.constant 0 : i32
    %c0_i32_0 = arith.constant 0 : i32
    %c0_i32_1 = arith.constant 0 : i32
    return %c0_i32, %c0_i32_0 : i32, i32
  }
  func.func @transform_2(%arg0: i32) -> (i32, i32, i32) {
    %c0_i32 = arith.constant 0 : i32
    %c0_i32_0 = arith.constant 0 : i32
    %c0_i32_1 = arith.constant 0 : i32
    %c0_i32_2 = arith.constant 0 : i32
    return %c0_i32, %c0_i32_0, %c0_i32_1 : i32, i32, i32
  }
  func.func @transform_3(%arg0: i32) -> (i32, i32, i32) {
    %c0_i32 = arith.constant 0 : i32
    %c0_i32_0 = arith.constant 0 : i32
    %c0_i32_1 = arith.constant 0 : i32
    %c0_i32_2 = arith.constant 0 : i32
    return %c0_i32, %c0_i32_0, %c0_i32_1 : i32, i32, i32
  }
  func.func @transform_4(%arg0: i32) -> (i32, i32, i32) {
    %c0_i32 = arith.constant 0 : i32
    %c0_i32_0 = arith.constant 0 : i32
    %c0_i32_1 = arith.constant 0 : i32
    return %arg0, %c0_i32, %c0_i32_0 : i32, i32, i32
  }
  func.func @transform_5(%arg0: i32) -> (i32, i32, i32) {
    %c0_i32 = arith.constant 0 : i32
    %c0_i32_0 = arith.constant 0 : i32
    %c0_i32_1 = arith.constant 0 : i32
    return %arg0, %c0_i32, %c0_i32_0 : i32, i32, i32
  }
  func.func @transform_6(%arg0: i32) -> (i32, i32, i32) {
    %c0_i32 = arith.constant 0 : i32
    %c0_i32_0 = arith.constant 0 : i32
    %c0_i32_1 = arith.constant 0 : i32
    return %arg0, %c0_i32, %c0_i32_0 : i32, i32, i32
  }
}

</mosaic_0001>

<llo_original>
// kernel: block_forward.2
$region0: #{block_forward.2}
  #allocation0 [shape = 'u32[]', space=smem, size = 0x4, offset = 0x4, fixed_abs, tag = 'smem constant byte address 0x4 - core index']
  #allocation1 [shape = 'u32[144,128]{1,0:T(1,128)}', space=vmem, size = 0x12000, scoped, tag = 'internal scratch']
  #allocation2 [shape = 'f32[576,64]{1,0:T(8,128)}', space=vmem, size = 0x48000, scoped, tag = 'scratch operand']
  %s0 = inlined_call_operand.vmem [shape: bf16[3136,64], index: 0, kind: input, shape index: {}, may-alias: {0,1}]
  %s1 = inlined_call_operand.vmem [shape: bf16[3136,64], index: 1, kind: input, shape index: {}, may-alias: {0,1}]
  %s2 = inlined_call_operand.vmem [shape: bf16[576,128], index: 2, kind: input, shape index: {}]
  %s3 = inlined_call_operand.vmem [shape: f32[1,128], index: 3, kind: input, shape index: {}]
  %s4 = inlined_call_operand.vmem [shape: f32[3072,128], index: 4, kind: output, shape index: {}]
  %s5 = sld [smem:[#allocation0]]
  $region49: #{block_forward.2} parent=0
    _
  %s7 = ssub.s32 1, %s5
  %s8 = scalar_select 0, %s7, %s5
  loop: start=0, step=1, limit=8
  $region2: #{block_forward.2} parent=0 // loop_pre_header
    _
  $region3: #{block_forward.2} parent=0 // loop_header
    %s10 = sphi 0, %s14
    %p11 = scmp.ge.s32.totalorder %s10, 8
    %s20 = sphi 0, %s22
    %s23 = sphi 0, %s20
    %s24 = sphi 0, %s23
    %s40 = sphi 0, %s24
    %s50 = sphi 0, %s52
    %s53 = sphi 0, %s50
    %s54 = sphi 0, %s53
    %s70 = sphi 0, %s54
    %s74 = sphi 0, %s74
    %s76 = sphi 0, %s74
    %s77 = sphi 0, %s76
    %s91 = sphi 0, %s77
    %s95 = sphi 0, %s95
    %s97 = sphi 0, %s95
    %s98 = sphi 0, %s97
    %s112 = sphi 0, %s98
    %s118 = sphi 0, %s120
    %s121 = sphi 0, %s118
    %s122 = sphi 0, %s121
    %s138 = sphi 0, %s122
  $region4: #{block_forward.2} parent=0 // loop_header_branch
    %13 = sbr.rel (%p11) target = $region8
  $region5: #{block_forward.2} parent=0 // loop_body
    %s15 = ssub.s32 %s10, 1
    %s16 = ssub.s32 %s10, 2
    %s17 = sadd.s32 %s10, 1
    %s18 = ssub.s32 %s10, %s17
    %p19 = scmp.eq.s32.totalorder %s18, 0
    %s21 = sadd.s32 %s20, 1
    %s22 = scalar_select %p19, %s20, %s21
    %p25 = pneg %p19
    %p26 = scmp.eq.s32.totalorder %s10, 5
    %p27 = por %p25, %p26
    %p28 = scmp.ne.s32.totalorder %s20, %s23
    %p29 = scmp.eq.s32.totalorder %s10, 0
    %p30 = por %p28, %p29
    %p31 = scmp.ne.s32.totalorder %s20, %s23
    %p32 = scmp.eq.s32.totalorder %s15, 5
    %p33 = por %p31, %p32
    %p34 = scmp.ne.s32.totalorder %s23, %s24
    %p35 = scmp.eq.s32.totalorder %s15, 0
    %p36 = por %p34, %p35
    %p37 = scmp.ne.s32.totalorder %s23, %s24
    %p38 = scmp.eq.s32.totalorder %s16, 5
    %p39 = por %p37, %p38
    %p41 = scmp.ne.s32.totalorder %s24, %s40
    %p42 = scmp.eq.s32.totalorder %s16, 0
    %p43 = por %p41, %p42
    %s44 = sadd.s32 %s10, 1
    %s45 = smul.u32 %s44, 8
    %s46 = sadd.s32 %s17, 1
    %s47 = smul.u32 %s46, 8
    %s48 = ssub.s32 %s45, %s47
    %p49 = scmp.eq.s32.totalorder %s48, 0
    %s51 = sadd.s32 %s50, 1
    %s52 = scalar_select %p49, %s50, %s51
    %p55 = pneg %p49
    %p56 = scmp.eq.s32.totalorder %s10, 5
    %p57 = por %p55, %p56
    %p58 = scmp.ne.s32.totalorder %s50, %s53
    %p59 = scmp.eq.s32.totalorder %s10, 0
    %p60 = por %p58, %p59
    %p61 = scmp.ne.s32.totalorder %s50, %s53
    %p62 = scmp.eq.s32.totalorder %s15, 5
    %p63 = por %p61, %p62
    %p64 = scmp.ne.s32.totalorder %s53, %s54
    %p65 = scmp.eq.s32.totalorder %s15, 0
    %p66 = por %p64, %p65
    %p67 = scmp.ne.s32.totalorder %s53, %s54
    %p68 = scmp.eq.s32.totalorder %s16, 5
    %p69 = por %p67, %p68
    %p71 = scmp.ne.s32.totalorder %s54, %s70
    %p72 = scmp.eq.s32.totalorder %s16, 0
    %p73 = por %p71, %p72
    %s75 = sadd.s32 %s74, 1
    %p78 = scmp.eq.s32.totalorder %s10, 5
    %p79 = scmp.ne.s32.totalorder %s74, %s76
    %p80 = scmp.eq.s32.totalorder %s10, 0
    %p81 = por %p79, %p80
    %p82 = scmp.ne.s32.totalorder %s74, %s76
    %p83 = scmp.eq.s32.totalorder %s15, 5
    %p84 = por %p82, %p83
    %p85 = scmp.ne.s32.totalorder %s76, %s77
    %p86 = scmp.eq.s32.totalorder %s15, 0
    %p87 = por %p85, %p86
    %p88 = scmp.ne.s32.totalorder %s76, %s77
    %p89 = scmp.eq.s32.totalorder %s16, 5
    %p90 = por %p88, %p89
    %p92 = scmp.ne.s32.totalorder %s77, %s91
    %p93 = scmp.eq.s32.totalorder %s16, 0
    %p94 = por %p92, %p93
    %s96 = sadd.s32 %s95, 1
    %p99 = scmp.eq.s32.totalorder %s10, 5
    %p100 = scmp.ne.s32.totalorder %s95, %s97
    %p101 = scmp.eq.s32.totalorder %s10, 0
    %p102 = por %p100, %p101
    %p103 = scmp.ne.s32.totalorder %s95, %s97
    %p104 = scmp.eq.s32.totalorder %s15, 5
    %p105 = por %p103, %p104
    %p106 = scmp.ne.s32.totalorder %s97, %s98
    %p107 = scmp.eq.s32.totalorder %s15, 0
    %p108 = por %p106, %p107
    %p109 = scmp.ne.s32.totalorder %s97, %s98
    %p110 = scmp.eq.s32.totalorder %s16, 5
    %p111 = por %p109, %p110
    %p113 = scmp.ne.s32.totalorder %s98, %s112
    %p114 = scmp.eq.s32.totalorder %s16, 0
    %p115 = por %p113, %p114
    %s116 = ssub.s32 %s10, %s17
    %p117 = scmp.eq.s32.totalorder %s116, 0
    %s119 = sadd.s32 %s118, 1
    %s120 = scalar_select %p117, %s118, %s119
    %p123 = pneg %p117
    %p124 = scmp.eq.s32.totalorder %s10, 5
    %p125 = por %p123, %p124
    %p126 = scmp.ne.s32.totalorder %s118, %s121
    %p127 = scmp.eq.s32.totalorder %s10, 0
    %p128 = por %p126, %p127
    %p129 = scmp.ne.s32.totalorder %s118, %s121
    %p130 = scmp.eq.s32.totalorder %s15, 5
    %p131 = por %p129, %p130
    %p132 = scmp.ne.s32.totalorder %s121, %s122
    %p133 = scmp.eq.s32.totalorder %s15, 0
    %p134 = por %p132, %p133
    %p135 = scmp.ne.s32.totalorder %s121, %s122
    %p136 = scmp.eq.s32.totalorder %s16, 5
    %p137 = por %p135, %p136
    %p139 = scmp.ne.s32.totalorder %s122, %s138
    %p140 = scmp.eq.s32.totalorder %s16, 0
    %p141 = por %p139, %p140
    %p142 = scmp.le.s32.totalorder 1, %s10
    %p143 = scmp.lt.s32.totalorder %s10, 7
    %p144 = pnand %p142, %p143
    %p145 = pneg %p144
    // Predicated region
    $region9: #{block_forward.2} parent=5 // pred_check
      _
    $region10: #{block_forward.2} parent=5 // pred_check_branch
      %147 = sbr.rel (%p144) target = $region12
    $region11: #{block_forward.2} parent=5 // pred_region
      %s148 = ssub.s32 %s10, 1
      // Predicated region
      $region13: #{block_forward.2} parent=11 // pred_check
        %p149 = pneg %p87
      $region14: #{block_forward.2} parent=11 // pred_check_branch
        %151 = sbr.rel (%p149) target = $region16
      $region15: #{block_forward.2} parent=11 // pred_region
        _
      $region16: #{block_forward.2} parent=11 // pred_fallthru
        _
      // Predicated region
      $region17: #{block_forward.2} parent=11 // pred_check
        %p152 = pneg %p108
      $region18: #{block_forward.2} parent=11 // pred_check_branch
        %154 = sbr.rel (%p152) target = $region20
      $region19: #{block_forward.2} parent=11 // pred_region
        _
      $region20: #{block_forward.2} parent=11 // pred_fallthru
        _
    $region12: #{block_forward.2} parent=5 // pred_fallthru
      _
    %p155 = scmp.lt.s32.totalorder %s10, 6
    // Predicated region
    $region21: #{block_forward.2} parent=5 // pred_check
      %p156 = pneg %p155
    $region22: #{block_forward.2} parent=5 // pred_check_branch
      %158 = sbr.rel (%p156) target = $region24
    $region23: #{block_forward.2} parent=5 // pred_region
      // Predicated region
      $region25: #{block_forward.2} parent=23 // pred_check
        %p159 = pneg %p30
      $region26: #{block_forward.2} parent=23 // pred_check_branch
        %161 = sbr.rel (%p159) target = $region28
      $region27: #{block_forward.2} parent=23 // pred_region
        %s162 = smul.u32 64, %s10
        %s163 = ssub.s32 392, %s162
        %p164 = scmp.lt.s32.totalorder %s163, 64
        %s165 = scalar_select %p164, %s163, 64
        %s166 = smul.u32 64, %s165
        %p167 = scmp.lt.s32.totalorder %s162, 391
        %s168 = scalar_select %p167, %s162, 391
        %s169 = smul.addr %s168, 4
        %s170 = scalar_lea.vmem %s0, %s169
        %s171 = smul.u32 64, %s10
        %s172 = ssub.s32 392, %s171
        %p173 = scmp.lt.s32.totalorder %s172, 64
        %s174 = scalar_select %p173, %s172, 64
        %s175 = smul.u32 64, %s174
      $region28: #{block_forward.2} parent=23 // pred_fallthru
        _
      // Predicated region
      $region29: #{block_forward.2} parent=23 // pred_check
        %p176 = pneg %p60
      $region30: #{block_forward.2} parent=23 // pred_check_branch
        %178 = sbr.rel (%p176) target = $region32
      $region31: #{block_forward.2} parent=23 // pred_region
        %s179 = sadd.s32 %s10, 1
        %s180 = smul.u32 %s179, 8
        %s181 = smul.u32 8, %s180
        %p182 = scmp.lt.s32.totalorder %s181, 391
        %s183 = scalar_select %p182, %s181, 391
        %s184 = smul.addr %s183, 4
        %s185 = scalar_lea.vmem %s1, %s184
        %s186 = sadd.s32 %s10, 1
        %s187 = smul.u32 %s186, 8
        %s188 = smul.u32 8, %s187
      $region32: #{block_forward.2} parent=23 // pred_fallthru
        _
    $region24: #{block_forward.2} parent=5 // pred_fallthru
      _
    %p189 = scmp.le.s32.totalorder 1, %s10
    %p190 = scmp.lt.s32.totalorder %s10, 7
    %p191 = pnand %p189, %p190
    %p192 = pneg %p191
    // Predicated region
    $region33: #{block_forward.2} parent=5 // pred_check
      _
    $region34: #{block_forward.2} parent=5 // pred_check_branch
      %194 = sbr.rel (%p191) target = $region36
    $region35: #{block_forward.2} parent=5 // pred_region
      %s195 = ssub.s32 %s10, 1
      %s196 = smul.u32 64, %s15
      %s197 = ssub.s32 392, %s196
      %p198 = scmp.lt.s32.totalorder %s197, 64
      %s199 = scalar_select %p198, %s197, 64
      %s200 = smul.u32 64, %s199
      %p201 = scmp.lt.s32.totalorder %s196, 391
      %s202 = scalar_select %p201, %s196, 391
      %s203 = smul.addr %s202, 4
      %s204 = scalar_lea.vmem %s0, %s203
      %p205 = pneg %p36
      %p206 = pneg %p33
      %s207 = sadd.s32 %s15, 1
      %s208 = smul.u32 %s207, 8
      %s209 = smul.u32 8, %s208
      %p210 = scmp.lt.s32.totalorder %s209, 391
      %s211 = scalar_select %p210, %s209, 391
      %s212 = smul.addr %s211, 4
      %s213 = scalar_lea.vmem %s1, %s212
      %p214 = pneg %p66
      %p215 = pneg %p63
      %p216 = pneg %p87
      %p217 = pneg %p84
      %p218 = pneg %p108
      %p219 = pneg %p105
      %p220 = pneg %p134
      %p221 = pneg %p131
      %s222 = smul.u32 64, %s15
      %p223 = scmp.lt.s32.totalorder %s222, 383
      %s224 = scalar_select %p223, %s222, 383
      %s225 = smul.addr %s224, 8
      %s226 = scalar_lea.vmem %s4, %s225
      %s227 = smul.u32 64, %s15
      %s228 = ssub.s32 392, %s227
      %p229 = scmp.lt.s32.totalorder %s228, 64
      %s230 = scalar_select %p229, %s228, 64
      %s231 = smul.u32 64, %s230
      %p232 = scmp.lt.s32.totalorder %s227, 391
      %s233 = scalar_select %p232, %s227, 391
      %s234 = smul.addr %s233, 4
      %s235 = scalar_lea.vmem %s0, %s234
      %s236 = smul.u32 64, %s15
      %s237 = ssub.s32 392, %s236
      %p238 = scmp.lt.s32.totalorder %s237, 64
      %s239 = scalar_select %p238, %s237, 64
      %s240 = smul.u32 64, %s239
      %s241 = sadd.s32 %s15, 1
      %s242 = smul.u32 %s241, 8
      %s243 = smul.u32 8, %s242
      %p244 = scmp.lt.s32.totalorder %s243, 391
      %s245 = scalar_select %p244, %s243, 391
      %s246 = smul.addr %s245, 4
      %s247 = scalar_lea.vmem %s1, %s246
      %s248 = sadd.s32 %s15, 1
      %s249 = smul.u32 %s248, 8
      %s250 = smul.u32 8, %s249
      %s251 = smul.u32 64, %s15
      %p252 = scmp.lt.s32.totalorder %s251, 383
      %s253 = scalar_select %p252, %s251, 383
      %s254 = smul.addr %s253, 8
      %s255 = scalar_lea.vmem %s4, %s254
      %s256 = smul.u32 64, %s15
      %v258 = vld [vmem:[%s235] sm:$0xf]
      %v259 = vld [vmem:[%s235 + $0x4] sm:$0xf]
      %v260 = vld [vmem:[%s235 + $0x8] sm:$0xf]
      %v261 = vld [vmem:[%s235 + $0xc] sm:$0xf]
      %v262 = vld [vmem:[%s235 + $0x10] sm:$0xf]
      %v263 = vld [vmem:[%s235 + $0x14] sm:$0xf]
      %v264 = vld [vmem:[%s235 + $0x18] sm:$0xf]
      %v265 = vld [vmem:[%s235 + $0x1c] sm:$0xf]
      %v266 = vld [vmem:[%s235 + $0x20] sm:$0xf]
      %v267 = vld [vmem:[%s235 + $0x24] sm:$0xf]
      %v268 = vld [vmem:[%s235 + $0x28] sm:$0xf]
      %v269 = vld [vmem:[%s235 + $0x2c] sm:$0xf]
      %v270 = vld [vmem:[%s235 + $0x30] sm:$0xf]
      %v271 = vld [vmem:[%s235 + $0x34] sm:$0xf]
      %v272 = vld [vmem:[%s235 + $0x38] sm:$0xf]
      %v273 = vld [vmem:[%s235 + $0x3c] sm:$0xf]
      %v274 = vld [vmem:[%s235 + $0x40] sm:$0xf]
      %v275 = vld [vmem:[%s235 + $0x44] sm:$0xf]
      %v276 = vld [vmem:[%s235 + $0x48] sm:$0xf]
      %v277 = vld [vmem:[%s235 + $0x4c] sm:$0xf]
      %v278 = vld [vmem:[%s235 + $0x50] sm:$0xf]
      %v279 = vld [vmem:[%s235 + $0x54] sm:$0xf]
      %v280 = vld [vmem:[%s235 + $0x58] sm:$0xf]
      %v281 = vld [vmem:[%s235 + $0x5c] sm:$0xf]
      %v282 = vld [vmem:[%s235 + $0x60] sm:$0xf]
      %v283 = vld [vmem:[%s235 + $0x64] sm:$0xf]
      %v284 = vld [vmem:[%s235 + $0x68] sm:$0xf]
      %v285 = vld [vmem:[%s235 + $0x6c] sm:$0xf]
      %v286 = vld [vmem:[%s235 + $0x70] sm:$0xf]
      %v287 = vld [vmem:[%s235 + $0x74] sm:$0xf]
      %v288 = vld [vmem:[%s235 + $0x78] sm:$0xf]
      %v289 = vld [vmem:[%s235 + $0x7c] sm:$0xf]
      %v290 = vld [vmem:[%s235 + $0x80] sm:$0xf]
      %v291 = vld [vmem:[%s235 + $0x84] sm:$0xf]
      %v292 = vld [vmem:[%s235 + $0x88] sm:$0xf]
      %v293 = vld [vmem:[%s235 + $0x8c] sm:$0xf]
      %v294 = vld [vmem:[%s235 + $0x90] sm:$0xf]
      %v295 = vld [vmem:[%s235 + $0x94] sm:$0xf]
      %v296 = vld [vmem:[%s235 + $0x98] sm:$0xf]
      %v297 = vld [vmem:[%s235 + $0x9c] sm:$0xf]
      %v298 = vld [vmem:[%s235 + $0xa0] sm:$0xf]
      %v299 = vld [vmem:[%s235 + $0xa4] sm:$0xf]
      %v300 = vld [vmem:[%s235 + $0xa8] sm:$0xf]
      %v301 = vld [vmem:[%s235 + $0xac] sm:$0xf]
      %v302 = vld [vmem:[%s235 + $0xb0] sm:$0xf]
      %v303 = vld [vmem:[%s235 + $0xb4] sm:$0xf]
      %v304 = vld [vmem:[%s235 + $0xb8] sm:$0xf]
      %v305 = vld [vmem:[%s235 + $0xbc] sm:$0xf]
      %v306 = vld [vmem:[%s235 + $0xc0] sm:$0xf]
      %v307 = vld [vmem:[%s235 + $0xc4] sm:$0xf]
      %v308 = vld [vmem:[%s235 + $0xc8] sm:$0xf]
      %v309 = vld [vmem:[%s235 + $0xcc] sm:$0xf]
      %v310 = vld [vmem:[%s235 + $0xd0] sm:$0xf]
      %v311 = vld [vmem:[%s235 + $0xd4] sm:$0xf]
      %v312 = vld [vmem:[%s235 + $0xd8] sm:$0xf]
      %v313 = vld [vmem:[%s235 + $0xdc] sm:$0xf]
      %v314 = vld [vmem:[%s235 + $0xe0] sm:$0xf]
      %v315 = vld [vmem:[%s235 + $0xe4] sm:$0xf]
      %v316 = vld [vmem:[%s235 + $0xe8] sm:$0xf]
      %v317 = vld [vmem:[%s235 + $0xec] sm:$0xf]
      %v318 = vld [vmem:[%s235 + $0xf0] sm:$0xf]
      %v319 = vld [vmem:[%s235 + $0xf4] sm:$0xf]
      %v320 = vld [vmem:[%s235 + $0xf8] sm:$0xf]
      %v321 = vld [vmem:[%s235 + $0xfc] sm:$0xf]
      %v322 = vunpack.c.l.bf16 %v258
      %v323 = vunpack.c.l.bf16 %v259
      %v324 = vunpack.c.l.bf16 %v260
      %v325 = vunpack.c.l.bf16 %v261
      %v326 = vunpack.c.l.bf16 %v262
      %v327 = vunpack.c.l.bf16 %v263
      %v328 = vunpack.c.l.bf16 %v264
      %v329 = vunpack.c.l.bf16 %v265
      %v330 = vunpack.c.l.bf16 %v266
      %v331 = vunpack.c.l.bf16 %v267
      %v332 = vunpack.c.l.bf16 %v268
      %v333 = vunpack.c.l.bf16 %v269
      %v334 = vunpack.c.l.bf16 %v270
      %v335 = vunpack.c.l.bf16 %v271
      %v336 = vunpack.c.l.bf16 %v272
      %v337 = vunpack.c.l.bf16 %v273
      %v338 = vunpack.c.l.bf16 %v274
      %v339 = vunpack.c.l.bf16 %v275
      %v340 = vunpack.c.l.bf16 %v276
      %v341 = vunpack.c.l.bf16 %v277
      %v342 = vunpack.c.l.bf16 %v278
      %v343 = vunpack.c.l.bf16 %v279
      %v344 = vunpack.c.l.bf16 %v280
      %v345 = vunpack.c.l.bf16 %v281
      %v346 = vunpack.c.l.bf16 %v282
      %v347 = vunpack.c.l.bf16 %v283
      %v348 = vunpack.c.l.bf16 %v284
      %v349 = vunpack.c.l.bf16 %v285
      %v350 = vunpack.c.l.bf16 %v286
      %v351 = vunpack.c.l.bf16 %v287
      %v352 = vunpack.c.l.bf16 %v288
      %v353 = vunpack.c.l.bf16 %v289
      %v354 = vunpack.c.l.bf16 %v290
      %v355 = vunpack.c.l.bf16 %v291
      %v356 = vunpack.c.l.bf16 %v292
      %v357 = vunpack.c.l.bf16 %v293
      %v358 = vunpack.c.l.bf16 %v294
      %v359 = vunpack.c.l.bf16 %v295
      %v360 = vunpack.c.l.bf16 %v296
      %v361 = vunpack.c.l.bf16 %v297
      %v362 = vunpack.c.l.bf16 %v298
      %v363 = vunpack.c.l.bf16 %v299
      %v364 = vunpack.c.l.bf16 %v300
      %v365 = vunpack.c.l.bf16 %v301
      %v366 = vunpack.c.l.bf16 %v302
      %v367 = vunpack.c.l.bf16 %v303
      %v368 = vunpack.c.l.bf16 %v304
      %v369 = vunpack.c.l.bf16 %v305
      %v370 = vunpack.c.l.bf16 %v306
      %v371 = vunpack.c.l.bf16 %v307
      %v372 = vunpack.c.l.bf16 %v308
      %v373 = vunpack.c.l.bf16 %v309
      %v374 = vunpack.c.l.bf16 %v310
      %v375 = vunpack.c.l.bf16 %v311
      %v376 = vunpack.c.l.bf16 %v312
      %v377 = vunpack.c.l.bf16 %v313
      %v378 = vunpack.c.l.bf16 %v314
      %v379 = vunpack.c.l.bf16 %v315
      %v380 = vunpack.c.l.bf16 %v316
      %v381 = vunpack.c.l.bf16 %v317
      %v382 = vunpack.c.l.bf16 %v318
      %v383 = vunpack.c.l.bf16 %v319
      %v384 = vunpack.c.l.bf16 %v320
      %v385 = vunpack.c.l.bf16 %v321
      %vm386 = vcmask 523264
      %387 = vst.msk [vmem:[#allocation2] sm:$0xff] %vm386, %v322
      %388 = vst.msk [vmem:[#allocation2 + $0x8] sm:$0xff] %vm386, %v323
      %389 = vst.msk [vmem:[#allocation2 + $0x10] sm:$0xff] %vm386, %v324
      %390 = vst.msk [vmem:[#allocation2 + $0x18] sm:$0xff] %vm386, %v325
      %391 = vst.msk [vmem:[#allocation2 + $0x20] sm:$0xff] %vm386, %v326
      %392 = vst.msk [vmem:[#allocation2 + $0x28] sm:$0xff] %vm386, %v327
      %393 = vst.msk [vmem:[#allocation2 + $0x30] sm:$0xff] %vm386, %v328
      %394 = vst.msk [vmem:[#allocation2 + $0x38] sm:$0xff] %vm386, %v329
      %395 = vst.msk [vmem:[#allocation2 + $0x40] sm:$0xff] %vm386, %v330
      %396 = vst.msk [vmem:[#allocation2 + $0x48] sm:$0xff] %vm386, %v331
      %397 = vst.msk [vmem:[#allocation2 + $0x50] sm:$0xff] %vm386, %v332
      %398 = vst.msk [vmem:[#allocation2 + $0x58] sm:$0xff] %vm386, %v333
      %399 = vst.msk [vmem:[#allocation2 + $0x60] sm:$0xff] %vm386, %v334
      %400 = vst.msk [vmem:[#allocation2 + $0x68] sm:$0xff] %vm386, %v335
      %401 = vst.msk [vmem:[#allocation2 + $0x70] sm:$0xff] %vm386, %v336
      %402 = vst.msk [vmem:[#allocation2 + $0x78] sm:$0xff] %vm386, %v337
      %403 = vst.msk [vmem:[#allocation2 + $0x80] sm:$0xff] %vm386, %v338
      %404 = vst.msk [vmem:[#allocation2 + $0x88] sm:$0xff] %vm386, %v339
      %405 = vst.msk [vmem:[#allocation2 + $0x90] sm:$0xff] %vm386, %v340
      %406 = vst.msk [vmem:[#allocation2 + $0x98] sm:$0xff] %vm386, %v341
      %407 = vst.msk [vmem:[#allocation2 + $0xa0] sm:$0xff] %vm386, %v342
      %408 = vst.msk [vmem:[#allocation2 + $0xa8] sm:$0xff] %vm386, %v343
      %409 = vst.msk [vmem:[#allocation2 + $0xb0] sm:$0xff] %vm386, %v344
      %410 = vst.msk [vmem:[#allocation2 + $0xb8] sm:$0xff] %vm386, %v345
      %411 = vst.msk [vmem:[#allocation2 + $0xc0] sm:$0xff] %vm386, %v346
      %412 = vst.msk [vmem:[#allocation2 + $0xc8] sm:$0xff] %vm386, %v347
      %413 = vst.msk [vmem:[#allocation2 + $0xd0] sm:$0xff] %vm386, %v348
      %414 = vst.msk [vmem:[#allocation2 + $0xd8] sm:$0xff] %vm386, %v349
      %415 = vst.msk [vmem:[#allocation2 + $0xe0] sm:$0xff] %vm386, %v350
      %416 = vst.msk [vmem:[#allocation2 + $0xe8] sm:$0xff] %vm386, %v351
      %417 = vst.msk [vmem:[#allocation2 + $0xf0] sm:$0xff] %vm386, %v352
      %418 = vst.msk [vmem:[#allocation2 + $0xf8] sm:$0xff] %vm386, %v353
      %419 = vst.msk [vmem:[#allocation2 + $0x100] sm:$0xff] %vm386, %v354
      %420 = vst.msk [vmem:[#allocation2 + $0x108] sm:$0xff] %vm386, %v355
      %421 = vst.msk [vmem:[#allocation2 + $0x110] sm:$0xff] %vm386, %v356
      %422 = vst.msk [vmem:[#allocation2 + $0x118] sm:$0xff] %vm386, %v357
      %423 = vst.msk [vmem:[#allocation2 + $0x120] sm:$0xff] %vm386, %v358
      %424 = vst.msk [vmem:[#allocation2 + $0x128] sm:$0xff] %vm386, %v359
      %425 = vst.msk [vmem:[#allocation2 + $0x130] sm:$0xff] %vm386, %v360
      %426 = vst.msk [vmem:[#allocation2 + $0x138] sm:$0xff] %vm386, %v361
      %427 = vst.msk [vmem:[#allocation2 + $0x140] sm:$0xff] %vm386, %v362
      %428 = vst.msk [vmem:[#allocation2 + $0x148] sm:$0xff] %vm386, %v363
      %429 = vst.msk [vmem:[#allocation2 + $0x150] sm:$0xff] %vm386, %v364
      %430 = vst.msk [vmem:[#allocation2 + $0x158] sm:$0xff] %vm386, %v365
      %431 = vst.msk [vmem:[#allocation2 + $0x160] sm:$0xff] %vm386, %v366
      %432 = vst.msk [vmem:[#allocation2 + $0x168] sm:$0xff] %vm386, %v367
      %433 = vst.msk [vmem:[#allocation2 + $0x170] sm:$0xff] %vm386, %v368
      %434 = vst.msk [vmem:[#allocation2 + $0x178] sm:$0xff] %vm386, %v369
      %435 = vst.msk [vmem:[#allocation2 + $0x180] sm:$0xff] %vm386, %v370
      %436 = vst.msk [vmem:[#allocation2 + $0x188] sm:$0xff] %vm386, %v371
      %437 = vst.msk [vmem:[#allocation2 + $0x190] sm:$0xff] %vm386, %v372
      %438 = vst.msk [vmem:[#allocation2 + $0x198] sm:$0xff] %vm386, %v373
      %439 = vst.msk [vmem:[#allocation2 + $0x1a0] sm:$0xff] %vm386, %v374
      %440 = vst.msk [vmem:[#allocation2 + $0x1a8] sm:$0xff] %vm386, %v375
      %441 = vst.msk [vmem:[#allocation2 + $0x1b0] sm:$0xff] %vm386, %v376
      %442 = vst.msk [vmem:[#allocation2 + $0x1b8] sm:$0xff] %vm386, %v377
      %443 = vst.msk [vmem:[#allocation2 + $0x1c0] sm:$0xff] %vm386, %v378
      %444 = vst.msk [vmem:[#allocation2 + $0x1c8] sm:$0xff] %vm386, %v379
      %445 = vst.msk [vmem:[#allocation2 + $0x1d0] sm:$0xff] %vm386, %v380
      %446 = vst.msk [vmem:[#allocation2 + $0x1d8] sm:$0xff] %vm386, %v381
      %447 = vst.msk [vmem:[#allocation2 + $0x1e0] sm:$0xff] %vm386, %v382
      %448 = vst.msk [vmem:[#allocation2 + $0x1e8] sm:$0xff] %vm386, %v383
      %449 = vst.msk [vmem:[#allocation2 + $0x1f0] sm:$0xff] %vm386, %v384
      %450 = vst.msk [vmem:[#allocation2 + $0x1f8] sm:$0xff] %vm386, %v385
      %v451 = vld [vmem:[%s247] sm:$0xf]
      %v452 = vld [vmem:[%s247 + $0x4] sm:$0xf]
      %v453 = vld [vmem:[%s247 + $0x8] sm:$0xf]
      %v454 = vld [vmem:[%s247 + $0xc] sm:$0xf]
      %v455 = vld [vmem:[%s247 + $0x10] sm:$0xf]
      %v456 = vld [vmem:[%s247 + $0x14] sm:$0xf]
      %v457 = vld [vmem:[%s247 + $0x18] sm:$0xf]
      %v458 = vld [vmem:[%s247 + $0x1c] sm:$0xf]
      %v459 = vunpack.c.l.bf16 %v451
      %v460 = vunpack.c.l.bf16 %v452
      %v461 = vunpack.c.l.bf16 %v453
      %v462 = vunpack.c.l.bf16 %v454
      %v463 = vunpack.c.l.bf16 %v455
      %v464 = vunpack.c.l.bf16 %v456
      %v465 = vunpack.c.l.bf16 %v457
      %v466 = vunpack.c.l.bf16 %v458
      %467 = vst.msk [vmem:[#allocation2 + $0x200] sm:$0xff] %vm386, %v459
      %468 = vst.msk [vmem:[#allocation2 + $0x208] sm:$0xff] %vm386, %v460
      %469 = vst.msk [vmem:[#allocation2 + $0x210] sm:$0xff] %vm386, %v461
      %470 = vst.msk [vmem:[#allocation2 + $0x218] sm:$0xff] %vm386, %v462
      %471 = vst.msk [vmem:[#allocation2 + $0x220] sm:$0xff] %vm386, %v463
      %472 = vst.msk [vmem:[#allocation2 + $0x228] sm:$0xff] %vm386, %v464
      %473 = vst.msk [vmem:[#allocation2 + $0x230] sm:$0xff] %vm386, %v465
      %474 = vst.msk [vmem:[#allocation2 + $0x238] sm:$0xff] %vm386, %v466
      %v475 = vld [vmem:[#allocation2] sm:$0xff]
      %v476 = vld [vmem:[#allocation2 + $0x8] sm:$0xff]
      %v477 = vld [vmem:[#allocation2 + $0x10] sm:$0xff]
      %v478 = vld [vmem:[#allocation2 + $0x18] sm:$0xff]
      %v479 = vld [vmem:[#allocation2 + $0x20] sm:$0xff]
      %v480 = vld [vmem:[#allocation2 + $0x28] sm:$0xff]
      %v481 = vld [vmem:[#allocation2 + $0x30] sm:$0xff]
      %v482 = vld [vmem:[#allocation2 + $0x38] sm:$0xff]
      %v483 = vld [vmem:[#allocation2 + $0x40] sm:$0xff]
      %v484 = vld [vmem:[#allocation2 + $0x48] sm:$0xff]
      %v485 = vld [vmem:[#allocation2 + $0x50] sm:$0xff]
      %v486 = vld [vmem:[#allocation2 + $0x58] sm:$0xff]
      %v487 = vld [vmem:[#allocation2 + $0x60] sm:$0xff]
      %v488 = vld [vmem:[#allocation2 + $0x68] sm:$0xff]
      %v489 = vld [vmem:[#allocation2 + $0x70] sm:$0xff]
      %v490 = vld [vmem:[#allocation2 + $0x78] sm:$0xff]
      %v491 = vld [vmem:[#allocation2 + $0x80] sm:$0xff]
      %v492 = vld [vmem:[#allocation2 + $0x88] sm:$0xff]
      %v493 = vld [vmem:[#allocation2 + $0x90] sm:$0xff]
      %v494 = vld [vmem:[#allocation2 + $0x98] sm:$0xff]
      %v495 = vld [vmem:[#allocation2 + $0xa0] sm:$0xff]
      %v496 = vld [vmem:[#allocation2 + $0xa8] sm:$0xff]
      %v497 = vld [vmem:[#allocation2 + $0xb0] sm:$0xff]
      %v498 = vld [vmem:[#allocation2 + $0xb8] sm:$0xff]
      %v499 = vld [vmem:[#allocation2 + $0xc0] sm:$0xff]
      %v500 = vld [vmem:[#allocation2 + $0xc8] sm:$0xff]
      %v501 = vld [vmem:[#allocation2 + $0xd0] sm:$0xff]
      %v502 = vld [vmem:[#allocation2 + $0xd8] sm:$0xff]
      %v503 = vld [vmem:[#allocation2 + $0xe0] sm:$0xff]
      %v504 = vld [vmem:[#allocation2 + $0xe8] sm:$0xff]
      %v505 = vld [vmem:[#allocation2 + $0xf0] sm:$0xff]
      %v506 = vld [vmem:[#allocation2 + $0xf8] sm:$0xff]
      %v507 = vld [vmem:[#allocation2 + $0x100] sm:$0xff]
      %v508 = vld [vmem:[#allocation2 + $0x108] sm:$0xff]
      %v509 = vld [vmem:[#allocation2 + $0x110] sm:$0xff]
      %v510 = vld [vmem:[#allocation2 + $0x118] sm:$0xff]
      %v511 = vld [vmem:[#allocation2 + $0x120] sm:$0xff]
      %v512 = vld [vmem:[#allocation2 + $0x128] sm:$0xff]
      %v513 = vld [vmem:[#allocation2 + $0x130] sm:$0xff]
      %v514 = vld [vmem:[#allocation2 + $0x138] sm:$0xff]
      %v515 = vld [vmem:[#allocation2 + $0x140] sm:$0xff]
      %v516 = vld [vmem:[#allocation2 + $0x148] sm:$0xff]
      %v517 = vld [vmem:[#allocation2 + $0x150] sm:$0xff]
      %v518 = vld [vmem:[#allocation2 + $0x158] sm:$0xff]
      %v519 = vld [vmem:[#allocation2 + $0x160] sm:$0xff]
      %v520 = vld [vmem:[#allocation2 + $0x168] sm:$0xff]
      %v521 = vld [vmem:[#allocation2 + $0x170] sm:$0xff]
      %v522 = vld [vmem:[#allocation2 + $0x178] sm:$0xff]
      %v523 = vld [vmem:[#allocation2 + $0x180] sm:$0xff]
      %v524 = vld [vmem:[#allocation2 + $0x188] sm:$0xff]
      %v525 = vld [vmem:[#allocation2 + $0x190] sm:$0xff]
      %v526 = vld [vmem:[#allocation2 + $0x198] sm:$0xff]
      %v527 = vld [vmem:[#allocation2 + $0x1a0] sm:$0xff]
      %v528 = vld [vmem:[#allocation2 + $0x1a8] sm:$0xff]
      %v529 = vld [vmem:[#allocation2 + $0x1b0] sm:$0xff]
      %v530 = vld [vmem:[#allocation2 + $0x1b8] sm:$0xff]
      %v531 = vld [vmem:[#allocation2 + $0x1c0] sm:$0xff]
      %v532 = vld [vmem:[#allocation2 + $0x1c8] sm:$0xff]
      %v533 = vld [vmem:[#allocation2 + $0x1d0] sm:$0xff]
      %v534 = vld [vmem:[#allocation2 + $0x1d8] sm:$0xff]
      %v535 = vld [vmem:[#allocation2 + $0x1e0] sm:$0xff]
      %v536 = vld [vmem:[#allocation2 + $0x1e8] sm:$0xff]
      %v537 = vld [vmem:[#allocation2 + $0x1f0] sm:$0xff]
      %v538 = vld [vmem:[#allocation2 + $0x1f8] sm:$0xff]
      %v539 = vpack.c.bf16 %v476, %v475
      %v540 = vpack.c.bf16 %v478, %v477
      %v541 = vpack.c.bf16 %v480, %v479
      %v542 = vpack.c.bf16 %v482, %v481
      %v543 = vpack.c.bf16 %v484, %v483
      %v544 = vpack.c.bf16 %v486, %v485
      %v545 = vpack.c.bf16 %v488, %v487
      %v546 = vpack.c.bf16 %v490, %v489
      %v547 = vpack.c.bf16 %v492, %v491
      %v548 = vpack.c.bf16 %v494, %v493
      %v549 = vpack.c.bf16 %v496, %v495
      %v550 = vpack.c.bf16 %v498, %v497
      %v551 = vpack.c.bf16 %v500, %v499
      %v552 = vpack.c.bf16 %v502, %v501
      %v553 = vpack.c.bf16 %v504, %v503
      %v554 = vpack.c.bf16 %v506, %v505
      %v555 = vpack.c.bf16 %v508, %v507
      %v556 = vpack.c.bf16 %v510, %v509
      %v557 = vpack.c.bf16 %v512, %v511
      %v558 = vpack.c.bf16 %v514, %v513
      %v559 = vpack.c.bf16 %v516, %v515
      %v560 = vpack.c.bf16 %v518, %v517
      %v561 = vpack.c.bf16 %v520, %v519
      %v562 = vpack.c.bf16 %v522, %v521
      %v563 = vpack.c.bf16 %v524, %v523
      %v564 = vpack.c.bf16 %v526, %v525
      %v565 = vpack.c.bf16 %v528, %v527
      %v566 = vpack.c.bf16 %v530, %v529
      %v567 = vpack.c.bf16 %v532, %v531
      %v568 = vpack.c.bf16 %v534, %v533
      %v569 = vpack.c.bf16 %v536, %v535
      %v570 = vpack.c.bf16 %v538, %v537
      %v571 = vld [vmem:[%s2] sm:$0xf]
      %v572 = vld [vmem:[%s2 + $0x4] sm:$0xf]
      %v573 = vld [vmem:[%s2 + $0x8] sm:$0xf]
      %v574 = vld [vmem:[%s2 + $0xc] sm:$0xf]
      %v575 = vld [vmem:[%s2 + $0x10] sm:$0xf]
      %v576 = vld [vmem:[%s2 + $0x14] sm:$0xf]
      %v577 = vld [vmem:[%s2 + $0x18] sm:$0xf]
      %v578 = vld [vmem:[%s2 + $0x1c] sm:$0xf]
      %v579 = vld [vmem:[#allocation2 + $0x1] sm:$0xff]
      %v580 = vld [vmem:[#allocation2 + $0x9] sm:$0xff]
      %v581 = vld [vmem:[#allocation2 + $0x11] sm:$0xff]
      %v582 = vld [vmem:[#allocation2 + $0x19] sm:$0xff]
      %v583 = vld [vmem:[#allocation2 + $0x21] sm:$0xff]
      %v584 = vld [vmem:[#allocation2 + $0x29] sm:$0xff]
      %v585 = vld [vmem:[#allocation2 + $0x31] sm:$0xff]
      %v586 = vld [vmem:[#allocation2 + $0x39] sm:$0xff]
      %v587 = vld [vmem:[#allocation2 + $0x41] sm:$0xff]
      %v588 = vld [vmem:[#allocation2 + $0x49] sm:$0xff]
      %v589 = vld [vmem:[#allocation2 + $0x51] sm:$0xff]
      %v590 = vld [vmem:[#allocation2 + $0x59] sm:$0xff]
      %v591 = vld [vmem:[#allocation2 + $0x61] sm:$0xff]
      %v592 = vld [vmem:[#allocation2 + $0x69] sm:$0xff]
      %v593 = vld [vmem:[#allocation2 + $0x71] sm:$0xff]
      %v594 = vld [vmem:[#allocation2 + $0x79] sm:$0xff]
      %v595 = vld [vmem:[#allocation2 + $0x81] sm:$0xff]
      %v596 = vld [vmem:[#allocation2 + $0x89] sm:$0xff]
      %v597 = vld [vmem:[#allocation2 + $0x91] sm:$0xff]
      %v598 = vld [vmem:[#allocation2 + $0x99] sm:$0xff]
      %v599 = vld [vmem:[#allocation2 + $0xa1] sm:$0xff]
      %v600 = vld [vmem:[#allocation2 + $0xa9] sm:$0xff]
      %v601 = vld [vmem:[#allocation2 + $0xb1] sm:$0xff]
      %v602 = vld [vmem:[#allocation2 + $0xb9] sm:$0xff]
      %v603 = vld [vmem:[#allocation2 + $0xc1] sm:$0xff]
      %v604 = vld [vmem:[#allocation2 + $0xc9] sm:$0xff]
      %v605 = vld [vmem:[#allocation2 + $0xd1] sm:$0xff]
      %v606 = vld [vmem:[#allocation2 + $0xd9] sm:$0xff]
      %v607 = vld [vmem:[#allocation2 + $0xe1] sm:$0xff]
      %v608 = vld [vmem:[#allocation2 + $0xe9] sm:$0xff]
      %v609 = vld [vmem:[#allocation2 + $0xf1] sm:$0xff]
      %v610 = vld [vmem:[#allocation2 + $0xf9] sm:$0xff]
      %v611 = vld [vmem:[#allocation2 + $0x101] sm:$0xff]
      %v612 = vld [vmem:[#allocation2 + $0x109] sm:$0xff]
      %v613 = vld [vmem:[#allocation2 + $0x111] sm:$0xff]
      %v614 = vld [vmem:[#allocation2 + $0x119] sm:$0xff]
      %v615 = vld [vmem:[#allocation2 + $0x121] sm:$0xff]
      %v616 = vld [vmem:[#allocation2 + $0x129] sm:$0xff]
      %v617 = vld [vmem:[#allocation2 + $0x131] sm:$0xff]
      %v618 = vld [vmem:[#allocation2 + $0x139] sm:$0xff]
      %v619 = vld [vmem:[#allocation2 + $0x141] sm:$0xff]
      %v620 = vld [vmem:[#allocation2 + $0x149] sm:$0xff]
      %v621 = vld [vmem:[#allocation2 + $0x151] sm:$0xff]
      %v622 = vld [vmem:[#allocation2 + $0x159] sm:$0xff]
      %v623 = vld [vmem:[#allocation2 + $0x161] sm:$0xff]
      %v624 = vld [vmem:[#allocation2 + $0x169] sm:$0xff]
      %v625 = vld [vmem:[#allocation2 + $0x171] sm:$0xff]
      %v626 = vld [vmem:[#allocation2 + $0x179] sm:$0xff]
      %v627 = vld [vmem:[#allocation2 + $0x181] sm:$0xff]
      %v628 = vld [vmem:[#allocation2 + $0x189] sm:$0xff]
      %v629 = vld [vmem:[#allocation2 + $0x191] sm:$0xff]
      %v630 = vld [vmem:[#allocation2 + $0x199] sm:$0xff]
      %v631 = vld [vmem:[#allocation2 + $0x1a1] sm:$0xff]
      %v632 = vld [vmem:[#allocation2 + $0x1a9] sm:$0xff]
      %v633 = vld [vmem:[#allocation2 + $0x1b1] sm:$0xff]
      %v634 = vld [vmem:[#allocation2 + $0x1b9] sm:$0xff]
      %v635 = vld [vmem:[#allocation2 + $0x1c1] sm:$0xff]
      %v636 = vld [vmem:[#allocation2 + $0x1c9] sm:$0xff]
      %v637 = vld [vmem:[#allocation2 + $0x1d1] sm:$0xff]
      %v638 = vld [vmem:[#allocation2 + $0x1d9] sm:$0xff]
      %v639 = vld [vmem:[#allocation2 + $0x1e1] sm:$0xff]
      %v640 = vld [vmem:[#allocation2 + $0x1e9] sm:$0xff]
      %v641 = vld [vmem:[#allocation2 + $0x1f1] sm:$0xff]
      %v642 = vld [vmem:[#allocation2 + $0x1f9] sm:$0xff]
      %v643 = vpack.c.bf16 %v580, %v579
      %v644 = vpack.c.bf16 %v582, %v581
      %v645 = vpack.c.bf16 %v584, %v583
      %v646 = vpack.c.bf16 %v586, %v585
      %v647 = vpack.c.bf16 %v588, %v587
      %v648 = vpack.c.bf16 %v590, %v589
      %v649 = vpack.c.bf16 %v592, %v591
      %v650 = vpack.c.bf16 %v594, %v593
      %v651 = vpack.c.bf16 %v596, %v595
      %v652 = vpack.c.bf16 %v598, %v597
      %v653 = vpack.c.bf16 %v600, %v599
      %v654 = vpack.c.bf16 %v602, %v601
      %v655 = vpack.c.bf16 %v604, %v603
      %v656 = vpack.c.bf16 %v606, %v605
      %v657 = vpack.c.bf16 %v608, %v607
      %v658 = vpack.c.bf16 %v610, %v609
      %v659 = vpack.c.bf16 %v612, %v611
      %v660 = vpack.c.bf16 %v614, %v613
      %v661 = vpack.c.bf16 %v616, %v615
      %v662 = vpack.c.bf16 %v618, %v617
      %v663 = vpack.c.bf16 %v620, %v619
      %v664 = vpack.c.bf16 %v622, %v621
      %v665 = vpack.c.bf16 %v624, %v623
      %v666 = vpack.c.bf16 %v626, %v625
      %v667 = vpack.c.bf16 %v628, %v627
      %v668 = vpack.c.bf16 %v630, %v629
      %v669 = vpack.c.bf16 %v632, %v631
      %v670 = vpack.c.bf16 %v634, %v633
      %v671 = vpack.c.bf16 %v636, %v635
      %v672 = vpack.c.bf16 %v638, %v637
      %v673 = vpack.c.bf16 %v640, %v639
      %v674 = vpack.c.bf16 %v642, %v641
      %v675 = vld [vmem:[%s2 + $0x20] sm:$0xf]
      %v676 = vld [vmem:[%s2 + $0x24] sm:$0xf]
      %v677 = vld [vmem:[%s2 + $0x28] sm:$0xf]
      %v678 = vld [vmem:[%s2 + $0x2c] sm:$0xf]
      %v679 = vld [vmem:[%s2 + $0x30] sm:$0xf]
      %v680 = vld [vmem:[%s2 + $0x34] sm:$0xf]
      %v681 = vld [vmem:[%s2 + $0x38] sm:$0xf]
      %v682 = vld [vmem:[%s2 + $0x3c] sm:$0xf]
      %v691 = vunpack.c.l.b16 %v675
      %v692 = vunpack.c.l.b16 %v676
      %v693 = vunpack.c.l.b16 %v677
      %v694 = vunpack.c.l.b16 %v678
      %v695 = vunpack.c.l.b16 %v679
      %v696 = vunpack.c.l.b16 %v680
      %v697 = vunpack.c.l.b16 %v681
      %v698 = vunpack.c.l.b16 %v682
      %v699 = vpack.c.b16 %v692, %v691
      %v700 = vpack.c.b16 %v694, %v693
      %v701 = vpack.c.b16 %v696, %v695
      %v702 = vpack.c.b16 %v698, %v697
      %v708 = vsel %vm386, %v643, 0
      %v711 = vsel %vm386, %v644, 0
      %v714 = vsel %vm386, %v645, 0
      %v717 = vsel %vm386, %v646, 0
      %v720 = vsel %vm386, %v647, 0
      %v723 = vsel %vm386, %v648, 0
      %v726 = vsel %vm386, %v649, 0
      %v729 = vsel %vm386, %v650, 0
      %v732 = vsel %vm386, %v651, 0
      %v735 = vsel %vm386, %v652, 0
      %v738 = vsel %vm386, %v653, 0
      %v741 = vsel %vm386, %v654, 0
      %v744 = vsel %vm386, %v655, 0
      %v747 = vsel %vm386, %v656, 0
      %v750 = vsel %vm386, %v657, 0
      %v753 = vsel %vm386, %v658, 0
      %v756 = vsel %vm386, %v659, 0
      %v759 = vsel %vm386, %v660, 0
      %v762 = vsel %vm386, %v661, 0
      %v765 = vsel %vm386, %v662, 0
      %v768 = vsel %vm386, %v663, 0
      %v771 = vsel %vm386, %v664, 0
      %v774 = vsel %vm386, %v665, 0
      %v777 = vsel %vm386, %v666, 0
      %v780 = vsel %vm386, %v667, 0
      %v783 = vsel %vm386, %v668, 0
      %v786 = vsel %vm386, %v669, 0
      %v789 = vsel %vm386, %v670, 0
      %v792 = vsel %vm386, %v671, 0
      %v795 = vsel %vm386, %v672, 0
      %v798 = vsel %vm386, %v673, 0
      %v801 = vsel %vm386, %v674, 0
      %803 = vmatprep.subr.bf16.mxu0 0
      %804 = vmatpush1.bf16.msra.mxu0 %v699
      %805 = vmatprep.subr.bf16.mxu0 0
      %806 = vmatpush1.bf16.msra.mxu0 %v700
      %807 = vmatprep.subr.bf16.mxu0 0
      %808 = vmatpush1.bf16.msra.mxu0 %v701
      %809 = vmatprep.subr.bf16.mxu0 0
      %810 = vmatpush1.bf16.msra.mxu0 %v702
      %811 = vmatprep.subr.bf16.mxu0 0
      %812 = vmatpush1.bf16.msra.mxu0 0
      %813 = vmatprep.subr.bf16.mxu0 0
      %814 = vmatpush1.bf16.msra.mxu0 0
      %815 = vmatprep.subr.bf16.mxu0 0
      %816 = vmatpush1.bf16.msra.mxu0 0
      %817 = vmatprep.subr.bf16.mxu0 0
      %818 = vmatpush1.bf16.msra.mxu0 0
      %819 = vmatprep.subr.bf16.mxu0 0
      %820 = vmatpush1.bf16.msra.mxu0 0
      %821 = vmatprep.subr.bf16.mxu0 0
      %822 = vmatpush1.bf16.msra.mxu0 0
      %823 = vmatprep.subr.bf16.mxu0 0
      %824 = vmatpush1.bf16.msra.mxu0 0
      %825 = vmatprep.subr.bf16.mxu0 0
      %826 = vmatpush1.bf16.msra.mxu0 0
      %827 = vmatprep.subr.bf16.mxu0 0
      %828 = vmatpush1.bf16.msra.mxu0 0
      %829 = vmatprep.subr.bf16.mxu0 0
      %830 = vmatpush1.bf16.msra.mxu0 0
      %831 = vmatprep.subr.bf16.mxu0 0
      %832 = vmatpush1.bf16.msra.mxu0 0
      %833 = vmatprep.subr.bf16.mxu0 0
      %834 = vmatpush1.bf16.msra.mxu0 0
      %835 = vmatprep.mubr.bf16.mxu0 0
      %836 = vmatmul.mubr.bf16.gmra.mrb[0].mxu0 %v708
      %v837 = vpop.f32.mrb[0].mxu0
      %v838 = vadd.f32 0.0, %v837
      %v839 = vpop.f32.mrb[0].mxu0
      %v840 = vpop.f32.mrb[0].mxu0
      %v841 = vadd.f32 0.0, %v840
      %v842 = vpop.f32.mrb[0].mxu0
      %843 = vmatprep.mubr.bf16.mxu0 0
      %844 = vmatmul.mubr.bf16.gmra.mrb[0].mxu0 %v711
      %v845 = vpop.f32.mrb[0].mxu0
      %v846 = vadd.f32 0.0, %v845
      %v847 = vpop.f32.mrb[0].mxu0
      %v848 = vpop.f32.mrb[0].mxu0
      %v849 = vadd.f32 0.0, %v848
      %v850 = vpop.f32.mrb[0].mxu0
      %851 = vmatprep.mubr.bf16.mxu0 0
      %852 = vmatmul.mubr.bf16.gmra.mrb[0].mxu0 %v714
      %v853 = vpop.f32.mrb[0].mxu0
      %v854 = vadd.f32 0.0, %v853
      %v855 = vpop.f32.mrb[0].mxu0
      %v856 = vpop.f32.mrb[0].mxu0
      %v857 = vadd.f32 0.0, %v856
      %v858 = vpop.f32.mrb[0].mxu0
      %859 = vmatprep.mubr.bf16.mxu0 0
      %860 = vmatmul.mubr.bf16.gmra.mrb[0].mxu0 %v717
      %v861 = vpop.f32.mrb[0].mxu0
      %v862 = vadd.f32 0.0, %v861
      %v863 = vpop.f32.mrb[0].mxu0
      %v864 = vpop.f32.mrb[0].mxu0
      %v865 = vadd.f32 0.0, %v864
      %v866 = vpop.f32.mrb[0].mxu0
      %867 = vmatprep.mubr.bf16.mxu0 0
      %868 = vmatmul.mubr.bf16.gmra.mrb[0].mxu0 %v720
      %v869 = vpop.f32.mrb[0].mxu0
      %v870 = vadd.f32 0.0, %v869
      %v871 = vpop.f32.mrb[0].mxu0
      %v872 = vpop.f32.mrb[0].mxu0
      %v873 = vadd.f32 0.0, %v872
      %v874 = vpop.f32.mrb[0].mxu0
      %875 = vmatprep.mubr.bf16.mxu0 0
      %876 = vmatmul.mubr.bf16.gmra.mrb[0].mxu0 %v723
      %v877 = vpop.f32.mrb[0].mxu0
      %v878 = vadd.f32 0.0, %v877
      %v879 = vpop.f32.mrb[0].mxu0
      %v880 = vpop.f32.mrb[0].mxu0
      %v881 = vadd.f32 0.0, %v880
      %v882 = vpop.f32.mrb[0].mxu0
      %883 = vmatprep.mubr.bf16.mxu0 0
      %884 = vmatmul.mubr.bf16.gmra.mrb[0].mxu0 %v726
      %v885 = vpop.f32.mrb[0].mxu0
      %v886 = vadd.f32 0.0, %v885
      %v887 = vpop.f32.mrb[0].mxu0
      %v888 = vpop.f32.mrb[0].mxu0
      %v889 = vadd.f32 0.0, %v888
      %v890 = vpop.f32.mrb[0].mxu0
      %891 = vmatprep.mubr.bf16.mxu0 0
      %892 = vmatmul.mubr.bf16.gmra.mrb[0].mxu0 %v729
      %v893 = vpop.f32.mrb[0].mxu0
      %v894 = vadd.f32 0.0, %v893
      %v895 = vpop.f32.mrb[0].mxu0
      %v896 = vpop.f32.mrb[0].mxu0
      %v897 = vadd.f32 0.0, %v896
      %v898 = vpop.f32.mrb[0].mxu0
      %899 = vmatprep.mubr.bf16.mxu0 0
      %900 = vmatmul.mubr.bf16.gmra.mrb[0].mxu0 %v732
      %v901 = vpop.f32.mrb[0].mxu0
      %v902 = vadd.f32 0.0, %v901
      %v903 = vpop.f32.mrb[0].mxu0
      %v904 = vpop.f32.mrb[0].mxu0
      %v905 = vadd.f32 0.0, %v904
      %v906 = vpop.f32.mrb[0].mxu0
      %907 = vmatprep.mubr.bf16.mxu0 0
      %908 = vmatmul.mubr.bf16.gmra.mrb[0].mxu0 %v735
      %v909 = vpop.f32.mrb[0].mxu0
      %v910 = vadd.f32 0.0, %v909
      %v911 = vpop.f32.mrb[0].mxu0
      %v912 = vpop.f32.mrb[0].mxu0
      %v913 = vadd.f32 0.0, %v912
      %v914 = vpop.f32.mrb[0].mxu0
      %915 = vmatprep.mubr.bf16.mxu0 0
      %916 = vmatmul.mubr.bf16.gmra.mrb[0].mxu0 %v738
      %v917 = vpop.f32.mrb[0].mxu0
      %v918 = vadd.f32 0.0, %v917
      %v919 = vpop.f32.mrb[0].mxu0
      %v920 = vpop.f32.mrb[0].mxu0
      %v921 = vadd.f32 0.0, %v920
      %v922 = vpop.f32.mrb[0].mxu0
      %923 = vmatprep.mubr.bf16.mxu0 0
      %924 = vmatmul.mubr.bf16.gmra.mrb[0].mxu0 %v741
      %v925 = vpop.f32.mrb[0].mxu0
      %v926 = vadd.f32 0.0, %v925
      %v927 = vpop.f32.mrb[0].mxu0
      %v928 = vpop.f32.mrb[0].mxu0
      %v929 = vadd.f32 0.0, %v928
      %v930 = vpop.f32.mrb[0].mxu0
      %931 = vmatprep.mubr.bf16.mxu0 0
      %932 = vmatmul.mubr.bf16.gmra.mrb[0].mxu0 %v744
      %v933 = vpop.f32.mrb[0].mxu0
      %v934 = vadd.f32 0.0, %v933
      %v935 = vpop.f32.mrb[0].mxu0
      %v936 = vpop.f32.mrb[0].mxu0
      %v937 = vadd.f32 0.0, %v936
      %v938 = vpop.f32.mrb[0].mxu0
      %939 = vmatprep.mubr.bf16.mxu0 0
      %940 = vmatmul.mubr.bf16.gmra.mrb[0].mxu0 %v747
      %v941 = vpop.f32.mrb[0].mxu0
      %v942 = vadd.f32 0.0, %v941
      %v943 = vpop.f32.mrb[0].mxu0
      %v944 = vpop.f32.mrb[0].mxu0
      %v945 = vadd.f32 0.0, %v944
      %v946 = vpop.f32.mrb[0].mxu0
      %947 = vmatprep.mubr.bf16.mxu0 0
      %948 = vmatmul.mubr.bf16.gmra.mrb[0].mxu0 %v750
      %v949 = vpop.f32.mrb[0].mxu0
      %v950 = vadd.f32 0.0, %v949
      %v951 = vpop.f32.mrb[0].mxu0
      %v952 = vpop.f32.mrb[0].mxu0
      %v953 = vadd.f32 0.0, %v952
      %v954 = vpop.f32.mrb[0].mxu0
      %955 = vmatprep.mubr.bf16.mxu0 0
      %956 = vmatmul.mubr.bf16.gmra.mrb[0].mxu0 %v753
      %v957 = vpop.f32.mrb[0].mxu0
      %v958 = vadd.f32 0.0, %v957
      %v959 = vpop.f32.mrb[0].mxu0
      %v960 = vpop.f32.mrb[0].mxu0
      %v961 = vadd.f32 0.0, %v960
      %v962 = vpop.f32.mrb[0].mxu0
      %963 = vmatprep.mubr.bf16.mxu0 0
      %964 = vmatmul.mubr.bf16.gmra.mrb[0].mxu0 %v756
      %v965 = vpop.f32.mrb[0].mxu0
      %v966 = vadd.f32 0.0, %v965
      %v967 = vpop.f32.mrb[0].mxu0
      %v968 = vpop.f32.mrb[0].mxu0
      %v969 = vadd.f32 0.0, %v968
      %v970 = vpop.f32.mrb[0].mxu0
      %971 = vmatprep.mubr.bf16.mxu0 0
      %972 = vmatmul.mubr.bf16.gmra.mrb[0].mxu0 %v759
      %v973 = vpop.f32.mrb[0].mxu0
      %v974 = vadd.f32 0.0, %v973
      %v975 = vpop.f32.mrb[0].mxu0
      %v976 = vpop.f32.mrb[0].mxu0
      %v977 = vadd.f32 0.0, %v976
      %v978 = vpop.f32.mrb[0].mxu0
      %979 = vmatprep.mubr.bf16.mxu0 0
      %980 = vmatmul.mubr.bf16.gmra.mrb[0].mxu0 %v762
      %v981 = vpop.f32.mrb[0].mxu0
      %v982 = vadd.f32 0.0, %v981
      %v983 = vpop.f32.mrb[0].mxu0
      %v984 = vpop.f32.mrb[0].mxu0
      %v985 = vadd.f32 0.0, %v984
      %v986 = vpop.f32.mrb[0].mxu0
      %987 = vmatprep.mubr.bf16.mxu0 0
      %988 = vmatmul.mubr.bf16.gmra.mrb[0].mxu0 %v765
      %v989 = vpop.f32.mrb[0].mxu0
      %v990 = vadd.f32 0.0, %v989
      %v991 = vpop.f32.mrb[0].mxu0
      %v992 = vpop.f32.mrb[0].mxu0
      %v993 = vadd.f32 0.0, %v992
      %v994 = vpop.f32.mrb[0].mxu0
      %995 = vmatprep.mubr.bf16.mxu0 0
      %996 = vmatmul.mubr.bf16.gmra.mrb[0].mxu0 %v768
      %v997 = vpop.f32.mrb[0].mxu0
      %v998 = vadd.f32 0.0, %v997
      %v999 = vpop.f32.mrb[0].mxu0
      %v1000 = vpop.f32.mrb[0].mxu0
      %v1001 = vadd.f32 0.0, %v1000
      %v1002 = vpop.f32.mrb[0].mxu0
      %1003 = vmatprep.mubr.bf16.mxu0 0
      %1004 = vmatmul.mubr.bf16.gmra.mrb[0].mxu0 %v771
      %v1005 = vpop.f32.mrb[0].mxu0
      %v1006 = vadd.f32 0.0, %v1005
      %v1007 = vpop.f32.mrb[0].mxu0
      %v1008 = vpop.f32.mrb[0].mxu0
      %v1009 = vadd.f32 0.0, %v1008
      %v1010 = vpop.f32.mrb[0].mxu0
      %1011 = vmatprep.mubr.bf16.mxu0 0
      %1012 = vmatmul.mubr.bf16.gmra.mrb[0].mxu0 %v774
      %v1013 = vpop.f32.mrb[0].mxu0
      %v1014 = vadd.f32 0.0, %v1013
      %v1015 = vpop.f32.mrb[0].mxu0
      %v1016 = vpop.f32.mrb[0].mxu0
      %v1017 = vadd.f32 0.0, %v1016
      %v1018 = vpop.f32.mrb[0].mxu0
      %1019 = vmatprep.mubr.bf16.mxu0 0
      %1020 = vmatmul.mubr.bf16.gmra.mrb[0].mxu0 %v777
      %v1021 = vpop.f32.mrb[0].mxu0
      %v1022 = vadd.f32 0.0, %v1021
      %v1023 = vpop.f32.mrb[0].mxu0
      %v1024 = vpop.f32.mrb[0].mxu0
      %v1025 = vadd.f32 0.0, %v1024
      %v1026 = vpop.f32.mrb[0].mxu0
      %1027 = vmatprep.mubr.bf16.mxu0 0
      %1028 = vmatmul.mubr.bf16.gmra.mrb[0].mxu0 %v780
      %v1029 = vpop.f32.mrb[0].mxu0
      %v1030 = vadd.f32 0.0, %v1029
      %v1031 = vpop.f32.mrb[0].mxu0
      %v1032 = vpop.f32.mrb[0].mxu0
      %v1033 = vadd.f32 0.0, %v1032
      %v1034 = vpop.f32.mrb[0].mxu0
      %1035 = vmatprep.mubr.bf16.mxu0 0
      %1036 = vmatmul.mubr.bf16.gmra.mrb[0].mxu0 %v783
      %v1037 = vpop.f32.mrb[0].mxu0
      %v1038 = vadd.f32 0.0, %v1037
      %v1039 = vpop.f32.mrb[0].mxu0
      %v1040 = vpop.f32.mrb[0].mxu0
      %v1041 = vadd.f32 0.0, %v1040
      %v1042 = vpop.f32.mrb[0].mxu0
      %1043 = vmatprep.mubr.bf16.mxu0 0
      %1044 = vmatmul.mubr.bf16.gmra.mrb[0].mxu0 %v786
      %v1045 = vpop.f32.mrb[0].mxu0
      %v1046 = vadd.f32 0.0, %v1045
      %v1047 = vpop.f32.mrb[0].mxu0
      %v1048 = vpop.f32.mrb[0].mxu0
      %v1049 = vadd.f32 0.0, %v1048
      %v1050 = vpop.f32.mrb[0].mxu0
      %1051 = vmatprep.mubr.bf16.mxu0 0
      %1052 = vmatmul.mubr.bf16.gmra.mrb[0].mxu0 %v789
      %v1053 = vpop.f32.mrb[0].mxu0
      %v1054 = vadd.f32 0.0, %v1053
      %v1055 = vpop.f32.mrb[0].mxu0
      %v1056 = vpop.f32.mrb[0].mxu0
      %v1057 = vadd.f32 0.0, %v1056
      %v1058 = vpop.f32.mrb[0].mxu0
      %1059 = vmatprep.mubr.bf16.mxu0 0
      %1060 = vmatmul.mubr.bf16.gmra.mrb[0].mxu0 %v792
      %v1061 = vpop.f32.mrb[0].mxu0
      %v1062 = vadd.f32 0.0, %v1061
      %v1063 = vpop.f32.mrb[0].mxu0
      %v1064 = vpop.f32.mrb[0].mxu0
      %v1065 = vadd.f32 0.0, %v1064
      %v1066 = vpop.f32.mrb[0].mxu0
      %1067 = vmatprep.mubr.bf16.mxu0 0
      %1068 = vmatmul.mubr.bf16.gmra.mrb[0].mxu0 %v795
      %v1069 = vpop.f32.mrb[0].mxu0
      %v1070 = vadd.f32 0.0, %v1069
      %v1071 = vpop.f32.mrb[0].mxu0
      %v1072 = vpop.f32.mrb[0].mxu0
      %v1073 = vadd.f32 0.0, %v1072
      %v1074 = vpop.f32.mrb[0].mxu0
      %1075 = vmatprep.mubr.bf16.mxu0 0
      %1076 = vmatmul.mubr.bf16.gmra.mrb[0].mxu0 %v798
      %v1077 = vpop.f32.mrb[0].mxu0
      %v1078 = vadd.f32 0.0, %v1077
      %v1079 = vpop.f32.mrb[0].mxu0
      %v1080 = vpop.f32.mrb[0].mxu0
      %v1081 = vadd.f32 0.0, %v1080
      %v1082 = vpop.f32.mrb[0].mxu0
      %1083 = vmatprep.mubr.bf16.mxu0 0
      %1084 = vmatmul.mubr.bf16.gmra.mrb[0].mxu0 %v801
      %v1085 = vpop.f32.mrb[0].mxu0
      %v1086 = vadd.f32 0.0, %v1085
      %v1087 = vpop.f32.mrb[0].mxu0
      %v1088 = vpop.f32.mrb[0].mxu0
      %v1089 = vadd.f32 0.0, %v1088
      %v1090 = vpop.f32.mrb[0].mxu0
      %1091 = vdwg.mxu0
      %v1100 = vunpack.c.l.b16 %v571
      %v1101 = vunpack.c.l.b16 %v572
      %v1102 = vunpack.c.l.b16 %v573
      %v1103 = vunpack.c.l.b16 %v574
      %v1104 = vunpack.c.l.b16 %v575
      %v1105 = vunpack.c.l.b16 %v576
      %v1106 = vunpack.c.l.b16 %v577
      %v1107 = vunpack.c.l.b16 %v578
      %v1108 = vpack.c.b16 %v1101, %v1100
      %v1109 = vpack.c.b16 %v1103, %v1102
      %v1110 = vpack.c.b16 %v1105, %v1104
      %v1111 = vpack.c.b16 %v1107, %v1106
      %v1117 = vsel %vm386, %v539, 0
      %v1120 = vsel %vm386, %v540, 0
      %v1123 = vsel %vm386, %v541, 0
      %v1126 = vsel %vm386, %v542, 0
      %v1129 = vsel %vm386, %v543, 0
      %v1132 = vsel %vm386, %v544, 0
      %v1135 = vsel %vm386, %v545, 0
      %v1138 = vsel %vm386, %v546, 0
      %v1141 = vsel %vm386, %v547, 0
      %v1144 = vsel %vm386, %v548, 0
      %v1147 = vsel %vm386, %v549, 0
      %v1150 = vsel %vm386, %v550, 0
      %v1153 = vsel %vm386, %v551, 0
      %v1156 = vsel %vm386, %v552, 0
      %v1159 = vsel %vm386, %v553, 0
      %v1162 = vsel %vm386, %v554, 0
      %v1165 = vsel %vm386, %v555, 0
      %v1168 = vsel %vm386, %v556, 0
      %v1171 = vsel %vm386, %v557, 0
      %v1174 = vsel %vm386, %v558, 0
      %v1177 = vsel %vm386, %v559, 0
      %v1180 = vsel %vm386, %v560, 0
      %v1183 = vsel %vm386, %v561, 0
      %v1186 = vsel %vm386, %v562, 0
      %v1189 = vsel %vm386, %v563, 0
      %v1192 = vsel %vm386, %v564, 0
      %v1195 = vsel %vm386, %v565, 0
      %v1198 = vsel %vm386, %v566, 0
      %v1201 = vsel %vm386, %v567, 0
      %v1204 = vsel %vm386, %v568, 0
      %v1207 = vsel %vm386, %v569, 0
      %v1210 = vsel %vm386, %v570, 0
      %1212 = vmatprep.subr.bf16.mxu0 0
      %1213 = vmatpush1.bf16.msra.mxu0 %v1108
      %1214 = vmatprep.subr.bf16.mxu0 0
      %1215 = vmatpush1.bf16.msra.mxu0 %v1109
      %1216 = vmatprep.subr.bf16.mxu0 0
      %1217 = vmatpush1.bf16.msra.mxu0 %v1110
      %1218 = vmatprep.subr.bf16.mxu0 0
      %1219 = vmatpush1.bf16.msra.mxu0 %v1111
      %1220 = vmatprep.subr.bf16.mxu0 0
      %1221 = vmatpush1.bf16.msra.mxu0 0
      %1222 = vmatprep.subr.bf16.mxu0 0
      %1223 = vmatpush1.bf16.msra.mxu0 0
      %1224 = vmatprep.subr.bf16.mxu0 0
      %1225 = vmatpush1.bf16.msra.mxu0 0
      %1226 = vmatprep.subr.bf16.mxu0 0
      %1227 = vmatpush1.bf16.msra.mxu0 0
      %1228 = vmatprep.subr.bf16.mxu0 0
      %1229 = vmatpush1.bf16.msra.mxu0 0
      %1230 = vmatprep.subr.bf16.mxu0 0
      %1231 = vmatpush1.bf16.msra.mxu0 0
      %1232 = vmatprep.subr.bf16.mxu0 0
      %1233 = vmatpush1.bf16.msra.mxu0 0
      %1234 = vmatprep.subr.bf16.mxu0 0
      %1235 = vmatpush1.bf16.msra.mxu0 0
      %1236 = vmatprep.subr.bf16.mxu0 0
      %1237 = vmatpush1.bf16.msra.mxu0 0
      %1238 = vmatprep.subr.bf16.mxu0 0
      %1239 = vmatpush1.bf16.msra.mxu0 0
      %1240 = vmatprep.subr.bf16.mxu0 0
      %1241 = vmatpush1.bf16.msra.mxu0 0
      %1242 = vmatprep.subr.bf16.mxu0 0
      %1243 = vmatpush1.bf16.msra.mxu0 0
      %1244 = vmatprep.mubr.bf16.mxu0 0
      %1245 = vmatmul.mubr.bf16.gmra.mrb[0].mxu0 %v1117
      %v1246 = vpop.f32.mrb[0].mxu0
      %v1247 = vadd.f32 %v838, %v1246
      %v1248 = vpop.f32.mrb[0].mxu0
      %v1249 = vpop.f32.mrb[0].mxu0
      %v1250 = vadd.f32 %v841, %v1249
      %v1251 = vpop.f32.mrb[0].mxu0
      %1252 = vmatprep.mubr.bf16.mxu0 0
      %1253 = vmatmul.mubr.bf16.gmra.mrb[0].mxu0 %v1120
      %v1254 = vpop.f32.mrb[0].mxu0
      %v1255 = vadd.f32 %v846, %v1254
      %v1256 = vpop.f32.mrb[0].mxu0
      %v1257 = vpop.f32.mrb[0].mxu0
      %v1258 = vadd.f32 %v849, %v1257
      %v1259 = vpop.f32.mrb[0].mxu0
      %1260 = vmatprep.mubr.bf16.mxu0 0
      %1261 = vmatmul.mubr.bf16.gmra.mrb[0].mxu0 %v1123
      %v1262 = vpop.f32.mrb[0].mxu0
      %v1263 = vadd.f32 %v854, %v1262
      %v1264 = vpop.f32.mrb[0].mxu0
      %v1265 = vpop.f32.mrb[0].mxu0
      %v1266 = vadd.f32 %v857, %v1265
      %v1267 = vpop.f32.mrb[0].mxu0
      %1268 = vmatprep.mubr.bf16.mxu0 0
      %1269 = vmatmul.mubr.bf16.gmra.mrb[0].mxu0 %v1126
      %v1270 = vpop.f32.mrb[0].mxu0
      %v1271 = vadd.f32 %v862, %v1270
      %v1272 = vpop.f32.mrb[0].mxu0
      %v1273 = vpop.f32.mrb[0].mxu0
      %v1274 = vadd.f32 %v865, %v1273
      %v1275 = vpop.f32.mrb[0].mxu0
      %1276 = vmatprep.mubr.bf16.mxu0 0
      %1277 = vmatmul.mubr.bf16.gmra.mrb[0].mxu0 %v1129
      %v1278 = vpop.f32.mrb[0].mxu0
      %v1279 = vadd.f32 %v870, %v1278
      %v1280 = vpop.f32.mrb[0].mxu0
      %v1281 = vpop.f32.mrb[0].mxu0
      %v1282 = vadd.f32 %v873, %v1281
      %v1283 = vpop.f32.mrb[0].mxu0
      %1284 = vmatprep.mubr.bf16.mxu0 0
      %1285 = vmatmul.mubr.bf16.gmra.mrb[0].mxu0 %v1132
      %v1286 = vpop.f32.mrb[0].mxu0
      %v1287 = vadd.f32 %v878, %v1286
      %v1288 = vpop.f32.mrb[0].mxu0
      %v1289 = vpop.f32.mrb[0].mxu0
      %v1290 = vadd.f32 %v881, %v1289
      %v1291 = vpop.f32.mrb[0].mxu0
      %1292 = vmatprep.mubr.bf16.mxu0 0
      %1293 = vmatmul.mubr.bf16.gmra.mrb[0].mxu0 %v1135
      %v1294 = vpop.f32.mrb[0].mxu0
      %v1295 = vadd.f32 %v886, %v1294
      %v1296 = vpop.f32.mrb[0].mxu0
      %v1297 = vpop.f32.mrb[0].mxu0
      %v1298 = vadd.f32 %v889, %v1297
      %v1299 = vpop.f32.mrb[0].mxu0
      %1300 = vmatprep.mubr.bf16.mxu0 0
      %1301 = vmatmul.mubr.bf16.gmra.mrb[0].mxu0 %v1138
      %v1302 = vpop.f32.mrb[0].mxu0
      %v1303 = vadd.f32 %v894, %v1302
      %v1304 = vpop.f32.mrb[0].mxu0
      %v1305 = vpop.f32.mrb[0].mxu0
      %v1306 = vadd.f32 %v897, %v1305
      %v1307 = vpop.f32.mrb[0].mxu0
      %1308 = vmatprep.mubr.bf16.mxu0 0
      %1309 = vmatmul.mubr.bf16.gmra.mrb[0].mxu0 %v1141
      %v1310 = vpop.f32.mrb[0].mxu0
      %v1311 = vadd.f32 %v902, %v1310
      %v1312 = vpop.f32.mrb[0].mxu0
      %v1313 = vpop.f32.mrb[0].mxu0
      %v1314 = vadd.f32 %v905, %v1313
      %v1315 = vpop.f32.mrb[0].mxu0
      %1316 = vmatprep.mubr.bf16.mxu0 0
      %1317 = vmatmul.mubr.bf16.gmra.mrb[0].mxu0 %v1144
      %v1318 = vpop.f32.mrb[0].mxu0
      %v1319 = vadd.f32 %v910, %v1318
      %v1320 = vpop.f32.mrb[0].mxu0
      %v1321 = vpop.f32.mrb[0].mxu0
      %v1322 = vadd.f32 %v913, %v1321
      %v1323 = vpop.f32.mrb[0].mxu0
      %1324 = vmatprep.mubr.bf16.mxu0 0
      %1325 = vmatmul.mubr.bf16.gmra.mrb[0].mxu0 %v1147
      %v1326 = vpop.f32.mrb[0].mxu0
      %v1327 = vadd.f32 %v918, %v1326
      %v1328 = vpop.f32.mrb[0].mxu0
      %v1329 = vpop.f32.mrb[0].mxu0
      %v1330 = vadd.f32 %v921, %v1329
      %v1331 = vpop.f32.mrb[0].mxu0
      %1332 = vmatprep.mubr.bf16.mxu0 0
      %1333 = vmatmul.mubr.bf16.gmra.mrb[0].mxu0 %v1150
      %v1334 = vpop.f32.mrb[0].mxu0
      %v1335 = vadd.f32 %v926, %v1334
      %v1336 = vpop.f32.mrb[0].mxu0
      %v1337 = vpop.f32.mrb[0].mxu0
      %v1338 = vadd.f32 %v929, %v1337
      %v1339 = vpop.f32.mrb[0].mxu0
      %1340 = vmatprep.mubr.bf16.mxu0 0
      %1341 = vmatmul.mubr.bf16.gmra.mrb[0].mxu0 %v1153
      %v1342 = vpop.f32.mrb[0].mxu0
      %v1343 = vadd.f32 %v934, %v1342
      %v1344 = vpop.f32.mrb[0].mxu0
      %v1345 = vpop.f32.mrb[0].mxu0
      %v1346 = vadd.f32 %v937, %v1345
      %v1347 = vpop.f32.mrb[0].mxu0
      %1348 = vmatprep.mubr.bf16.mxu0 0
      %1349 = vmatmul.mubr.bf16.gmra.mrb[0].mxu0 %v1156
      %v1350 = vpop.f32.mrb[0].mxu0
      %v1351 = vadd.f32 %v942, %v1350
      %v1352 = vpop.f32.mrb[0].mxu0
      %v1353 = vpop.f32.mrb[0].mxu0
      %v1354 = vadd.f32 %v945, %v1353
      %v1355 = vpop.f32.mrb[0].mxu0
      %1356 = vmatprep.mubr.bf16.mxu0 0
      %1357 = vmatmul.mubr.bf16.gmra.mrb[0].mxu0 %v1159
      %v1358 = vpop.f32.mrb[0].mxu0
      %v1359 = vadd.f32 %v950, %v1358
      %v1360 = vpop.f32.mrb[0].mxu0
      %v1361 = vpop.f32.mrb[0].mxu0
      %v1362 = vadd.f32 %v953, %v1361
      %v1363 = vpop.f32.mrb[0].mxu0
      %1364 = vmatprep.mubr.bf16.mxu0 0
      %1365 = vmatmul.mubr.bf16.gmra.mrb[0].mxu0 %v1162
      %v1366 = vpop.f32.mrb[0].mxu0
      %v1367 = vadd.f32 %v958, %v1366
      %v1368 = vpop.f32.mrb[0].mxu0
      %v1369 = vpop.f32.mrb[0].mxu0
      %v1370 = vadd.f32 %v961, %v1369
      %v1371 = vpop.f32.mrb[0].mxu0
      %1372 = vmatprep.mubr.bf16.mxu0 0
      %1373 = vmatmul.mubr.bf16.gmra.mrb[0].mxu0 %v1165
      %v1374 = vpop.f32.mrb[0].mxu0
      %v1375 = vadd.f32 %v966, %v1374
      %v1376 = vpop.f32.mrb[0].mxu0
      %v1377 = vpop.f32.mrb[0].mxu0
      %v1378 = vadd.f32 %v969, %v1377
      %v1379 = vpop.f32.mrb[0].mxu0
      %1380 = vmatprep.mubr.bf16.mxu0 0
      %1381 = vmatmul.mubr.bf16.gmra.mrb[0].mxu0 %v1168
      %v1382 = vpop.f32.mrb[0].mxu0
      %v1383 = vadd.f32 %v974, %v1382
      %v1384 = vpop.f32.mrb[0].mxu0
      %v1385 = vpop.f32.mrb[0].mxu0
      %v1386 = vadd.f32 %v977, %v1385
      %v1387 = vpop.f32.mrb[0].mxu0
      %1388 = vmatprep.mubr.bf16.mxu0 0
      %1389 = vmatmul.mubr.bf16.gmra.mrb[0].mxu0 %v1171
      %v1390 = vpop.f32.mrb[0].mxu0
      %v1391 = vadd.f32 %v982, %v1390
      %v1392 = vpop.f32.mrb[0].mxu0
      %v1393 = vpop.f32.mrb[0].mxu0
      %v1394 = vadd.f32 %v985, %v1393
      %v1395 = vpop.f32.mrb[0].mxu0
      %1396 = vmatprep.mubr.bf16.mxu0 0
      %1397 = vmatmul.mubr.bf16.gmra.mrb[0].mxu0 %v1174
      %v1398 = vpop.f32.mrb[0].mxu0
      %v1399 = vadd.f32 %v990, %v1398
      %v1400 = vpop.f32.mrb[0].mxu0
      %v1401 = vpop.f32.mrb[0].mxu0
      %v1402 = vadd.f32 %v993, %v1401
      %v1403 = vpop.f32.mrb[0].mxu0
      %1404 = vmatprep.mubr.bf16.mxu0 0
      %1405 = vmatmul.mubr.bf16.gmra.mrb[0].mxu0 %v1177
      %v1406 = vpop.f32.mrb[0].mxu0
      %v1407 = vadd.f32 %v998, %v1406
      %v1408 = vpop.f32.mrb[0].mxu0
      %v1409 = vpop.f32.mrb[0].mxu0
      %v1410 = vadd.f32 %v1001, %v1409
      %v1411 = vpop.f32.mrb[0].mxu0
      %1412 = vmatprep.mubr.bf16.mxu0 0
      %1413 = vmatmul.mubr.bf16.gmra.mrb[0].mxu0 %v1180
      %v1414 = vpop.f32.mrb[0].mxu0
      %v1415 = vadd.f32 %v1006, %v1414
      %v1416 = vpop.f32.mrb[0].mxu0
      %v1417 = vpop.f32.mrb[0].mxu0
      %v1418 = vadd.f32 %v1009, %v1417
      %v1419 = vpop.f32.mrb[0].mxu0
      %1420 = vmatprep.mubr.bf16.mxu0 0
      %1421 = vmatmul.mubr.bf16.gmra.mrb[0].mxu0 %v1183
      %v1422 = vpop.f32.mrb[0].mxu0
      %v1423 = vadd.f32 %v1014, %v1422
      %v1424 = vpop.f32.mrb[0].mxu0
      %v1425 = vpop.f32.mrb[0].mxu0
      %v1426 = vadd.f32 %v1017, %v1425
      %v1427 = vpop.f32.mrb[0].mxu0
      %1428 = vmatprep.mubr.bf16.mxu0 0
      %1429 = vmatmul.mubr.bf16.gmra.mrb[0].mxu0 %v1186
      %v1430 = vpop.f32.mrb[0].mxu0
      %v1431 = vadd.f32 %v1022, %v1430
      %v1432 = vpop.f32.mrb[0].mxu0
      %v1433 = vpop.f32.mrb[0].mxu0
      %v1434 = vadd.f32 %v1025, %v1433
      %v1435 = vpop.f32.mrb[0].mxu0
      %1436 = vmatprep.mubr.bf16.mxu0 0
      %1437 = vmatmul.mubr.bf16.gmra.mrb[0].mxu0 %v1189
      %v1438 = vpop.f32.mrb[0].mxu0
      %v1439 = vadd.f32 %v1030, %v1438
      %v1440 = vpop.f32.mrb[0].mxu0
      %v1441 = vpop.f32.mrb[0].mxu0
      %v1442 = vadd.f32 %v1033, %v1441
      %v1443 = vpop.f32.mrb[0].mxu0
      %1444 = vmatprep.mubr.bf16.mxu0 0
      %1445 = vmatmul.mubr.bf16.gmra.mrb[0].mxu0 %v1192
      %v1446 = vpop.f32.mrb[0].mxu0
      %v1447 = vadd.f32 %v1038, %v1446
      %v1448 = vpop.f32.mrb[0].mxu0
      %v1449 = vpop.f32.mrb[0].mxu0
      %v1450 = vadd.f32 %v1041, %v1449
      %v1451 = vpop.f32.mrb[0].mxu0
      %1452 = vmatprep.mubr.bf16.mxu0 0
      %1453 = vmatmul.mubr.bf16.gmra.mrb[0].mxu0 %v1195
      %v1454 = vpop.f32.mrb[0].mxu0
      %v1455 = vadd.f32 %v1046, %v1454
      %v1456 = vpop.f32.mrb[0].mxu0
      %v1457 = vpop.f32.mrb[0].mxu0
      %v1458 = vadd.f32 %v1049, %v1457
      %v1459 = vpop.f32.mrb[0].mxu0
      %1460 = vmatprep.mubr.bf16.mxu0 0
      %1461 = vmatmul.mubr.bf16.gmra.mrb[0].mxu0 %v1198
      %v1462 = vpop.f32.mrb[0].mxu0
      %v1463 = vadd.f32 %v1054, %v1462
      %v1464 = vpop.f32.mrb[0].mxu0
      %v1465 = vpop.f32.mrb[0].mxu0
      %v1466 = vadd.f32 %v1057, %v1465
      %v1467 = vpop.f32.mrb[0].mxu0
      %1468 = vmatprep.mubr.bf16.mxu0 0
      %1469 = vmatmul.mubr.bf16.gmra.mrb[0].mxu0 %v1201
      %v1470 = vpop.f32.mrb[0].mxu0
      %v1471 = vadd.f32 %v1062, %v1470
      %v1472 = vpop.f32.mrb[0].mxu0
      %v1473 = vpop.f32.mrb[0].mxu0
      %v1474 = vadd.f32 %v1065, %v1473
      %v1475 = vpop.f32.mrb[0].mxu0
      %1476 = vmatprep.mubr.bf16.mxu0 0
      %1477 = vmatmul.mubr.bf16.gmra.mrb[0].mxu0 %v1204
      %v1478 = vpop.f32.mrb[0].mxu0
      %v1479 = vadd.f32 %v1070, %v1478
      %v1480 = vpop.f32.mrb[0].mxu0
      %v1481 = vpop.f32.mrb[0].mxu0
      %v1482 = vadd.f32 %v1073, %v1481
      %v1483 = vpop.f32.mrb[0].mxu0
      %1484 = vmatprep.mubr.bf16.mxu0 0
      %1485 = vmatmul.mubr.bf16.gmra.mrb[0].mxu0 %v1207
      %v1486 = vpop.f32.mrb[0].mxu0
      %v1487 = vadd.f32 %v1078, %v1486
      %v1488 = vpop.f32.mrb[0].mxu0
      %v1489 = vpop.f32.mrb[0].mxu0
      %v1490 = vadd.f32 %v1081, %v1489
      %v1491 = vpop.f32.mrb[0].mxu0
      %1492 = vmatprep.mubr.bf16.mxu0 0
      %1493 = vmatmul.mubr.bf16.gmra.mrb[0].mxu0 %v1210
      %v1494 = vpop.f32.mrb[0].mxu0
      %v1495 = vadd.f32 %v1086, %v1494
      %v1496 = vpop.f32.mrb[0].mxu0
      %v1497 = vpop.f32.mrb[0].mxu0
      %v1498 = vadd.f32 %v1089, %v1497
      %v1499 = vpop.f32.mrb[0].mxu0
      %1500 = vdwg.mxu0
      %v1501 = vld [vmem:[#allocation2 + $0x2] sm:$0xff]
      %v1502 = vld [vmem:[#allocation2 + $0xa] sm:$0xff]
      %v1503 = vld [vmem:[#allocation2 + $0x12] sm:$0xff]
      %v1504 = vld [vmem:[#allocation2 + $0x1a] sm:$0xff]
      %v1505 = vld [vmem:[#allocation2 + $0x22] sm:$0xff]
      %v1506 = vld [vmem:[#allocation2 + $0x2a] sm:$0xff]
      %v1507 = vld [vmem:[#allocation2 + $0x32] sm:$0xff]
      %v1508 = vld [vmem:[#allocation2 + $0x3a] sm:$0xff]
      %v1509 = vld [vmem:[#allocation2 + $0x42] sm:$0xff]
      %v1510 = vld [vmem:[#allocation2 + $0x4a] sm:$0xff]
      %v1511 = vld [vmem:[#allocation2 + $0x52] sm:$0xff]
      %v1512 = vld [vmem:[#allocation2 + $0x5a] sm:$0xff]
      %v1513 = vld [vmem:[#allocation2 + $0x62] sm:$0xff]
      %v1514 = vld [vmem:[#allocation2 + $0x6a] sm:$0xff]
      %v1515 = vld [vmem:[#allocation2 + $0x72] sm:$0xff]
      %v1516 = vld [vmem:[#allocation2 + $0x7a] sm:$0xff]
      %v1517 = vld [vmem:[#allocation2 + $0x82] sm:$0xff]
      %v1518 = vld [vmem:[#allocation2 + $0x8a] sm:$0xff]
      %v1519 = vld [vmem:[#allocation2 + $0x92] sm:$0xff]
      %v1520 = vld [vmem:[#allocation2 + $0x9a] sm:$0xff]
      %v1521 = vld [vmem:[#allocation2 + $0xa2] sm:$0xff]
      %v1522 = vld [vmem:[#allocation2 + $0xaa] sm:$0xff]
      %v1523 = vld [vmem:[#allocation2 + $0xb2] sm:$0xff]
      %v1524 = vld [vmem:[#allocation2 + $0xba] sm:$0xff]
      %v1525 = vld [vmem:[#allocation2 + $0xc2] sm:$0xff]
      %v1526 = vld [vmem:[#allocation2 + $0xca] sm:$0xff]
      %v1527 = vld [vmem:[#allocation2 + $0xd2] sm:$0xff]
      %v1528 = vld [vmem:[#allocation2 + $0xda] sm:$0xff]
      %v1529 = vld [vmem:[#allocation2 + $0xe2] sm:$0xff]
      %v1530 = vld [vmem:[#allocation2 + $0xea] sm:$0xff]
      %v1531 = vld [vmem:[#allocation2 + $0xf2] sm:$0xff]
      %v1532 = vld [vmem:[#allocation2 + $0xfa] sm:$0xff]
      %v1533 = vld [vmem:[#allocation2 + $0x102] sm:$0xff]
      %v1534 = vld [vmem:[#allocation2 + $0x10a] sm:$0xff]
      %v1535 = vld [vmem:[#allocation2 + $0x112] sm:$0xff]
      %v1536 = vld [vmem:[#allocation2 + $0x11a] sm:$0xff]
      %v1537 = vld [vmem:[#allocation2 + $0x122] sm:$0xff]
      %v1538 = vld [vmem:[#allocation2 + $0x12a] sm:$0xff]
      %v1539 = vld [vmem:[#allocation2 + $0x132] sm:$0xff]
      %v1540 = vld [vmem:[#allocation2 + $0x13a] sm:$0xff]
      %v1541 = vld [vmem:[#allocation2 + $0x142] sm:$0xff]
      %v1542 = vld [vmem:[#allocation2 + $0x14a] sm:$0xff]
      %v1543 = vld [vmem:[#allocation2 + $0x152] sm:$0xff]
      %v1544 = vld [vmem:[#allocation2 + $0x15a] sm:$0xff]
      %v1545 = vld [vmem:[#allocation2 + $0x162] sm:$0xff]
      %v1546 = vld [vmem:[#allocation2 + $0x16a] sm:$0xff]
      %v1547 = vld [vmem:[#allocation2 + $0x172] sm:$0xff]
      %v1548 = vld [vmem:[#allocation2 + $0x17a] sm:$0xff]
      %v1549 = vld [vmem:[#allocation2 + $0x182] sm:$0xff]
      %v1550 = vld [vmem:[#allocation2 + $0x18a] sm:$0xff]
      %v1551 = vld [vmem:[#allocation2 + $0x192] sm:$0xff]
      %v1552 = vld [vmem:[#allocation2 + $0x19a] sm:$0xff]
      %v1553 = vld [vmem:[#allocation2 + $0x1a2] sm:$0xff]
      %v1554 = vld [vmem:[#allocation2 + $0x1aa] sm:$0xff]
      %v1555 = vld [vmem:[#allocation2 + $0x1b2] sm:$0xff]
      %v1556 = vld [vmem:[#allocation2 + $0x1ba] sm:$0xff]
      %v1557 = vld [vmem:[#allocation2 + $0x1c2] sm:$0xff]
      %v1558 = vld [vmem:[#allocation2 + $0x1ca] sm:$0xff]
      %v1559 = vld [vmem:[#allocation2 + $0x1d2] sm:$0xff]
      %v1560 = vld [vmem:[#allocation2 + $0x1da] sm:$0xff]
      %v1561 = vld [vmem:[#allocation2 + $0x1e2] sm:$0xff]
      %v1562 = vld [vmem:[#allocation2 + $0x1ea] sm:$0xff]
      %v1563 = vld [vmem:[#allocation2 + $0x1f2] sm:$0xff]
      %v1564 = vld [vmem:[#allocation2 + $0x1fa] sm:$0xff]
      %v1565 = vpack.c.bf16 %v1502, %v1501
      %v1566 = vpack.c.bf16 %v1504, %v1503
      %v1567 = vpack.c.bf16 %v1506, %v1505
      %v1568 = vpack.c.bf16 %v1508, %v1507
      %v1569 = vpack.c.bf16 %v1510, %v1509
      %v1570 = vpack.c.bf16 %v1512, %v1511
      %v1571 = vpack.c.bf16 %v1514, %v1513
      %v1572 = vpack.c.bf16 %v1516, %v1515
      %v1573 = vpack.c.bf16 %v1518, %v1517
      %v1574 = vpack.c.bf16 %v1520, %v1519
      %v1575 = vpack.c.bf16 %v1522, %v1521
      %v1576 = vpack.c.bf16 %v1524, %v1523
      %v1577 = vpack.c.bf16 %v1526, %v1525
      %v1578 = vpack.c.bf16 %v1528, %v1527
      %v1579 = vpack.c.bf16 %v1530, %v1529
      %v1580 = vpack.c.bf16 %v1532, %v1531
      %v1581 = vpack.c.bf16 %v1534, %v1533
      %v1582 = vpack.c.bf16 %v1536, %v1535
      %v1583 = vpack.c.bf16 %v1538, %v1537
      %v1584 = vpack.c.bf16 %v1540, %v1539
      %v1585 = vpack.c.bf16 %v1542, %v1541
      %v1586 = vpack.c.bf16 %v1544, %v1543
      %v1587 = vpack.c.bf16 %v1546, %v1545
      %v1588 = vpack.c.bf16 %v1548, %v1547
      %v1589 = vpack.c.bf16 %v1550, %v1549
      %v1590 = vpack.c.bf16 %v1552, %v1551
      %v1591 = vpack.c.bf16 %v1554, %v1553
      %v1592 = vpack.c.bf16 %v1556, %v1555
      %v1593 = vpack.c.bf16 %v1558, %v1557
      %v1594 = vpack.c.bf16 %v1560, %v1559
      %v1595 = vpack.c.bf16 %v1562, %v1561
      %v1596 = vpack.c.bf16 %v1564, %v1563
      %v1597 = vld [vmem:[%s2 + $0x40] sm:$0xf]
      %v1598 = vld [vmem:[%s2 + $0x44] sm:$0xf]
      %v1599 = vld [vmem:[%s2 + $0x48] sm:$0xf]
      %v1600 = vld [vmem:[%s2 + $0x4c] sm:$0xf]
      %v1601 = vld [vmem:[%s2 + $0x50] sm:$0xf]
      %v1602 = vld [vmem:[%s2 + $0x54] sm:$0xf]
      %v1603 = vld [vmem:[%s2 + $0x58] sm:$0xf]
      %v1604 = vld [vmem:[%s2 + $0x5c] sm:$0xf]
      %v1613 = vunpack.c.l.b16 %v1597
      %v1614 = vunpack.c.l.b16 %v1598
      %v1615 = vunpack.c.l.b16 %v1599
      %v1616 = vunpack.c.l.b16 %v1600
      %v1617 = vunpack.c.l.b16 %v1601
      %v1618 = vunpack.c.l.b16 %v1602
      %v1619 = vunpack.c.l.b16 %v1603
      %v1620 = vunpack.c.l.b16 %v1604
      %v1621 = vpack.c.b16 %v1614, %v1613
      %v1622 = vpack.c.b16 %v1616, %v1615
      %v1623 = vpack.c.b16 %v1618, %v1617
      %v1624 = vpack.c.b16 %v1620, %v1619
      %v1630 = vsel %vm386, %v1565, 0
      %v1633 = vsel %vm386, %v1566, 0
      %v1636 = vsel %vm386, %v1567, 0
      %v1639 = vsel %vm386, %v1568, 0
      %v1642 = vsel %vm386, %v1569, 0
      %v1645 = vsel %vm386, %v1570, 0
      %v1648 = vsel %vm386, %v1571, 0
      %v1651 = vsel %vm386, %v1572, 0
      %v1654 = vsel %vm386, %v1573, 0
      %v1657 = vsel %vm386, %v1574, 0
      %v1660 = vsel %vm386, %v1575, 0
      %v1663 = vsel %vm386, %v1576, 0
      %v1666 = vsel %vm386, %v1577, 0
      %v1669 = vsel %vm386, %v1578, 0
      %v1672 = vsel %vm386, %v1579, 0
      %v1675 = vsel %vm386, %v1580, 0
      %v1678 = vsel %vm386, %v1581, 0
      %v1681 = vsel %vm386, %v1582, 0
      %v1684 = vsel %vm386, %v1583, 0
      %v1687 = vsel %vm386, %v1584, 0
      %v1690 = vsel %vm386, %v1585, 0
      %v1693 = vsel %vm386, %v1586, 0
      %v1696 = vsel %vm386, %v1587, 0
      %v1699 = vsel %vm386, %v1588, 0
      %v1702 = vsel %vm386, %v1589, 0
      %v1705 = vsel %vm386, %v1590, 0
      %v1708 = vsel %vm386, %v1591, 0
      %v1711 = vsel %vm386, %v1592, 0
      %v1714 = vsel %vm386, %v1593, 0
      %v1717 = vsel %vm386, %v1594, 0
      %v1720 = vsel %vm386, %v1595, 0
      %v1723 = vsel %vm386, %v1596, 0
      %1725 = vmatprep.subr.bf16.mxu0 0
      %1726 = vmatpush1.bf16.msra.mxu0 %v1621
      %1727 = vmatprep.subr.bf16.mxu0 0
      %1728 = vmatpush1.bf16.msra.mxu0 %v1622
      %1729 = vmatprep.subr.bf16.mxu0 0
      %1730 = vmatpush1.bf16.msra.mxu0 %v1623
      %1731 = vmatprep.subr.bf16.mxu0 0
      %1732 = vmatpush1.bf16.msra.mxu0 %v1624
      %1733 = vmatprep.subr.bf16.mxu0 0
      %1734 = vmatpush1.bf16.msra.mxu0 0
      %1735 = vmatprep.subr.bf16.mxu0 0
      %1736 = vmatpush1.bf16.msra.mxu0 0
      %1737 = vmatprep.subr.bf16.mxu0 0
      %1738 = vmatpush1.bf16.msra.mxu0 0
      %1739 = vmatprep.subr.bf16.mxu0 0
      %1740 = vmatpush1.bf16.msra.mxu0 0
      %1741 = vmatprep.subr.bf16.mxu0 0
      %1742 = vmatpush1.bf16.msra.mxu0 0
      %1743 = vmatprep.subr.bf16.mxu0 0
      %1744 = vmatpush1.bf16.msra.mxu0 0
      %1745 = vmatprep.subr.bf16.mxu0 0
      %1746 = vmatpush1.bf16.msra.mxu0 0
      %1747 = vmatprep.subr.bf16.mxu0 0
      %1748 = vmatpush1.bf16.msra.mxu0 0
      %1749 = vmatprep.subr.bf16.mxu0 0
      %1750 = vmatpush1.bf16.msra.mxu0 0
      %1751 = vmatprep.subr.bf16.mxu0 0
      %1752 = vmatpush1.bf16.msra.mxu0 0
      %1753 = vmatprep.subr.bf16.mxu0 0
      %1754 = vmatpush1.bf16.msra.mxu0 0
      %1755 = vmatprep.subr.bf16.mxu0 0
      %1756 = vmatpush1.bf16.msra.mxu0 0
      %1757 = vmatprep.mubr.bf16.mxu0 0
      %1758 = vmatmul.mubr.bf16.gmra.mrb[0].mxu0 %v1630
      %v1759 = vpop.f32.mrb[0].mxu0
      %v1760 = vadd.f32 0.0, %v1759
      %v1761 = vpop.f32.mrb[0].mxu0
      %v1762 = vpop.f32.mrb[0].mxu0
      %v1763 = vadd.f32 0.0, %v1762
      %v1764 = vpop.f32.mrb[0].mxu0
      %1765 = vmatprep.mubr.bf16.mxu0 0
      %1766 = vmatmul.mubr.bf16.gmra.mrb[0].mxu0 %v1633
      %v1767 = vpop.f32.mrb[0].mxu0
      %v1768 = vadd.f32 0.0, %v1767
      %v1769 = vpop.f32.mrb[0].mxu0
      %v1770 = vpop.f32.mrb[0].mxu0
      %v1771 = vadd.f32 0.0, %v1770
      %v1772 = vpop.f32.mrb[0].mxu0
      %1773 = vmatprep.mubr.bf16.mxu0 0
      %1774 = vmatmul.mubr.bf16.gmra.mrb[0].mxu0 %v1636
      %v1775 = vpop.f32.mrb[0].mxu0
      %v1776 = vadd.f32 0.0, %v1775
      %v1777 = vpop.f32.mrb[0].mxu0
      %v1778 = vpop.f32.mrb[0].mxu0
      %v1779 = vadd.f32 0.0, %v1778
      %v1780 = vpop.f32.mrb[0].mxu0
      %1781 = vmatprep.mubr.bf16.mxu0 0
      %1782 = vmatmul.mubr.bf16.gmra.mrb[0].mxu0 %v1639
      %v1783 = vpop.f32.mrb[0].mxu0
      %v1784 = vadd.f32 0.0, %v1783
      %v1785 = vpop.f32.mrb[0].mxu0
      %v1786 = vpop.f32.mrb[0].mxu0
      %v1787 = vadd.f32 0.0, %v1786
      %v1788 = vpop.f32.mrb[0].mxu0
      %1789 = vmatprep.mubr.bf16.mxu0 0
      %1790 = vmatmul.mubr.bf16.gmra.mrb[0].mxu0 %v1642
      %v1791 = vpop.f32.mrb[0].mxu0
      %v1792 = vadd.f32 0.0, %v1791
      %v1793 = vpop.f32.mrb[0].mxu0
      %v1794 = vpop.f32.mrb[0].mxu0
      %v1795 = vadd.f32 0.0, %v1794
      %v1796 = vpop.f32.mrb[0].mxu0
      %1797 = vmatprep.mubr.bf16.mxu0 0
      %1798 = vmatmul.mubr.bf16.gmra.mrb[0].mxu0 %v1645
      %v1799 = vpop.f32.mrb[0].mxu0
      %v1800 = vadd.f32 0.0, %v1799
      %v1801 = vpop.f32.mrb[0].mxu0
      %v1802 = vpop.f32.mrb[0].mxu0
      %v1803 = vadd.f32 0.0, %v1802
      %v1804 = vpop.f32.mrb[0].mxu0
      %1805 = vmatprep.mubr.bf16.mxu0 0
      %1806 = vmatmul.mubr.bf16.gmra.mrb[0].mxu0 %v1648
      %v1807 = vpop.f32.mrb[0].mxu0
      %v1808 = vadd.f32 0.0, %v1807
      %v1809 = vpop.f32.mrb[0].mxu0
      %v1810 = vpop.f32.mrb[0].mxu0
      %v1811 = vadd.f32 0.0, %v1810
      %v1812 = vpop.f32.mrb[0].mxu0
      %1813 = vmatprep.mubr.bf16.mxu0 0
      %1814 = vmatmul.mubr.bf16.gmra.mrb[0].mxu0 %v1651
      %v1815 = vpop.f32.mrb[0].mxu0
      %v1816 = vadd.f32 0.0, %v1815
      %v1817 = vpop.f32.mrb[0].mxu0
      %v1818 = vpop.f32.mrb[0].mxu0
      %v1819 = vadd.f32 0.0, %v1818
      %v1820 = vpop.f32.mrb[0].mxu0
      %1821 = vmatprep.mubr.bf16.mxu0 0
      %1822 = vmatmul.mubr.bf16.gmra.mrb[0].mxu0 %v1654
      %v1823 = vpop.f32.mrb[0].mxu0
      %v1824 = vadd.f32 0.0, %v1823
      %v1825 = vpop.f32.mrb[0].mxu0
      %v1826 = vpop.f32.mrb[0].mxu0
      %v1827 = vadd.f32 0.0, %v1826
      %v1828 = vpop.f32.mrb[0].mxu0
      %1829 = vmatprep.mubr.bf16.mxu0 0
      %1830 = vmatmul.mubr.bf16.gmra.mrb[0].mxu0 %v1657
      %v1831 = vpop.f32.mrb[0].mxu0
      %v1832 = vadd.f32 0.0, %v1831
      %v1833 = vpop.f32.mrb[0].mxu0
      %v1834 = vpop.f32.mrb[0].mxu0
      %v1835 = vadd.f32 0.0, %v1834
      %v1836 = vpop.f32.mrb[0].mxu0
      %1837 = vmatprep.mubr.bf16.mxu0 0
      %1838 = vmatmul.mubr.bf16.gmra.mrb[0].mxu0 %v1660
      %v1839 = vpop.f32.mrb[0].mxu0
      %v1840 = vadd.f32 0.0, %v1839
      %v1841 = vpop.f32.mrb[0].mxu0
      %v1842 = vpop.f32.mrb[0].mxu0
      %v1843 = vadd.f32 0.0, %v1842
      %v1844 = vpop.f32.mrb[0].mxu0
      %1845 = vmatprep.mubr.bf16.mxu0 0
      %1846 = vmatmul.mubr.bf16.gmra.mrb[0].mxu0 %v1663
      %v1847 = vpop.f32.mrb[0].mxu0
      %v1848 = vadd.f32 0.0, %v1847
      %v1849 = vpop.f32.mrb[0].mxu0
      %v1850 = vpop.f32.mrb[0].mxu0
      %v1851 = vadd.f32 0.0, %v1850
      %v1852 = vpop.f32.mrb[0].mxu0
      %1853 = vmatprep.mubr.bf16.mxu0 0
      %1854 = vmatmul.mubr.bf16.gmra.mrb[0].mxu0 %v1666
      %v1855 = vpop.f32.mrb[0].mxu0
      %v1856 = vadd.f32 0.0, %v1855
      %v1857 = vpop.f32.mrb[0].mxu0
      %v1858 = vpop.f32.mrb[0].mxu0
      %v1859 = vadd.f32 0.0, %v1858
      %v1860 = vpop.f32.mrb[0].mxu0
      %1861 = vmatprep.mubr.bf16.mxu0 0
      %1862 = vmatmul.mubr.bf16.gmra.mrb[0].mxu0 %v1669
      %v1863 = vpop.f32.mrb[0].mxu0
      %v1864 = vadd.f32 0.0, %v1863
      %v1865 = vpop.f32.mrb[0].mxu0
      %v1866 = vpop.f32.mrb[0].mxu0
      %v1867 = vadd.f32 0.0, %v1866
      %v1868 = vpop.f32.mrb[0].mxu0
      %1869 = vmatprep.mubr.bf16.mxu0 0
      %1870 = vmatmul.mubr.bf16.gmra.mrb[0].mxu0 %v1672
      %v1871 = vpop.f32.mrb[0].mxu0
      %v1872 = vadd.f32 0.0, %v1871
      %v1873 = vpop.f32.mrb[0].mxu0
      %v1874 = vpop.f32.mrb[0].mxu0
      %v1875 = vadd.f32 0.0, %v1874
      %v1876 = vpop.f32.mrb[0].mxu0
      %1877 = vmatprep.mubr.bf16.mxu0 0
      %1878 = vmatmul.mubr.bf16.gmra.mrb[0].mxu0 %v1675
      %v1879 = vpop.f32.mrb[0].mxu0
      %v1880 = vadd.f32 0.0, %v1879
      %v1881 = vpop.f32.mrb[0].mxu0
      %v1882 = vpop.f32.mrb[0].mxu0
      %v1883 = vadd.f32 0.0, %v1882
      %v1884 = vpop.f32.mrb[0].mxu0
      %1885 = vmatprep.mubr.bf16.mxu0 0
      %1886 = vmatmul.mubr.bf16.gmra.mrb[0].mxu0 %v1678
      %v1887 = vpop.f32.mrb[0].mxu0
      %v1888 = vadd.f32 0.0, %v1887
      %v1889 = vpop.f32.mrb[0].mxu0
      %v1890 = vpop.f32.mrb[0].mxu0
      %v1891 = vadd.f32 0.0, %v1890
      %v1892 = vpop.f32.mrb[0].mxu0
      %1893 = vmatprep.mubr.bf16.mxu0 0
      %1894 = vmatmul.mubr.bf16.gmra.mrb[0].mxu0 %v1681
      %v1895 = vpop.f32.mrb[0].mxu0
      %v1896 = vadd.f32 0.0, %v1895
      %v1897 = vpop.f32.mrb[0].mxu0
      %v1898 = vpop.f32.mrb[0].mxu0
      %v1899 = vadd.f32 0.0, %v1898
      %v1900 = vpop.f32.mrb[0].mxu0
      %1901 = vmatprep.mubr.bf16.mxu0 0
      %1902 = vmatmul.mubr.bf16.gmra.mrb[0].mxu0 %v1684
      %v1903 = vpop.f32.mrb[0].mxu0
      %v1904 = vadd.f32 0.0, %v1903
      %v1905 = vpop.f32.mrb[0].mxu0
      %v1906 = vpop.f32.mrb[0].mxu0
      %v1907 = vadd.f32 0.0, %v1906
      %v1908 = vpop.f32.mrb[0].mxu0
      %1909 = vmatprep.mubr.bf16.mxu0 0
      %1910 = vmatmul.mubr.bf16.gmra.mrb[0].mxu0 %v1687
      %v1911 = vpop.f32.mrb[0].mxu0
      %v1912 = vadd.f32 0.0, %v1911
      %v1913 = vpop.f32.mrb[0].mxu0
      %v1914 = vpop.f32.mrb[0].mxu0
      %v1915 = vadd.f32 0.0, %v1914
      %v1916 = vpop.f32.mrb[0].mxu0
      %1917 = vmatprep.mubr.bf16.mxu0 0
      %1918 = vmatmul.mubr.bf16.gmra.mrb[0].mxu0 %v1690
      %v1919 = vpop.f32.mrb[0].mxu0
      %v1920 = vadd.f32 0.0, %v1919
      %v1921 = vpop.f32.mrb[0].mxu0
      %v1922 = vpop.f32.mrb[0].mxu0
      %v1923 = vadd.f32 0.0, %v1922
      %v1924 = vpop.f32.mrb[0].mxu0
      %1925 = vmatprep.mubr.bf16.mxu0 0
      %1926 = vmatmul.mubr.bf16.gmra.mrb[0].mxu0 %v1693
      %v1927 = vpop.f32.mrb[0].mxu0
      %v1928 = vadd.f32 0.0, %v1927
      %v1929 = vpop.f32.mrb[0].mxu0
      %v1930 = vpop.f32.mrb[0].mxu0
      %v1931 = vadd.f32 0.0, %v1930
      %v1932 = vpop.f32.mrb[0].mxu0
      %1933 = vmatprep.mubr.bf16.mxu0 0
      %1934 = vmatmul.mubr.bf16.gmra.mrb[0].mxu0 %v1696
      %v1935 = vpop.f32.mrb[0].mxu0
      %v1936 = vadd.f32 0.0, %v1935
      %v1937 = vpop.f32.mrb[0].mxu0
      %v1938 = vpop.f32.mrb[0].mxu0
      %v1939 = vadd.f32 0.0, %v1938
      %v1940 = vpop.f32.mrb[0].mxu0
      %1941 = vmatprep.mubr.bf16.mxu0 0
      %1942 = vmatmul.mubr.bf16.gmra.mrb[0].mxu0 %v1699
      %v1943 = vpop.f32.mrb[0].mxu0
      %v1944 = vadd.f32 0.0, %v1943
      %v1945 = vpop.f32.mrb[0].mxu0
      %v1946 = vpop.f32.mrb[0].mxu0
      %v1947 = vadd.f32 0.0, %v1946
      %v1948 = vpop.f32.mrb[0].mxu0
      %1949 = vmatprep.mubr.bf16.mxu0 0
      %1950 = vmatmul.mubr.bf16.gmra.mrb[0].mxu0 %v1702
      %v1951 = vpop.f32.mrb[0].mxu0
      %v1952 = vadd.f32 0.0, %v1951
      %v1953 = vpop.f32.mrb[0].mxu0
      %v1954 = vpop.f32.mrb[0].mxu0
      %v1955 = vadd.f32 0.0, %v1954
      %v1956 = vpop.f32.mrb[0].mxu0
      %1957 = vmatprep.mubr.bf16.mxu0 0
      %1958 = vmatmul.mubr.bf16.gmra.mrb[0].mxu0 %v1705
      %v1959 = vpop.f32.mrb[0].mxu0
      %v1960 = vadd.f32 0.0, %v1959
      %v1961 = vpop.f32.mrb[0].mxu0
      %v1962 = vpop.f32.mrb[0].mxu0
      %v1963 = vadd.f32 0.0, %v1962
      %v1964 = vpop.f32.mrb[0].mxu0
      %1965 = vmatprep.mubr.bf16.mxu0 0
      %1966 = vmatmul.mubr.bf16.gmra.mrb[0].mxu0 %v1708
      %v1967 = vpop.f32.mrb[0].mxu0
      %v1968 = vadd.f32 0.0, %v1967
      %v1969 = vpop.f32.mrb[0].mxu0
      %v1970 = vpop.f32.mrb[0].mxu0
      %v1971 = vadd.f32 0.0, %v1970
      %v1972 = vpop.f32.mrb[0].mxu0
      %1973 = vmatprep.mubr.bf16.mxu0 0
      %1974 = vmatmul.mubr.bf16.gmra.mrb[0].mxu0 %v1711
      %v1975 = vpop.f32.mrb[0].mxu0
      %v1976 = vadd.f32 0.0, %v1975
      %v1977 = vpop.f32.mrb[0].mxu0
      %v1978 = vpop.f32.mrb[0].mxu0
      %v1979 = vadd.f32 0.0, %v1978
      %v1980 = vpop.f32.mrb[0].mxu0
      %1981 = vmatprep.mubr.bf16.mxu0 0
      %1982 = vmatmul.mubr.bf16.gmra.mrb[0].mxu0 %v1714
      %v1983 = vpop.f32.mrb[0].mxu0
      %v1984 = vadd.f32 0.0, %v1983
      %v1985 = vpop.f32.mrb[0].mxu0
      %v1986 = vpop.f32.mrb[0].mxu0
      %v1987 = vadd.f32 0.0, %v1986
      %v1988 = vpop.f32.mrb[0].mxu0
      %1989 = vmatprep.mubr.bf16.mxu0 0
      %1990 = vmatmul.mubr.bf16.gmra.mrb[0].mxu0 %v1717
      %v1991 = vpop.f32.mrb[0].mxu0
      %v1992 = vadd.f32 0.0, %v1991
      %v1993 = vpop.f32.mrb[0].mxu0
      %v1994 = vpop.f32.mrb[0].mxu0
      %v1995 = vadd.f32 0.0, %v1994
      %v1996 = vpop.f32.mrb[0].mxu0
      %1997 = vmatprep.mubr.bf16.mxu0 0
      %1998 = vmatmul.mubr.bf16.gmra.mrb[0].mxu0 %v1720
      %v1999 = vpop.f32.mrb[0].mxu0
      %v2000 = vadd.f32 0.0, %v1999
      %v2001 = vpop.f32.mrb[0].mxu0
      %v2002 = vpop.f32.mrb[0].mxu0
      %v2003 = vadd.f32 0.0, %v2002
      %v2004 = vpop.f32.mrb[0].mxu0
      %2005 = vmatprep.mubr.bf16.mxu0 0
      %2006 = vmatmul.mubr.bf16.gmra.mrb[0].mxu0 %v1723
      %v2007 = vpop.f32.mrb[0].mxu0
      %v2008 = vadd.f32 0.0, %v2007
      %v2009 = vpop.f32.mrb[0].mxu0
      %v2010 = vpop.f32.mrb[0].mxu0
      %v2011 = vadd.f32 0.0, %v2010
      %v2012 = vpop.f32.mrb[0].mxu0
      %2013 = vdwg.mxu0
      %v2014 = vadd.f32 %v1247, %v1760
      %v2015 = vadd.f32 %v1250, %v1763
      %v2016 = vadd.f32 %v1255, %v1768
      %v2017 = vadd.f32 %v1258, %v1771
      %v2018 = vadd.f32 %v1263, %v1776
      %v2019 = vadd.f32 %v1266, %v1779
      %v2020 = vadd.f32 %v1271, %v1784
      %v2021 = vadd.f32 %v1274, %v1787
      %v2022 = vadd.f32 %v1279, %v1792
      %v2023 = vadd.f32 %v1282, %v1795
      %v2024 = vadd.f32 %v1287, %v1800
      %v2025 = vadd.f32 %v1290, %v1803
      %v2026 = vadd.f32 %v1295, %v1808
      %v2027 = vadd.f32 %v1298, %v1811
      %v2028 = vadd.f32 %v1303, %v1816
      %v2029 = vadd.f32 %v1306, %v1819
      %v2030 = vadd.f32 %v1311, %v1824
      %v2031 = vadd.f32 %v1314, %v1827
      %v2032 = vadd.f32 %v1319, %v1832
      %v2033 = vadd.f32 %v1322, %v1835
      %v2034 = vadd.f32 %v1327, %v1840
      %v2035 = vadd.f32 %v1330, %v1843
      %v2036 = vadd.f32 %v1335, %v1848
      %v2037 = vadd.f32 %v1338, %v1851
      %v2038 = vadd.f32 %v1343, %v1856
      %v2039 = vadd.f32 %v1346, %v1859
      %v2040 = vadd.f32 %v1351, %v1864
      %v2041 = vadd.f32 %v1354, %v1867
      %v2042 = vadd.f32 %v1359, %v1872
      %v2043 = vadd.f32 %v1362, %v1875
      %v2044 = vadd.f32 %v1367, %v1880
      %v2045 = vadd.f32 %v1370, %v1883
      %v2046 = vadd.f32 %v1375, %v1888
      %v2047 = vadd.f32 %v1378, %v1891
      %v2048 = vadd.f32 %v1383, %v1896
      %v2049 = vadd.f32 %v1386, %v1899
      %v2050 = vadd.f32 %v1391, %v1904
      %v2051 = vadd.f32 %v1394, %v1907
      %v2052 = vadd.f32 %v1399, %v1912
      %v2053 = vadd.f32 %v1402, %v1915
      %v2054 = vadd.f32 %v1407, %v1920
      %v2055 = vadd.f32 %v1410, %v1923
      %v2056 = vadd.f32 %v1415, %v1928
      %v2057 = vadd.f32 %v1418, %v1931
      %v2058 = vadd.f32 %v1423, %v1936
      %v2059 = vadd.f32 %v1426, %v1939
      %v2060 = vadd.f32 %v1431, %v1944
      %v2061 = vadd.f32 %v1434, %v1947
      %v2062 = vadd.f32 %v1439, %v1952
      %v2063 = vadd.f32 %v1442, %v1955
      %v2064 = vadd.f32 %v1447, %v1960
      %v2065 = vadd.f32 %v1450, %v1963
      %v2066 = vadd.f32 %v1455, %v1968
      %v2067 = vadd.f32 %v1458, %v1971
      %v2068 = vadd.f32 %v1463, %v1976
      %v2069 = vadd.f32 %v1466, %v1979
      %v2070 = vadd.f32 %v1471, %v1984
      %v2071 = vadd.f32 %v1474, %v1987
      %v2072 = vadd.f32 %v1479, %v1992
      %v2073 = vadd.f32 %v1482, %v1995
      %v2074 = vadd.f32 %v1487, %v2000
      %v2075 = vadd.f32 %v1490, %v2003
      %v2076 = vadd.f32 %v1495, %v2008
      %v2077 = vadd.f32 %v1498, %v2011
      %v2078 = vld [vmem:[#allocation2 + $0x12] sm:$0xff]
      %v2079 = vld [vmem:[#allocation2 + $0x1a] sm:$0xff]
      %v2080 = vld [vmem:[#allocation2 + $0x22] sm:$0xff]
      %v2081 = vld [vmem:[#allocation2 + $0x2a] sm:$0xff]
      %v2082 = vld [vmem:[#allocation2 + $0x32] sm:$0xff]
      %v2083 = vld [vmem:[#allocation2 + $0x3a] sm:$0xff]
      %v2084 = vld [vmem:[#allocation2 + $0x42] sm:$0xff]
      %v2085 = vld [vmem:[#allocation2 + $0x4a] sm:$0xff]
      %v2086 = vld [vmem:[#allocation2 + $0x52] sm:$0xff]
      %v2087 = vld [vmem:[#allocation2 + $0x5a] sm:$0xff]
      %v2088 = vld [vmem:[#allocation2 + $0x62] sm:$0xff]
      %v2089 = vld [vmem:[#allocation2 + $0x6a] sm:$0xff]
      %v2090 = vld [vmem:[#allocation2 + $0x72] sm:$0xff]
      %v2091 = vld [vmem:[#allocation2 + $0x7a] sm:$0xff]
      %v2092 = vld [vmem:[#allocation2 + $0x82] sm:$0xff]
      %v2093 = vld [vmem:[#allocation2 + $0x8a] sm:$0xff]
      %v2094 = vld [vmem:[#allocation2 + $0x92] sm:$0xff]
      %v2095 = vld [vmem:[#allocation2 + $0x9a] sm:$0xff]
      %v2096 = vld [vmem:[#allocation2 + $0xa2] sm:$0xff]
      %v2097 = vld [vmem:[#allocation2 + $0xaa] sm:$0xff]
      %v2098 = vld [vmem:[#allocation2 + $0xb2] sm:$0xff]
      %v2099 = vld [vmem:[#allocation2 + $0xba] sm:$0xff]
      %v2100 = vld [vmem:[#allocation2 + $0xc2] sm:$0xff]
      %v2101 = vld [vmem:[#allocation2 + $0xca] sm:$0xff]
      %v2102 = vld [vmem:[#allocation2 + $0xd2] sm:$0xff]
      %v2103 = vld [vmem:[#allocation2 + $0xda] sm:$0xff]
      %v2104 = vld [vmem:[#allocation2 + $0xe2] sm:$0xff]
      %v2105 = vld [vmem:[#allocation2 + $0xea] sm:$0xff]
      %v2106 = vld [vmem:[#allocation2 + $0xf2] sm:$0xff]
      %v2107 = vld [vmem:[#allocation2 + $0xfa] sm:$0xff]
      %v2108 = vld [vmem:[#allocation2 + $0x102] sm:$0xff]
      %v2109 = vld [vmem:[#allocation2 + $0x10a] sm:$0xff]
      %v2110 = vld [vmem:[#allocation2 + $0x112] sm:$0xff]
      %v2111 = vld [vmem:[#allocation2 + $0x11a] sm:$0xff]
      %v2112 = vld [vmem:[#allocation2 + $0x122] sm:$0xff]
      %v2113 = vld [vmem:[#allocation2 + $0x12a] sm:$0xff]
      %v2114 = vld [vmem:[#allocation2 + $0x132] sm:$0xff]
      %v2115 = vld [vmem:[#allocation2 + $0x13a] sm:$0xff]
      %v2116 = vld [vmem:[#allocation2 + $0x142] sm:$0xff]
      %v2117 = vld [vmem:[#allocation2 + $0x14a] sm:$0xff]
      %v2118 = vld [vmem:[#allocation2 + $0x152] sm:$0xff]
      %v2119 = vld [vmem:[#allocation2 + $0x15a] sm:$0xff]
      %v2120 = vld [vmem:[#allocation2 + $0x162] sm:$0xff]
      %v2121 = vld [vmem:[#allocation2 + $0x16a] sm:$0xff]
      %v2122 = vld [vmem:[#allocation2 + $0x172] sm:$0xff]
      %v2123 = vld [vmem:[#allocation2 + $0x17a] sm:$0xff]
      %v2124 = vld [vmem:[#allocation2 + $0x182] sm:$0xff]
      %v2125 = vld [vmem:[#allocation2 + $0x18a] sm:$0xff]
      %v2126 = vld [vmem:[#allocation2 + $0x192] sm:$0xff]
      %v2127 = vld [vmem:[#allocation2 + $0x19a] sm:$0xff]
      %v2128 = vld [vmem:[#allocation2 + $0x1a2] sm:$0xff]
      %v2129 = vld [vmem:[#allocation2 + $0x1aa] sm:$0xff]
      %v2130 = vld [vmem:[#allocation2 + $0x1b2] sm:$0xff]
      %v2131 = vld [vmem:[#allocation2 + $0x1ba] sm:$0xff]
      %v2132 = vld [vmem:[#allocation2 + $0x1c2] sm:$0xff]
      %v2133 = vld [vmem:[#allocation2 + $0x1ca] sm:$0xff]
      %v2134 = vld [vmem:[#allocation2 + $0x1d2] sm:$0xff]
      %v2135 = vld [vmem:[#allocation2 + $0x1da] sm:$0xff]
      %v2136 = vld [vmem:[#allocation2 + $0x1e2] sm:$0xff]
      %v2137 = vld [vmem:[#allocation2 + $0x1ea] sm:$0xff]
      %v2138 = vld [vmem:[#allocation2 + $0x1f2] sm:$0xff]
      %v2139 = vld [vmem:[#allocation2 + $0x1fa] sm:$0xff]
      %v2140 = vld [vmem:[#allocation2 + $0x202] sm:$0xff]
      %v2141 = vld [vmem:[#allocation2 + $0x20a] sm:$0xff]
      %v2142 = vpack.c.bf16 %v2079, %v2078
      %v2143 = vpack.c.bf16 %v2081, %v2080
      %v2144 = vpack.c.bf16 %v2083, %v2082
      %v2145 = vpack.c.bf16 %v2085, %v2084
      %v2146 = vpack.c.bf16 %v2087, %v2086
      %v2147 = vpack.c.bf16 %v2089, %v2088
      %v2148 = vpack.c.bf16 %v2091, %v2090
      %v2149 = vpack.c.bf16 %v2093, %v2092
      %v2150 = vpack.c.bf16 %v2095, %v2094
      %v2151 = vpack.c.bf16 %v2097, %v2096
      %v2152 = vpack.c.bf16 %v2099, %v2098
      %v2153 = vpack.c.bf16 %v2101, %v2100
      %v2154 = vpack.c.bf16 %v2103, %v2102
      %v2155 = vpack.c.bf16 %v2105, %v2104
      %v2156 = vpack.c.bf16 %v2107, %v2106
      %v2157 = vpack.c.bf16 %v2109, %v2108
      %v2158 = vpack.c.bf16 %v2111, %v2110
      %v2159 = vpack.c.bf16 %v2113, %v2112
      %v2160 = vpack.c.bf16 %v2115, %v2114
      %v2161 = vpack.c.bf16 %v2117, %v2116
      %v2162 = vpack.c.bf16 %v2119, %v2118
      %v2163 = vpack.c.bf16 %v2121, %v2120
      %v2164 = vpack.c.bf16 %v2123, %v2122
      %v2165 = vpack.c.bf16 %v2125, %v2124
      %v2166 = vpack.c.bf16 %v2127, %v2126
      %v2167 = vpack.c.bf16 %v2129, %v2128
      %v2168 = vpack.c.bf16 %v2131, %v2130
      %v2169 = vpack.c.bf16 %v2133, %v2132
      %v2170 = vpack.c.bf16 %v2135, %v2134
      %v2171 = vpack.c.bf16 %v2137, %v2136
      %v2172 = vpack.c.bf16 %v2139, %v2138
      %v2173 = vpack.c.bf16 %v2141, %v2140
      %v2174 = vld [vmem:[%s2 + $0x60] sm:$0xf]
      %v2175 = vld [vmem:[%s2 + $0x64] sm:$0xf]
      %v2176 = vld [vmem:[%s2 + $0x68] sm:$0xf]
      %v2177 = vld [vmem:[%s2 + $0x6c] sm:$0xf]
      %v2178 = vld [vmem:[%s2 + $0x70] sm:$0xf]
      %v2179 = vld [vmem:[%s2 + $0x74] sm:$0xf]
      %v2180 = vld [vmem:[%s2 + $0x78] sm:$0xf]
      %v2181 = vld [vmem:[%s2 + $0x7c] sm:$0xf]
      %v2190 = vunpack.c.l.b16 %v2174
      %v2191 = vunpack.c.l.b16 %v2175
      %v2192 = vunpack.c.l.b16 %v2176
      %v2193 = vunpack.c.l.b16 %v2177
      %v2194 = vunpack.c.l.b16 %v2178
      %v2195 = vunpack.c.l.b16 %v2179
      %v2196 = vunpack.c.l.b16 %v2180
      %v2197 = vunpack.c.l.b16 %v2181
      %v2198 = vpack.c.b16 %v2191, %v2190
      %v2199 = vpack.c.b16 %v2193, %v2192
      %v2200 = vpack.c.b16 %v2195, %v2194
      %v2201 = vpack.c.b16 %v2197, %v2196
      %v2207 = vsel %vm386, %v2142, 0
      %v2210 = vsel %vm386, %v2143, 0
      %v2213 = vsel %vm386, %v2144, 0
      %v2216 = vsel %vm386, %v2145, 0
      %v2219 = vsel %vm386, %v2146, 0
      %v2222 = vsel %vm386, %v2147, 0
      %v2225 = vsel %vm386, %v2148, 0
      %v2228 = vsel %vm386, %v2149, 0
      %v2231 = vsel %vm386, %v2150, 0
      %v2234 = vsel %vm386, %v2151, 0
      %v2237 = vsel %vm386, %v2152, 0
      %v2240 = vsel %vm386, %v2153, 0
      %v2243 = vsel %vm386, %v2154, 0
      %v2246 = vsel %vm386, %v2155, 0
      %v2249 = vsel %vm386, %v2156, 0
      %v2252 = vsel %vm386, %v2157, 0
      %v2255 = vsel %vm386, %v2158, 0
      %v2258 = vsel %vm386, %v2159, 0
      %v2261 = vsel %vm386, %v2160, 0
      %v2264 = vsel %vm386, %v2161, 0
      %v2267 = vsel %vm386, %v2162, 0
      %v2270 = vsel %vm386, %v2163, 0
      %v2273 = vsel %vm386, %v2164, 0
      %v2276 = vsel %vm386, %v2165, 0
      %v2279 = vsel %vm386, %v2166, 0
      %v2282 = vsel %vm386, %v2167, 0
      %v2285 = vsel %vm386, %v2168, 0
      %v2288 = vsel %vm386, %v2169, 0
      %v2291 = vsel %vm386, %v2170, 0
      %v2294 = vsel %vm386, %v2171, 0
      %v2297 = vsel %vm386, %v2172, 0
      %v2300 = vsel %vm386, %v2173, 0
      %2302 = vmatprep.subr.bf16.mxu0 0
      %2303 = vmatpush1.bf16.msra.mxu0 %v2198
      %2304 = vmatprep.subr.bf16.mxu0 0
      %2305 = vmatpush1.bf16.msra.mxu0 %v2199
      %2306 = vmatprep.subr.bf16.mxu0 0
      %2307 = vmatpush1.bf16.msra.mxu0 %v2200
      %2308 = vmatprep.subr.bf16.mxu0 0
      %2309 = vmatpush1.bf16.msra.mxu0 %v2201
      %2310 = vmatprep.subr.bf16.mxu0 0
      %2311 = vmatpush1.bf16.msra.mxu0 0
      %2312 = vmatprep.subr.bf16.mxu0 0
      %2313 = vmatpush1.bf16.msra.mxu0 0
      %2314 = vmatprep.subr.bf16.mxu0 0
      %2315 = vmatpush1.bf16.msra.mxu0 0
      %2316 = vmatprep.subr.bf16.mxu0 0
      %2317 = vmatpush1.bf16.msra.mxu0 0
      %2318 = vmatprep.subr.bf16.mxu0 0
      %2319 = vmatpush1.bf16.msra.mxu0 0
      %2320 = vmatprep.subr.bf16.mxu0 0
      %2321 = vmatpush1.bf16.msra.mxu0 0
      %2322 = vmatprep.subr.bf16.mxu0 0
      %2323 = vmatpush1.bf16.msra.mxu0 0
      %2324 = vmatprep.subr.bf16.mxu0 0
      %2325 = vmatpush1.bf16.msra.mxu0 0
      %2326 = vmatprep.subr.bf16.mxu0 0
      %2327 = vmatpush1.bf16.msra.mxu0 0
      %2328 = vmatprep.subr.bf16.mxu0 0
      %2329 = vmatpush1.bf16.msra.mxu0 0
      %2330 = vmatprep.subr.bf16.mxu0 0
      %2331 = vmatpush1.bf16.msra.mxu0 0
      %2332 = vmatprep.subr.bf16.mxu0 0
      %2333 = vmatpush1.bf16.msra.mxu0 0
      %2334 = vmatprep.mubr.bf16.mxu0 0
      %2335 = vmatmul.mubr.bf16.gmra.mrb[0].mxu0 %v2207
      %v2336 = vpop.f32.mrb[0].mxu0
      %v2337 = vadd.f32 0.0, %v2336
      %v2338 = vpop.f32.mrb[0].mxu0
      %v2339 = vpop.f32.mrb[0].mxu0
      %v2340 = vadd.f32 0.0, %v2339
      %v2341 = vpop.f32.mrb[0].mxu0
      %2342 = vmatprep.mubr.bf16.mxu0 0
      %2343 = vmatmul.mubr.bf16.gmra.mrb[0].mxu0 %v2210
      %v2344 = vpop.f32.mrb[0].mxu0
      %v2345 = vadd.f32 0.0, %v2344
      %v2346 = vpop.f32.mrb[0].mxu0
      %v2347 = vpop.f32.mrb[0].mxu0
      %v2348 = vadd.f32 0.0, %v2347
      %v2349 = vpop.f32.mrb[0].mxu0
      %2350 = vmatprep.mubr.bf16.mxu0 0
      %2351 = vmatmul.mubr.bf16.gmra.mrb[0].mxu0 %v2213
      %v2352 = vpop.f32.mrb[0].mxu0
      %v2353 = vadd.f32 0.0, %v2352
      %v2354 = vpop.f32.mrb[0].mxu0
      %v2355 = vpop.f32.mrb[0].mxu0
      %v2356 = vadd.f32 0.0, %v2355
      %v2357 = vpop.f32.mrb[0].mxu0
      %2358 = vmatprep.mubr.bf16.mxu0 0
      %2359 = vmatmul.mubr.bf16.gmra.mrb[0].mxu0 %v2216
      %v2360 = vpop.f32.mrb[0].mxu0
      %v2361 = vadd.f32 0.0, %v2360
      %v2362 = vpop.f32.mrb[0].mxu0
      %v2363 = vpop.f32.mrb[0].mxu0
      %v2364 = vadd.f32 0.0, %v2363
      %v2365 = vpop.f32.mrb[0].mxu0
      %2366 = vmatprep.mubr.bf16.mxu0 0
      %2367 = vmatmul.mubr.bf16.gmra.mrb[0].mxu0 %v2219
      %v2368 = vpop.f32.mrb[0].mxu0
      %v2369 = vadd.f32 0.0, %v2368
      %v2370 = vpop.f32.mrb[0].mxu0
      %v2371 = vpop.f32.mrb[0].mxu0
      %v2372 = vadd.f32 0.0, %v2371
      %v2373 = vpop.f32.mrb[0].mxu0
      %2374 = vmatprep.mubr.bf16.mxu0 0
      %2375 = vmatmul.mubr.bf16.gmra.mrb[0].mxu0 %v2222
      %v2376 = vpop.f32.mrb[0].mxu0
      %v2377 = vadd.f32 0.0, %v2376
      %v2378 = vpop.f32.mrb[0].mxu0
      %v2379 = vpop.f32.mrb[0].mxu0
      %v2380 = vadd.f32 0.0, %v2379
      %v2381 = vpop.f32.mrb[0].mxu0
      %2382 = vmatprep.mubr.bf16.mxu0 0
      %2383 = vmatmul.mubr.bf16.gmra.mrb[0].mxu0 %v2225
      %v2384 = vpop.f32.mrb[0].mxu0
      %v2385 = vadd.f32 0.0, %v2384
      %v2386 = vpop.f32.mrb[0].mxu0
      %v2387 = vpop.f32.mrb[0].mxu0
      %v2388 = vadd.f32 0.0, %v2387
      %v2389 = vpop.f32.mrb[0].mxu0
      %2390 = vmatprep.mubr.bf16.mxu0 0
      %2391 = vmatmul.mubr.bf16.gmra.mrb[0].mxu0 %v2228
      %v2392 = vpop.f32.mrb[0].mxu0
      %v2393 = vadd.f32 0.0, %v2392
      %v2394 = vpop.f32.mrb[0].mxu0
      %v2395 = vpop.f32.mrb[0].mxu0
      %v2396 = vadd.f32 0.0, %v2395
      %v2397 = vpop.f32.mrb[0].mxu0
      %2398 = vmatprep.mubr.bf16.mxu0 0
      %2399 = vmatmul.mubr.bf16.gmra.mrb[0].mxu0 %v2231
      %v2400 = vpop.f32.mrb[0].mxu0
      %v2401 = vadd.f32 0.0, %v2400
      %v2402 = vpop.f32.mrb[0].mxu0
      %v2403 = vpop.f32.mrb[0].mxu0
      %v2404 = vadd.f32 0.0, %v2403
      %v2405 = vpop.f32.mrb[0].mxu0
      %2406 = vmatprep.mubr.bf16.mxu0 0
      %2407 = vmatmul.mubr.bf16.gmra.mrb[0].mxu0 %v2234
      %v2408 = vpop.f32.mrb[0].mxu0
      %v2409 = vadd.f32 0.0, %v2408
      %v2410 = vpop.f32.mrb[0].mxu0
      %v2411 = vpop.f32.mrb[0].mxu0
      %v2412 = vadd.f32 0.0, %v2411
      %v2413 = vpop.f32.mrb[0].mxu0
      %2414 = vmatprep.mubr.bf16.mxu0 0
      %2415 = vmatmul.mubr.bf16.gmra.mrb[0].mxu0 %v2237
      %v2416 = vpop.f32.mrb[0].mxu0
      %v2417 = vadd.f32 0.0, %v2416
      %v2418 = vpop.f32.mrb[0].mxu0
      %v2419 = vpop.f32.mrb[0].mxu0
      %v2420 = vadd.f32 0.0, %v2419
      %v2421 = vpop.f32.mrb[0].mxu0
      %2422 = vmatprep.mubr.bf16.mxu0 0
      %2423 = vmatmul.mubr.bf16.gmra.mrb[0].mxu0 %v2240
      %v2424 = vpop.f32.mrb[0].mxu0
      %v2425 = vadd.f32 0.0, %v2424
      %v2426 = vpop.f32.mrb[0].mxu0
      %v2427 = vpop.f32.mrb[0].mxu0
      %v2428 = vadd.f32 0.0, %v2427
      %v2429 = vpop.f32.mrb[0].mxu0
      %2430 = vmatprep.mubr.bf16.mxu0 0
      %2431 = vmatmul.mubr.bf16.gmra.mrb[0].mxu0 %v2243
      %v2432 = vpop.f32.mrb[0].mxu0
      %v2433 = vadd.f32 0.0, %v2432
      %v2434 = vpop.f32.mrb[0].mxu0
      %v2435 = vpop.f32.mrb[0].mxu0
      %v2436 = vadd.f32 0.0, %v2435
      %v2437 = vpop.f32.mrb[0].mxu0
      %2438 = vmatprep.mubr.bf16.mxu0 0
      %2439 = vmatmul.mubr.bf16.gmra.mrb[0].mxu0 %v2246
      %v2440 = vpop.f32.mrb[0].mxu0
      %v2441 = vadd.f32 0.0, %v2440
      %v2442 = vpop.f32.mrb[0].mxu0
      %v2443 = vpop.f32.mrb[0].mxu0
      %v2444 = vadd.f32 0.0, %v2443
      %v2445 = vpop.f32.mrb[0].mxu0
      %2446 = vmatprep.mubr.bf16.mxu0 0
      %2447 = vmatmul.mubr.bf16.gmra.mrb[0].mxu0 %v2249
      %v2448 = vpop.f32.mrb[0].mxu0
      %v2449 = vadd.f32 0.0, %v2448
      %v2450 = vpop.f32.mrb[0].mxu0
      %v2451 = vpop.f32.mrb[0].mxu0
      %v2452 = vadd.f32 0.0, %v2451
      %v2453 = vpop.f32.mrb[0].mxu0
      %2454 = vmatprep.mubr.bf16.mxu0 0
      %2455 = vmatmul.mubr.bf16.gmra.mrb[0].mxu0 %v2252
      %v2456 = vpop.f32.mrb[0].mxu0
      %v2457 = vadd.f32 0.0, %v2456
      %v2458 = vpop.f32.mrb[0].mxu0
      %v2459 = vpop.f32.mrb[0].mxu0
      %v2460 = vadd.f32 0.0, %v2459
      %v2461 = vpop.f32.mrb[0].mxu0
      %2462 = vmatprep.mubr.bf16.mxu0 0
      %2463 = vmatmul.mubr.bf16.gmra.mrb[0].mxu0 %v2255
      %v2464 = vpop.f32.mrb[0].mxu0
      %v2465 = vadd.f32 0.0, %v2464
      %v2466 = vpop.f32.mrb[0].mxu0
      %v2467 = vpop.f32.mrb[0].mxu0
      %v2468 = vadd.f32 0.0, %v2467
      %v2469 = vpop.f32.mrb[0].mxu0
      %2470 = vmatprep.mubr.bf16.mxu0 0
      %2471 = vmatmul.mubr.bf16.gmra.mrb[0].mxu0 %v2258
      %v2472 = vpop.f32.mrb[0].mxu0
      %v2473 = vadd.f32 0.0, %v2472
      %v2474 = vpop.f32.mrb[0].mxu0
      %v2475 = vpop.f32.mrb[0].mxu0
      %v2476 = vadd.f32 0.0, %v2475
      %v2477 = vpop.f32.mrb[0].mxu0
      %2478 = vmatprep.mubr.bf16.mxu0 0
      %2479 = vmatmul.mubr.bf16.gmra.mrb[0].mxu0 %v2261
      %v2480 = vpop.f32.mrb[0].mxu0
      %v2481 = vadd.f32 0.0, %v2480
      %v2482 = vpop.f32.mrb[0].mxu0
      %v2483 = vpop.f32.mrb[0].mxu0
      %v2484 = vadd.f32 0.0, %v2483
      %v2485 = vpop.f32.mrb[0].mxu0
      %2486 = vmatprep.mubr.bf16.mxu0 0
      %2487 = vmatmul.mubr.bf16.gmra.mrb[0].mxu0 %v2264
      %v2488 = vpop.f32.mrb[0].mxu0
      %v2489 = vadd.f32 0.0, %v2488
      %v2490 = vpop.f32.mrb[0].mxu0
      %v2491 = vpop.f32.mrb[0].mxu0
      %v2492 = vadd.f32 0.0, %v2491
      %v2493 = vpop.f32.mrb[0].mxu0
      %2494 = vmatprep.mubr.bf16.mxu0 0
      %2495 = vmatmul.mubr.bf16.gmra.mrb[0].mxu0 %v2267
      %v2496 = vpop.f32.mrb[0].mxu0
      %v2497 = vadd.f32 0.0, %v2496
      %v2498 = vpop.f32.mrb[0].mxu0
      %v2499 = vpop.f32.mrb[0].mxu0
      %v2500 = vadd.f32 0.0, %v2499
      %v2501 = vpop.f32.mrb[0].mxu0
      %2502 = vmatprep.mubr.bf16.mxu0 0
      %2503 = vmatmul.mubr.bf16.gmra.mrb[0].mxu0 %v2270
      %v2504 = vpop.f32.mrb[0].mxu0
      %v2505 = vadd.f32 0.0, %v2504
      %v2506 = vpop.f32.mrb[0].mxu0
      %v2507 = vpop.f32.mrb[0].mxu0
      %v2508 = vadd.f32 0.0, %v2507
      %v2509 = vpop.f32.mrb[0].mxu0
      %2510 = vmatprep.mubr.bf16.mxu0 0
      %2511 = vmatmul.mubr.bf16.gmra.mrb[0].mxu0 %v2273
      %v2512 = vpop.f32.mrb[0].mxu0
      %v2513 = vadd.f32 0.0, %v2512
      %v2514 = vpop.f32.mrb[0].mxu0
      %v2515 = vpop.f32.mrb[0].mxu0
      %v2516 = vadd.f32 0.0, %v2515
      %v2517 = vpop.f32.mrb[0].mxu0
      %2518 = vmatprep.mubr.bf16.mxu0 0
      %2519 = vmatmul.mubr.bf16.gmra.mrb[0].mxu0 %v2276
      %v2520 = vpop.f32.mrb[0].mxu0
      %v2521 = vadd.f32 0.0, %v2520
      %v2522 = vpop.f32.mrb[0].mxu0
      %v2523 = vpop.f32.mrb[0].mxu0
      %v2524 = vadd.f32 0.0, %v2523
      %v2525 = vpop.f32.mrb[0].mxu0
      %2526 = vmatprep.mubr.bf16.mxu0 0
      %2527 = vmatmul.mubr.bf16.gmra.mrb[0].mxu0 %v2279
      %v2528 = vpop.f32.mrb[0].mxu0
      %v2529 = vadd.f32 0.0, %v2528
      %v2530 = vpop.f32.mrb[0].mxu0
      %v2531 = vpop.f32.mrb[0].mxu0
      %v2532 = vadd.f32 0.0, %v2531
      %v2533 = vpop.f32.mrb[0].mxu0
      %2534 = vmatprep.mubr.bf16.mxu0 0
      %2535 = vmatmul.mubr.bf16.gmra.mrb[0].mxu0 %v2282
      %v2536 = vpop.f32.mrb[0].mxu0
      %v2537 = vadd.f32 0.0, %v2536
      %v2538 = vpop.f32.mrb[0].mxu0
      %v2539 = vpop.f32.mrb[0].mxu0
      %v2540 = vadd.f32 0.0, %v2539
      %v2541 = vpop.f32.mrb[0].mxu0
      %2542 = vmatprep.mubr.bf16.mxu0 0
      %2543 = vmatmul.mubr.bf16.gmra.mrb[0].mxu0 %v2285
      %v2544 = vpop.f32.mrb[0].mxu0
      %v2545 = vadd.f32 0.0, %v2544
      %v2546 = vpop.f32.mrb[0].mxu0
      %v2547 = vpop.f32.mrb[0].mxu0
      %v2548 = vadd.f32 0.0, %v2547
      %v2549 = vpop.f32.mrb[0].mxu0
      %2550 = vmatprep.mubr.bf16.mxu0 0
      %2551 = vmatmul.mubr.bf16.gmra.mrb[0].mxu0 %v2288
      %v2552 = vpop.f32.mrb[0].mxu0
      %v2553 = vadd.f32 0.0, %v2552
      %v2554 = vpop.f32.mrb[0].mxu0
      %v2555 = vpop.f32.mrb[0].mxu0
      %v2556 = vadd.f32 0.0, %v2555
      %v2557 = vpop.f32.mrb[0].mxu0
      %2558 = vmatprep.mubr.bf16.mxu0 0
      %2559 = vmatmul.mubr.bf16.gmra.mrb[0].mxu0 %v2291
      %v2560 = vpop.f32.mrb[0].mxu0
      %v2561 = vadd.f32 0.0, %v2560
      %v2562 = vpop.f32.mrb[0].mxu0
      %v2563 = vpop.f32.mrb[0].mxu0
      %v2564 = vadd.f32 0.0, %v2563
      %v2565 = vpop.f32.mrb[0].mxu0
      %2566 = vmatprep.mubr.bf16.mxu0 0
      %2567 = vmatmul.mubr.bf16.gmra.mrb[0].mxu0 %v2294
      %v2568 = vpop.f32.mrb[0].mxu0
      %v2569 = vadd.f32 0.0, %v2568
      %v2570 = vpop.f32.mrb[0].mxu0
      %v2571 = vpop.f32.mrb[0].mxu0
      %v2572 = vadd.f32 0.0, %v2571
      %v2573 = vpop.f32.mrb[0].mxu0
      %2574 = vmatprep.mubr.bf16.mxu0 0
      %2575 = vmatmul.mubr.bf16.gmra.mrb[0].mxu0 %v2297
      %v2576 = vpop.f32.mrb[0].mxu0
      %v2577 = vadd.f32 0.0, %v2576
      %v2578 = vpop.f32.mrb[0].mxu0
      %v2579 = vpop.f32.mrb[0].mxu0
      %v2580 = vadd.f32 0.0, %v2579
      %v2581 = vpop.f32.mrb[0].mxu0
      %2582 = vmatprep.mubr.bf16.mxu0 0
      %2583 = vmatmul.mubr.bf16.gmra.mrb[0].mxu0 %v2300
      %v2584 = vpop.f32.mrb[0].mxu0
      %v2585 = vadd.f32 0.0, %v2584
      %v2586 = vpop.f32.mrb[0].mxu0
      %v2587 = vpop.f32.mrb[0].mxu0
      %v2588 = vadd.f32 0.0, %v2587
      %v2589 = vpop.f32.mrb[0].mxu0
      %2590 = vdwg.mxu0
      %v2591 = vadd.f32 %v2014, %v2337
      %v2592 = vadd.f32 %v2015, %v2340
      %v2593 = vadd.f32 %v2016, %v2345
      %v2594 = vadd.f32 %v2017, %v2348
      %v2595 = vadd.f32 %v2018, %v2353
      %v2596 = vadd.f32 %v2019, %v2356
      %v2597 = vadd.f32 %v2020, %v2361
      %v2598 = vadd.f32 %v2021, %v2364
      %v2599 = vadd.f32 %v2022, %v2369
      %v2600 = vadd.f32 %v2023, %v2372
      %v2601 = vadd.f32 %v2024, %v2377
      %v2602 = vadd.f32 %v2025, %v2380
      %v2603 = vadd.f32 %v2026, %v2385
      %v2604 = vadd.f32 %v2027, %v2388
      %v2605 = vadd.f32 %v2028, %v2393
      %v2606 = vadd.f32 %v2029, %v2396
      %v2607 = vadd.f32 %v2030, %v2401
      %v2608 = vadd.f32 %v2031, %v2404
      %v2609 = vadd.f32 %v2032, %v2409
      %v2610 = vadd.f32 %v2033, %v2412
      %v2611 = vadd.f32 %v2034, %v2417
      %v2612 = vadd.f32 %v2035, %v2420
      %v2613 = vadd.f32 %v2036, %v2425
      %v2614 = vadd.f32 %v2037, %v2428
      %v2615 = vadd.f32 %v2038, %v2433
      %v2616 = vadd.f32 %v2039, %v2436
      %v2617 = vadd.f32 %v2040, %v2441
      %v2618 = vadd.f32 %v2041, %v2444
      %v2619 = vadd.f32 %v2042, %v2449
      %v2620 = vadd.f32 %v2043, %v2452
      %v2621 = vadd.f32 %v2044, %v2457
      %v2622 = vadd.f32 %v2045, %v2460
      %v2623 = vadd.f32 %v2046, %v2465
      %v2624 = vadd.f32 %v2047, %v2468
      %v2625 = vadd.f32 %v2048, %v2473
      %v2626 = vadd.f32 %v2049, %v2476
      %v2627 = vadd.f32 %v2050, %v2481
      %v2628 = vadd.f32 %v2051, %v2484
      %v2629 = vadd.f32 %v2052, %v2489
      %v2630 = vadd.f32 %v2053, %v2492
      %v2631 = vadd.f32 %v2054, %v2497
      %v2632 = vadd.f32 %v2055, %v2500
      %v2633 = vadd.f32 %v2056, %v2505
      %v2634 = vadd.f32 %v2057, %v2508
      %v2635 = vadd.f32 %v2058, %v2513
      %v2636 = vadd.f32 %v2059, %v2516
      %v2637 = vadd.f32 %v2060, %v2521
      %v2638 = vadd.f32 %v2061, %v2524
      %v2639 = vadd.f32 %v2062, %v2529
      %v2640 = vadd.f32 %v2063, %v2532
      %v2641 = vadd.f32 %v2064, %v2537
      %v2642 = vadd.f32 %v2065, %v2540
      %v2643 = vadd.f32 %v2066, %v2545
      %v2644 = vadd.f32 %v2067, %v2548
      %v2645 = vadd.f32 %v2068, %v2553
      %v2646 = vadd.f32 %v2069, %v2556
      %v2647 = vadd.f32 %v2070, %v2561
      %v2648 = vadd.f32 %v2071, %v2564
      %v2649 = vadd.f32 %v2072, %v2569
      %v2650 = vadd.f32 %v2073, %v2572
      %v2651 = vadd.f32 %v2074, %v2577
      %v2652 = vadd.f32 %v2075, %v2580
      %v2653 = vadd.f32 %v2076, %v2585
      %v2654 = vadd.f32 %v2077, %v2588
      %v2655 = vld [vmem:[#allocation2 + $0x13] sm:$0xff]
      %v2656 = vld [vmem:[#allocation2 + $0x1b] sm:$0xff]
      %v2657 = vld [vmem:[#allocation2 + $0x23] sm:$0xff]
      %v2658 = vld [vmem:[#allocation2 + $0x2b] sm:$0xff]
      %v2659 = vld [vmem:[#allocation2 + $0x33] sm:$0xff]
      %v2660 = vld [vmem:[#allocation2 + $0x3b] sm:$0xff]
      %v2661 = vld [vmem:[#allocation2 + $0x43] sm:$0xff]
      %v2662 = vld [vmem:[#allocation2 + $0x4b] sm:$0xff]
      %v2663 = vld [vmem:[#allocation2 + $0x53] sm:$0xff]
      %v2664 = vld [vmem:[#allocation2 + $0x5b] sm:$0xff]
      %v2665 = vld [vmem:[#allocation2 + $0x63] sm:$0xff]
      %v2666 = vld [vmem:[#allocation2 + $0x6b] sm:$0xff]
      %v2667 = vld [vmem:[#allocation2 + $0x73] sm:$0xff]
      %v2668 = vld [vmem:[#allocation2 + $0x7b] sm:$0xff]
      %v2669 = vld [vmem:[#allocation2 + $0x83] sm:$0xff]
      %v2670 = vld [vmem:[#allocation2 + $0x8b] sm:$0xff]
      %v2671 = vld [vmem:[#allocation2 + $0x93] sm:$0xff]
      %v2672 = vld [vmem:[#allocation2 + $0x9b] sm:$0xff]
      %v2673 = vld [vmem:[#allocation2 + $0xa3] sm:$0xff]
      %v2674 = vld [vmem:[#allocation2 + $0xab] sm:$0xff]
      %v2675 = vld [vmem:[#allocation2 + $0xb3] sm:$0xff]
      %v2676 = vld [vmem:[#allocation2 + $0xbb] sm:$0xff]
      %v2677 = vld [vmem:[#allocation2 + $0xc3] sm:$0xff]
      %v2678 = vld [vmem:[#allocation2 + $0xcb] sm:$0xff]
      %v2679 = vld [vmem:[#allocation2 + $0xd3] sm:$0xff]
      %v2680 = vld [vmem:[#allocation2 + $0xdb] sm:$0xff]
      %v2681 = vld [vmem:[#allocation2 + $0xe3] sm:$0xff]
      %v2682 = vld [vmem:[#allocation2 + $0xeb] sm:$0xff]
      %v2683 = vld [vmem:[#allocation2 + $0xf3] sm:$0xff]
      %v2684 = vld [vmem:[#allocation2 + $0xfb] sm:$0xff]
      %v2685 = vld [vmem:[#allocation2 + $0x103] sm:$0xff]
      %v2686 = vld [vmem:[#allocation2 + $0x10b] sm:$0xff]
      %v2687 = vld [vmem:[#allocation2 + $0x113] sm:$0xff]
      %v2688 = vld [vmem:[#allocation2 + $0x11b] sm:$0xff]
      %v2689 = vld [vmem:[#allocation2 + $0x123] sm:$0xff]
      %v2690 = vld [vmem:[#allocation2 + $0x12b] sm:$0xff]
      %v2691 = vld [vmem:[#allocation2 + $0x133] sm:$0xff]
      %v2692 = vld [vmem:[#allocation2 + $0x13b] sm:$0xff]
      %v2693 = vld [vmem:[#allocation2 + $0x143] sm:$0xff]
      %v2694 = vld [vmem:[#allocation2 + $0x14b] sm:$0xff]
      %v2695 = vld [vmem:[#allocation2 + $0x153] sm:$0xff]
      %v2696 = vld [vmem:[#allocation2 + $0x15b] sm:$0xff]
      %v2697 = vld [vmem:[#allocation2 + $0x163] sm:$0xff]
      %v2698 = vld [vmem:[#allocation2 + $0x16b] sm:$0xff]
      %v2699 = vld [vmem:[#allocation2 + $0x173] sm:$0xff]
      %v2700 = vld [vmem:[#allocation2 + $0x17b] sm:$0xff]
      %v2701 = vld [vmem:[#allocation2 + $0x183] sm:$0xff]
      %v2702 = vld [vmem:[#allocation2 + $0x18b] sm:$0xff]
      %v2703 = vld [vmem:[#allocation2 + $0x193] sm:$0xff]
      %v2704 = vld [vmem:[#allocation2 + $0x19b] sm:$0xff]
      %v2705 = vld [vmem:[#allocation2 + $0x1a3] sm:$0xff]
      %v2706 = vld [vmem:[#allocation2 + $0x1ab] sm:$0xff]
      %v2707 = vld [vmem:[#allocation2 + $0x1b3] sm:$0xff]
      %v2708 = vld [vmem:[#allocation2 + $0x1bb] sm:$0xff]
      %v2709 = vld [vmem:[#allocation2 + $0x1c3] sm:$0xff]
      %v2710 = vld [vmem:[#allocation2 + $0x1cb] sm:$0xff]
      %v2711 = vld [vmem:[#allocation2 + $0x1d3] sm:$0xff]
      %v2712 = vld [vmem:[#allocation2 + $0x1db] sm:$0xff]
      %v2713 = vld [vmem:[#allocation2 + $0x1e3] sm:$0xff]
      %v2714 = vld [vmem:[#allocation2 + $0x1eb] sm:$0xff]
      %v2715 = vld [vmem:[#allocation2 + $0x1f3] sm:$0xff]
      %v2716 = vld [vmem:[#allocation2 + $0x1fb] sm:$0xff]
      %v2717 = vld [vmem:[#allocation2 + $0x203] sm:$0xff]
      %v2718 = vld [vmem:[#allocation2 + $0x20b] sm:$0xff]
      %v2719 = vpack.c.bf16 %v2656, %v2655
      %v2720 = vpack.c.bf16 %v2658, %v2657
      %v2721 = vpack.c.bf16 %v2660, %v2659
      %v2722 = vpack.c.bf16 %v2662, %v2661
      %v2723 = vpack.c.bf16 %v2664, %v2663
      %v2724 = vpack.c.bf16 %v2666, %v2665
      %v2725 = vpack.c.bf16 %v2668, %v2667
      %v2726 = vpack.c.bf16 %v2670, %v2669
      %v2727 = vpack.c.bf16 %v2672, %v2671
      %v2728 = vpack.c.bf16 %v2674, %v2673
      %v2729 = vpack.c.bf16 %v2676, %v2675
      %v2730 = vpack.c.bf16 %v2678, %v2677
      %v2731 = vpack.c.bf16 %v2680, %v2679
      %v2732 = vpack.c.bf16 %v2682, %v2681
      %v2733 = vpack.c.bf16 %v2684, %v2683
      %v2734 = vpack.c.bf16 %v2686, %v2685
      %v2735 = vpack.c.bf16 %v2688, %v2687
      %v2736 = vpack.c.bf16 %v2690, %v2689
      %v2737 = vpack.c.bf16 %v2692, %v2691
      %v2738 = vpack.c.bf16 %v2694, %v2693
      %v2739 = vpack.c.bf16 %v2696, %v2695
      %v2740 = vpack.c.bf16 %v2698, %v2697
      %v2741 = vpack.c.bf16 %v2700, %v2699
      %v2742 = vpack.c.bf16 %v2702, %v2701
      %v2743 = vpack.c.bf16 %v2704, %v2703
      %v2744 = vpack.c.bf16 %v2706, %v2705
      %v2745 = vpack.c.bf16 %v2708, %v2707
      %v2746 = vpack.c.bf16 %v2710, %v2709
      %v2747 = vpack.c.bf16 %v2712, %v2711
      %v2748 = vpack.c.bf16 %v2714, %v2713
      %v2749 = vpack.c.bf16 %v2716, %v2715
      %v2750 = vpack.c.bf16 %v2718, %v2717
      %v2751 = vld [vmem:[%s2 + $0x80] sm:$0xf]
      %v2752 = vld [vmem:[%s2 + $0x84] sm:$0xf]
      %v2753 = vld [vmem:[%s2 + $0x88] sm:$0xf]
      %v2754 = vld [vmem:[%s2 + $0x8c] sm:$0xf]
      %v2755 = vld [vmem:[%s2 + $0x90] sm:$0xf]
      %v2756 = vld [vmem:[%s2 + $0x94] sm:$0xf]
      %v2757 = vld [vmem:[%s2 + $0x98] sm:$0xf]
      %v2758 = vld [vmem:[%s2 + $0x9c] sm:$0xf]
      %v2767 = vunpack.c.l.b16 %v2751
      %v2768 = vunpack.c.l.b16 %v2752
      %v2769 = vunpack.c.l.b16 %v2753
      %v2770 = vunpack.c.l.b16 %v2754
      %v2771 = vunpack.c.l.b16 %v2755
      %v2772 = vunpack.c.l.b16 %v2756
      %v2773 = vunpack.c.l.b16 %v2757
      %v2774 = vunpack.c.l.b16 %v2758
      %v2775 = vpack.c.b16 %v2768, %v2767
      %v2776 = vpack.c.b16 %v2770, %v2769
      %v2777 = vpack.c.b16 %v2772, %v2771
      %v2778 = vpack.c.b16 %v2774, %v2773
      %v2784 = vsel %vm386, %v2719, 0
      %v2787 = vsel %vm386, %v2720, 0
      %v2790 = vsel %vm386, %v2721, 0
      %v2793 = vsel %vm386, %v2722, 0
      %v2796 = vsel %vm386, %v2723, 0
      %v2799 = vsel %vm386, %v2724, 0
      %v2802 = vsel %vm386, %v2725, 0
      %v2805 = vsel %vm386, %v2726, 0
      %v2808 = vsel %vm386, %v2727, 0
      %v2811 = vsel %vm386, %v2728, 0
      %v2814 = vsel %vm386, %v2729, 0
      %v2817 = vsel %vm386, %v2730, 0
      %v2820 = vsel %vm386, %v2731, 0
      %v2823 = vsel %vm386, %v2732, 0
      %v2826 = vsel %vm386, %v2733, 0
      %v2829 = vsel %vm386, %v2734, 0
      %v2832 = vsel %vm386, %v2735, 0
      %v2835 = vsel %vm386, %v2736, 0
      %v2838 = vsel %vm386, %v2737, 0
      %v2841 = vsel %vm386, %v2738, 0
      %v2844 = vsel %vm386, %v2739, 0
      %v2847 = vsel %vm386, %v2740, 0
      %v2850 = vsel %vm386, %v2741, 0
      %v2853 = vsel %vm386, %v2742, 0
      %v2856 = vsel %vm386, %v2743, 0
      %v2859 = vsel %vm386, %v2744, 0
      %v2862 = vsel %vm386, %v2745, 0
      %v2865 = vsel %vm386, %v2746, 0
      %v2868 = vsel %vm386, %v2747, 0
      %v2871 = vsel %vm386, %v2748, 0
      %v2874 = vsel %vm386, %v2749, 0
      %v2877 = vsel %vm386, %v2750, 0
      %2879 = vmatprep.subr.bf16.mxu0 0
      %2880 = vmatpush1.bf16.msra.mxu0 %v2775
      %2881 = vmatprep.subr.bf16.mxu0 0
      %2882 = vmatpush1.bf16.msra.mxu0 %v2776
      %2883 = vmatprep.subr.bf16.mxu0 0
      %2884 = vmatpush1.bf16.msra.mxu0 %v2777
      %2885 = vmatprep.subr.bf16.mxu0 0
      %2886 = vmatpush1.bf16.msra.mxu0 %v2778
      %2887 = vmatprep.subr.bf16.mxu0 0
      %2888 = vmatpush1.bf16.msra.mxu0 0
      %2889 = vmatprep.subr.bf16.mxu0 0
      %2890 = vmatpush1.bf16.msra.mxu0 0
      %2891 = vmatprep.subr.bf16.mxu0 0
      %2892 = vmatpush1.bf16.msra.mxu0 0
      %2893 = vmatprep.subr.bf16.mxu0 0
      %2894 = vmatpush1.bf16.msra.mxu0 0
      %2895 = vmatprep.subr.bf16.mxu0 0
      %2896 = vmatpush1.bf16.msra.mxu0 0
      %2897 = vmatprep.subr.bf16.mxu0 0
      %2898 = vmatpush1.bf16.msra.mxu0 0
      %2899 = vmatprep.subr.bf16.mxu0 0
      %2900 = vmatpush1.bf16.msra.mxu0 0
      %2901 = vmatprep.subr.bf16.mxu0 0
      %2902 = vmatpush1.bf16.msra.mxu0 0
      %2903 = vmatprep.subr.bf16.mxu0 0
      %2904 = vmatpush1.bf16.msra.mxu0 0
      %2905 = vmatprep.subr.bf16.mxu0 0
      %2906 = vmatpush1.bf16.msra.mxu0 0
      %2907 = vmatprep.subr.bf16.mxu0 0
      %2908 = vmatpush1.bf16.msra.mxu0 0
      %2909 = vmatprep.subr.bf16.mxu0 0
      %2910 = vmatpush1.bf16.msra.mxu0 0
      %2911 = vmatprep.mubr.bf16.mxu0 0
      %2912 = vmatmul.mubr.bf16.gmra.mrb[0].mxu0 %v2784
      %v2913 = vpop.f32.mrb[0].mxu0
      %v2914 = vadd.f32 0.0, %v2913
      %v2915 = vpop.f32.mrb[0].mxu0
      %v2916 = vpop.f32.mrb[0].mxu0
      %v2917 = vadd.f32 0.0, %v2916
      %v2918 = vpop.f32.mrb[0].mxu0
      %2919 = vmatprep.mubr.bf16.mxu0 0
      %2920 = vmatmul.mubr.bf16.gmra.mrb[0].mxu0 %v2787
      %v2921 = vpop.f32.mrb[0].mxu0
      %v2922 = vadd.f32 0.0, %v2921
      %v2923 = vpop.f32.mrb[0].mxu0
      %v2924 = vpop.f32.mrb[0].mxu0
      %v2925 = vadd.f32 0.0, %v2924
      %v2926 = vpop.f32.mrb[0].mxu0
      %2927 = vmatprep.mubr.bf16.mxu0 0
      %2928 = vmatmul.mubr.bf16.gmra.mrb[0].mxu0 %v2790
      %v2929 = vpop.f32.mrb[0].mxu0
      %v2930 = vadd.f32 0.0, %v2929
      %v2931 = vpop.f32.mrb[0].mxu0
      %v2932 = vpop.f32.mrb[0].mxu0
      %v2933 = vadd.f32 0.0, %v2932
      %v2934 = vpop.f32.mrb[0].mxu0
      %2935 = vmatprep.mubr.bf16.mxu0 0
      %2936 = vmatmul.mubr.bf16.gmra.mrb[0].mxu0 %v2793
      %v2937 = vpop.f32.mrb[0].mxu0
      %v2938 = vadd.f32 0.0, %v2937
      %v2939 = vpop.f32.mrb[0].mxu0
      %v2940 = vpop.f32.mrb[0].mxu0
      %v2941 = vadd.f32 0.0, %v2940
      %v2942 = vpop.f32.mrb[0].mxu0
      %2943 = vmatprep.mubr.bf16.mxu0 0
      %2944 = vmatmul.mubr.bf16.gmra.mrb[0].mxu0 %v2796
      %v2945 = vpop.f32.mrb[0].mxu0
      %v2946 = vadd.f32 0.0, %v2945
      %v2947 = vpop.f32.mrb[0].mxu0
      %v2948 = vpop.f32.mrb[0].mxu0
      %v2949 = vadd.f32 0.0, %v2948
      %v2950 = vpop.f32.mrb[0].mxu0
      %2951 = vmatprep.mubr.bf16.mxu0 0
      %2952 = vmatmul.mubr.bf16.gmra.mrb[0].mxu0 %v2799
      %v2953 = vpop.f32.mrb[0].mxu0
      %v2954 = vadd.f32 0.0, %v2953
      %v2955 = vpop.f32.mrb[0].mxu0
      %v2956 = vpop.f32.mrb[0].mxu0
      %v2957 = vadd.f32 0.0, %v2956
      %v2958 = vpop.f32.mrb[0].mxu0
      %2959 = vmatprep.mubr.bf16.mxu0 0
      %2960 = vmatmul.mubr.bf16.gmra.mrb[0].mxu0 %v2802
      %v2961 = vpop.f32.mrb[0].mxu0
      %v2962 = vadd.f32 0.0, %v2961
      %v2963 = vpop.f32.mrb[0].mxu0
      %v2964 = vpop.f32.mrb[0].mxu0
      %v2965 = vadd.f32 0.0, %v2964
      %v2966 = vpop.f32.mrb[0].mxu0
      %2967 = vmatprep.mubr.bf16.mxu0 0
      %2968 = vmatmul.mubr.bf16.gmra.mrb[0].mxu0 %v2805
      %v2969 = vpop.f32.mrb[0].mxu0
      %v2970 = vadd.f32 0.0, %v2969
      %v2971 = vpop.f32.mrb[0].mxu0
      %v2972 = vpop.f32.mrb[0].mxu0
      %v2973 = vadd.f32 0.0, %v2972
      %v2974 = vpop.f32.mrb[0].mxu0
      %2975 = vmatprep.mubr.bf16.mxu0 0
      %2976 = vmatmul.mubr.bf16.gmra.mrb[0].mxu0 %v2808
      %v2977 = vpop.f32.mrb[0].mxu0
      %v2978 = vadd.f32 0.0, %v2977
      %v2979 = vpop.f32.mrb[0].mxu0
      %v2980 = vpop.f32.mrb[0].mxu0
      %v2981 = vadd.f32 0.0, %v2980
      %v2982 = vpop.f32.mrb[0].mxu0
      %2983 = vmatprep.mubr.bf16.mxu0 0
      %2984 = vmatmul.mubr.bf16.gmra.mrb[0].mxu0 %v2811
      %v2985 = vpop.f32.mrb[0].mxu0
      %v2986 = vadd.f32 0.0, %v2985
      %v2987 = vpop.f32.mrb[0].mxu0
      %v2988 = vpop.f32.mrb[0].mxu0
      %v2989 = vadd.f32 0.0, %v2988
      %v2990 = vpop.f32.mrb[0].mxu0
      %2991 = vmatprep.mubr.bf16.mxu0 0
      %2992 = vmatmul.mubr.bf16.gmra.mrb[0].mxu0 %v2814
      %v2993 = vpop.f32.mrb[0].mxu0
      %v2994 = vadd.f32 0.0, %v2993
      %v2995 = vpop.f32.mrb[0].mxu0
      %v2996 = vpop.f32.mrb[0].mxu0
      %v2997 = vadd.f32 0.0, %v2996
      %v2998 = vpop.f32.mrb[0].mxu0
      %2999 = vmatprep.mubr.bf16.mxu0 0
      %3000 = vmatmul.mubr.bf16.gmra.mrb[0].mxu0 %v2817
      %v3001 = vpop.f32.mrb[0].mxu0
      %v3002 = vadd.f32 0.0, %v3001
      %v3003 = vpop.f32.mrb[0].mxu0
      %v3004 = vpop.f32.mrb[0].mxu0
      %v3005 = vadd.f32 0.0, %v3004
      %v3006 = vpop.f32.mrb[0].mxu0
      %3007 = vmatprep.mubr.bf16.mxu0 0
      %3008 = vmatmul.mubr.bf16.gmra.mrb[0].mxu0 %v2820
      %v3009 = vpop.f32.mrb[0].mxu0
      %v3010 = vadd.f32 0.0, %v3009
      %v3011 = vpop.f32.mrb[0].mxu0
      %v3012 = vpop.f32.mrb[0].mxu0
      %v3013 = vadd.f32 0.0, %v3012
      %v3014 = vpop.f32.mrb[0].mxu0
      %3015 = vmatprep.mubr.bf16.mxu0 0
      %3016 = vmatmul.mubr.bf16.gmra.mrb[0].mxu0 %v2823
      %v3017 = vpop.f32.mrb[0].mxu0
      %v3018 = vadd.f32 0.0, %v3017
      %v3019 = vpop.f32.mrb[0].mxu0
      %v3020 = vpop.f32.mrb[0].mxu0
      %v3021 = vadd.f32 0.0, %v3020
      %v3022 = vpop.f32.mrb[0].mxu0
      %3023 = vmatprep.mubr.bf16.mxu0 0
      %3024 = vmatmul.mubr.bf16.gmra.mrb[0].mxu0 %v2826
      %v3025 = vpop.f32.mrb[0].mxu0
      %v3026 = vadd.f32 0.0, %v3025
      %v3027 = vpop.f32.mrb[0].mxu0
      %v3028 = vpop.f32.mrb[0].mxu0
      %v3029 = vadd.f32 0.0, %v3028
      %v3030 = vpop.f32.mrb[0].mxu0
      %3031 = vmatprep.mubr.bf16.mxu0 0
      %3032 = vmatmul.mubr.bf16.gmra.mrb[0].mxu0 %v2829
      %v3033 = vpop.f32.mrb[0].mxu0
      %v3034 = vadd.f32 0.0, %v3033
      %v3035 = vpop.f32.mrb[0].mxu0
      %v3036 = vpop.f32.mrb[0].mxu0
      %v3037 = vadd.f32 0.0, %v3036
      %v3038 = vpop.f32.mrb[0].mxu0
      %3039 = vmatprep.mubr.bf16.mxu0 0
      %3040 = vmatmul.mubr.bf16.gmra.mrb[0].mxu0 %v2832
      %v3041 = vpop.f32.mrb[0].mxu0
      %v3042 = vadd.f32 0.0, %v3041
      %v3043 = vpop.f32.mrb[0].mxu0
      %v3044 = vpop.f32.mrb[0].mxu0
      %v3045 = vadd.f32 0.0, %v3044
      %v3046 = vpop.f32.mrb[0].mxu0
      %3047 = vmatprep.mubr.bf16.mxu0 0
      %3048 = vmatmul.mubr.bf16.gmra.mrb[0].mxu0 %v2835
      %v3049 = vpop.f32.mrb[0].mxu0
      %v3050 = vadd.f32 0.0, %v3049
      %v3051 = vpop.f32.mrb[0].mxu0
      %v3052 = vpop.f32.mrb[0].mxu0
      %v3053 = vadd.f32 0.0, %v3052
      %v3054 = vpop.f32.mrb[0].mxu0
      %3055 = vmatprep.mubr.bf16.mxu0 0
      %3056 = vmatmul.mubr.bf16.gmra.mrb[0].mxu0 %v2838
      %v3057 = vpop.f32.mrb[0].mxu0
      %v3058 = vadd.f32 0.0, %v3057
      %v3059 = vpop.f32.mrb[0].mxu0
      %v3060 = vpop.f32.mrb[0].mxu0
      %v3061 = vadd.f32 0.0, %v3060
      %v3062 = vpop.f32.mrb[0].mxu0
      %3063 = vmatprep.mubr.bf16.mxu0 0
      %3064 = vmatmul.mubr.bf16.gmra.mrb[0].mxu0 %v2841
      %v3065 = vpop.f32.mrb[0].mxu0
      %v3066 = vadd.f32 0.0, %v3065
      %v3067 = vpop.f32.mrb[0].mxu0
      %v3068 = vpop.f32.mrb[0].mxu0
      %v3069 = vadd.f32 0.0, %v3068
      %v3070 = vpop.f32.mrb[0].mxu0
      %3071 = vmatprep.mubr.bf16.mxu0 0
      %3072 = vmatmul.mubr.bf16.gmra.mrb[0].mxu0 %v2844
      %v3073 = vpop.f32.mrb[0].mxu0
      %v3074 = vadd.f32 0.0, %v3073
      %v3075 = vpop.f32.mrb[0].mxu0
      %v3076 = vpop.f32.mrb[0].mxu0
      %v3077 = vadd.f32 0.0, %v3076
      %v3078 = vpop.f32.mrb[0].mxu0
      %3079 = vmatprep.mubr.bf16.mxu0 0
      %3080 = vmatmul.mubr.bf16.gmra.mrb[0].mxu0 %v2847
      %v3081 = vpop.f32.mrb[0].mxu0
      %v3082 = vadd.f32 0.0, %v3081
      %v3083 = vpop.f32.mrb[0].mxu0
      %v3084 = vpop.f32.mrb[0].mxu0
      %v3085 = vadd.f32 0.0, %v3084
      %v3086 = vpop.f32.mrb[0].mxu0
      %3087 = vmatprep.mubr.bf16.mxu0 0
      %3088 = vmatmul.mubr.bf16.gmra.mrb[0].mxu0 %v2850
      %v3089 = vpop.f32.mrb[0].mxu0
      %v3090 = vadd.f32 0.0, %v3089
      %v3091 = vpop.f32.mrb[0].mxu0
      %v3092 = vpop.f32.mrb[0].mxu0
      %v3093 = vadd.f32 0.0, %v3092
      %v3094 = vpop.f32.mrb[0].mxu0
      %3095 = vmatprep.mubr.bf16.mxu0 0
      %3096 = vmatmul.mubr.bf16.gmra.mrb[0].mxu0 %v2853
      %v3097 = vpop.f32.mrb[0].mxu0
      %v3098 = vadd.f32 0.0, %v3097
      %v3099 = vpop.f32.mrb[0].mxu0
      %v3100 = vpop.f32.mrb[0].mxu0
      %v3101 = vadd.f32 0.0, %v3100
      %v3102 = vpop.f32.mrb[0].mxu0
      %3103 = vmatprep.mubr.bf16.mxu0 0
      %3104 = vmatmul.mubr.bf16.gmra.mrb[0].mxu0 %v2856
      %v3105 = vpop.f32.mrb[0].mxu0
      %v3106 = vadd.f32 0.0, %v3105
      %v3107 = vpop.f32.mrb[0].mxu0
      %v3108 = vpop.f32.mrb[0].mxu0
      %v3109 = vadd.f32 0.0, %v3108
      %v3110 = vpop.f32.mrb[0].mxu0
      %3111 = vmatprep.mubr.bf16.mxu0 0
      %3112 = vmatmul.mubr.bf16.gmra.mrb[0].mxu0 %v2859
      %v3113 = vpop.f32.mrb[0].mxu0
      %v3114 = vadd.f32 0.0, %v3113
      %v3115 = vpop.f32.mrb[0].mxu0
      %v3116 = vpop.f32.mrb[0].mxu0
      %v3117 = vadd.f32 0.0, %v3116
      %v3118 = vpop.f32.mrb[0].mxu0
      %3119 = vmatprep.mubr.bf16.mxu0 0
      %3120 = vmatmul.mubr.bf16.gmra.mrb[0].mxu0 %v2862
      %v3121 = vpop.f32.mrb[0].mxu0
      %v3122 = vadd.f32 0.0, %v3121
      %v3123 = vpop.f32.mrb[0].mxu0
      %v3124 = vpop.f32.mrb[0].mxu0
      %v3125 = vadd.f32 0.0, %v3124
      %v3126 = vpop.f32.mrb[0].mxu0
      %3127 = vmatprep.mubr.bf16.mxu0 0
      %3128 = vmatmul.mubr.bf16.gmra.mrb[0].mxu0 %v2865
      %v3129 = vpop.f32.mrb[0].mxu0
      %v3130 = vadd.f32 0.0, %v3129
      %v3131 = vpop.f32.mrb[0].mxu0
      %v3132 = vpop.f32.mrb[0].mxu0
      %v3133 = vadd.f32 0.0, %v3132
      %v3134 = vpop.f32.mrb[0].mxu0
      %3135 = vmatprep.mubr.bf16.mxu0 0
      %3136 = vmatmul.mubr.bf16.gmra.mrb[0].mxu0 %v2868
      %v3137 = vpop.f32.mrb[0].mxu0
      %v3138 = vadd.f32 0.0, %v3137
      %v3139 = vpop.f32.mrb[0].mxu0
      %v3140 = vpop.f32.mrb[0].mxu0
      %v3141 = vadd.f32 0.0, %v3140
      %v3142 = vpop.f32.mrb[0].mxu0
      %3143 = vmatprep.mubr.bf16.mxu0 0
      %3144 = vmatmul.mubr.bf16.gmra.mrb[0].mxu0 %v2871
      %v3145 = vpop.f32.mrb[0].mxu0
      %v3146 = vadd.f32 0.0, %v3145
      %v3147 = vpop.f32.mrb[0].mxu0
      %v3148 = vpop.f32.mrb[0].mxu0
      %v3149 = vadd.f32 0.0, %v3148
      %v3150 = vpop.f32.mrb[0].mxu0
      %3151 = vmatprep.mubr.bf16.mxu0 0
      %3152 = vmatmul.mubr.bf16.gmra.mrb[0].mxu0 %v2874
      %v3153 = vpop.f32.mrb[0].mxu0
      %v3154 = vadd.f32 0.0, %v3153
      %v3155 = vpop.f32.mrb[0].mxu0
      %v3156 = vpop.f32.mrb[0].mxu0
      %v3157 = vadd.f32 0.0, %v3156
      %v3158 = vpop.f32.mrb[0].mxu0
      %3159 = vmatprep.mubr.bf16.mxu0 0
      %3160 = vmatmul.mubr.bf16.gmra.mrb[0].mxu0 %v2877
      %v3161 = vpop.f32.mrb[0].mxu0
      %v3162 = vadd.f32 0.0, %v3161
      %v3163 = vpop.f32.mrb[0].mxu0
      %v3164 = vpop.f32.mrb[0].mxu0
      %v3165 = vadd.f32 0.0, %v3164
      %v3166 = vpop.f32.mrb[0].mxu0
      %3167 = vdwg.mxu0
      %v3168 = vadd.f32 %v2591, %v2914
      %v3169 = vadd.f32 %v2592, %v2917
      %v3170 = vadd.f32 %v2593, %v2922
      %v3171 = vadd.f32 %v2594, %v2925
      %v3172 = vadd.f32 %v2595, %v2930
      %v3173 = vadd.f32 %v2596, %v2933
      %v3174 = vadd.f32 %v2597, %v2938
      %v3175 = vadd.f32 %v2598, %v2941
      %v3176 = vadd.f32 %v2599, %v2946
      %v3177 = vadd.f32 %v2600, %v2949
      %v3178 = vadd.f32 %v2601, %v2954
      %v3179 = vadd.f32 %v2602, %v2957
      %v3180 = vadd.f32 %v2603, %v2962
      %v3181 = vadd.f32 %v2604, %v2965
      %v3182 = vadd.f32 %v2605, %v2970
      %v3183 = vadd.f32 %v2606, %v2973
      %v3184 = vadd.f32 %v2607, %v2978
      %v3185 = vadd.f32 %v2608, %v2981
      %v3186 = vadd.f32 %v2609, %v2986
      %v3187 = vadd.f32 %v2610, %v2989
      %v3188 = vadd.f32 %v2611, %v2994
      %v3189 = vadd.f32 %v2612, %v2997
      %v3190 = vadd.f32 %v2613, %v3002
      %v3191 = vadd.f32 %v2614, %v3005
      %v3192 = vadd.f32 %v2615, %v3010
      %v3193 = vadd.f32 %v2616, %v3013
      %v3194 = vadd.f32 %v2617, %v3018
      %v3195 = vadd.f32 %v2618, %v3021
      %v3196 = vadd.f32 %v2619, %v3026
      %v3197 = vadd.f32 %v2620, %v3029
      %v3198 = vadd.f32 %v2621, %v3034
      %v3199 = vadd.f32 %v2622, %v3037
      %v3200 = vadd.f32 %v2623, %v3042
      %v3201 = vadd.f32 %v2624, %v3045
      %v3202 = vadd.f32 %v2625, %v3050
      %v3203 = vadd.f32 %v2626, %v3053
      %v3204 = vadd.f32 %v2627, %v3058
      %v3205 = vadd.f32 %v2628, %v3061
      %v3206 = vadd.f32 %v2629, %v3066
      %v3207 = vadd.f32 %v2630, %v3069
      %v3208 = vadd.f32 %v2631, %v3074
      %v3209 = vadd.f32 %v2632, %v3077
      %v3210 = vadd.f32 %v2633, %v3082
      %v3211 = vadd.f32 %v2634, %v3085
      %v3212 = vadd.f32 %v2635, %v3090
      %v3213 = vadd.f32 %v2636, %v3093
      %v3214 = vadd.f32 %v2637, %v3098
      %v3215 = vadd.f32 %v2638, %v3101
      %v3216 = vadd.f32 %v2639, %v3106
      %v3217 = vadd.f32 %v2640, %v3109
      %v3218 = vadd.f32 %v2641, %v3114
      %v3219 = vadd.f32 %v2642, %v3117
      %v3220 = vadd.f32 %v2643, %v3122
      %v3221 = vadd.f32 %v2644, %v3125
      %v3222 = vadd.f32 %v2645, %v3130
      %v3223 = vadd.f32 %v2646, %v3133
      %v3224 = vadd.f32 %v2647, %v3138
      %v3225 = vadd.f32 %v2648, %v3141
      %v3226 = vadd.f32 %v2649, %v3146
      %v3227 = vadd.f32 %v2650, %v3149
      %v3228 = vadd.f32 %v2651, %v3154
      %v3229 = vadd.f32 %v2652, %v3157
      %v3230 = vadd.f32 %v2653, %v3162
      %v3231 = vadd.f32 %v2654, %v3165
      %v3232 = vld [vmem:[#allocation2 + $0x14] sm:$0xff]
      %v3233 = vld [vmem:[#allocation2 + $0x1c] sm:$0xff]
      %v3234 = vld [vmem:[#allocation2 + $0x24] sm:$0xff]
      %v3235 = vld [vmem:[#allocation2 + $0x2c] sm:$0xff]
      %v3236 = vld [vmem:[#allocation2 + $0x34] sm:$0xff]
      %v3237 = vld [vmem:[#allocation2 + $0x3c] sm:$0xff]
      %v3238 = vld [vmem:[#allocation2 + $0x44] sm:$0xff]
      %v3239 = vld [vmem:[#allocation2 + $0x4c] sm:$0xff]
      %v3240 = vld [vmem:[#allocation2 + $0x54] sm:$0xff]
      %v3241 = vld [vmem:[#allocation2 + $0x5c] sm:$0xff]
      %v3242 = vld [vmem:[#allocation2 + $0x64] sm:$0xff]
      %v3243 = vld [vmem:[#allocation2 + $0x6c] sm:$0xff]
      %v3244 = vld [vmem:[#allocation2 + $0x74] sm:$0xff]
      %v3245 = vld [vmem:[#allocation2 + $0x7c] sm:$0xff]
      %v3246 = vld [vmem:[#allocation2 + $0x84] sm:$0xff]
      %v3247 = vld [vmem:[#allocation2 + $0x8c] sm:$0xff]
      %v3248 = vld [vmem:[#allocation2 + $0x94] sm:$0xff]
      %v3249 = vld [vmem:[#allocation2 + $0x9c] sm:$0xff]
      %v3250 = vld [vmem:[#allocation2 + $0xa4] sm:$0xff]
      %v3251 = vld [vmem:[#allocation2 + $0xac] sm:$0xff]
      %v3252 = vld [vmem:[#allocation2 + $0xb4] sm:$0xff]
      %v3253 = vld [vmem:[#allocation2 + $0xbc] sm:$0xff]
      %v3254 = vld [vmem:[#allocation2 + $0xc4] sm:$0xff]
      %v3255 = vld [vmem:[#allocation2 + $0xcc] sm:$0xff]
      %v3256 = vld [vmem:[#allocation2 + $0xd4] sm:$0xff]
      %v3257 = vld [vmem:[#allocation2 + $0xdc] sm:$0xff]
      %v3258 = vld [vmem:[#allocation2 + $0xe4] sm:$0xff]
      %v3259 = vld [vmem:[#allocation2 + $0xec] sm:$0xff]
      %v3260 = vld [vmem:[#allocation2 + $0xf4] sm:$0xff]
      %v3261 = vld [vmem:[#allocation2 + $0xfc] sm:$0xff]
      %v3262 = vld [vmem:[#allocation2 + $0x104] sm:$0xff]
      %v3263 = vld [vmem:[#allocation2 + $0x10c] sm:$0xff]
      %v3264 = vld [vmem:[#allocation2 + $0x114] sm:$0xff]
      %v3265 = vld [vmem:[#allocation2 + $0x11c] sm:$0xff]
      %v3266 = vld [vmem:[#allocation2 + $0x124] sm:$0xff]
      %v3267 = vld [vmem:[#allocation2 + $0x12c] sm:$0xff]
      %v3268 = vld [vmem:[#allocation2 + $0x134] sm:$0xff]
      %v3269 = vld [vmem:[#allocation2 + $0x13c] sm:$0xff]
      %v3270 = vld [vmem:[#allocation2 + $0x144] sm:$0xff]
      %v3271 = vld [vmem:[#allocation2 + $0x14c] sm:$0xff]
      %v3272 = vld [vmem:[#allocation2 + $0x154] sm:$0xff]
      %v3273 = vld [vmem:[#allocation2 + $0x15c] sm:$0xff]
      %v3274 = vld [vmem:[#allocation2 + $0x164] sm:$0xff]
      %v3275 = vld [vmem:[#allocation2 + $0x16c] sm:$0xff]
      %v3276 = vld [vmem:[#allocation2 + $0x174] sm:$0xff]
      %v3277 = vld [vmem:[#allocation2 + $0x17c] sm:$0xff]
      %v3278 = vld [vmem:[#allocation2 + $0x184] sm:$0xff]
      %v3279 = vld [vmem:[#allocation2 + $0x18c] sm:$0xff]
      %v3280 = vld [vmem:[#allocation2 + $0x194] sm:$0xff]
      %v3281 = vld [vmem:[#allocation2 + $0x19c] sm:$0xff]
      %v3282 = vld [vmem:[#allocation2 + $0x1a4] sm:$0xff]
      %v3283 = vld [vmem:[#allocation2 + $0x1ac] sm:$0xff]
      %v3284 = vld [vmem:[#allocation2 + $0x1b4] sm:$0xff]
      %v3285 = vld [vmem:[#allocation2 + $0x1bc] sm:$0xff]
      %v3286 = vld [vmem:[#allocation2 + $0x1c4] sm:$0xff]
      %v3287 = vld [vmem:[#allocation2 + $0x1cc] sm:$0xff]
      %v3288 = vld [vmem:[#allocation2 + $0x1d4] sm:$0xff]
      %v3289 = vld [vmem:[#allocation2 + $0x1dc] sm:$0xff]
      %v3290 = vld [vmem:[#allocation2 + $0x1e4] sm:$0xff]
      %v3291 = vld [vmem:[#allocation2 + $0x1ec] sm:$0xff]
      %v3292 = vld [vmem:[#allocation2 + $0x1f4] sm:$0xff]
      %v3293 = vld [vmem:[#allocation2 + $0x1fc] sm:$0xff]
      %v3294 = vld [vmem:[#allocation2 + $0x204] sm:$0xff]
      %v3295 = vld [vmem:[#allocation2 + $0x20c] sm:$0xff]
      %v3296 = vpack.c.bf16 %v3233, %v3232
      %v3297 = vpack.c.bf16 %v3235, %v3234
      %v3298 = vpack.c.bf16 %v3237, %v3236
      %v3299 = vpack.c.bf16 %v3239, %v3238
      %v3300 = vpack.c.bf16 %v3241, %v3240
      %v3301 = vpack.c.bf16 %v3243, %v3242
      %v3302 = vpack.c.bf16 %v3245, %v3244
      %v3303 = vpack.c.bf16 %v3247, %v3246
      %v3304 = vpack.c.bf16 %v3249, %v3248
      %v3305 = vpack.c.bf16 %v3251, %v3250
      %v3306 = vpack.c.bf16 %v3253, %v3252
      %v3307 = vpack.c.bf16 %v3255, %v3254
      %v3308 = vpack.c.bf16 %v3257, %v3256
      %v3309 = vpack.c.bf16 %v3259, %v3258
      %v3310 = vpack.c.bf16 %v3261, %v3260
      %v3311 = vpack.c.bf16 %v3263, %v3262
      %v3312 = vpack.c.bf16 %v3265, %v3264
      %v3313 = vpack.c.bf16 %v3267, %v3266
      %v3314 = vpack.c.bf16 %v3269, %v3268
      %v3315 = vpack.c.bf16 %v3271, %v3270
      %v3316 = vpack.c.bf16 %v3273, %v3272
      %v3317 = vpack.c.bf16 %v3275, %v3274
      %v3318 = vpack.c.bf16 %v3277, %v3276
      %v3319 = vpack.c.bf16 %v3279, %v3278
      %v3320 = vpack.c.bf16 %v3281, %v3280
      %v3321 = vpack.c.bf16 %v3283, %v3282
      %v3322 = vpack.c.bf16 %v3285, %v3284
      %v3323 = vpack.c.bf16 %v3287, %v3286
      %v3324 = vpack.c.bf16 %v3289, %v3288
      %v3325 = vpack.c.bf16 %v3291, %v3290
      %v3326 = vpack.c.bf16 %v3293, %v3292
      %v3327 = vpack.c.bf16 %v3295, %v3294
      %v3328 = vld [vmem:[%s2 + $0xa0] sm:$0xf]
      %v3329 = vld [vmem:[%s2 + $0xa4] sm:$0xf]
      %v3330 = vld [vmem:[%s2 + $0xa8] sm:$0xf]
      %v3331 = vld [vmem:[%s2 + $0xac] sm:$0xf]
      %v3332 = vld [vmem:[%s2 + $0xb0] sm:$0xf]
      %v3333 = vld [vmem:[%s2 + $0xb4] sm:$0xf]
      %v3334 = vld [vmem:[%s2 + $0xb8] sm:$0xf]
      %v3335 = vld [vmem:[%s2 + $0xbc] sm:$0xf]
      %v3344 = vunpack.c.l.b16 %v3328
      %v3345 = vunpack.c.l.b16 %v3329
      %v3346 = vunpack.c.l.b16 %v3330
      %v3347 = vunpack.c.l.b16 %v3331
      %v3348 = vunpack.c.l.b16 %v3332
      %v3349 = vunpack.c.l.b16 %v3333
      %v3350 = vunpack.c.l.b16 %v3334
      %v3351 = vunpack.c.l.b16 %v3335
      %v3352 = vpack.c.b16 %v3345, %v3344
      %v3353 = vpack.c.b16 %v3347, %v3346
      %v3354 = vpack.c.b16 %v3349, %v3348
      %v3355 = vpack.c.b16 %v3351, %v3350
      %v3361 = vsel %vm386, %v3296, 0
      %v3364 = vsel %vm386, %v3297, 0
      %v3367 = vsel %vm386, %v3298, 0
      %v3370 = vsel %vm386, %v3299, 0
      %v3373 = vsel %vm386, %v3300, 0
      %v3376 = vsel %vm386, %v3301, 0
      %v3379 = vsel %vm386, %v3302, 0
      %v3382 = vsel %vm386, %v3303, 0
      %v3385 = vsel %vm386, %v3304, 0
      %v3388 = vsel %vm386, %v3305, 0
      %v3391 = vsel %vm386, %v3306, 0
      %v3394 = vsel %vm386, %v3307, 0
      %v3397 = vsel %vm386, %v3308, 0
      %v3400 = vsel %vm386, %v3309, 0
      %v3403 = vsel %vm386, %v3310, 0
      %v3406 = vsel %vm386, %v3311, 0
      %v3409 = vsel %vm386, %v3312, 0
      %v3412 = vsel %vm386, %v3313, 0
      %v3415 = vsel %vm386, %v3314, 0
      %v3418 = vsel %vm386, %v3315, 0
      %v3421 = vsel %vm386, %v3316, 0
      %v3424 = vsel %vm386, %v3317, 0
      %v3427 = vsel %vm386, %v3318, 0
      %v3430 = vsel %vm386, %v3319, 0
      %v3433 = vsel %vm386, %v3320, 0
      %v3436 = vsel %vm386, %v3321, 0
      %v3439 = vsel %vm386, %v3322, 0
      %v3442 = vsel %vm386, %v3323, 0
      %v3445 = vsel %vm386, %v3324, 0
      %v3448 = vsel %vm386, %v3325, 0
      %v3451 = vsel %vm386, %v3326, 0
      %v3454 = vsel %vm386, %v3327, 0
      %3456 = vmatprep.subr.bf16.mxu0 0
      %3457 = vmatpush1.bf16.msra.mxu0 %v3352
      %3458 = vmatprep.subr.bf16.mxu0 0
      %3459 = vmatpush1.bf16.msra.mxu0 %v3353
      %3460 = vmatprep.subr.bf16.mxu0 0
      %3461 = vmatpush1.bf16.msra.mxu0 %v3354
      %3462 = vmatprep.subr.bf16.mxu0 0
      %3463 = vmatpush1.bf16.msra.mxu0 %v3355
      %3464 = vmatprep.subr.bf16.mxu0 0
      %3465 = vmatpush1.bf16.msra.mxu0 0
      %3466 = vmatprep.subr.bf16.mxu0 0
      %3467 = vmatpush1.bf16.msra.mxu0 0
      %3468 = vmatprep.subr.bf16.mxu0 0
      %3469 = vmatpush1.bf16.msra.mxu0 0
      %3470 = vmatprep.subr.bf16.mxu0 0
      %3471 = vmatpush1.bf16.msra.mxu0 0
      %3472 = vmatprep.subr.bf16.mxu0 0
      %3473 = vmatpush1.bf16.msra.mxu0 0
      %3474 = vmatprep.subr.bf16.mxu0 0
      %3475 = vmatpush1.bf16.msra.mxu0 0
      %3476 = vmatprep.subr.bf16.mxu0 0
      %3477 = vmatpush1.bf16.msra.mxu0 0
      %3478 = vmatprep.subr.bf16.mxu0 0
      %3479 = vmatpush1.bf16.msra.mxu0 0
      %3480 = vmatprep.subr.bf16.mxu0 0
      %3481 = vmatpush1.bf16.msra.mxu0 0
      %3482 = vmatprep.subr.bf16.mxu0 0
      %3483 = vmatpush1.bf16.msra.mxu0 0
      %3484 = vmatprep.subr.bf16.mxu0 0
      %3485 = vmatpush1.bf16.msra.mxu0 0
      %3486 = vmatprep.subr.bf16.mxu0 0
      %3487 = vmatpush1.bf16.msra.mxu0 0
      %3488 = vmatprep.mubr.bf16.mxu0 0
      %3489 = vmatmul.mubr.bf16.gmra.mrb[0].mxu0 %v3361
      %v3490 = vpop.f32.mrb[0].mxu0
      %v3491 = vadd.f32 0.0, %v3490
      %v3492 = vpop.f32.mrb[0].mxu0
      %v3493 = vpop.f32.mrb[0].mxu0
      %v3494 = vadd.f32 0.0, %v3493
      %v3495 = vpop.f32.mrb[0].mxu0
      %3496 = vmatprep.mubr.bf16.mxu0 0
      %3497 = vmatmul.mubr.bf16.gmra.mrb[0].mxu0 %v3364
      %v3498 = vpop.f32.mrb[0].mxu0
      %v3499 = vadd.f32 0.0, %v3498
      %v3500 = vpop.f32.mrb[0].mxu0
      %v3501 = vpop.f32.mrb[0].mxu0
      %v3502 = vadd.f32 0.0, %v3501
      %v3503 = vpop.f32.mrb[0].mxu0
      %3504 = vmatprep.mubr.bf16.mxu0 0
      %3505 = vmatmul.mubr.bf16.gmra.mrb[0].mxu0 %v3367
      %v3506 = vpop.f32.mrb[0].mxu0
      %v3507 = vadd.f32 0.0, %v3506
      %v3508 = vpop.f32.mrb[0].mxu0
      %v3509 = vpop.f32.mrb[0].mxu0
      %v3510 = vadd.f32 0.0, %v3509
      %v3511 = vpop.f32.mrb[0].mxu0
      %3512 = vmatprep.mubr.bf16.mxu0 0
      %3513 = vmatmul.mubr.bf16.gmra.mrb[0].mxu0 %v3370
      %v3514 = vpop.f32.mrb[0].mxu0
      %v3515 = vadd.f32 0.0, %v3514
      %v3516 = vpop.f32.mrb[0].mxu0
      %v3517 = vpop.f32.mrb[0].mxu0
      %v3518 = vadd.f32 0.0, %v3517
      %v3519 = vpop.f32.mrb[0].mxu0
      %3520 = vmatprep.mubr.bf16.mxu0 0
      %3521 = vmatmul.mubr.bf16.gmra.mrb[0].mxu0 %v3373
      %v3522 = vpop.f32.mrb[0].mxu0
      %v3523 = vadd.f32 0.0, %v3522
      %v3524 = vpop.f32.mrb[0].mxu0
      %v3525 = vpop.f32.mrb[0].mxu0
      %v3526 = vadd.f32 0.0, %v3525
      %v3527 = vpop.f32.mrb[0].mxu0
      %3528 = vmatprep.mubr.bf16.mxu0 0
      %3529 = vmatmul.mubr.bf16.gmra.mrb[0].mxu0 %v3376
      %v3530 = vpop.f32.mrb[0].mxu0
      %v3531 = vadd.f32 0.0, %v3530
      %v3532 = vpop.f32.mrb[0].mxu0
      %v3533 = vpop.f32.mrb[0].mxu0
      %v3534 = vadd.f32 0.0, %v3533
      %v3535 = vpop.f32.mrb[0].mxu0
      %3536 = vmatprep.mubr.bf16.mxu0 0
      %3537 = vmatmul.mubr.bf16.gmra.mrb[0].mxu0 %v3379
      %v3538 = vpop.f32.mrb[0].mxu0
      %v3539 = vadd.f32 0.0, %v3538
      %v3540 = vpop.f32.mrb[0].mxu0
      %v3541 = vpop.f32.mrb[0].mxu0
      %v3542 = vadd.f32 0.0, %v3541
      %v3543 = vpop.f32.mrb[0].mxu0
      %3544 = vmatprep.mubr.bf16.mxu0 0
      %3545 = vmatmul.mubr.bf16.gmra.mrb[0].mxu0 %v3382
      %v3546 = vpop.f32.mrb[0].mxu0
      %v3547 = vadd.f32 0.0, %v3546
      %v3548 = vpop.f32.mrb[0].mxu0
      %v3549 = vpop.f32.mrb[0].mxu0
      %v3550 = vadd.f32 0.0, %v3549
      %v3551 = vpop.f32.mrb[0].mxu0
      %3552 = vmatprep.mubr.bf16.mxu0 0
      %3553 = vmatmul.mubr.bf16.gmra.mrb[0].mxu0 %v3385
      %v3554 = vpop.f32.mrb[0].mxu0
      %v3555 = vadd.f32 0.0, %v3554
      %v3556 = vpop.f32.mrb[0].mxu0
      %v3557 = vpop.f32.mrb[0].mxu0
      %v3558 = vadd.f32 0.0, %v3557
      %v3559 = vpop.f32.mrb[0].mxu0
      %3560 = vmatprep.mubr.bf16.mxu0 0
      %3561 = vmatmul.mubr.bf16.gmra.mrb[0].mxu0 %v3388
      %v3562 = vpop.f32.mrb[0].mxu0
      %v3563 = vadd.f32 0.0, %v3562
      %v3564 = vpop.f32.mrb[0].mxu0
      %v3565 = vpop.f32.mrb[0].mxu0
      %v3566 = vadd.f32 0.0, %v3565
      %v3567 = vpop.f32.mrb[0].mxu0
      %3568 = vmatprep.mubr.bf16.mxu0 0
      %3569 = vmatmul.mubr.bf16.gmra.mrb[0].mxu0 %v3391
      %v3570 = vpop.f32.mrb[0].mxu0
      %v3571 = vadd.f32 0.0, %v3570
      %v3572 = vpop.f32.mrb[0].mxu0
      %v3573 = vpop.f32.mrb[0].mxu0
      %v3574 = vadd.f32 0.0, %v3573
      %v3575 = vpop.f32.mrb[0].mxu0
      %3576 = vmatprep.mubr.bf16.mxu0 0
      %3577 = vmatmul.mubr.bf16.gmra.mrb[0].mxu0 %v3394
      %v3578 = vpop.f32.mrb[0].mxu0
      %v3579 = vadd.f32 0.0, %v3578
      %v3580 = vpop.f32.mrb[0].mxu0
      %v3581 = vpop.f32.mrb[0].mxu0
      %v3582 = vadd.f32 0.0, %v3581
      %v3583 = vpop.f32.mrb[0].mxu0
      %3584 = vmatprep.mubr.bf16.mxu0 0
      %3585 = vmatmul.mubr.bf16.gmra.mrb[0].mxu0 %v3397
      %v3586 = vpop.f32.mrb[0].mxu0
      %v3587 = vadd.f32 0.0, %v3586
      %v3588 = vpop.f32.mrb[0].mxu0
      %v3589 = vpop.f32.mrb[0].mxu0
      %v3590 = vadd.f32 0.0, %v3589
      %v3591 = vpop.f32.mrb[0].mxu0
      %3592 = vmatprep.mubr.bf16.mxu0 0
      %3593 = vmatmul.mubr.bf16.gmra.mrb[0].mxu0 %v3400
      %v3594 = vpop.f32.mrb[0].mxu0
      %v3595 = vadd.f32 0.0, %v3594
      %v3596 = vpop.f32.mrb[0].mxu0
      %v3597 = vpop.f32.mrb[0].mxu0
      %v3598 = vadd.f32 0.0, %v3597
      %v3599 = vpop.f32.mrb[0].mxu0
      %3600 = vmatprep.mubr.bf16.mxu0 0
      %3601 = vmatmul.mubr.bf16.gmra.mrb[0].mxu0 %v3403
      %v3602 = vpop.f32.mrb[0].mxu0
      %v3603 = vadd.f32 0.0, %v3602
      %v3604 = vpop.f32.mrb[0].mxu0
      %v3605 = vpop.f32.mrb[0].mxu0
      %v3606 = vadd.f32 0.0, %v3605
      %v3607 = vpop.f32.mrb[0].mxu0
      %3608 = vmatprep.mubr.bf16.mxu0 0
      %3609 = vmatmul.mubr.bf16.gmra.mrb[0].mxu0 %v3406
      %v3610 = vpop.f32.mrb[0].mxu0
      %v3611 = vadd.f32 0.0, %v3610
      %v3612 = vpop.f32.mrb[0].mxu0
      %v3613 = vpop.f32.mrb[0].mxu0
      %v3614 = vadd.f32 0.0, %v3613
      %v3615 = vpop.f32.mrb[0].mxu0
      %3616 = vmatprep.mubr.bf16.mxu0 0
      %3617 = vmatmul.mubr.bf16.gmra.mrb[0].mxu0 %v3409
      %v3618 = vpop.f32.mrb[0].mxu0
      %v3619 = vadd.f32 0.0, %v3618
      %v3620 = vpop.f32.mrb[0].mxu0
      %v3621 = vpop.f32.mrb[0].mxu0
      %v3622 = vadd.f32 0.0, %v3621
      %v3623 = vpop.f32.mrb[0].mxu0
      %3624 = vmatprep.mubr.bf16.mxu0 0
      %3625 = vmatmul.mubr.bf16.gmra.mrb[0].mxu0 %v3412
      %v3626 = vpop.f32.mrb[0].mxu0
      %v3627 = vadd.f32 0.0, %v3626
      %v3628 = vpop.f32.mrb[0].mxu0
      %v3629 = vpop.f32.mrb[0].mxu0
      %v3630 = vadd.f32 0.0, %v3629
      %v3631 = vpop.f32.mrb[0].mxu0
      %3632 = vmatprep.mubr.bf16.mxu0 0
      %3633 = vmatmul.mubr.bf16.gmra.mrb[0].mxu0 %v3415
      %v3634 = vpop.f32.mrb[0].mxu0
      %v3635 = vadd.f32 0.0, %v3634
      %v3636 = vpop.f32.mrb[0].mxu0
      %v3637 = vpop.f32.mrb[0].mxu0
      %v3638 = vadd.f32 0.0, %v3637
      %v3639 = vpop.f32.mrb[0].mxu0
      %3640 = vmatprep.mubr.bf16.mxu0 0
      %3641 = vmatmul.mubr.bf16.gmra.mrb[0].mxu0 %v3418
      %v3642 = vpop.f32.mrb[0].mxu0
      %v3643 = vadd.f32 0.0, %v3642
      %v3644 = vpop.f32.mrb[0].mxu0
      %v3645 = vpop.f32.mrb[0].mxu0
      %v3646 = vadd.f32 0.0, %v3645
      %v3647 = vpop.f32.mrb[0].mxu0
      %3648 = vmatprep.mubr.bf16.mxu0 0
      %3649 = vmatmul.mubr.bf16.gmra.mrb[0].mxu0 %v3421
      %v3650 = vpop.f32.mrb[0].mxu0
      %v3651 = vadd.f32 0.0, %v3650
      %v3652 = vpop.f32.mrb[0].mxu0
      %v3653 = vpop.f32.mrb[0].mxu0
      %v3654 = vadd.f32 0.0, %v3653
      %v3655 = vpop.f32.mrb[0].mxu0
      %3656 = vmatprep.mubr.bf16.mxu0 0
      %3657 = vmatmul.mubr.bf16.gmra.mrb[0].mxu0 %v3424
      %v3658 = vpop.f32.mrb[0].mxu0
      %v3659 = vadd.f32 0.0, %v3658
      %v3660 = vpop.f32.mrb[0].mxu0
      %v3661 = vpop.f32.mrb[0].mxu0
      %v3662 = vadd.f32 0.0, %v3661
      %v3663 = vpop.f32.mrb[0].mxu0
      %3664 = vmatprep.mubr.bf16.mxu0 0
      %3665 = vmatmul.mubr.bf16.gmra.mrb[0].mxu0 %v3427
      %v3666 = vpop.f32.mrb[0].mxu0
      %v3667 = vadd.f32 0.0, %v3666
      %v3668 = vpop.f32.mrb[0].mxu0
      %v3669 = vpop.f32.mrb[0].mxu0
      %v3670 = vadd.f32 0.0, %v3669
      %v3671 = vpop.f32.mrb[0].mxu0
      %3672 = vmatprep.mubr.bf16.mxu0 0
      %3673 = vmatmul.mubr.bf16.gmra.mrb[0].mxu0 %v3430
      %v3674 = vpop.f32.mrb[0].mxu0
      %v3675 = vadd.f32 0.0, %v3674
      %v3676 = vpop.f32.mrb[0].mxu0
      %v3677 = vpop.f32.mrb[0].mxu0
      %v3678 = vadd.f32 0.0, %v3677
      %v3679 = vpop.f32.mrb[0].mxu0
      %3680 = vmatprep.mubr.bf16.mxu0 0
      %3681 = vmatmul.mubr.bf16.gmra.mrb[0].mxu0 %v3433
      %v3682 = vpop.f32.mrb[0].mxu0
      %v3683 = vadd.f32 0.0, %v3682
      %v3684 = vpop.f32.mrb[0].mxu0
      %v3685 = vpop.f32.mrb[0].mxu0
      %v3686 = vadd.f32 0.0, %v3685
      %v3687 = vpop.f32.mrb[0].mxu0
      %3688 = vmatprep.mubr.bf16.mxu0 0
      %3689 = vmatmul.mubr.bf16.gmra.mrb[0].mxu0 %v3436
      %v3690 = vpop.f32.mrb[0].mxu0
      %v3691 = vadd.f32 0.0, %v3690
      %v3692 = vpop.f32.mrb[0].mxu0
      %v3693 = vpop.f32.mrb[0].mxu0
      %v3694 = vadd.f32 0.0, %v3693
      %v3695 = vpop.f32.mrb[0].mxu0
      %3696 = vmatprep.mubr.bf16.mxu0 0
      %3697 = vmatmul.mubr.bf16.gmra.mrb[0].mxu0 %v3439
      %v3698 = vpop.f32.mrb[0].mxu0
      %v3699 = vadd.f32 0.0, %v3698
      %v3700 = vpop.f32.mrb[0].mxu0
      %v3701 = vpop.f32.mrb[0].mxu0
      %v3702 = vadd.f32 0.0, %v3701
      %v3703 = vpop.f32.mrb[0].mxu0
      %3704 = vmatprep.mubr.bf16.mxu0 0
      %3705 = vmatmul.mubr.bf16.gmra.mrb[0].mxu0 %v3442
      %v3706 = vpop.f32.mrb[0].mxu0
      %v3707 = vadd.f32 0.0, %v3706
      %v3708 = vpop.f32.mrb[0].mxu0
      %v3709 = vpop.f32.mrb[0].mxu0
      %v3710 = vadd.f32 0.0, %v3709
      %v3711 = vpop.f32.mrb[0].mxu0
      %3712 = vmatprep.mubr.bf16.mxu0 0
      %3713 = vmatmul.mubr.bf16.gmra.mrb[0].mxu0 %v3445
      %v3714 = vpop.f32.mrb[0].mxu0
      %v3715 = vadd.f32 0.0, %v3714
      %v3716 = vpop.f32.mrb[0].mxu0
      %v3717 = vpop.f32.mrb[0].mxu0
      %v3718 = vadd.f32 0.0, %v3717
      %v3719 = vpop.f32.mrb[0].mxu0
      %3720 = vmatprep.mubr.bf16.mxu0 0
      %3721 = vmatmul.mubr.bf16.gmra.mrb[0].mxu0 %v3448
      %v3722 = vpop.f32.mrb[0].mxu0
      %v3723 = vadd.f32 0.0, %v3722
      %v3724 = vpop.f32.mrb[0].mxu0
      %v3725 = vpop.f32.mrb[0].mxu0
      %v3726 = vadd.f32 0.0, %v3725
      %v3727 = vpop.f32.mrb[0].mxu0
      %3728 = vmatprep.mubr.bf16.mxu0 0
      %3729 = vmatmul.mubr.bf16.gmra.mrb[0].mxu0 %v3451
      %v3730 = vpop.f32.mrb[0].mxu0
      %v3731 = vadd.f32 0.0, %v3730
      %v3732 = vpop.f32.mrb[0].mxu0
      %v3733 = vpop.f32.mrb[0].mxu0
      %v3734 = vadd.f32 0.0, %v3733
      %v3735 = vpop.f32.mrb[0].mxu0
      %3736 = vmatprep.mubr.bf16.mxu0 0
      %3737 = vmatmul.mubr.bf16.gmra.mrb[0].mxu0 %v3454
      %v3738 = vpop.f32.mrb[0].mxu0
      %v3739 = vadd.f32 0.0, %v3738
      %v3740 = vpop.f32.mrb[0].mxu0
      %v3741 = vpop.f32.mrb[0].mxu0
      %v3742 = vadd.f32 0.0, %v3741
      %v3743 = vpop.f32.mrb[0].mxu0
      %3744 = vdwg.mxu0
      %v3745 = vadd.f32 %v3168, %v3491
      %v3746 = vadd.f32 %v3169, %v3494
      %v3747 = vadd.f32 %v3170, %v3499
      %v3748 = vadd.f32 %v3171, %v3502
      %v3749 = vadd.f32 %v3172, %v3507
      %v3750 = vadd.f32 %v3173, %v3510
      %v3751 = vadd.f32 %v3174, %v3515
      %v3752 = vadd.f32 %v3175, %v3518
      %v3753 = vadd.f32 %v3176, %v3523
      %v3754 = vadd.f32 %v3177, %v3526
      %v3755 = vadd.f32 %v3178, %v3531
      %v3756 = vadd.f32 %v3179, %v3534
      %v3757 = vadd.f32 %v3180, %v3539
      %v3758 = vadd.f32 %v3181, %v3542
      %v3759 = vadd.f32 %v3182, %v3547
      %v3760 = vadd.f32 %v3183, %v3550
      %v3761 = vadd.f32 %v3184, %v3555
      %v3762 = vadd.f32 %v3185, %v3558
      %v3763 = vadd.f32 %v3186, %v3563
      %v3764 = vadd.f32 %v3187, %v3566
      %v3765 = vadd.f32 %v3188, %v3571
      %v3766 = vadd.f32 %v3189, %v3574
      %v3767 = vadd.f32 %v3190, %v3579
      %v3768 = vadd.f32 %v3191, %v3582
      %v3769 = vadd.f32 %v3192, %v3587
      %v3770 = vadd.f32 %v3193, %v3590
      %v3771 = vadd.f32 %v3194, %v3595
      %v3772 = vadd.f32 %v3195, %v3598
      %v3773 = vadd.f32 %v3196, %v3603
      %v3774 = vadd.f32 %v3197, %v3606
      %v3775 = vadd.f32 %v3198, %v3611
      %v3776 = vadd.f32 %v3199, %v3614
      %v3777 = vadd.f32 %v3200, %v3619
      %v3778 = vadd.f32 %v3201, %v3622
      %v3779 = vadd.f32 %v3202, %v3627
      %v3780 = vadd.f32 %v3203, %v3630
      %v3781 = vadd.f32 %v3204, %v3635
      %v3782 = vadd.f32 %v3205, %v3638
      %v3783 = vadd.f32 %v3206, %v3643
      %v3784 = vadd.f32 %v3207, %v3646
      %v3785 = vadd.f32 %v3208, %v3651
      %v3786 = vadd.f32 %v3209, %v3654
      %v3787 = vadd.f32 %v3210, %v3659
      %v3788 = vadd.f32 %v3211, %v3662
      %v3789 = vadd.f32 %v3212, %v3667
      %v3790 = vadd.f32 %v3213, %v3670
      %v3791 = vadd.f32 %v3214, %v3675
      %v3792 = vadd.f32 %v3215, %v3678
      %v3793 = vadd.f32 %v3216, %v3683
      %v3794 = vadd.f32 %v3217, %v3686
      %v3795 = vadd.f32 %v3218, %v3691
      %v3796 = vadd.f32 %v3219, %v3694
      %v3797 = vadd.f32 %v3220, %v3699
      %v3798 = vadd.f32 %v3221, %v3702
      %v3799 = vadd.f32 %v3222, %v3707
      %v3800 = vadd.f32 %v3223, %v3710
      %v3801 = vadd.f32 %v3224, %v3715
      %v3802 = vadd.f32 %v3225, %v3718
      %v3803 = vadd.f32 %v3226, %v3723
      %v3804 = vadd.f32 %v3227, %v3726
      %v3805 = vadd.f32 %v3228, %v3731
      %v3806 = vadd.f32 %v3229, %v3734
      %v3807 = vadd.f32 %v3230, %v3739
      %v3808 = vadd.f32 %v3231, %v3742
      %v3809 = vld [vmem:[#allocation2 + $0x24] sm:$0xff]
      %v3810 = vld [vmem:[#allocation2 + $0x2c] sm:$0xff]
      %v3811 = vld [vmem:[#allocation2 + $0x34] sm:$0xff]
      %v3812 = vld [vmem:[#allocation2 + $0x3c] sm:$0xff]
      %v3813 = vld [vmem:[#allocation2 + $0x44] sm:$0xff]
      %v3814 = vld [vmem:[#allocation2 + $0x4c] sm:$0xff]
      %v3815 = vld [vmem:[#allocation2 + $0x54] sm:$0xff]
      %v3816 = vld [vmem:[#allocation2 + $0x5c] sm:$0xff]
      %v3817 = vld [vmem:[#allocation2 + $0x64] sm:$0xff]
      %v3818 = vld [vmem:[#allocation2 + $0x6c] sm:$0xff]
      %v3819 = vld [vmem:[#allocation2 + $0x74] sm:$0xff]
      %v3820 = vld [vmem:[#allocation2 + $0x7c] sm:$0xff]
      %v3821 = vld [vmem:[#allocation2 + $0x84] sm:$0xff]
      %v3822 = vld [vmem:[#allocation2 + $0x8c] sm:$0xff]
      %v3823 = vld [vmem:[#allocation2 + $0x94] sm:$0xff]
      %v3824 = vld [vmem:[#allocation2 + $0x9c] sm:$0xff]
      %v3825 = vld [vmem:[#allocation2 + $0xa4] sm:$0xff]
      %v3826 = vld [vmem:[#allocation2 + $0xac] sm:$0xff]
      %v3827 = vld [vmem:[#allocation2 + $0xb4] sm:$0xff]
      %v3828 = vld [vmem:[#allocation2 + $0xbc] sm:$0xff]
      %v3829 = vld [vmem:[#allocation2 + $0xc4] sm:$0xff]
      %v3830 = vld [vmem:[#allocation2 + $0xcc] sm:$0xff]
      %v3831 = vld [vmem:[#allocation2 + $0xd4] sm:$0xff]
      %v3832 = vld [vmem:[#allocation2 + $0xdc] sm:$0xff]
      %v3833 = vld [vmem:[#allocation2 + $0xe4] sm:$0xff]
      %v3834 = vld [vmem:[#allocation2 + $0xec] sm:$0xff]
      %v3835 = vld [vmem:[#allocation2 + $0xf4] sm:$0xff]
      %v3836 = vld [vmem:[#allocation2 + $0xfc] sm:$0xff]
      %v3837 = vld [vmem:[#allocation2 + $0x104] sm:$0xff]
      %v3838 = vld [vmem:[#allocation2 + $0x10c] sm:$0xff]
      %v3839 = vld [vmem:[#allocation2 + $0x114] sm:$0xff]
      %v3840 = vld [vmem:[#allocation2 + $0x11c] sm:$0xff]
      %v3841 = vld [vmem:[#allocation2 + $0x124] sm:$0xff]
      %v3842 = vld [vmem:[#allocation2 + $0x12c] sm:$0xff]
      %v3843 = vld [vmem:[#allocation2 + $0x134] sm:$0xff]
      %v3844 = vld [vmem:[#allocation2 + $0x13c] sm:$0xff]
      %v3845 = vld [vmem:[#allocation2 + $0x144] sm:$0xff]
      %v3846 = vld [vmem:[#allocation2 + $0x14c] sm:$0xff]
      %v3847 = vld [vmem:[#allocation2 + $0x154] sm:$0xff]
      %v3848 = vld [vmem:[#allocation2 + $0x15c] sm:$0xff]
      %v3849 = vld [vmem:[#allocation2 + $0x164] sm:$0xff]
      %v3850 = vld [vmem:[#allocation2 + $0x16c] sm:$0xff]
      %v3851 = vld [vmem:[#allocation2 + $0x174] sm:$0xff]
      %v3852 = vld [vmem:[#allocation2 + $0x17c] sm:$0xff]
      %v3853 = vld [vmem:[#allocation2 + $0x184] sm:$0xff]
      %v3854 = vld [vmem:[#allocation2 + $0x18c] sm:$0xff]
      %v3855 = vld [vmem:[#allocation2 + $0x194] sm:$0xff]
      %v3856 = vld [vmem:[#allocation2 + $0x19c] sm:$0xff]
      %v3857 = vld [vmem:[#allocation2 + $0x1a4] sm:$0xff]
      %v3858 = vld [vmem:[#allocation2 + $0x1ac] sm:$0xff]
      %v3859 = vld [vmem:[#allocation2 + $0x1b4] sm:$0xff]
      %v3860 = vld [vmem:[#allocation2 + $0x1bc] sm:$0xff]
      %v3861 = vld [vmem:[#allocation2 + $0x1c4] sm:$0xff]
      %v3862 = vld [vmem:[#allocation2 + $0x1cc] sm:$0xff]
      %v3863 = vld [vmem:[#allocation2 + $0x1d4] sm:$0xff]
      %v3864 = vld [vmem:[#allocation2 + $0x1dc] sm:$0xff]
      %v3865 = vld [vmem:[#allocation2 + $0x1e4] sm:$0xff]
      %v3866 = vld [vmem:[#allocation2 + $0x1ec] sm:$0xff]
      %v3867 = vld [vmem:[#allocation2 + $0x1f4] sm:$0xff]
      %v3868 = vld [vmem:[#allocation2 + $0x1fc] sm:$0xff]
      %v3869 = vld [vmem:[#allocation2 + $0x204] sm:$0xff]
      %v3870 = vld [vmem:[#allocation2 + $0x20c] sm:$0xff]
      %v3871 = vld [vmem:[#allocation2 + $0x214] sm:$0xff]
      %v3872 = vld [vmem:[#allocation2 + $0x21c] sm:$0xff]
      %v3873 = vpack.c.bf16 %v3810, %v3809
      %v3874 = vpack.c.bf16 %v3812, %v3811
      %v3875 = vpack.c.bf16 %v3814, %v3813
      %v3876 = vpack.c.bf16 %v3816, %v3815
      %v3877 = vpack.c.bf16 %v3818, %v3817
      %v3878 = vpack.c.bf16 %v3820, %v3819
      %v3879 = vpack.c.bf16 %v3822, %v3821
      %v3880 = vpack.c.bf16 %v3824, %v3823
      %v3881 = vpack.c.bf16 %v3826, %v3825
      %v3882 = vpack.c.bf16 %v3828, %v3827
      %v3883 = vpack.c.bf16 %v3830, %v3829
      %v3884 = vpack.c.bf16 %v3832, %v3831
      %v3885 = vpack.c.bf16 %v3834, %v3833
      %v3886 = vpack.c.bf16 %v3836, %v3835
      %v3887 = vpack.c.bf16 %v3838, %v3837
      %v3888 = vpack.c.bf16 %v3840, %v3839
      %v3889 = vpack.c.bf16 %v3842, %v3841
      %v3890 = vpack.c.bf16 %v3844, %v3843
      %v3891 = vpack.c.bf16 %v3846, %v3845
      %v3892 = vpack.c.bf16 %v3848, %v3847
      %v3893 = vpack.c.bf16 %v3850, %v3849
      %v3894 = vpack.c.bf16 %v3852, %v3851
      %v3895 = vpack.c.bf16 %v3854, %v3853
      %v3896 = vpack.c.bf16 %v3856, %v3855
      %v3897 = vpack.c.bf16 %v3858, %v3857
      %v3898 = vpack.c.bf16 %v3860, %v3859
      %v3899 = vpack.c.bf16 %v3862, %v3861
      %v3900 = vpack.c.bf16 %v3864, %v3863
      %v3901 = vpack.c.bf16 %v3866, %v3865
      %v3902 = vpack.c.bf16 %v3868, %v3867
      %v3903 = vpack.c.bf16 %v3870, %v3869
      %v3904 = vpack.c.bf16 %v3872, %v3871
      %v3905 = vld [vmem:[%s2 + $0xc0] sm:$0xf]
      %v3906 = vld [vmem:[%s2 + $0xc4] sm:$0xf]
      %v3907 = vld [vmem:[%s2 + $0xc8] sm:$0xf]
      %v3908 = vld [vmem:[%s2 + $0xcc] sm:$0xf]
      %v3909 = vld [vmem:[%s2 + $0xd0] sm:$0xf]
      %v3910 = vld [vmem:[%s2 + $0xd4] sm:$0xf]
      %v3911 = vld [vmem:[%s2 + $0xd8] sm:$0xf]
      %v3912 = vld [vmem:[%s2 + $0xdc] sm:$0xf]
      %v3921 = vunpack.c.l.b16 %v3905
      %v3922 = vunpack.c.l.b16 %v3906
      %v3923 = vunpack.c.l.b16 %v3907
      %v3924 = vunpack.c.l.b16 %v3908
      %v3925 = vunpack.c.l.b16 %v3909
      %v3926 = vunpack.c.l.b16 %v3910
      %v3927 = vunpack.c.l.b16 %v3911
      %v3928 = vunpack.c.l.b16 %v3912
      %v3929 = vpack.c.b16 %v3922, %v3921
      %v3930 = vpack.c.b16 %v3924, %v3923
      %v3931 = vpack.c.b16 %v3926, %v3925
      %v3932 = vpack.c.b16 %v3928, %v3927
      %v3938 = vsel %vm386, %v3873, 0
      %v3941 = vsel %vm386, %v3874, 0
      %v3944 = vsel %vm386, %v3875, 0
      %v3947 = vsel %vm386, %v3876, 0
      %v3950 = vsel %vm386, %v3877, 0
      %v3953 = vsel %vm386, %v3878, 0
      %v3956 = vsel %vm386, %v3879, 0
      %v3959 = vsel %vm386, %v3880, 0
      %v3962 = vsel %vm386, %v3881, 0
      %v3965 = vsel %vm386, %v3882, 0
      %v3968 = vsel %vm386, %v3883, 0
      %v3971 = vsel %vm386, %v3884, 0
      %v3974 = vsel %vm386, %v3885, 0
      %v3977 = vsel %vm386, %v3886, 0
      %v3980 = vsel %vm386, %v3887, 0
      %v3983 = vsel %vm386, %v3888, 0
      %v3986 = vsel %vm386, %v3889, 0
      %v3989 = vsel %vm386, %v3890, 0
      %v3992 = vsel %vm386, %v3891, 0
      %v3995 = vsel %vm386, %v3892, 0
      %v3998 = vsel %vm386, %v3893, 0
      %v4001 = vsel %vm386, %v3894, 0
      %v4004 = vsel %vm386, %v3895, 0
      %v4007 = vsel %vm386, %v3896, 0
      %v4010 = vsel %vm386, %v3897, 0
      %v4013 = vsel %vm386, %v3898, 0
      %v4016 = vsel %vm386, %v3899, 0
      %v4019 = vsel %vm386, %v3900, 0
      %v4022 = vsel %vm386, %v3901, 0
      %v4025 = vsel %vm386, %v3902, 0
      %v4028 = vsel %vm386, %v3903, 0
      %v4031 = vsel %vm386, %v3904, 0
      %4033 = vmatprep.subr.bf16.mxu0 0
      %4034 = vmatpush1.bf16.msra.mxu0 %v3929
      %4035 = vmatprep.subr.bf16.mxu0 0
      %4036 = vmatpush1.bf16.msra.mxu0 %v3930
      %4037 = vmatprep.subr.bf16.mxu0 0
      %4038 = vmatpush1.bf16.msra.mxu0 %v3931
      %4039 = vmatprep.subr.bf16.mxu0 0
      %4040 = vmatpush1.bf16.msra.mxu0 %v3932
      %4041 = vmatprep.subr.bf16.mxu0 0
      %4042 = vmatpush1.bf16.msra.mxu0 0
      %4043 = vmatprep.subr.bf16.mxu0 0
      %4044 = vmatpush1.bf16.msra.mxu0 0
      %4045 = vmatprep.subr.bf16.mxu0 0
      %4046 = vmatpush1.bf16.msra.mxu0 0
      %4047 = vmatprep.subr.bf16.mxu0 0
      %4048 = vmatpush1.bf16.msra.mxu0 0
      %4049 = vmatprep.subr.bf16.mxu0 0
      %4050 = vmatpush1.bf16.msra.mxu0 0
      %4051 = vmatprep.subr.bf16.mxu0 0
      %4052 = vmatpush1.bf16.msra.mxu0 0
      %4053 = vmatprep.subr.bf16.mxu0 0
      %4054 = vmatpush1.bf16.msra.mxu0 0
      %4055 = vmatprep.subr.bf16.mxu0 0
      %4056 = vmatpush1.bf16.msra.mxu0 0
      %4057 = vmatprep.subr.bf16.mxu0 0
      %4058 = vmatpush1.bf16.msra.mxu0 0
      %4059 = vmatprep.subr.bf16.mxu0 0
      %4060 = vmatpush1.bf16.msra.mxu0 0
      %4061 = vmatprep.subr.bf16.mxu0 0
      %4062 = vmatpush1.bf16.msra.mxu0 0
      %4063 = vmatprep.subr.bf16.mxu0 0
      %4064 = vmatpush1.bf16.msra.mxu0 0
      %4065 = vmatprep.mubr.bf16.mxu0 0
      %4066 = vmatmul.mubr.bf16.gmra.mrb[0].mxu0 %v3938
      %v4067 = vpop.f32.mrb[0].mxu0
      %v4068 = vadd.f32 0.0, %v4067
      %v4069 = vpop.f32.mrb[0].mxu0
      %v4070 = vpop.f32.mrb[0].mxu0
      %v4071 = vadd.f32 0.0, %v4070
      %v4072 = vpop.f32.mrb[0].mxu0
      %4073 = vmatprep.mubr.bf16.mxu0 0
      %4074 = vmatmul.mubr.bf16.gmra.mrb[0].mxu0 %v3941
      %v4075 = vpop.f32.mrb[0].mxu0
      %v4076 = vadd.f32 0.0, %v4075
      %v4077 = vpop.f32.mrb[0].mxu0
      %v4078 = vpop.f32.mrb[0].mxu0
      %v4079 = vadd.f32 0.0, %v4078
      %v4080 = vpop.f32.mrb[0].mxu0
      %4081 = vmatprep.mubr.bf16.mxu0 0
      %4082 = vmatmul.mubr.bf16.gmra.mrb[0].mxu0 %v3944
      %v4083 = vpop.f32.mrb[0].mxu0
      %v4084 = vadd.f32 0.0, %v4083
      %v4085 = vpop.f32.mrb[0].mxu0
      %v4086 = vpop.f32.mrb[0].mxu0
      %v4087 = vadd.f32 0.0, %v4086
      %v4088 = vpop.f32.mrb[0].mxu0
      %4089 = vmatprep.mubr.bf16.mxu0 0
      %4090 = vmatmul.mubr.bf16.gmra.mrb[0].mxu0 %v3947
      %v4091 = vpop.f32.mrb[0].mxu0
      %v4092 = vadd.f32 0.0, %v4091
      %v4093 = vpop.f32.mrb[0].mxu0
      %v4094 = vpop.f32.mrb[0].mxu0
      %v4095 = vadd.f32 0.0, %v4094
      %v4096 = vpop.f32.mrb[0].mxu0
      %4097 = vmatprep.mubr.bf16.mxu0 0
      %4098 = vmatmul.mubr.bf16.gmra.mrb[0].mxu0 %v3950
      %v4099 = vpop.f32.mrb[0].mxu0
      %v4100 = vadd.f32 0.0, %v4099
      %v4101 = vpop.f32.mrb[0].mxu0
      %v4102 = vpop.f32.mrb[0].mxu0
      %v4103 = vadd.f32 0.0, %v4102
      %v4104 = vpop.f32.mrb[0].mxu0
      %4105 = vmatprep.mubr.bf16.mxu0 0
      %4106 = vmatmul.mubr.bf16.gmra.mrb[0].mxu0 %v3953
      %v4107 = vpop.f32.mrb[0].mxu0
      %v4108 = vadd.f32 0.0, %v4107
      %v4109 = vpop.f32.mrb[0].mxu0
      %v4110 = vpop.f32.mrb[0].mxu0
      %v4111 = vadd.f32 0.0, %v4110
      %v4112 = vpop.f32.mrb[0].mxu0
      %4113 = vmatprep.mubr.bf16.mxu0 0
      %4114 = vmatmul.mubr.bf16.gmra.mrb[0].mxu0 %v3956
      %v4115 = vpop.f32.mrb[0].mxu0
      %v4116 = vadd.f32 0.0, %v4115
      %v4117 = vpop.f32.mrb[0].mxu0
      %v4118 = vpop.f32.mrb[0].mxu0
      %v4119 = vadd.f32 0.0, %v4118
      %v4120 = vpop.f32.mrb[0].mxu0
      %4121 = vmatprep.mubr.bf16.mxu0 0
      %4122 = vmatmul.mubr.bf16.gmra.mrb[0].mxu0 %v3959
      %v4123 = vpop.f32.mrb[0].mxu0
      %v4124 = vadd.f32 0.0, %v4123
      %v4125 = vpop.f32.mrb[0].mxu0
      %v4126 = vpop.f32.mrb[0].mxu0
      %v4127 = vadd.f32 0.0, %v4126
      %v4128 = vpop.f32.mrb[0].mxu0
      %4129 = vmatprep.mubr.bf16.mxu0 0
      %4130 = vmatmul.mubr.bf16.gmra.mrb[0].mxu0 %v3962
      %v4131 = vpop.f32.mrb[0].mxu0
      %v4132 = vadd.f32 0.0, %v4131
      %v4133 = vpop.f32.mrb[0].mxu0
      %v4134 = vpop.f32.mrb[0].mxu0
      %v4135 = vadd.f32 0.0, %v4134
      %v4136 = vpop.f32.mrb[0].mxu0
      %4137 = vmatprep.mubr.bf16.mxu0 0
      %4138 = vmatmul.mubr.bf16.gmra.mrb[0].mxu0 %v3965
      %v4139 = vpop.f32.mrb[0].mxu0
      %v4140 = vadd.f32 0.0, %v4139
      %v4141 = vpop.f32.mrb[0].mxu0
      %v4142 = vpop.f32.mrb[0].mxu0
      %v4143 = vadd.f32 0.0, %v4142
      %v4144 = vpop.f32.mrb[0].mxu0
      %4145 = vmatprep.mubr.bf16.mxu0 0
      %4146 = vmatmul.mubr.bf16.gmra.mrb[0].mxu0 %v3968
      %v4147 = vpop.f32.mrb[0].mxu0
      %v4148 = vadd.f32 0.0, %v4147
      %v4149 = vpop.f32.mrb[0].mxu0
      %v4150 = vpop.f32.mrb[0].mxu0
      %v4151 = vadd.f32 0.0, %v4150
      %v4152 = vpop.f32.mrb[0].mxu0
      %4153 = vmatprep.mubr.bf16.mxu0 0
      %4154 = vmatmul.mubr.bf16.gmra.mrb[0].mxu0 %v3971
      %v4155 = vpop.f32.mrb[0].mxu0
      %v4156 = vadd.f32 0.0, %v4155
      %v4157 = vpop.f32.mrb[0].mxu0
      %v4158 = vpop.f32.mrb[0].mxu0
      %v4159 = vadd.f32 0.0, %v4158
      %v4160 = vpop.f32.mrb[0].mxu0
      %4161 = vmatprep.mubr.bf16.mxu0 0
      %4162 = vmatmul.mubr.bf16.gmra.mrb[0].mxu0 %v3974
      %v4163 = vpop.f32.mrb[0].mxu0
      %v4164 = vadd.f32 0.0, %v4163
      %v4165 = vpop.f32.mrb[0].mxu0
      %v4166 = vpop.f32.mrb[0].mxu0
      %v4167 = vadd.f32 0.0, %v4166
      %v4168 = vpop.f32.mrb[0].mxu0
      %4169 = vmatprep.mubr.bf16.mxu0 0
      %4170 = vmatmul.mubr.bf16.gmra.mrb[0].mxu0 %v3977
      %v4171 = vpop.f32.mrb[0].mxu0
      %v4172 = vadd.f32 0.0, %v4171
      %v4173 = vpop.f32.mrb[0].mxu0
      %v4174 = vpop.f32.mrb[0].mxu0
      %v4175 = vadd.f32 0.0, %v4174
      %v4176 = vpop.f32.mrb[0].mxu0
      %4177 = vmatprep.mubr.bf16.mxu0 0
      %4178 = vmatmul.mubr.bf16.gmra.mrb[0].mxu0 %v3980
      %v4179 = vpop.f32.mrb[0].mxu0
      %v4180 = vadd.f32 0.0, %v4179
      %v4181 = vpop.f32.mrb[0].mxu0
      %v4182 = vpop.f32.mrb[0].mxu0
      %v4183 = vadd.f32 0.0, %v4182
      %v4184 = vpop.f32.mrb[0].mxu0
      %4185 = vmatprep.mubr.bf16.mxu0 0
      %4186 = vmatmul.mubr.bf16.gmra.mrb[0].mxu0 %v3983
      %v4187 = vpop.f32.mrb[0].mxu0
      %v4188 = vadd.f32 0.0, %v4187
      %v4189 = vpop.f32.mrb[0].mxu0
      %v4190 = vpop.f32.mrb[0].mxu0
      %v4191 = vadd.f32 0.0, %v4190
      %v4192 = vpop.f32.mrb[0].mxu0
      %4193 = vmatprep.mubr.bf16.mxu0 0
      %4194 = vmatmul.mubr.bf16.gmra.mrb[0].mxu0 %v3986
      %v4195 = vpop.f32.mrb[0].mxu0
      %v4196 = vadd.f32 0.0, %v4195
      %v4197 = vpop.f32.mrb[0].mxu0
      %v4198 = vpop.f32.mrb[0].mxu0
      %v4199 = vadd.f32 0.0, %v4198
      %v4200 = vpop.f32.mrb[0].mxu0
      %4201 = vmatprep.mubr.bf16.mxu0 0
      %4202 = vmatmul.mubr.bf16.gmra.mrb[0].mxu0 %v3989
      %v4203 = vpop.f32.mrb[0].mxu0
      %v4204 = vadd.f32 0.0, %v4203
      %v4205 = vpop.f32.mrb[0].mxu0
      %v4206 = vpop.f32.mrb[0].mxu0
      %v4207 = vadd.f32 0.0, %v4206
      %v4208 = vpop.f32.mrb[0].mxu0
      %4209 = vmatprep.mubr.bf16.mxu0 0
      %4210 = vmatmul.mubr.bf16.gmra.mrb[0].mxu0 %v3992
      %v4211 = vpop.f32.mrb[0].mxu0
      %v4212 = vadd.f32 0.0, %v4211
      %v4213 = vpop.f32.mrb[0].mxu0
      %v4214 = vpop.f32.mrb[0].mxu0
      %v4215 = vadd.f32 0.0, %v4214
      %v4216 = vpop.f32.mrb[0].mxu0
      %4217 = vmatprep.mubr.bf16.mxu0 0
      %4218 = vmatmul.mubr.bf16.gmra.mrb[0].mxu0 %v3995
      %v4219 = vpop.f32.mrb[0].mxu0
      %v4220 = vadd.f32 0.0, %v4219
      %v4221 = vpop.f32.mrb[0].mxu0
      %v4222 = vpop.f32.mrb[0].mxu0
      %v4223 = vadd.f32 0.0, %v4222
      %v4224 = vpop.f32.mrb[0].mxu0
      %4225 = vmatprep.mubr.bf16.mxu0 0
      %4226 = vmatmul.mubr.bf16.gmra.mrb[0].mxu0 %v3998
      %v4227 = vpop.f32.mrb[0].mxu0
      %v4228 = vadd.f32 0.0, %v4227
      %v4229 = vpop.f32.mrb[0].mxu0
      %v4230 = vpop.f32.mrb[0].mxu0
      %v4231 = vadd.f32 0.0, %v4230
      %v4232 = vpop.f32.mrb[0].mxu0
      %4233 = vmatprep.mubr.bf16.mxu0 0
      %4234 = vmatmul.mubr.bf16.gmra.mrb[0].mxu0 %v4001
      %v4235 = vpop.f32.mrb[0].mxu0
      %v4236 = vadd.f32 0.0, %v4235
      %v4237 = vpop.f32.mrb[0].mxu0
      %v4238 = vpop.f32.mrb[0].mxu0
      %v4239 = vadd.f32 0.0, %v4238
      %v4240 = vpop.f32.mrb[0].mxu0
      %4241 = vmatprep.mubr.bf16.mxu0 0
      %4242 = vmatmul.mubr.bf16.gmra.mrb[0].mxu0 %v4004
      %v4243 = vpop.f32.mrb[0].mxu0
      %v4244 = vadd.f32 0.0, %v4243
      %v4245 = vpop.f32.mrb[0].mxu0
      %v4246 = vpop.f32.mrb[0].mxu0
      %v4247 = vadd.f32 0.0, %v4246
      %v4248 = vpop.f32.mrb[0].mxu0
      %4249 = vmatprep.mubr.bf16.mxu0 0
      %4250 = vmatmul.mubr.bf16.gmra.mrb[0].mxu0 %v4007
      %v4251 = vpop.f32.mrb[0].mxu0
      %v4252 = vadd.f32 0.0, %v4251
      %v4253 = vpop.f32.mrb[0].mxu0
      %v4254 = vpop.f32.mrb[0].mxu0
      %v4255 = vadd.f32 0.0, %v4254
      %v4256 = vpop.f32.mrb[0].mxu0
      %4257 = vmatprep.mubr.bf16.mxu0 0
      %4258 = vmatmul.mubr.bf16.gmra.mrb[0].mxu0 %v4010
      %v4259 = vpop.f32.mrb[0].mxu0
      %v4260 = vadd.f32 0.0, %v4259
      %v4261 = vpop.f32.mrb[0].mxu0
      %v4262 = vpop.f32.mrb[0].mxu0
      %v4263 = vadd.f32 0.0, %v4262
      %v4264 = vpop.f32.mrb[0].mxu0
      %4265 = vmatprep.mubr.bf16.mxu0 0
      %4266 = vmatmul.mubr.bf16.gmra.mrb[0].mxu0 %v4013
      %v4267 = vpop.f32.mrb[0].mxu0
      %v4268 = vadd.f32 0.0, %v4267
      %v4269 = vpop.f32.mrb[0].mxu0
      %v4270 = vpop.f32.mrb[0].mxu0
      %v4271 = vadd.f32 0.0, %v4270
      %v4272 = vpop.f32.mrb[0].mxu0
      %4273 = vmatprep.mubr.bf16.mxu0 0
      %4274 = vmatmul.mubr.bf16.gmra.mrb[0].mxu0 %v4016
      %v4275 = vpop.f32.mrb[0].mxu0
      %v4276 = vadd.f32 0.0, %v4275
      %v4277 = vpop.f32.mrb[0].mxu0
      %v4278 = vpop.f32.mrb[0].mxu0
      %v4279 = vadd.f32 0.0, %v4278
      %v4280 = vpop.f32.mrb[0].mxu0
      %4281 = vmatprep.mubr.bf16.mxu0 0
      %4282 = vmatmul.mubr.bf16.gmra.mrb[0].mxu0 %v4019
      %v4283 = vpop.f32.mrb[0].mxu0
      %v4284 = vadd.f32 0.0, %v4283
      %v4285 = vpop.f32.mrb[0].mxu0
      %v4286 = vpop.f32.mrb[0].mxu0
      %v4287 = vadd.f32 0.0, %v4286
      %v4288 = vpop.f32.mrb[0].mxu0
      %4289 = vmatprep.mubr.bf16.mxu0 0
      %4290 = vmatmul.mubr.bf16.gmra.mrb[0].mxu0 %v4022
      %v4291 = vpop.f32.mrb[0].mxu0
      %v4292 = vadd.f32 0.0, %v4291
      %v4293 = vpop.f32.mrb[0].mxu0
      %v4294 = vpop.f32.mrb[0].mxu0
      %v4295 = vadd.f32 0.0, %v4294
      %v4296 = vpop.f32.mrb[0].mxu0
      %4297 = vmatprep.mubr.bf16.mxu0 0
      %4298 = vmatmul.mubr.bf16.gmra.mrb[0].mxu0 %v4025
      %v4299 = vpop.f32.mrb[0].mxu0
      %v4300 = vadd.f32 0.0, %v4299
      %v4301 = vpop.f32.mrb[0].mxu0
      %v4302 = vpop.f32.mrb[0].mxu0
      %v4303 = vadd.f32 0.0, %v4302
      %v4304 = vpop.f32.mrb[0].mxu0
      %4305 = vmatprep.mubr.bf16.mxu0 0
      %4306 = vmatmul.mubr.bf16.gmra.mrb[0].mxu0 %v4028
      %v4307 = vpop.f32.mrb[0].mxu0
      %v4308 = vadd.f32 0.0, %v4307
      %v4309 = vpop.f32.mrb[0].mxu0
      %v4310 = vpop.f32.mrb[0].mxu0
      %v4311 = vadd.f32 0.0, %v4310
      %v4312 = vpop.f32.mrb[0].mxu0
      %4313 = vmatprep.mubr.bf16.mxu0 0
      %4314 = vmatmul.mubr.bf16.gmra.mrb[0].mxu0 %v4031
      %v4315 = vpop.f32.mrb[0].mxu0
      %v4316 = vadd.f32 0.0, %v4315
      %v4317 = vpop.f32.mrb[0].mxu0
      %v4318 = vpop.f32.mrb[0].mxu0
      %v4319 = vadd.f32 0.0, %v4318
      %v4320 = vpop.f32.mrb[0].mxu0
      %4321 = vdwg.mxu0
      %v4322 = vadd.f32 %v3745, %v4068
      %v4323 = vadd.f32 %v3746, %v4071
      %v4324 = vadd.f32 %v3747, %v4076
      %v4325 = vadd.f32 %v3748, %v4079
      %v4326 = vadd.f32 %v3749, %v4084
      %v4327 = vadd.f32 %v3750, %v4087
      %v4328 = vadd.f32 %v3751, %v4092
      %v4329 = vadd.f32 %v3752, %v4095
      %v4330 = vadd.f32 %v3753, %v4100
      %v4331 = vadd.f32 %v3754, %v4103
      %v4332 = vadd.f32 %v3755, %v4108
      %v4333 = vadd.f32 %v3756, %v4111
      %v4334 = vadd.f32 %v3757, %v4116
      %v4335 = vadd.f32 %v3758, %v4119
      %v4336 = vadd.f32 %v3759, %v4124
      %v4337 = vadd.f32 %v3760, %v4127
      %v4338 = vadd.f32 %v3761, %v4132
      %v4339 = vadd.f32 %v3762, %v4135
      %v4340 = vadd.f32 %v3763, %v4140
      %v4341 = vadd.f32 %v3764, %v4143
      %v4342 = vadd.f32 %v3765, %v4148
      %v4343 = vadd.f32 %v3766, %v4151
      %v4344 = vadd.f32 %v3767, %v4156
      %v4345 = vadd.f32 %v3768, %v4159
      %v4346 = vadd.f32 %v3769, %v4164
      %v4347 = vadd.f32 %v3770, %v4167
      %v4348 = vadd.f32 %v3771, %v4172
      %v4349 = vadd.f32 %v3772, %v4175
      %v4350 = vadd.f32 %v3773, %v4180
      %v4351 = vadd.f32 %v3774, %v4183
      %v4352 = vadd.f32 %v3775, %v4188
      %v4353 = vadd.f32 %v3776, %v4191
      %v4354 = vadd.f32 %v3777, %v4196
      %v4355 = vadd.f32 %v3778, %v4199
      %v4356 = vadd.f32 %v3779, %v4204
      %v4357 = vadd.f32 %v3780, %v4207
      %v4358 = vadd.f32 %v3781, %v4212
      %v4359 = vadd.f32 %v3782, %v4215
      %v4360 = vadd.f32 %v3783, %v4220
      %v4361 = vadd.f32 %v3784, %v4223
      %v4362 = vadd.f32 %v3785, %v4228
      %v4363 = vadd.f32 %v3786, %v4231
      %v4364 = vadd.f32 %v3787, %v4236
      %v4365 = vadd.f32 %v3788, %v4239
      %v4366 = vadd.f32 %v3789, %v4244
      %v4367 = vadd.f32 %v3790, %v4247
      %v4368 = vadd.f32 %v3791, %v4252
      %v4369 = vadd.f32 %v3792, %v4255
      %v4370 = vadd.f32 %v3793, %v4260
      %v4371 = vadd.f32 %v3794, %v4263
      %v4372 = vadd.f32 %v3795, %v4268
      %v4373 = vadd.f32 %v3796, %v4271
      %v4374 = vadd.f32 %v3797, %v4276
      %v4375 = vadd.f32 %v3798, %v4279
      %v4376 = vadd.f32 %v3799, %v4284
      %v4377 = vadd.f32 %v3800, %v4287
      %v4378 = vadd.f32 %v3801, %v4292
      %v4379 = vadd.f32 %v3802, %v4295
      %v4380 = vadd.f32 %v3803, %v4300
      %v4381 = vadd.f32 %v3804, %v4303
      %v4382 = vadd.f32 %v3805, %v4308
      %v4383 = vadd.f32 %v3806, %v4311
      %v4384 = vadd.f32 %v3807, %v4316
      %v4385 = vadd.f32 %v3808, %v4319
      %v4386 = vld [vmem:[#allocation2 + $0x25] sm:$0xff]
      %v4387 = vld [vmem:[#allocation2 + $0x2d] sm:$0xff]
      %v4388 = vld [vmem:[#allocation2 + $0x35] sm:$0xff]
      %v4389 = vld [vmem:[#allocation2 + $0x3d] sm:$0xff]
      %v4390 = vld [vmem:[#allocation2 + $0x45] sm:$0xff]
      %v4391 = vld [vmem:[#allocation2 + $0x4d] sm:$0xff]
      %v4392 = vld [vmem:[#allocation2 + $0x55] sm:$0xff]
      %v4393 = vld [vmem:[#allocation2 + $0x5d] sm:$0xff]
      %v4394 = vld [vmem:[#allocation2 + $0x65] sm:$0xff]
      %v4395 = vld [vmem:[#allocation2 + $0x6d] sm:$0xff]
      %v4396 = vld [vmem:[#allocation2 + $0x75] sm:$0xff]
      %v4397 = vld [vmem:[#allocation2 + $0x7d] sm:$0xff]
      %v4398 = vld [vmem:[#allocation2 + $0x85] sm:$0xff]
      %v4399 = vld [vmem:[#allocation2 + $0x8d] sm:$0xff]
      %v4400 = vld [vmem:[#allocation2 + $0x95] sm:$0xff]
      %v4401 = vld [vmem:[#allocation2 + $0x9d] sm:$0xff]
      %v4402 = vld [vmem:[#allocation2 + $0xa5] sm:$0xff]
      %v4403 = vld [vmem:[#allocation2 + $0xad] sm:$0xff]
      %v4404 = vld [vmem:[#allocation2 + $0xb5] sm:$0xff]
      %v4405 = vld [vmem:[#allocation2 + $0xbd] sm:$0xff]
      %v4406 = vld [vmem:[#allocation2 + $0xc5] sm:$0xff]
      %v4407 = vld [vmem:[#allocation2 + $0xcd] sm:$0xff]
      %v4408 = vld [vmem:[#allocation2 + $0xd5] sm:$0xff]
      %v4409 = vld [vmem:[#allocation2 + $0xdd] sm:$0xff]
      %v4410 = vld [vmem:[#allocation2 + $0xe5] sm:$0xff]
      %v4411 = vld [vmem:[#allocation2 + $0xed] sm:$0xff]
      %v4412 = vld [vmem:[#allocation2 + $0xf5] sm:$0xff]
      %v4413 = vld [vmem:[#allocation2 + $0xfd] sm:$0xff]
      %v4414 = vld [vmem:[#allocation2 + $0x105] sm:$0xff]
      %v4415 = vld [vmem:[#allocation2 + $0x10d] sm:$0xff]
      %v4416 = vld [vmem:[#allocation2 + $0x115] sm:$0xff]
      %v4417 = vld [vmem:[#allocation2 + $0x11d] sm:$0xff]
      %v4418 = vld [vmem:[#allocation2 + $0x125] sm:$0xff]
      %v4419 = vld [vmem:[#allocation2 + $0x12d] sm:$0xff]
      %v4420 = vld [vmem:[#allocation2 + $0x135] sm:$0xff]
      %v4421 = vld [vmem:[#allocation2 + $0x13d] sm:$0xff]
      %v4422 = vld [vmem:[#allocation2 + $0x145] sm:$0xff]
      %v4423 = vld [vmem:[#allocation2 + $0x14d] sm:$0xff]
      %v4424 = vld [vmem:[#allocation2 + $0x155] sm:$0xff]
      %v4425 = vld [vmem:[#allocation2 + $0x15d] sm:$0xff]
      %v4426 = vld [vmem:[#allocation2 + $0x165] sm:$0xff]
      %v4427 = vld [vmem:[#allocation2 + $0x16d] sm:$0xff]
      %v4428 = vld [vmem:[#allocation2 + $0x175] sm:$0xff]
      %v4429 = vld [vmem:[#allocation2 + $0x17d] sm:$0xff]
      %v4430 = vld [vmem:[#allocation2 + $0x185] sm:$0xff]
      %v4431 = vld [vmem:[#allocation2 + $0x18d] sm:$0xff]
      %v4432 = vld [vmem:[#allocation2 + $0x195] sm:$0xff]
      %v4433 = vld [vmem:[#allocation2 + $0x19d] sm:$0xff]
      %v4434 = vld [vmem:[#allocation2 + $0x1a5] sm:$0xff]
      %v4435 = vld [vmem:[#allocation2 + $0x1ad] sm:$0xff]
      %v4436 = vld [vmem:[#allocation2 + $0x1b5] sm:$0xff]
      %v4437 = vld [vmem:[#allocation2 + $0x1bd] sm:$0xff]
      %v4438 = vld [vmem:[#allocation2 + $0x1c5] sm:$0xff]
      %v4439 = vld [vmem:[#allocation2 + $0x1cd] sm:$0xff]
      %v4440 = vld [vmem:[#allocation2 + $0x1d5] sm:$0xff]
      %v4441 = vld [vmem:[#allocation2 + $0x1dd] sm:$0xff]
      %v4442 = vld [vmem:[#allocation2 + $0x1e5] sm:$0xff]
      %v4443 = vld [vmem:[#allocation2 + $0x1ed] sm:$0xff]
      %v4444 = vld [vmem:[#allocation2 + $0x1f5] sm:$0xff]
      %v4445 = vld [vmem:[#allocation2 + $0x1fd] sm:$0xff]
      %v4446 = vld [vmem:[#allocation2 + $0x205] sm:$0xff]
      %v4447 = vld [vmem:[#allocation2 + $0x20d] sm:$0xff]
      %v4448 = vld [vmem:[#allocation2 + $0x215] sm:$0xff]
      %v4449 = vld [vmem:[#allocation2 + $0x21d] sm:$0xff]
      %v4450 = vpack.c.bf16 %v4387, %v4386
      %v4451 = vpack.c.bf16 %v4389, %v4388
      %v4452 = vpack.c.bf16 %v4391, %v4390
      %v4453 = vpack.c.bf16 %v4393, %v4392
      %v4454 = vpack.c.bf16 %v4395, %v4394
      %v4455 = vpack.c.bf16 %v4397, %v4396
      %v4456 = vpack.c.bf16 %v4399, %v4398
      %v4457 = vpack.c.bf16 %v4401, %v4400
      %v4458 = vpack.c.bf16 %v4403, %v4402
      %v4459 = vpack.c.bf16 %v4405, %v4404
      %v4460 = vpack.c.bf16 %v4407, %v4406
      %v4461 = vpack.c.bf16 %v4409, %v4408
      %v4462 = vpack.c.bf16 %v4411, %v4410
      %v4463 = vpack.c.bf16 %v4413, %v4412
      %v4464 = vpack.c.bf16 %v4415, %v4414
      %v4465 = vpack.c.bf16 %v4417, %v4416
      %v4466 = vpack.c.bf16 %v4419, %v4418
      %v4467 = vpack.c.bf16 %v4421, %v4420
      %v4468 = vpack.c.bf16 %v4423, %v4422
      %v4469 = vpack.c.bf16 %v4425, %v4424
      %v4470 = vpack.c.bf16 %v4427, %v4426
      %v4471 = vpack.c.bf16 %v4429, %v4428
      %v4472 = vpack.c.bf16 %v4431, %v4430
      %v4473 = vpack.c.bf16 %v4433, %v4432
      %v4474 = vpack.c.bf16 %v4435, %v4434
      %v4475 = vpack.c.bf16 %v4437, %v4436
      %v4476 = vpack.c.bf16 %v4439, %v4438
      %v4477 = vpack.c.bf16 %v4441, %v4440
      %v4478 = vpack.c.bf16 %v4443, %v4442
      %v4479 = vpack.c.bf16 %v4445, %v4444
      %v4480 = vpack.c.bf16 %v4447, %v4446
      %v4481 = vpack.c.bf16 %v4449, %v4448
      %v4482 = vld [vmem:[%s2 + $0xe0] sm:$0xf]
      %v4483 = vld [vmem:[%s2 + $0xe4] sm:$0xf]
      %v4484 = vld [vmem:[%s2 + $0xe8] sm:$0xf]
      %v4485 = vld [vmem:[%s2 + $0xec] sm:$0xf]
      %v4486 = vld [vmem:[%s2 + $0xf0] sm:$0xf]
      %v4487 = vld [vmem:[%s2 + $0xf4] sm:$0xf]
      %v4488 = vld [vmem:[%s2 + $0xf8] sm:$0xf]
      %v4489 = vld [vmem:[%s2 + $0xfc] sm:$0xf]
      %v4498 = vunpack.c.l.b16 %v4482
      %v4499 = vunpack.c.l.b16 %v4483
      %v4500 = vunpack.c.l.b16 %v4484
      %v4501 = vunpack.c.l.b16 %v4485
      %v4502 = vunpack.c.l.b16 %v4486
      %v4503 = vunpack.c.l.b16 %v4487
      %v4504 = vunpack.c.l.b16 %v4488
      %v4505 = vunpack.c.l.b16 %v4489
      %v4506 = vpack.c.b16 %v4499, %v4498
      %v4507 = vpack.c.b16 %v4501, %v4500
      %v4508 = vpack.c.b16 %v4503, %v4502
      %v4509 = vpack.c.b16 %v4505, %v4504
      %v4515 = vsel %vm386, %v4450, 0
      %v4518 = vsel %vm386, %v4451, 0
      %v4521 = vsel %vm386, %v4452, 0
      %v4524 = vsel %vm386, %v4453, 0
      %v4527 = vsel %vm386, %v4454, 0
      %v4530 = vsel %vm386, %v4455, 0
      %v4533 = vsel %vm386, %v4456, 0
      %v4536 = vsel %vm386, %v4457, 0
      %v4539 = vsel %vm386, %v4458, 0
      %v4542 = vsel %vm386, %v4459, 0
      %v4545 = vsel %vm386, %v4460, 0
      %v4548 = vsel %vm386, %v4461, 0
      %v4551 = vsel %vm386, %v4462, 0
      %v4554 = vsel %vm386, %v4463, 0
      %v4557 = vsel %vm386, %v4464, 0
      %v4560 = vsel %vm386, %v4465, 0
      %v4563 = vsel %vm386, %v4466, 0
      %v4566 = vsel %vm386, %v4467, 0
      %v4569 = vsel %vm386, %v4468, 0
      %v4572 = vsel %vm386, %v4469, 0
      %v4575 = vsel %vm386, %v4470, 0
      %v4578 = vsel %vm386, %v4471, 0
      %v4581 = vsel %vm386, %v4472, 0
      %v4584 = vsel %vm386, %v4473, 0
      %v4587 = vsel %vm386, %v4474, 0
      %v4590 = vsel %vm386, %v4475, 0
      %v4593 = vsel %vm386, %v4476, 0
      %v4596 = vsel %vm386, %v4477, 0
      %v4599 = vsel %vm386, %v4478, 0
      %v4602 = vsel %vm386, %v4479, 0
      %v4605 = vsel %vm386, %v4480, 0
      %v4608 = vsel %vm386, %v4481, 0
      %4610 = vmatprep.subr.bf16.mxu0 0
      %4611 = vmatpush1.bf16.msra.mxu0 %v4506
      %4612 = vmatprep.subr.bf16.mxu0 0
      %4613 = vmatpush1.bf16.msra.mxu0 %v4507
      %4614 = vmatprep.subr.bf16.mxu0 0
      %4615 = vmatpush1.bf16.msra.mxu0 %v4508
      %4616 = vmatprep.subr.bf16.mxu0 0
      %4617 = vmatpush1.bf16.msra.mxu0 %v4509
      %4618 = vmatprep.subr.bf16.mxu0 0
      %4619 = vmatpush1.bf16.msra.mxu0 0
      %4620 = vmatprep.subr.bf16.mxu0 0
      %4621 = vmatpush1.bf16.msra.mxu0 0
      %4622 = vmatprep.subr.bf16.mxu0 0
      %4623 = vmatpush1.bf16.msra.mxu0 0
      %4624 = vmatprep.subr.bf16.mxu0 0
      %4625 = vmatpush1.bf16.msra.mxu0 0
      %4626 = vmatprep.subr.bf16.mxu0 0
      %4627 = vmatpush1.bf16.msra.mxu0 0
      %4628 = vmatprep.subr.bf16.mxu0 0
      %4629 = vmatpush1.bf16.msra.mxu0 0
      %4630 = vmatprep.subr.bf16.mxu0 0
      %4631 = vmatpush1.bf16.msra.mxu0 0
      %4632 = vmatprep.subr.bf16.mxu0 0
      %4633 = vmatpush1.bf16.msra.mxu0 0
      %4634 = vmatprep.subr.bf16.mxu0 0
      %4635 = vmatpush1.bf16.msra.mxu0 0
      %4636 = vmatprep.subr.bf16.mxu0 0
      %4637 = vmatpush1.bf16.msra.mxu0 0
      %4638 = vmatprep.subr.bf16.mxu0 0
      %4639 = vmatpush1.bf16.msra.mxu0 0
      %4640 = vmatprep.subr.bf16.mxu0 0
      %4641 = vmatpush1.bf16.msra.mxu0 0
      %4642 = vmatprep.mubr.bf16.mxu0 0
      %4643 = vmatmul.mubr.bf16.gmra.mrb[0].mxu0 %v4515
      %v4644 = vpop.f32.mrb[0].mxu0
      %v4645 = vadd.f32 0.0, %v4644
      %v4646 = vpop.f32.mrb[0].mxu0
      %v4647 = vpop.f32.mrb[0].mxu0
      %v4648 = vadd.f32 0.0, %v4647
      %v4649 = vpop.f32.mrb[0].mxu0
      %4650 = vmatprep.mubr.bf16.mxu0 0
      %4651 = vmatmul.mubr.bf16.gmra.mrb[0].mxu0 %v4518
      %v4652 = vpop.f32.mrb[0].mxu0
      %v4653 = vadd.f32 0.0, %v4652
      %v4654 = vpop.f32.mrb[0].mxu0
      %v4655 = vpop.f32.mrb[0].mxu0
      %v4656 = vadd.f32 0.0, %v4655
      %v4657 = vpop.f32.mrb[0].mxu0
      %4658 = vmatprep.mubr.bf16.mxu0 0
      %4659 = vmatmul.mubr.bf16.gmra.mrb[0].mxu0 %v4521
      %v4660 = vpop.f32.mrb[0].mxu0
      %v4661 = vadd.f32 0.0, %v4660
      %v4662 = vpop.f32.mrb[0].mxu0
      %v4663 = vpop.f32.mrb[0].mxu0
      %v4664 = vadd.f32 0.0, %v4663
      %v4665 = vpop.f32.mrb[0].mxu0
      %4666 = vmatprep.mubr.bf16.mxu0 0
      %4667 = vmatmul.mubr.bf16.gmra.mrb[0].mxu0 %v4524
      %v4668 = vpop.f32.mrb[0].mxu0
      %v4669 = vadd.f32 0.0, %v4668
      %v4670 = vpop.f32.mrb[0].mxu0
      %v4671 = vpop.f32.mrb[0].mxu0
      %v4672 = vadd.f32 0.0, %v4671
      %v4673 = vpop.f32.mrb[0].mxu0
      %4674 = vmatprep.mubr.bf16.mxu0 0
      %4675 = vmatmul.mubr.bf16.gmra.mrb[0].mxu0 %v4527
      %v4676 = vpop.f32.mrb[0].mxu0
      %v4677 = vadd.f32 0.0, %v4676
      %v4678 = vpop.f32.mrb[0].mxu0
      %v4679 = vpop.f32.mrb[0].mxu0
      %v4680 = vadd.f32 0.0, %v4679
      %v4681 = vpop.f32.mrb[0].mxu0
      %4682 = vmatprep.mubr.bf16.mxu0 0
      %4683 = vmatmul.mubr.bf16.gmra.mrb[0].mxu0 %v4530
      %v4684 = vpop.f32.mrb[0].mxu0
      %v4685 = vadd.f32 0.0, %v4684
      %v4686 = vpop.f32.mrb[0].mxu0
      %v4687 = vpop.f32.mrb[0].mxu0
      %v4688 = vadd.f32 0.0, %v4687
      %v4689 = vpop.f32.mrb[0].mxu0
      %4690 = vmatprep.mubr.bf16.mxu0 0
      %4691 = vmatmul.mubr.bf16.gmra.mrb[0].mxu0 %v4533
      %v4692 = vpop.f32.mrb[0].mxu0
      %v4693 = vadd.f32 0.0, %v4692
      %v4694 = vpop.f32.mrb[0].mxu0
      %v4695 = vpop.f32.mrb[0].mxu0
      %v4696 = vadd.f32 0.0, %v4695
      %v4697 = vpop.f32.mrb[0].mxu0
      %4698 = vmatprep.mubr.bf16.mxu0 0
      %4699 = vmatmul.mubr.bf16.gmra.mrb[0].mxu0 %v4536
      %v4700 = vpop.f32.mrb[0].mxu0
      %v4701 = vadd.f32 0.0, %v4700
      %v4702 = vpop.f32.mrb[0].mxu0
      %v4703 = vpop.f32.mrb[0].mxu0
      %v4704 = vadd.f32 0.0, %v4703
      %v4705 = vpop.f32.mrb[0].mxu0
      %4706 = vmatprep.mubr.bf16.mxu0 0
      %4707 = vmatmul.mubr.bf16.gmra.mrb[0].mxu0 %v4539
      %v4708 = vpop.f32.mrb[0].mxu0
      %v4709 = vadd.f32 0.0, %v4708
      %v4710 = vpop.f32.mrb[0].mxu0
      %v4711 = vpop.f32.mrb[0].mxu0
      %v4712 = vadd.f32 0.0, %v4711
      %v4713 = vpop.f32.mrb[0].mxu0
      %4714 = vmatprep.mubr.bf16.mxu0 0
      %4715 = vmatmul.mubr.bf16.gmra.mrb[0].mxu0 %v4542
      %v4716 = vpop.f32.mrb[0].mxu0
      %v4717 = vadd.f32 0.0, %v4716
      %v4718 = vpop.f32.mrb[0].mxu0
      %v4719 = vpop.f32.mrb[0].mxu0
      %v4720 = vadd.f32 0.0, %v4719
      %v4721 = vpop.f32.mrb[0].mxu0
      %4722 = vmatprep.mubr.bf16.mxu0 0
      %4723 = vmatmul.mubr.bf16.gmra.mrb[0].mxu0 %v4545
      %v4724 = vpop.f32.mrb[0].mxu0
      %v4725 = vadd.f32 0.0, %v4724
      %v4726 = vpop.f32.mrb[0].mxu0
      %v4727 = vpop.f32.mrb[0].mxu0
      %v4728 = vadd.f32 0.0, %v4727
      %v4729 = vpop.f32.mrb[0].mxu0
      %4730 = vmatprep.mubr.bf16.mxu0 0
      %4731 = vmatmul.mubr.bf16.gmra.mrb[0].mxu0 %v4548
      %v4732 = vpop.f32.mrb[0].mxu0
      %v4733 = vadd.f32 0.0, %v4732
      %v4734 = vpop.f32.mrb[0].mxu0
      %v4735 = vpop.f32.mrb[0].mxu0
      %v4736 = vadd.f32 0.0, %v4735
      %v4737 = vpop.f32.mrb[0].mxu0
      %4738 = vmatprep.mubr.bf16.mxu0 0
      %4739 = vmatmul.mubr.bf16.gmra.mrb[0].mxu0 %v4551
      %v4740 = vpop.f32.mrb[0].mxu0
      %v4741 = vadd.f32 0.0, %v4740
      %v4742 = vpop.f32.mrb[0].mxu0
      %v4743 = vpop.f32.mrb[0].mxu0
      %v4744 = vadd.f32 0.0, %v4743
      %v4745 = vpop.f32.mrb[0].mxu0
      %4746 = vmatprep.mubr.bf16.mxu0 0
      %4747 = vmatmul.mubr.bf16.gmra.mrb[0].mxu0 %v4554
      %v4748 = vpop.f32.mrb[0].mxu0
      %v4749 = vadd.f32 0.0, %v4748
      %v4750 = vpop.f32.mrb[0].mxu0
      %v4751 = vpop.f32.mrb[0].mxu0
      %v4752 = vadd.f32 0.0, %v4751
      %v4753 = vpop.f32.mrb[0].mxu0
      %4754 = vmatprep.mubr.bf16.mxu0 0
      %4755 = vmatmul.mubr.bf16.gmra.mrb[0].mxu0 %v4557
      %v4756 = vpop.f32.mrb[0].mxu0
      %v4757 = vadd.f32 0.0, %v4756
      %v4758 = vpop.f32.mrb[0].mxu0
      %v4759 = vpop.f32.mrb[0].mxu0
      %v4760 = vadd.f32 0.0, %v4759
      %v4761 = vpop.f32.mrb[0].mxu0
      %4762 = vmatprep.mubr.bf16.mxu0 0
      %4763 = vmatmul.mubr.bf16.gmra.mrb[0].mxu0 %v4560
      %v4764 = vpop.f32.mrb[0].mxu0
      %v4765 = vadd.f32 0.0, %v4764
      %v4766 = vpop.f32.mrb[0].mxu0
      %v4767 = vpop.f32.mrb[0].mxu0
      %v4768 = vadd.f32 0.0, %v4767
      %v4769 = vpop.f32.mrb[0].mxu0
      %4770 = vmatprep.mubr.bf16.mxu0 0
      %4771 = vmatmul.mubr.bf16.gmra.mrb[0].mxu0 %v4563
      %v4772 = vpop.f32.mrb[0].mxu0
      %v4773 = vadd.f32 0.0, %v4772
      %v4774 = vpop.f32.mrb[0].mxu0
      %v4775 = vpop.f32.mrb[0].mxu0
      %v4776 = vadd.f32 0.0, %v4775
      %v4777 = vpop.f32.mrb[0].mxu0
      %4778 = vmatprep.mubr.bf16.mxu0 0
      %4779 = vmatmul.mubr.bf16.gmra.mrb[0].mxu0 %v4566
      %v4780 = vpop.f32.mrb[0].mxu0
      %v4781 = vadd.f32 0.0, %v4780
      %v4782 = vpop.f32.mrb[0].mxu0
      %v4783 = vpop.f32.mrb[0].mxu0
      %v4784 = vadd.f32 0.0, %v4783
      %v4785 = vpop.f32.mrb[0].mxu0
      %4786 = vmatprep.mubr.bf16.mxu0 0
      %4787 = vmatmul.mubr.bf16.gmra.mrb[0].mxu0 %v4569
      %v4788 = vpop.f32.mrb[0].mxu0
      %v4789 = vadd.f32 0.0, %v4788
      %v4790 = vpop.f32.mrb[0].mxu0
      %v4791 = vpop.f32.mrb[0].mxu0
      %v4792 = vadd.f32 0.0, %v4791
      %v4793 = vpop.f32.mrb[0].mxu0
      %4794 = vmatprep.mubr.bf16.mxu0 0
      %4795 = vmatmul.mubr.bf16.gmra.mrb[0].mxu0 %v4572
      %v4796 = vpop.f32.mrb[0].mxu0
      %v4797 = vadd.f32 0.0, %v4796
      %v4798 = vpop.f32.mrb[0].mxu0
      %v4799 = vpop.f32.mrb[0].mxu0
      %v4800 = vadd.f32 0.0, %v4799
      %v4801 = vpop.f32.mrb[0].mxu0
      %4802 = vmatprep.mubr.bf16.mxu0 0
      %4803 = vmatmul.mubr.bf16.gmra.mrb[0].mxu0 %v4575
      %v4804 = vpop.f32.mrb[0].mxu0
      %v4805 = vadd.f32 0.0, %v4804
      %v4806 = vpop.f32.mrb[0].mxu0
      %v4807 = vpop.f32.mrb[0].mxu0
      %v4808 = vadd.f32 0.0, %v4807
      %v4809 = vpop.f32.mrb[0].mxu0
      %4810 = vmatprep.mubr.bf16.mxu0 0
      %4811 = vmatmul.mubr.bf16.gmra.mrb[0].mxu0 %v4578
      %v4812 = vpop.f32.mrb[0].mxu0
      %v4813 = vadd.f32 0.0, %v4812
      %v4814 = vpop.f32.mrb[0].mxu0
      %v4815 = vpop.f32.mrb[0].mxu0
      %v4816 = vadd.f32 0.0, %v4815
      %v4817 = vpop.f32.mrb[0].mxu0
      %4818 = vmatprep.mubr.bf16.mxu0 0
      %4819 = vmatmul.mubr.bf16.gmra.mrb[0].mxu0 %v4581
      %v4820 = vpop.f32.mrb[0].mxu0
      %v4821 = vadd.f32 0.0, %v4820
      %v4822 = vpop.f32.mrb[0].mxu0
      %v4823 = vpop.f32.mrb[0].mxu0
      %v4824 = vadd.f32 0.0, %v4823
      %v4825 = vpop.f32.mrb[0].mxu0
      %4826 = vmatprep.mubr.bf16.mxu0 0
      %4827 = vmatmul.mubr.bf16.gmra.mrb[0].mxu0 %v4584
      %v4828 = vpop.f32.mrb[0].mxu0
      %v4829 = vadd.f32 0.0, %v4828
      %v4830 = vpop.f32.mrb[0].mxu0
      %v4831 = vpop.f32.mrb[0].mxu0
      %v4832 = vadd.f32 0.0, %v4831
      %v4833 = vpop.f32.mrb[0].mxu0
      %4834 = vmatprep.mubr.bf16.mxu0 0
      %4835 = vmatmul.mubr.bf16.gmra.mrb[0].mxu0 %v4587
      %v4836 = vpop.f32.mrb[0].mxu0
      %v4837 = vadd.f32 0.0, %v4836
      %v4838 = vpop.f32.mrb[0].mxu0
      %v4839 = vpop.f32.mrb[0].mxu0
      %v4840 = vadd.f32 0.0, %v4839
      %v4841 = vpop.f32.mrb[0].mxu0
      %4842 = vmatprep.mubr.bf16.mxu0 0
      %4843 = vmatmul.mubr.bf16.gmra.mrb[0].mxu0 %v4590
      %v4844 = vpop.f32.mrb[0].mxu0
      %v4845 = vadd.f32 0.0, %v4844
      %v4846 = vpop.f32.mrb[0].mxu0
      %v4847 = vpop.f32.mrb[0].mxu0
      %v4848 = vadd.f32 0.0, %v4847
      %v4849 = vpop.f32.mrb[0].mxu0
      %4850 = vmatprep.mubr.bf16.mxu0 0
      %4851 = vmatmul.mubr.bf16.gmra.mrb[0].mxu0 %v4593
      %v4852 = vpop.f32.mrb[0].mxu0
      %v4853 = vadd.f32 0.0, %v4852
      %v4854 = vpop.f32.mrb[0].mxu0
      %v4855 = vpop.f32.mrb[0].mxu0
      %v4856 = vadd.f32 0.0, %v4855
      %v4857 = vpop.f32.mrb[0].mxu0
      %4858 = vmatprep.mubr.bf16.mxu0 0
      %4859 = vmatmul.mubr.bf16.gmra.mrb[0].mxu0 %v4596
      %v4860 = vpop.f32.mrb[0].mxu0
      %v4861 = vadd.f32 0.0, %v4860
      %v4862 = vpop.f32.mrb[0].mxu0
      %v4863 = vpop.f32.mrb[0].mxu0
      %v4864 = vadd.f32 0.0, %v4863
      %v4865 = vpop.f32.mrb[0].mxu0
      %4866 = vmatprep.mubr.bf16.mxu0 0
      %4867 = vmatmul.mubr.bf16.gmra.mrb[0].mxu0 %v4599
      %v4868 = vpop.f32.mrb[0].mxu0
      %v4869 = vadd.f32 0.0, %v4868
      %v4870 = vpop.f32.mrb[0].mxu0
      %v4871 = vpop.f32.mrb[0].mxu0
      %v4872 = vadd.f32 0.0, %v4871
      %v4873 = vpop.f32.mrb[0].mxu0
      %4874 = vmatprep.mubr.bf16.mxu0 0
      %4875 = vmatmul.mubr.bf16.gmra.mrb[0].mxu0 %v4602
      %v4876 = vpop.f32.mrb[0].mxu0
      %v4877 = vadd.f32 0.0, %v4876
      %v4878 = vpop.f32.mrb[0].mxu0
      %v4879 = vpop.f32.mrb[0].mxu0
      %v4880 = vadd.f32 0.0, %v4879
      %v4881 = vpop.f32.mrb[0].mxu0
      %4882 = vmatprep.mubr.bf16.mxu0 0
      %4883 = vmatmul.mubr.bf16.gmra.mrb[0].mxu0 %v4605
      %v4884 = vpop.f32.mrb[0].mxu0
      %v4885 = vadd.f32 0.0, %v4884
      %v4886 = vpop.f32.mrb[0].mxu0
      %v4887 = vpop.f32.mrb[0].mxu0
      %v4888 = vadd.f32 0.0, %v4887
      %v4889 = vpop.f32.mrb[0].mxu0
      %4890 = vmatprep.mubr.bf16.mxu0 0
      %4891 = vmatmul.mubr.bf16.gmra.mrb[0].mxu0 %v4608
      %v4892 = vpop.f32.mrb[0].mxu0
      %v4893 = vadd.f32 0.0, %v4892
      %v4894 = vpop.f32.mrb[0].mxu0
      %v4895 = vpop.f32.mrb[0].mxu0
      %v4896 = vadd.f32 0.0, %v4895
      %v4897 = vpop.f32.mrb[0].mxu0
      %4898 = vdwg.mxu0
      %v4899 = vadd.f32 %v4322, %v4645
      %v4900 = vadd.f32 %v4323, %v4648
      %v4901 = vadd.f32 %v4324, %v4653
      %v4902 = vadd.f32 %v4325, %v4656
      %v4903 = vadd.f32 %v4326, %v4661
      %v4904 = vadd.f32 %v4327, %v4664
      %v4905 = vadd.f32 %v4328, %v4669
      %v4906 = vadd.f32 %v4329, %v4672
      %v4907 = vadd.f32 %v4330, %v4677
      %v4908 = vadd.f32 %v4331, %v4680
      %v4909 = vadd.f32 %v4332, %v4685
      %v4910 = vadd.f32 %v4333, %v4688
      %v4911 = vadd.f32 %v4334, %v4693
      %v4912 = vadd.f32 %v4335, %v4696
      %v4913 = vadd.f32 %v4336, %v4701
      %v4914 = vadd.f32 %v4337, %v4704
      %v4915 = vadd.f32 %v4338, %v4709
      %v4916 = vadd.f32 %v4339, %v4712
      %v4917 = vadd.f32 %v4340, %v4717
      %v4918 = vadd.f32 %v4341, %v4720
      %v4919 = vadd.f32 %v4342, %v4725
      %v4920 = vadd.f32 %v4343, %v4728
      %v4921 = vadd.f32 %v4344, %v4733
      %v4922 = vadd.f32 %v4345, %v4736
      %v4923 = vadd.f32 %v4346, %v4741
      %v4924 = vadd.f32 %v4347, %v4744
      %v4925 = vadd.f32 %v4348, %v4749
      %v4926 = vadd.f32 %v4349, %v4752
      %v4927 = vadd.f32 %v4350, %v4757
      %v4928 = vadd.f32 %v4351, %v4760
      %v4929 = vadd.f32 %v4352, %v4765
      %v4930 = vadd.f32 %v4353, %v4768
      %v4931 = vadd.f32 %v4354, %v4773
      %v4932 = vadd.f32 %v4355, %v4776
      %v4933 = vadd.f32 %v4356, %v4781
      %v4934 = vadd.f32 %v4357, %v4784
      %v4935 = vadd.f32 %v4358, %v4789
      %v4936 = vadd.f32 %v4359, %v4792
      %v4937 = vadd.f32 %v4360, %v4797
      %v4938 = vadd.f32 %v4361, %v4800
      %v4939 = vadd.f32 %v4362, %v4805
      %v4940 = vadd.f32 %v4363, %v4808
      %v4941 = vadd.f32 %v4364, %v4813
      %v4942 = vadd.f32 %v4365, %v4816
      %v4943 = vadd.f32 %v4366, %v4821
      %v4944 = vadd.f32 %v4367, %v4824
      %v4945 = vadd.f32 %v4368, %v4829
      %v4946 = vadd.f32 %v4369, %v4832
      %v4947 = vadd.f32 %v4370, %v4837
      %v4948 = vadd.f32 %v4371, %v4840
      %v4949 = vadd.f32 %v4372, %v4845
      %v4950 = vadd.f32 %v4373, %v4848
      %v4951 = vadd.f32 %v4374, %v4853
      %v4952 = vadd.f32 %v4375, %v4856
      %v4953 = vadd.f32 %v4376, %v4861
      %v4954 = vadd.f32 %v4377, %v4864
      %v4955 = vadd.f32 %v4378, %v4869
      %v4956 = vadd.f32 %v4379, %v4872
      %v4957 = vadd.f32 %v4380, %v4877
      %v4958 = vadd.f32 %v4381, %v4880
      %v4959 = vadd.f32 %v4382, %v4885
      %v4960 = vadd.f32 %v4383, %v4888
      %v4961 = vadd.f32 %v4384, %v4893
      %v4962 = vadd.f32 %v4385, %v4896
      %v4963 = vld [vmem:[#allocation2 + $0x26] sm:$0xff]
      %v4964 = vld [vmem:[#allocation2 + $0x2e] sm:$0xff]
      %v4965 = vld [vmem:[#allocation2 + $0x36] sm:$0xff]
      %v4966 = vld [vmem:[#allocation2 + $0x3e] sm:$0xff]
      %v4967 = vld [vmem:[#allocation2 + $0x46] sm:$0xff]
      %v4968 = vld [vmem:[#allocation2 + $0x4e] sm:$0xff]
      %v4969 = vld [vmem:[#allocation2 + $0x56] sm:$0xff]
      %v4970 = vld [vmem:[#allocation2 + $0x5e] sm:$0xff]
      %v4971 = vld [vmem:[#allocation2 + $0x66] sm:$0xff]
      %v4972 = vld [vmem:[#allocation2 + $0x6e] sm:$0xff]
      %v4973 = vld [vmem:[#allocation2 + $0x76] sm:$0xff]
      %v4974 = vld [vmem:[#allocation2 + $0x7e] sm:$0xff]
      %v4975 = vld [vmem:[#allocation2 + $0x86] sm:$0xff]
      %v4976 = vld [vmem:[#allocation2 + $0x8e] sm:$0xff]
      %v4977 = vld [vmem:[#allocation2 + $0x96] sm:$0xff]
      %v4978 = vld [vmem:[#allocation2 + $0x9e] sm:$0xff]
      %v4979 = vld [vmem:[#allocation2 + $0xa6] sm:$0xff]
      %v4980 = vld [vmem:[#allocation2 + $0xae] sm:$0xff]
      %v4981 = vld [vmem:[#allocation2 + $0xb6] sm:$0xff]
      %v4982 = vld [vmem:[#allocation2 + $0xbe] sm:$0xff]
      %v4983 = vld [vmem:[#allocation2 + $0xc6] sm:$0xff]
      %v4984 = vld [vmem:[#allocation2 + $0xce] sm:$0xff]
      %v4985 = vld [vmem:[#allocation2 + $0xd6] sm:$0xff]
      %v4986 = vld [vmem:[#allocation2 + $0xde] sm:$0xff]
      %v4987 = vld [vmem:[#allocation2 + $0xe6] sm:$0xff]
      %v4988 = vld [vmem:[#allocation2 + $0xee] sm:$0xff]
      %v4989 = vld [vmem:[#allocation2 + $0xf6] sm:$0xff]
      %v4990 = vld [vmem:[#allocation2 + $0xfe] sm:$0xff]
      %v4991 = vld [vmem:[#allocation2 + $0x106] sm:$0xff]
      %v4992 = vld [vmem:[#allocation2 + $0x10e] sm:$0xff]
      %v4993 = vld [vmem:[#allocation2 + $0x116] sm:$0xff]
      %v4994 = vld [vmem:[#allocation2 + $0x11e] sm:$0xff]
      %v4995 = vld [vmem:[#allocation2 + $0x126] sm:$0xff]
      %v4996 = vld [vmem:[#allocation2 + $0x12e] sm:$0xff]
      %v4997 = vld [vmem:[#allocation2 + $0x136] sm:$0xff]
      %v4998 = vld [vmem:[#allocation2 + $0x13e] sm:$0xff]
      %v4999 = vld [vmem:[#allocation2 + $0x146] sm:$0xff]
      %v5000 = vld [vmem:[#allocation2 + $0x14e] sm:$0xff]
      %v5001 = vld [vmem:[#allocation2 + $0x156] sm:$0xff]
      %v5002 = vld [vmem:[#allocation2 + $0x15e] sm:$0xff]
      %v5003 = vld [vmem:[#allocation2 + $0x166] sm:$0xff]
      %v5004 = vld [vmem:[#allocation2 + $0x16e] sm:$0xff]
      %v5005 = vld [vmem:[#allocation2 + $0x176] sm:$0xff]
      %v5006 = vld [vmem:[#allocation2 + $0x17e] sm:$0xff]
      %v5007 = vld [vmem:[#allocation2 + $0x186] sm:$0xff]
      %v5008 = vld [vmem:[#allocation2 + $0x18e] sm:$0xff]
      %v5009 = vld [vmem:[#allocation2 + $0x196] sm:$0xff]
      %v5010 = vld [vmem:[#allocation2 + $0x19e] sm:$0xff]
      %v5011 = vld [vmem:[#allocation2 + $0x1a6] sm:$0xff]
      %v5012 = vld [vmem:[#allocation2 + $0x1ae] sm:$0xff]
      %v5013 = vld [vmem:[#allocation2 + $0x1b6] sm:$0xff]
      %v5014 = vld [vmem:[#allocation2 + $0x1be] sm:$0xff]
      %v5015 = vld [vmem:[#allocation2 + $0x1c6] sm:$0xff]
      %v5016 = vld [vmem:[#allocation2 + $0x1ce] sm:$0xff]
      %v5017 = vld [vmem:[#allocation2 + $0x1d6] sm:$0xff]
      %v5018 = vld [vmem:[#allocation2 + $0x1de] sm:$0xff]
      %v5019 = vld [vmem:[#allocation2 + $0x1e6] sm:$0xff]
      %v5020 = vld [vmem:[#allocation2 + $0x1ee] sm:$0xff]
      %v5021 = vld [vmem:[#allocation2 + $0x1f6] sm:$0xff]
      %v5022 = vld [vmem:[#allocation2 + $0x1fe] sm:$0xff]
      %v5023 = vld [vmem:[#allocation2 + $0x206] sm:$0xff]
      %v5024 = vld [vmem:[#allocation2 + $0x20e] sm:$0xff]
      %v5025 = vld [vmem:[#allocation2 + $0x216] sm:$0xff]
      %v5026 = vld [vmem:[#allocation2 + $0x21e] sm:$0xff]
      %v5027 = vpack.c.bf16 %v4964, %v4963
      %v5028 = vpack.c.bf16 %v4966, %v4965
      %v5029 = vpack.c.bf16 %v4968, %v4967
      %v5030 = vpack.c.bf16 %v4970, %v4969
      %v5031 = vpack.c.bf16 %v4972, %v4971
      %v5032 = vpack.c.bf16 %v4974, %v4973
      %v5033 = vpack.c.bf16 %v4976, %v4975
      %v5034 = vpack.c.bf16 %v4978, %v4977
      %v5035 = vpack.c.bf16 %v4980, %v4979
      %v5036 = vpack.c.bf16 %v4982, %v4981
      %v5037 = vpack.c.bf16 %v4984, %v4983
      %v5038 = vpack.c.bf16 %v4986, %v4985
      %v5039 = vpack.c.bf16 %v4988, %v4987
      %v5040 = vpack.c.bf16 %v4990, %v4989
      %v5041 = vpack.c.bf16 %v4992, %v4991
      %v5042 = vpack.c.bf16 %v4994, %v4993
      %v5043 = vpack.c.bf16 %v4996, %v4995
      %v5044 = vpack.c.bf16 %v4998, %v4997
      %v5045 = vpack.c.bf16 %v5000, %v4999
      %v5046 = vpack.c.bf16 %v5002, %v5001
      %v5047 = vpack.c.bf16 %v5004, %v5003
      %v5048 = vpack.c.bf16 %v5006, %v5005
      %v5049 = vpack.c.bf16 %v5008, %v5007
      %v5050 = vpack.c.bf16 %v5010, %v5009
      %v5051 = vpack.c.bf16 %v5012, %v5011
      %v5052 = vpack.c.bf16 %v5014, %v5013
      %v5053 = vpack.c.bf16 %v5016, %v5015
      %v5054 = vpack.c.bf16 %v5018, %v5017
      %v5055 = vpack.c.bf16 %v5020, %v5019
      %v5056 = vpack.c.bf16 %v5022, %v5021
      %v5057 = vpack.c.bf16 %v5024, %v5023
      %v5058 = vpack.c.bf16 %v5026, %v5025
      %v5059 = vld [vmem:[%s2 + $0x100] sm:$0xf]
      %v5060 = vld [vmem:[%s2 + $0x104] sm:$0xf]
      %v5061 = vld [vmem:[%s2 + $0x108] sm:$0xf]
      %v5062 = vld [vmem:[%s2 + $0x10c] sm:$0xf]
      %v5063 = vld [vmem:[%s2 + $0x110] sm:$0xf]
      %v5064 = vld [vmem:[%s2 + $0x114] sm:$0xf]
      %v5065 = vld [vmem:[%s2 + $0x118] sm:$0xf]
      %v5066 = vld [vmem:[%s2 + $0x11c] sm:$0xf]
      %v5075 = vunpack.c.l.b16 %v5059
      %v5076 = vunpack.c.l.b16 %v5060
      %v5077 = vunpack.c.l.b16 %v5061
      %v5078 = vunpack.c.l.b16 %v5062
      %v5079 = vunpack.c.l.b16 %v5063
      %v5080 = vunpack.c.l.b16 %v5064
      %v5081 = vunpack.c.l.b16 %v5065
      %v5082 = vunpack.c.l.b16 %v5066
      %v5083 = vpack.c.b16 %v5076, %v5075
      %v5084 = vpack.c.b16 %v5078, %v5077
      %v5085 = vpack.c.b16 %v5080, %v5079
      %v5086 = vpack.c.b16 %v5082, %v5081
      %v5092 = vsel %vm386, %v5027, 0
      %v5095 = vsel %vm386, %v5028, 0
      %v5098 = vsel %vm386, %v5029, 0
      %v5101 = vsel %vm386, %v5030, 0
      %v5104 = vsel %vm386, %v5031, 0
      %v5107 = vsel %vm386, %v5032, 0
      %v5110 = vsel %vm386, %v5033, 0
      %v5113 = vsel %vm386, %v5034, 0
      %v5116 = vsel %vm386, %v5035, 0
      %v5119 = vsel %vm386, %v5036, 0
      %v5122 = vsel %vm386, %v5037, 0
      %v5125 = vsel %vm386, %v5038, 0
      %v5128 = vsel %vm386, %v5039, 0
      %v5131 = vsel %vm386, %v5040, 0
      %v5134 = vsel %vm386, %v5041, 0
      %v5137 = vsel %vm386, %v5042, 0
      %v5140 = vsel %vm386, %v5043, 0
      %v5143 = vsel %vm386, %v5044, 0
      %v5146 = vsel %vm386, %v5045, 0
      %v5149 = vsel %vm386, %v5046, 0
      %v5152 = vsel %vm386, %v5047, 0
      %v5155 = vsel %vm386, %v5048, 0
      %v5158 = vsel %vm386, %v5049, 0
      %v5161 = vsel %vm386, %v5050, 0
      %v5164 = vsel %vm386, %v5051, 0
      %v5167 = vsel %vm386, %v5052, 0
      %v5170 = vsel %vm386, %v5053, 0
      %v5173 = vsel %vm386, %v5054, 0
      %v5176 = vsel %vm386, %v5055, 0
      %v5179 = vsel %vm386, %v5056, 0
      %v5182 = vsel %vm386, %v5057, 0
      %v5185 = vsel %vm386, %v5058, 0
      %5187 = vmatprep.subr.bf16.mxu0 0
      %5188 = vmatpush1.bf16.msra.mxu0 %v5083
      %5189 = vmatprep.subr.bf16.mxu0 0
      %5190 = vmatpush1.bf16.msra.mxu0 %v5084
      %5191 = vmatprep.subr.bf16.mxu0 0
      %5192 = vmatpush1.bf16.msra.mxu0 %v5085
      %5193 = vmatprep.subr.bf16.mxu0 0
      %5194 = vmatpush1.bf16.msra.mxu0 %v5086
      %5195 = vmatprep.subr.bf16.mxu0 0
      %5196 = vmatpush1.bf16.msra.mxu0 0
      %5197 = vmatprep.subr.bf16.mxu0 0
      %5198 = vmatpush1.bf16.msra.mxu0 0
      %5199 = vmatprep.subr.bf16.mxu0 0
      %5200 = vmatpush1.bf16.msra.mxu0 0
      %5201 = vmatprep.subr.bf16.mxu0 0
      %5202 = vmatpush1.bf16.msra.mxu0 0
      %5203 = vmatprep.subr.bf16.mxu0 0
      %5204 = vmatpush1.bf16.msra.mxu0 0
      %5205 = vmatprep.subr.bf16.mxu0 0
      %5206 = vmatpush1.bf16.msra.mxu0 0
      %5207 = vmatprep.subr.bf16.mxu0 0
      %5208 = vmatpush1.bf16.msra.mxu0 0
      %5209 = vmatprep.subr.bf16.mxu0 0
      %5210 = vmatpush1.bf16.msra.mxu0 0
      %5211 = vmatprep.subr.bf16.mxu0 0
      %5212 = vmatpush1.bf16.msra.mxu0 0
      %5213 = vmatprep.subr.bf16.mxu0 0
      %5214 = vmatpush1.bf16.msra.mxu0 0
      %5215 = vmatprep.subr.bf16.mxu0 0
      %5216 = vmatpush1.bf16.msra.mxu0 0
      %5217 = vmatprep.subr.bf16.mxu0 0
      %5218 = vmatpush1.bf16.msra.mxu0 0
      %5219 = vmatprep.mubr.bf16.mxu0 0
      %5220 = vmatmul.mubr.bf16.gmra.mrb[0].mxu0 %v5092
      %v5221 = vpop.f32.mrb[0].mxu0
      %v5222 = vadd.f32 0.0, %v5221
      %v5223 = vpop.f32.mrb[0].mxu0
      %v5224 = vpop.f32.mrb[0].mxu0
      %v5225 = vadd.f32 0.0, %v5224
      %v5226 = vpop.f32.mrb[0].mxu0
      %5227 = vmatprep.mubr.bf16.mxu0 0
      %5228 = vmatmul.mubr.bf16.gmra.mrb[0].mxu0 %v5095
      %v5229 = vpop.f32.mrb[0].mxu0
      %v5230 = vadd.f32 0.0, %v5229
      %v5231 = vpop.f32.mrb[0].mxu0
      %v5232 = vpop.f32.mrb[0].mxu0
      %v5233 = vadd.f32 0.0, %v5232
      %v5234 = vpop.f32.mrb[0].mxu0
      %5235 = vmatprep.mubr.bf16.mxu0 0
      %5236 = vmatmul.mubr.bf16.gmra.mrb[0].mxu0 %v5098
      %v5237 = vpop.f32.mrb[0].mxu0
      %v5238 = vadd.f32 0.0, %v5237
      %v5239 = vpop.f32.mrb[0].mxu0
      %v5240 = vpop.f32.mrb[0].mxu0
      %v5241 = vadd.f32 0.0, %v5240
      %v5242 = vpop.f32.mrb[0].mxu0
      %5243 = vmatprep.mubr.bf16.mxu0 0
      %5244 = vmatmul.mubr.bf16.gmra.mrb[0].mxu0 %v5101
      %v5245 = vpop.f32.mrb[0].mxu0
      %v5246 = vadd.f32 0.0, %v5245
      %v5247 = vpop.f32.mrb[0].mxu0
      %v5248 = vpop.f32.mrb[0].mxu0
      %v5249 = vadd.f32 0.0, %v5248
      %v5250 = vpop.f32.mrb[0].mxu0
      %5251 = vmatprep.mubr.bf16.mxu0 0
      %5252 = vmatmul.mubr.bf16.gmra.mrb[0].mxu0 %v5104
      %v5253 = vpop.f32.mrb[0].mxu0
      %v5254 = vadd.f32 0.0, %v5253
      %v5255 = vpop.f32.mrb[0].mxu0
      %v5256 = vpop.f32.mrb[0].mxu0
      %v5257 = vadd.f32 0.0, %v5256
      %v5258 = vpop.f32.mrb[0].mxu0
      %5259 = vmatprep.mubr.bf16.mxu0 0
      %5260 = vmatmul.mubr.bf16.gmra.mrb[0].mxu0 %v5107
      %v5261 = vpop.f32.mrb[0].mxu0
      %v5262 = vadd.f32 0.0, %v5261
      %v5263 = vpop.f32.mrb[0].mxu0
      %v5264 = vpop.f32.mrb[0].mxu0
      %v5265 = vadd.f32 0.0, %v5264
      %v5266 = vpop.f32.mrb[0].mxu0
      %5267 = vmatprep.mubr.bf16.mxu0 0
      %5268 = vmatmul.mubr.bf16.gmra.mrb[0].mxu0 %v5110
      %v5269 = vpop.f32.mrb[0].mxu0
      %v5270 = vadd.f32 0.0, %v5269
      %v5271 = vpop.f32.mrb[0].mxu0
      %v5272 = vpop.f32.mrb[0].mxu0
      %v5273 = vadd.f32 0.0, %v5272
      %v5274 = vpop.f32.mrb[0].mxu0
      %5275 = vmatprep.mubr.bf16.mxu0 0
      %5276 = vmatmul.mubr.bf16.gmra.mrb[0].mxu0 %v5113
      %v5277 = vpop.f32.mrb[0].mxu0
      %v5278 = vadd.f32 0.0, %v5277
      %v5279 = vpop.f32.mrb[0].mxu0
      %v5280 = vpop.f32.mrb[0].mxu0
      %v5281 = vadd.f32 0.0, %v5280
      %v5282 = vpop.f32.mrb[0].mxu0
      %5283 = vmatprep.mubr.bf16.mxu0 0
      %5284 = vmatmul.mubr.bf16.gmra.mrb[0].mxu0 %v5116
      %v5285 = vpop.f32.mrb[0].mxu0
      %v5286 = vadd.f32 0.0, %v5285
      %v5287 = vpop.f32.mrb[0].mxu0
      %v5288 = vpop.f32.mrb[0].mxu0
      %v5289 = vadd.f32 0.0, %v5288
      %v5290 = vpop.f32.mrb[0].mxu0
      %5291 = vmatprep.mubr.bf16.mxu0 0
      %5292 = vmatmul.mubr.bf16.gmra.mrb[0].mxu0 %v5119
      %v5293 = vpop.f32.mrb[0].mxu0
      %v5294 = vadd.f32 0.0, %v5293
      %v5295 = vpop.f32.mrb[0].mxu0
      %v5296 = vpop.f32.mrb[0].mxu0
      %v5297 = vadd.f32 0.0, %v5296
      %v5298 = vpop.f32.mrb[0].mxu0
      %5299 = vmatprep.mubr.bf16.mxu0 0
      %5300 = vmatmul.mubr.bf16.gmra.mrb[0].mxu0 %v5122
      %v5301 = vpop.f32.mrb[0].mxu0
      %v5302 = vadd.f32 0.0, %v5301
      %v5303 = vpop.f32.mrb[0].mxu0
      %v5304 = vpop.f32.mrb[0].mxu0
      %v5305 = vadd.f32 0.0, %v5304
      %v5306 = vpop.f32.mrb[0].mxu0
      %5307 = vmatprep.mubr.bf16.mxu0 0
      %5308 = vmatmul.mubr.bf16.gmra.mrb[0].mxu0 %v5125
      %v5309 = vpop.f32.mrb[0].mxu0
      %v5310 = vadd.f32 0.0, %v5309
      %v5311 = vpop.f32.mrb[0].mxu0
      %v5312 = vpop.f32.mrb[0].mxu0
      %v5313 = vadd.f32 0.0, %v5312
      %v5314 = vpop.f32.mrb[0].mxu0
      %5315 = vmatprep.mubr.bf16.mxu0 0
      %5316 = vmatmul.mubr.bf16.gmra.mrb[0].mxu0 %v5128
      %v5317 = vpop.f32.mrb[0].mxu0
      %v5318 = vadd.f32 0.0, %v5317
      %v5319 = vpop.f32.mrb[0].mxu0
      %v5320 = vpop.f32.mrb[0].mxu0
      %v5321 = vadd.f32 0.0, %v5320
      %v5322 = vpop.f32.mrb[0].mxu0
      %5323 = vmatprep.mubr.bf16.mxu0 0
      %5324 = vmatmul.mubr.bf16.gmra.mrb[0].mxu0 %v5131
      %v5325 = vpop.f32.mrb[0].mxu0
      %v5326 = vadd.f32 0.0, %v5325
      %v5327 = vpop.f32.mrb[0].mxu0
      %v5328 = vpop.f32.mrb[0].mxu0
      %v5329 = vadd.f32 0.0, %v5328
      %v5330 = vpop.f32.mrb[0].mxu0
      %5331 = vmatprep.mubr.bf16.mxu0 0
      %5332 = vmatmul.mubr.bf16.gmra.mrb[0].mxu0 %v5134
      %v5333 = vpop.f32.mrb[0].mxu0
      %v5334 = vadd.f32 0.0, %v5333
      %v5335 = vpop.f32.mrb[0].mxu0
      %v5336 = vpop.f32.mrb[0].mxu0
      %v5337 = vadd.f32 0.0, %v5336
      %v5338 = vpop.f32.mrb[0].mxu0
      %5339 = vmatprep.mubr.bf16.mxu0 0
      %5340 = vmatmul.mubr.bf16.gmra.mrb[0].mxu0 %v5137
      %v5341 = vpop.f32.mrb[0].mxu0
      %v5342 = vadd.f32 0.0, %v5341
      %v5343 = vpop.f32.mrb[0].mxu0
      %v5344 = vpop.f32.mrb[0].mxu0
      %v5345 = vadd.f32 0.0, %v5344
      %v5346 = vpop.f32.mrb[0].mxu0
      %5347 = vmatprep.mubr.bf16.mxu0 0
      %5348 = vmatmul.mubr.bf16.gmra.mrb[0].mxu0 %v5140
      %v5349 = vpop.f32.mrb[0].mxu0
      %v5350 = vadd.f32 0.0, %v5349
      %v5351 = vpop.f32.mrb[0].mxu0
      %v5352 = vpop.f32.mrb[0].mxu0
      %v5353 = vadd.f32 0.0, %v5352
      %v5354 = vpop.f32.mrb[0].mxu0
      %5355 = vmatprep.mubr.bf16.mxu0 0
      %5356 = vmatmul.mubr.bf16.gmra.mrb[0].mxu0 %v5143
      %v5357 = vpop.f32.mrb[0].mxu0
      %v5358 = vadd.f32 0.0, %v5357
      %v5359 = vpop.f32.mrb[0].mxu0
      %v5360 = vpop.f32.mrb[0].mxu0
      %v5361 = vadd.f32 0.0, %v5360
      %v5362 = vpop.f32.mrb[0].mxu0
      %5363 = vmatprep.mubr.bf16.mxu0 0
      %5364 = vmatmul.mubr.bf16.gmra.mrb[0].mxu0 %v5146
      %v5365 = vpop.f32.mrb[0].mxu0
      %v5366 = vadd.f32 0.0, %v5365
      %v5367 = vpop.f32.mrb[0].mxu0
      %v5368 = vpop.f32.mrb[0].mxu0
      %v5369 = vadd.f32 0.0, %v5368
      %v5370 = vpop.f32.mrb[0].mxu0
      %5371 = vmatprep.mubr.bf16.mxu0 0
      %5372 = vmatmul.mubr.bf16.gmra.mrb[0].mxu0 %v5149
      %v5373 = vpop.f32.mrb[0].mxu0
      %v5374 = vadd.f32 0.0, %v5373
      %v5375 = vpop.f32.mrb[0].mxu0
      %v5376 = vpop.f32.mrb[0].mxu0
      %v5377 = vadd.f32 0.0, %v5376
      %v5378 = vpop.f32.mrb[0].mxu0
      %5379 = vmatprep.mubr.bf16.mxu0 0
      %5380 = vmatmul.mubr.bf16.gmra.mrb[0].mxu0 %v5152
      %v5381 = vpop.f32.mrb[0].mxu0
      %v5382 = vadd.f32 0.0, %v5381
      %v5383 = vpop.f32.mrb[0].mxu0
      %v5384 = vpop.f32.mrb[0].mxu0
      %v5385 = vadd.f32 0.0, %v5384
      %v5386 = vpop.f32.mrb[0].mxu0
      %5387 = vmatprep.mubr.bf16.mxu0 0
      %5388 = vmatmul.mubr.bf16.gmra.mrb[0].mxu0 %v5155
      %v5389 = vpop.f32.mrb[0].mxu0
      %v5390 = vadd.f32 0.0, %v5389
      %v5391 = vpop.f32.mrb[0].mxu0
      %v5392 = vpop.f32.mrb[0].mxu0
      %v5393 = vadd.f32 0.0, %v5392
      %v5394 = vpop.f32.mrb[0].mxu0
      %5395 = vmatprep.mubr.bf16.mxu0 0
      %5396 = vmatmul.mubr.bf16.gmra.mrb[0].mxu0 %v5158
      %v5397 = vpop.f32.mrb[0].mxu0
      %v5398 = vadd.f32 0.0, %v5397
      %v5399 = vpop.f32.mrb[0].mxu0
      %v5400 = vpop.f32.mrb[0].mxu0
      %v5401 = vadd.f32 0.0, %v5400
      %v5402 = vpop.f32.mrb[0].mxu0
      %5403 = vmatprep.mubr.bf16.mxu0 0
      %5404 = vmatmul.mubr.bf16.gmra.mrb[0].mxu0 %v5161
      %v5405 = vpop.f32.mrb[0].mxu0
      %v5406 = vadd.f32 0.0, %v5405
      %v5407 = vpop.f32.mrb[0].mxu0
      %v5408 = vpop.f32.mrb[0].mxu0
      %v5409 = vadd.f32 0.0, %v5408
      %v5410 = vpop.f32.mrb[0].mxu0
      %5411 = vmatprep.mubr.bf16.mxu0 0
      %5412 = vmatmul.mubr.bf16.gmra.mrb[0].mxu0 %v5164
      %v5413 = vpop.f32.mrb[0].mxu0
      %v5414 = vadd.f32 0.0, %v5413
      %v5415 = vpop.f32.mrb[0].mxu0
      %v5416 = vpop.f32.mrb[0].mxu0
      %v5417 = vadd.f32 0.0, %v5416
      %v5418 = vpop.f32.mrb[0].mxu0
      %5419 = vmatprep.mubr.bf16.mxu0 0
      %5420 = vmatmul.mubr.bf16.gmra.mrb[0].mxu0 %v5167
      %v5421 = vpop.f32.mrb[0].mxu0
      %v5422 = vadd.f32 0.0, %v5421
      %v5423 = vpop.f32.mrb[0].mxu0
      %v5424 = vpop.f32.mrb[0].mxu0
      %v5425 = vadd.f32 0.0, %v5424
      %v5426 = vpop.f32.mrb[0].mxu0
      %5427 = vmatprep.mubr.bf16.mxu0 0
      %5428 = vmatmul.mubr.bf16.gmra.mrb[0].mxu0 %v5170
      %v5429 = vpop.f32.mrb[0].mxu0
      %v5430 = vadd.f32 0.0, %v5429
      %v5431 = vpop.f32.mrb[0].mxu0
      %v5432 = vpop.f32.mrb[0].mxu0
      %v5433 = vadd.f32 0.0, %v5432
      %v5434 = vpop.f32.mrb[0].mxu0
      %5435 = vmatprep.mubr.bf16.mxu0 0
      %5436 = vmatmul.mubr.bf16.gmra.mrb[0].mxu0 %v5173
      %v5437 = vpop.f32.mrb[0].mxu0
      %v5438 = vadd.f32 0.0, %v5437
      %v5439 = vpop.f32.mrb[0].mxu0
      %v5440 = vpop.f32.mrb[0].mxu0
      %v5441 = vadd.f32 0.0, %v5440
      %v5442 = vpop.f32.mrb[0].mxu0
      %5443 = vmatprep.mubr.bf16.mxu0 0
      %5444 = vmatmul.mubr.bf16.gmra.mrb[0].mxu0 %v5176
      %v5445 = vpop.f32.mrb[0].mxu0
      %v5446 = vadd.f32 0.0, %v5445
      %v5447 = vpop.f32.mrb[0].mxu0
      %v5448 = vpop.f32.mrb[0].mxu0
      %v5449 = vadd.f32 0.0, %v5448
      %v5450 = vpop.f32.mrb[0].mxu0
      %5451 = vmatprep.mubr.bf16.mxu0 0
      %5452 = vmatmul.mubr.bf16.gmra.mrb[0].mxu0 %v5179
      %v5453 = vpop.f32.mrb[0].mxu0
      %v5454 = vadd.f32 0.0, %v5453
      %v5455 = vpop.f32.mrb[0].mxu0
      %v5456 = vpop.f32.mrb[0].mxu0
      %v5457 = vadd.f32 0.0, %v5456
      %v5458 = vpop.f32.mrb[0].mxu0
      %5459 = vmatprep.mubr.bf16.mxu0 0
      %5460 = vmatmul.mubr.bf16.gmra.mrb[0].mxu0 %v5182
      %v5461 = vpop.f32.mrb[0].mxu0
      %v5462 = vadd.f32 0.0, %v5461
      %v5463 = vpop.f32.mrb[0].mxu0
      %v5464 = vpop.f32.mrb[0].mxu0
      %v5465 = vadd.f32 0.0, %v5464
      %v5466 = vpop.f32.mrb[0].mxu0
      %5467 = vmatprep.mubr.bf16.mxu0 0
      %5468 = vmatmul.mubr.bf16.gmra.mrb[0].mxu0 %v5185
      %v5469 = vpop.f32.mrb[0].mxu0
      %v5470 = vadd.f32 0.0, %v5469
      %v5471 = vpop.f32.mrb[0].mxu0
      %v5472 = vpop.f32.mrb[0].mxu0
      %v5473 = vadd.f32 0.0, %v5472
      %v5474 = vpop.f32.mrb[0].mxu0
      %5475 = vdwg.mxu0
      %v5476 = vadd.f32 %v4899, %v5222
      %v5477 = vadd.f32 %v4900, %v5225
      %v5478 = vadd.f32 %v4901, %v5230
      %v5479 = vadd.f32 %v4902, %v5233
      %v5480 = vadd.f32 %v4903, %v5238
      %v5481 = vadd.f32 %v4904, %v5241
      %v5482 = vadd.f32 %v4905, %v5246
      %v5483 = vadd.f32 %v4906, %v5249
      %v5484 = vadd.f32 %v4907, %v5254
      %v5485 = vadd.f32 %v4908, %v5257
      %v5486 = vadd.f32 %v4909, %v5262
      %v5487 = vadd.f32 %v4910, %v5265
      %v5488 = vadd.f32 %v4911, %v5270
      %v5489 = vadd.f32 %v4912, %v5273
      %v5490 = vadd.f32 %v4913, %v5278
      %v5491 = vadd.f32 %v4914, %v5281
      %v5492 = vadd.f32 %v4915, %v5286
      %v5493 = vadd.f32 %v4916, %v5289
      %v5494 = vadd.f32 %v4917, %v5294
      %v5495 = vadd.f32 %v4918, %v5297
      %v5496 = vadd.f32 %v4919, %v5302
      %v5497 = vadd.f32 %v4920, %v5305
      %v5498 = vadd.f32 %v4921, %v5310
      %v5499 = vadd.f32 %v4922, %v5313
      %v5500 = vadd.f32 %v4923, %v5318
      %v5501 = vadd.f32 %v4924, %v5321
      %v5502 = vadd.f32 %v4925, %v5326
      %v5503 = vadd.f32 %v4926, %v5329
      %v5504 = vadd.f32 %v4927, %v5334
      %v5505 = vadd.f32 %v4928, %v5337
      %v5506 = vadd.f32 %v4929, %v5342
      %v5507 = vadd.f32 %v4930, %v5345
      %v5508 = vadd.f32 %v4931, %v5350
      %v5509 = vadd.f32 %v4932, %v5353
      %v5510 = vadd.f32 %v4933, %v5358
      %v5511 = vadd.f32 %v4934, %v5361
      %v5512 = vadd.f32 %v4935, %v5366
      %v5513 = vadd.f32 %v4936, %v5369
      %v5514 = vadd.f32 %v4937, %v5374
      %v5515 = vadd.f32 %v4938, %v5377
      %v5516 = vadd.f32 %v4939, %v5382
      %v5517 = vadd.f32 %v4940, %v5385
      %v5518 = vadd.f32 %v4941, %v5390
      %v5519 = vadd.f32 %v4942, %v5393
      %v5520 = vadd.f32 %v4943, %v5398
      %v5521 = vadd.f32 %v4944, %v5401
      %v5522 = vadd.f32 %v4945, %v5406
      %v5523 = vadd.f32 %v4946, %v5409
      %v5524 = vadd.f32 %v4947, %v5414
      %v5525 = vadd.f32 %v4948, %v5417
      %v5526 = vadd.f32 %v4949, %v5422
      %v5527 = vadd.f32 %v4950, %v5425
      %v5528 = vadd.f32 %v4951, %v5430
      %v5529 = vadd.f32 %v4952, %v5433
      %v5530 = vadd.f32 %v4953, %v5438
      %v5531 = vadd.f32 %v4954, %v5441
      %v5532 = vadd.f32 %v4955, %v5446
      %v5533 = vadd.f32 %v4956, %v5449
      %v5534 = vadd.f32 %v4957, %v5454
      %v5535 = vadd.f32 %v4958, %v5457
      %v5536 = vadd.f32 %v4959, %v5462
      %v5537 = vadd.f32 %v4960, %v5465
      %v5538 = vadd.f32 %v4961, %v5470
      %v5539 = vadd.f32 %v4962, %v5473
      %v5540 = vld [vmem:[%s3] sm:$0x1]
      %v5542 = vlaneseq
      %v5543 = vshrl.u32 %v5542, 7
      %v5544 = vsub.s32 0, %v5543
      %v5545 = vrot.slane %v5540, %v5544
      %v5547 = vadd.f32 %v5476, %v5545
      %v5548 = vadd.f32 %v5477, %v5545
      %v5549 = vadd.f32 %v5478, %v5545
      %v5550 = vadd.f32 %v5479, %v5545
      %v5551 = vadd.f32 %v5480, %v5545
      %v5552 = vadd.f32 %v5481, %v5545
      %v5553 = vadd.f32 %v5482, %v5545
      %v5554 = vadd.f32 %v5483, %v5545
      %v5555 = vadd.f32 %v5484, %v5545
      %v5556 = vadd.f32 %v5485, %v5545
      %v5557 = vadd.f32 %v5486, %v5545
      %v5558 = vadd.f32 %v5487, %v5545
      %v5559 = vadd.f32 %v5488, %v5545
      %v5560 = vadd.f32 %v5489, %v5545
      %v5561 = vadd.f32 %v5490, %v5545
      %v5562 = vadd.f32 %v5491, %v5545
      %v5563 = vadd.f32 %v5492, %v5545
      %v5564 = vadd.f32 %v5493, %v5545
      %v5565 = vadd.f32 %v5494, %v5545
      %v5566 = vadd.f32 %v5495, %v5545
      %v5567 = vadd.f32 %v5496, %v5545
      %v5568 = vadd.f32 %v5497, %v5545
      %v5569 = vadd.f32 %v5498, %v5545
      %v5570 = vadd.f32 %v5499, %v5545
      %v5571 = vadd.f32 %v5500, %v5545
      %v5572 = vadd.f32 %v5501, %v5545
      %v5573 = vadd.f32 %v5502, %v5545
      %v5574 = vadd.f32 %v5503, %v5545
      %v5575 = vadd.f32 %v5504, %v5545
      %v5576 = vadd.f32 %v5505, %v5545
      %v5577 = vadd.f32 %v5506, %v5545
      %v5578 = vadd.f32 %v5507, %v5545
      %v5579 = vadd.f32 %v5508, %v5545
      %v5580 = vadd.f32 %v5509, %v5545
      %v5581 = vadd.f32 %v5510, %v5545
      %v5582 = vadd.f32 %v5511, %v5545
      %v5583 = vadd.f32 %v5512, %v5545
      %v5584 = vadd.f32 %v5513, %v5545
      %v5585 = vadd.f32 %v5514, %v5545
      %v5586 = vadd.f32 %v5515, %v5545
      %v5587 = vadd.f32 %v5516, %v5545
      %v5588 = vadd.f32 %v5517, %v5545
      %v5589 = vadd.f32 %v5518, %v5545
      %v5590 = vadd.f32 %v5519, %v5545
      %v5591 = vadd.f32 %v5520, %v5545
      %v5592 = vadd.f32 %v5521, %v5545
      %v5593 = vadd.f32 %v5522, %v5545
      %v5594 = vadd.f32 %v5523, %v5545
      %v5595 = vadd.f32 %v5524, %v5545
      %v5596 = vadd.f32 %v5525, %v5545
      %v5597 = vadd.f32 %v5526, %v5545
      %v5598 = vadd.f32 %v5527, %v5545
      %v5599 = vadd.f32 %v5528, %v5545
      %v5600 = vadd.f32 %v5529, %v5545
      %v5601 = vadd.f32 %v5530, %v5545
      %v5602 = vadd.f32 %v5531, %v5545
      %v5603 = vadd.f32 %v5532, %v5545
      %v5604 = vadd.f32 %v5533, %v5545
      %v5605 = vadd.f32 %v5534, %v5545
      %v5606 = vadd.f32 %v5535, %v5545
      %v5607 = vadd.f32 %v5536, %v5545
      %v5608 = vadd.f32 %v5537, %v5545
      %v5609 = vadd.f32 %v5538, %v5545
      %v5610 = vadd.f32 %v5539, %v5545
      %5611 = vst [vmem:[%s255] sm:$0xff] %v5547
      %5612 = vst [vmem:[%s255 + $0x8] sm:$0xff] %v5548
      %5613 = vst [vmem:[%s255 + $0x10] sm:$0xff] %v5549
      %5614 = vst [vmem:[%s255 + $0x18] sm:$0xff] %v5550
      %5615 = vst [vmem:[%s255 + $0x20] sm:$0xff] %v5551
      %5616 = vst [vmem:[%s255 + $0x28] sm:$0xff] %v5552
      %5617 = vst [vmem:[%s255 + $0x30] sm:$0xff] %v5553
      %5618 = vst [vmem:[%s255 + $0x38] sm:$0xff] %v5554
      %5619 = vst [vmem:[%s255 + $0x40] sm:$0xff] %v5555
      %5620 = vst [vmem:[%s255 + $0x48] sm:$0xff] %v5556
      %5621 = vst [vmem:[%s255 + $0x50] sm:$0xff] %v5557
      %5622 = vst [vmem:[%s255 + $0x58] sm:$0xff] %v5558
      %5623 = vst [vmem:[%s255 + $0x60] sm:$0xff] %v5559
      %5624 = vst [vmem:[%s255 + $0x68] sm:$0xff] %v5560
      %5625 = vst [vmem:[%s255 + $0x70] sm:$0xff] %v5561
      %5626 = vst [vmem:[%s255 + $0x78] sm:$0xff] %v5562
      %5627 = vst [vmem:[%s255 + $0x80] sm:$0xff] %v5563
      %5628 = vst [vmem:[%s255 + $0x88] sm:$0xff] %v5564
      %5629 = vst [vmem:[%s255 + $0x90] sm:$0xff] %v5565
      %5630 = vst [vmem:[%s255 + $0x98] sm:$0xff] %v5566
      %5631 = vst [vmem:[%s255 + $0xa0] sm:$0xff] %v5567
      %5632 = vst [vmem:[%s255 + $0xa8] sm:$0xff] %v5568
      %5633 = vst [vmem:[%s255 + $0xb0] sm:$0xff] %v5569
      %5634 = vst [vmem:[%s255 + $0xb8] sm:$0xff] %v5570
      %5635 = vst [vmem:[%s255 + $0xc0] sm:$0xff] %v5571
      %5636 = vst [vmem:[%s255 + $0xc8] sm:$0xff] %v5572
      %5637 = vst [vmem:[%s255 + $0xd0] sm:$0xff] %v5573
      %5638 = vst [vmem:[%s255 + $0xd8] sm:$0xff] %v5574
      %5639 = vst [vmem:[%s255 + $0xe0] sm:$0xff] %v5575
      %5640 = vst [vmem:[%s255 + $0xe8] sm:$0xff] %v5576
      %5641 = vst [vmem:[%s255 + $0xf0] sm:$0xff] %v5577
      %5642 = vst [vmem:[%s255 + $0xf8] sm:$0xff] %v5578
      %5643 = vst [vmem:[%s255 + $0x100] sm:$0xff] %v5579
      %5644 = vst [vmem:[%s255 + $0x108] sm:$0xff] %v5580
      %5645 = vst [vmem:[%s255 + $0x110] sm:$0xff] %v5581
      %5646 = vst [vmem:[%s255 + $0x118] sm:$0xff] %v5582
      %5647 = vst [vmem:[%s255 + $0x120] sm:$0xff] %v5583
      %5648 = vst [vmem:[%s255 + $0x128] sm:$0xff] %v5584
      %5649 = vst [vmem:[%s255 + $0x130] sm:$0xff] %v5585
      %5650 = vst [vmem:[%s255 + $0x138] sm:$0xff] %v5586
      %5651 = vst [vmem:[%s255 + $0x140] sm:$0xff] %v5587
      %5652 = vst [vmem:[%s255 + $0x148] sm:$0xff] %v5588
      %5653 = vst [vmem:[%s255 + $0x150] sm:$0xff] %v5589
      %5654 = vst [vmem:[%s255 + $0x158] sm:$0xff] %v5590
      %5655 = vst [vmem:[%s255 + $0x160] sm:$0xff] %v5591
      %5656 = vst [vmem:[%s255 + $0x168] sm:$0xff] %v5592
      %5657 = vst [vmem:[%s255 + $0x170] sm:$0xff] %v5593
      %5658 = vst [vmem:[%s255 + $0x178] sm:$0xff] %v5594
      %5659 = vst [vmem:[%s255 + $0x180] sm:$0xff] %v5595
      %5660 = vst [vmem:[%s255 + $0x188] sm:$0xff] %v5596
      %5661 = vst [vmem:[%s255 + $0x190] sm:$0xff] %v5597
      %5662 = vst [vmem:[%s255 + $0x198] sm:$0xff] %v5598
      %5663 = vst [vmem:[%s255 + $0x1a0] sm:$0xff] %v5599
      %5664 = vst [vmem:[%s255 + $0x1a8] sm:$0xff] %v5600
      %5665 = vst [vmem:[%s255 + $0x1b0] sm:$0xff] %v5601
      %5666 = vst [vmem:[%s255 + $0x1b8] sm:$0xff] %v5602
      %5667 = vst [vmem:[%s255 + $0x1c0] sm:$0xff] %v5603
      %5668 = vst [vmem:[%s255 + $0x1c8] sm:$0xff] %v5604
      %5669 = vst [vmem:[%s255 + $0x1d0] sm:$0xff] %v5605
      %5670 = vst [vmem:[%s255 + $0x1d8] sm:$0xff] %v5606
      %5671 = vst [vmem:[%s255 + $0x1e0] sm:$0xff] %v5607
      %5672 = vst [vmem:[%s255 + $0x1e8] sm:$0xff] %v5608
      %5673 = vst [vmem:[%s255 + $0x1f0] sm:$0xff] %v5609
      %5674 = vst [vmem:[%s255 + $0x1f8] sm:$0xff] %v5610
      %s5675 = smul.u32 64, %s15
      %p5676 = scmp.lt.s32.totalorder %s5675, 383
      %s5677 = scalar_select %p5676, %s5675, 383
      %s5678 = smul.addr %s5677, 8
      %s5679 = scalar_lea.vmem %s4, %s5678
      // Predicated region
      $region37: #{block_forward.2} parent=35 // pred_check
        %p5680 = pneg %p131
      $region38: #{block_forward.2} parent=35 // pred_check_branch
        %5682 = sbr.rel (%p5680) target = $region40
      $region39: #{block_forward.2} parent=35 // pred_region
        %s5683 = smul.u32 64, %s15
      $region40: #{block_forward.2} parent=35 // pred_fallthru
        _
    $region36: #{block_forward.2} parent=5 // pred_fallthru
      _
    %p5684 = scmp.le.s32.totalorder 2, %s10
    // Predicated region
    $region41: #{block_forward.2} parent=5 // pred_check
      %p5685 = pneg %p5684
    $region42: #{block_forward.2} parent=5 // pred_check_branch
      %5687 = sbr.rel (%p5685) target = $region44
    $region43: #{block_forward.2} parent=5 // pred_region
      %s5688 = ssub.s32 %s10, 2
      // Predicated region
      $region45: #{block_forward.2} parent=43 // pred_check
        %p5689 = pneg %p137
      $region46: #{block_forward.2} parent=43 // pred_check_branch
        %5691 = sbr.rel (%p5689) target = $region48
      $region47: #{block_forward.2} parent=43 // pred_region
        %s5692 = smul.u32 64, %s16
        %p5693 = scmp.lt.s32.totalorder %s5692, 383
        %s5694 = scalar_select %p5693, %s5692, 383
        %s5695 = smul.addr %s5694, 8
        %s5696 = scalar_lea.vmem %s4, %s5695
      $region48: #{block_forward.2} parent=43 // pred_fallthru
        _
    $region44: #{block_forward.2} parent=5 // pred_fallthru
      _
  $region6: #{block_forward.2} parent=0 // loop_footer
    %s14 = sadd.s32 1, %s10
  $region7: #{block_forward.2} parent=0 // loop_footer_branch
    %9 = sbr.rel target = $region3
  $region8: #{block_forward.2} parent=0 // loop_exit
    _

// kernel: block_forward.3
$region0: #{block_forward.3}
  #allocation0 [shape = 'u32[]', space=smem, size = 0x4, offset = 0x4, fixed_abs, tag = 'smem constant byte address 0x4 - core index']
  #allocation1 [shape = 'u32[144,128]{1,0:T(1,128)}', space=vmem, size = 0x12000, scoped, tag = 'internal scratch']
  %s0 = inlined_call_operand.vmem [shape: f32[2,1024,128], index: 0, kind: input, shape index: {}]
  %s1 = inlined_call_operand.vmem [shape: f32[128,128], index: 1, kind: input, shape index: {}]
  %s2 = inlined_call_operand.vmem [shape: f32[1,1,128], index: 2, kind: input, shape index: {}]
  %s3 = inlined_call_operand.vmem [shape: f32[1,1,128], index: 3, kind: input, shape index: {}]
  %s4 = inlined_call_operand.vmem [shape: f32[2,1,128], index: 4, kind: input, shape index: {}]
  %s5 = inlined_call_operand.vmem [shape: f32[2,1,128], index: 5, kind: input, shape index: {}]
  %s6 = inlined_call_operand.hbm [shape: f32[2,1024,128], index: 6, kind: output, shape index: {}]
  %s7 = sld [smem:[#allocation0]]
  $region57: #{block_forward.3} parent=0
    _
  %s9 = ssub.s32 1, %s7
  %s10 = scalar_select 0, %s9, %s7
  $region1: #{block_forward.3} parent=0
    #allocation2 [shape = 'u8[1048576]{0}', space=vmem, size = 0x100000, scoped, tag = 'output window, operand 0']
    #allocation3 [shape = 's32[2]{0}', space=sflag, size = 0x8, scoped, tag = 'scoped memory for block_forward.3']
    %11 = vsyncpa [#allocation3], 0
    %s12 = scalar_lea.sflag [#allocation3], 1
    %13 = vsyncpa %s12, 0
    loop: start=0, step=1, limit=4
    $region2: #{block_forward.3} parent=1 // loop_pre_header
      _
    $region3: #{block_forward.3} parent=1 // loop_header
      %s15 = sphi 0, %s19
      %p16 = scmp.ge.s32.totalorder %s15, 4
      %s25 = sphi 0, %s27
      %s28 = sphi 0, %s25
      %s29 = sphi 0, %s28
      %s45 = sphi 0, %s29
      %s49 = sphi 0, %s49
      %s51 = sphi 0, %s49
      %s52 = sphi 0, %s51
      %s66 = sphi 0, %s52
      %s70 = sphi 0, %s70
      %s72 = sphi 0, %s70
      %s73 = sphi 0, %s72
      %s87 = sphi 0, %s73
      %s91 = sphi 0, %s91
      %s93 = sphi 0, %s91
      %s94 = sphi 0, %s93
      %s108 = sphi 0, %s94
      %s114 = sphi 0, %s116
      %s117 = sphi 0, %s114
      %s118 = sphi 0, %s117
      %s134 = sphi 0, %s118
      %s140 = sphi 0, %s142
      %s143 = sphi 0, %s140
      %s144 = sphi 0, %s143
      %s160 = sphi 0, %s144
      %s166 = sphi 0, %s168
      %s169 = sphi 0, %s166
      %s170 = sphi 0, %s169
      %s186 = sphi 0, %s170
    $region4: #{block_forward.3} parent=1 // loop_header_branch
      %18 = sbr.rel (%p16) target = $region8
    $region5: #{block_forward.3} parent=1 // loop_body
      %s20 = ssub.s32 %s15, 1
      %s21 = ssub.s32 %s15, 2
      %s22 = sadd.s32 %s15, 1
      %s23 = ssub.s32 %s15, %s22
      %p24 = scmp.eq.s32.totalorder %s23, 0
      %s26 = sadd.s32 %s25, 1
      %s27 = scalar_select %p24, %s25, %s26
      %p30 = pneg %p24
      %p31 = scmp.eq.s32.totalorder %s15, 1
      %p32 = por %p30, %p31
      %p33 = scmp.ne.s32.totalorder %s25, %s28
      %p34 = scmp.eq.s32.totalorder %s15, 0
      %p35 = por %p33, %p34
      %p36 = scmp.ne.s32.totalorder %s25, %s28
      %p37 = scmp.eq.s32.totalorder %s20, 1
      %p38 = por %p36, %p37
      %p39 = scmp.ne.s32.totalorder %s28, %s29
      %p40 = scmp.eq.s32.totalorder %s20, 0
      %p41 = por %p39, %p40
      %p42 = scmp.ne.s32.totalorder %s28, %s29
      %p43 = scmp.eq.s32.totalorder %s21, 1
      %p44 = por %p42, %p43
      %p46 = scmp.ne.s32.totalorder %s29, %s45
      %p47 = scmp.eq.s32.totalorder %s21, 0
      %p48 = por %p46, %p47
      %s50 = sadd.s32 %s49, 1
      %p53 = scmp.eq.s32.totalorder %s15, 1
      %p54 = scmp.ne.s32.totalorder %s49, %s51
      %p55 = scmp.eq.s32.totalorder %s15, 0
      %p56 = por %p54, %p55
      %p57 = scmp.ne.s32.totalorder %s49, %s51
      %p58 = scmp.eq.s32.totalorder %s20, 1
      %p59 = por %p57, %p58
      %p60 = scmp.ne.s32.totalorder %s51, %s52
      %p61 = scmp.eq.s32.totalorder %s20, 0
      %p62 = por %p60, %p61
      %p63 = scmp.ne.s32.totalorder %s51, %s52
      %p64 = scmp.eq.s32.totalorder %s21, 1
      %p65 = por %p63, %p64
      %p67 = scmp.ne.s32.totalorder %s52, %s66
      %p68 = scmp.eq.s32.totalorder %s21, 0
      %p69 = por %p67, %p68
      %s71 = sadd.s32 %s70, 1
      %p74 = scmp.eq.s32.totalorder %s15, 1
      %p75 = scmp.ne.s32.totalorder %s70, %s72
      %p76 = scmp.eq.s32.totalorder %s15, 0
      %p77 = por %p75, %p76
      %p78 = scmp.ne.s32.totalorder %s70, %s72
      %p79 = scmp.eq.s32.totalorder %s20, 1
      %p80 = por %p78, %p79
      %p81 = scmp.ne.s32.totalorder %s72, %s73
      %p82 = scmp.eq.s32.totalorder %s20, 0
      %p83 = por %p81, %p82
      %p84 = scmp.ne.s32.totalorder %s72, %s73
      %p85 = scmp.eq.s32.totalorder %s21, 1
      %p86 = por %p84, %p85
      %p88 = scmp.ne.s32.totalorder %s73, %s87
      %p89 = scmp.eq.s32.totalorder %s21, 0
      %p90 = por %p88, %p89
      %s92 = sadd.s32 %s91, 1
      %p95 = scmp.eq.s32.totalorder %s15, 1
      %p96 = scmp.ne.s32.totalorder %s91, %s93
      %p97 = scmp.eq.s32.totalorder %s15, 0
      %p98 = por %p96, %p97
      %p99 = scmp.ne.s32.totalorder %s91, %s93
      %p100 = scmp.eq.s32.totalorder %s20, 1
      %p101 = por %p99, %p100
      %p102 = scmp.ne.s32.totalorder %s93, %s94
      %p103 = scmp.eq.s32.totalorder %s20, 0
      %p104 = por %p102, %p103
      %p105 = scmp.ne.s32.totalorder %s93, %s94
      %p106 = scmp.eq.s32.totalorder %s21, 1
      %p107 = por %p105, %p106
      %p109 = scmp.ne.s32.totalorder %s94, %s108
      %p110 = scmp.eq.s32.totalorder %s21, 0
      %p111 = por %p109, %p110
      %s112 = ssub.s32 %s15, %s22
      %p113 = scmp.eq.s32.totalorder %s112, 0
      %s115 = sadd.s32 %s114, 1
      %s116 = scalar_select %p113, %s114, %s115
      %p119 = pneg %p113
      %p120 = scmp.eq.s32.totalorder %s15, 1
      %p121 = por %p119, %p120
      %p122 = scmp.ne.s32.totalorder %s114, %s117
      %p123 = scmp.eq.s32.totalorder %s15, 0
      %p124 = por %p122, %p123
      %p125 = scmp.ne.s32.totalorder %s114, %s117
      %p126 = scmp.eq.s32.totalorder %s20, 1
      %p127 = por %p125, %p126
      %p128 = scmp.ne.s32.totalorder %s117, %s118
      %p129 = scmp.eq.s32.totalorder %s20, 0
      %p130 = por %p128, %p129
      %p131 = scmp.ne.s32.totalorder %s117, %s118
      %p132 = scmp.eq.s32.totalorder %s21, 1
      %p133 = por %p131, %p132
      %p135 = scmp.ne.s32.totalorder %s118, %s134
      %p136 = scmp.eq.s32.totalorder %s21, 0
      %p137 = por %p135, %p136
      %s138 = ssub.s32 %s15, %s22
      %p139 = scmp.eq.s32.totalorder %s138, 0
      %s141 = sadd.s32 %s140, 1
      %s142 = scalar_select %p139, %s140, %s141
      %p145 = pneg %p139
      %p146 = scmp.eq.s32.totalorder %s15, 1
      %p147 = por %p145, %p146
      %p148 = scmp.ne.s32.totalorder %s140, %s143
      %p149 = scmp.eq.s32.totalorder %s15, 0
      %p150 = por %p148, %p149
      %p151 = scmp.ne.s32.totalorder %s140, %s143
      %p152 = scmp.eq.s32.totalorder %s20, 1
      %p153 = por %p151, %p152
      %p154 = scmp.ne.s32.totalorder %s143, %s144
      %p155 = scmp.eq.s32.totalorder %s20, 0
      %p156 = por %p154, %p155
      %p157 = scmp.ne.s32.totalorder %s143, %s144
      %p158 = scmp.eq.s32.totalorder %s21, 1
      %p159 = por %p157, %p158
      %p161 = scmp.ne.s32.totalorder %s144, %s160
      %p162 = scmp.eq.s32.totalorder %s21, 0
      %p163 = por %p161, %p162
      %s164 = ssub.s32 %s15, %s22
      %p165 = scmp.eq.s32.totalorder %s164, 0
      %s167 = sadd.s32 %s166, 1
      %s168 = scalar_select %p165, %s166, %s167
      %p171 = pneg %p165
      %p172 = scmp.eq.s32.totalorder %s15, 1
      %p173 = por %p171, %p172
      %p174 = scmp.ne.s32.totalorder %s166, %s169
      %p175 = scmp.eq.s32.totalorder %s15, 0
      %p176 = por %p174, %p175
      %p177 = scmp.ne.s32.totalorder %s166, %s169
      %p178 = scmp.eq.s32.totalorder %s20, 1
      %p179 = por %p177, %p178
      %p180 = scmp.ne.s32.totalorder %s169, %s170
      %p181 = scmp.eq.s32.totalorder %s20, 0
      %p182 = por %p180, %p181
      %p183 = scmp.ne.s32.totalorder %s169, %s170
      %p184 = scmp.eq.s32.totalorder %s21, 1
      %p185 = por %p183, %p184
      %p187 = scmp.ne.s32.totalorder %s170, %s186
      %p188 = scmp.eq.s32.totalorder %s21, 0
      %p189 = por %p187, %p188
      %p190 = scmp.le.s32.totalorder 1, %s15
      %p191 = scmp.lt.s32.totalorder %s15, 3
      %p192 = pnand %p190, %p191
      %p193 = pneg %p192
      // Predicated region
      $region9: #{block_forward.3} parent=5 // pred_check
        _
      $region10: #{block_forward.3} parent=5 // pred_check_branch
        %195 = sbr.rel (%p192) target = $region12
      $region11: #{block_forward.3} parent=5 // pred_region
        %s196 = ssub.s32 %s15, 1
        // Predicated region
        $region13: #{block_forward.3} parent=11 // pred_check
          %p197 = pneg %p62
        $region14: #{block_forward.3} parent=11 // pred_check_branch
          %199 = sbr.rel (%p197) target = $region16
        $region15: #{block_forward.3} parent=11 // pred_region
          _
        $region16: #{block_forward.3} parent=11 // pred_fallthru
          _
        // Predicated region
        $region17: #{block_forward.3} parent=11 // pred_check
          %p200 = pneg %p83
        $region18: #{block_forward.3} parent=11 // pred_check_branch
          %202 = sbr.rel (%p200) target = $region20
        $region19: #{block_forward.3} parent=11 // pred_region
          _
        $region20: #{block_forward.3} parent=11 // pred_fallthru
          _
        // Predicated region
        $region21: #{block_forward.3} parent=11 // pred_check
          %p203 = pneg %p104
        $region22: #{block_forward.3} parent=11 // pred_check_branch
          %205 = sbr.rel (%p203) target = $region24
        $region23: #{block_forward.3} parent=11 // pred_region
          _
        $region24: #{block_forward.3} parent=11 // pred_fallthru
          _
      $region12: #{block_forward.3} parent=5 // pred_fallthru
        _
      %p206 = scmp.lt.s32.totalorder %s15, 2
      // Predicated region
      $region25: #{block_forward.3} parent=5 // pred_check
        %p207 = pneg %p206
      $region26: #{block_forward.3} parent=5 // pred_check_branch
        %209 = sbr.rel (%p207) target = $region28
      $region27: #{block_forward.3} parent=5 // pred_region
        // Predicated region
        $region29: #{block_forward.3} parent=27 // pred_check
          %p210 = pneg %p35
        $region30: #{block_forward.3} parent=27 // pred_check_branch
          %212 = sbr.rel (%p210) target = $region32
        $region31: #{block_forward.3} parent=27 // pred_region
          %p213 = scmp.lt.s32.totalorder %s15, 1
          %s214 = scalar_select %p213, %s15, 1
          %s215 = smul.addr %s214, 128
          %s216 = smul.addr %s215, 8
          %s217 = scalar_lea.vmem %s0, %s216
        $region32: #{block_forward.3} parent=27 // pred_fallthru
          _
        // Predicated region
        $region33: #{block_forward.3} parent=27 // pred_check
          %p218 = pneg %p124
        $region34: #{block_forward.3} parent=27 // pred_check_branch
          %220 = sbr.rel (%p218) target = $region36
        $region35: #{block_forward.3} parent=27 // pred_region
          %p221 = scmp.lt.s32.totalorder %s15, 1
          %s222 = scalar_select %p221, %s15, 1
          %s223 = scalar_lea.vmem %s4, %s222
        $region36: #{block_forward.3} parent=27 // pred_fallthru
          _
        // Predicated region
        $region37: #{block_forward.3} parent=27 // pred_check
          %p224 = pneg %p150
        $region38: #{block_forward.3} parent=27 // pred_check_branch
          %226 = sbr.rel (%p224) target = $region40
        $region39: #{block_forward.3} parent=27 // pred_region
          %p227 = scmp.lt.s32.totalorder %s15, 1
          %s228 = scalar_select %p227, %s15, 1
          %s229 = scalar_lea.vmem %s5, %s228
        $region40: #{block_forward.3} parent=27 // pred_fallthru
          _
      $region28: #{block_forward.3} parent=5 // pred_fallthru
        _
      %p230 = scmp.le.s32.totalorder 1, %s15
      %p231 = scmp.lt.s32.totalorder %s15, 3
      %p232 = pnand %p230, %p231
      %p233 = pneg %p232
      // Predicated region
      $region41: #{block_forward.3} parent=5 // pred_check
        _
      $region42: #{block_forward.3} parent=5 // pred_check_branch
        %235 = sbr.rel (%p232) target = $region44
      $region43: #{block_forward.3} parent=5 // pred_region
        %s236 = ssub.s32 %s15, 1
        %p237 = scmp.lt.s32.totalorder %s20, 1
        %s238 = scalar_select %p237, %s20, 1
        %s239 = smul.addr %s238, 128
        %s240 = smul.addr %s239, 8
        %s241 = scalar_lea.vmem %s0, %s240
        %p242 = pneg %p41
        %p243 = pneg %p38
        %p244 = pneg %p62
        %p245 = pneg %p59
        %p246 = pneg %p83
        %p247 = pneg %p80
        %p248 = pneg %p104
        %p249 = pneg %p101
        %p250 = scmp.lt.s32.totalorder %s20, 1
        %s251 = scalar_select %p250, %s20, 1
        %s252 = scalar_lea.vmem %s4, %s251
        %p253 = pneg %p130
        %p254 = pneg %p127
        %p255 = scmp.lt.s32.totalorder %s20, 1
        %s256 = scalar_select %p255, %s20, 1
        %s257 = scalar_lea.vmem %s5, %s256
        %p258 = pneg %p156
        %p259 = pneg %p153
        %p260 = pneg %p182
        %p261 = pneg %p179
        %s262 = sand.u32 %s169, 1
        %s263 = scalar_lea.sflag [#allocation3], %s262
        %s264 = sand.u32 %s169, 1
        %s265 = smul.addr %s264, 1024
        %s266 = scalar_lea.vmem [#allocation2], %s265
        %p267 = scmp.lt.s32.totalorder %s20, 1
        %s268 = scalar_select %p267, %s20, 1
        %s269 = smul.addr %s268, 128
        %s270 = smul.addr %s269, 8
        %s271 = scalar_lea.vmem %s0, %s270
        %p272 = scmp.lt.s32.totalorder %s20, 1
        %s273 = scalar_select %p272, %s20, 1
        %s274 = scalar_lea.vmem %s4, %s273
        %p275 = scmp.lt.s32.totalorder %s20, 1
        %s276 = scalar_select %p275, %s20, 1
        %s277 = scalar_lea.vmem %s5, %s276
        %v278 = vld [vmem:[%s271] sm:$0xff]
        %v279 = vld [vmem:[%s271 + $0x8] sm:$0xff]
        %v280 = vld [vmem:[%s271 + $0x10] sm:$0xff]
        %v281 = vld [vmem:[%s271 + $0x18] sm:$0xff]
        %v282 = vld [vmem:[%s271 + $0x20] sm:$0xff]
        %v283 = vld [vmem:[%s271 + $0x28] sm:$0xff]
        %v284 = vld [vmem:[%s271 + $0x30] sm:$0xff]
        %v285 = vld [vmem:[%s271 + $0x38] sm:$0xff]
        %v286 = vld [vmem:[%s271 + $0x40] sm:$0xff]
        %v287 = vld [vmem:[%s271 + $0x48] sm:$0xff]
        %v288 = vld [vmem:[%s271 + $0x50] sm:$0xff]
        %v289 = vld [vmem:[%s271 + $0x58] sm:$0xff]
        %v290 = vld [vmem:[%s271 + $0x60] sm:$0xff]
        %v291 = vld [vmem:[%s271 + $0x68] sm:$0xff]
        %v292 = vld [vmem:[%s271 + $0x70] sm:$0xff]
        %v293 = vld [vmem:[%s271 + $0x78] sm:$0xff]
        %v294 = vld [vmem:[%s271 + $0x80] sm:$0xff]
        %v295 = vld [vmem:[%s271 + $0x88] sm:$0xff]
        %v296 = vld [vmem:[%s271 + $0x90] sm:$0xff]
        %v297 = vld [vmem:[%s271 + $0x98] sm:$0xff]
        %v298 = vld [vmem:[%s271 + $0xa0] sm:$0xff]
        %v299 = vld [vmem:[%s271 + $0xa8] sm:$0xff]
        %v300 = vld [vmem:[%s271 + $0xb0] sm:$0xff]
        %v301 = vld [vmem:[%s271 + $0xb8] sm:$0xff]
        %v302 = vld [vmem:[%s271 + $0xc0] sm:$0xff]
        %v303 = vld [vmem:[%s271 + $0xc8] sm:$0xff]
        %v304 = vld [vmem:[%s271 + $0xd0] sm:$0xff]
        %v305 = vld [vmem:[%s271 + $0xd8] sm:$0xff]
        %v306 = vld [vmem:[%s271 + $0xe0] sm:$0xff]
        %v307 = vld [vmem:[%s271 + $0xe8] sm:$0xff]
        %v308 = vld [vmem:[%s271 + $0xf0] sm:$0xff]
        %v309 = vld [vmem:[%s271 + $0xf8] sm:$0xff]
        %v310 = vld [vmem:[%s271 + $0x100] sm:$0xff]
        %v311 = vld [vmem:[%s271 + $0x108] sm:$0xff]
        %v312 = vld [vmem:[%s271 + $0x110] sm:$0xff]
        %v313 = vld [vmem:[%s271 + $0x118] sm:$0xff]
        %v314 = vld [vmem:[%s271 + $0x120] sm:$0xff]
        %v315 = vld [vmem:[%s271 + $0x128] sm:$0xff]
        %v316 = vld [vmem:[%s271 + $0x130] sm:$0xff]
        %v317 = vld [vmem:[%s271 + $0x138] sm:$0xff]
        %v318 = vld [vmem:[%s271 + $0x140] sm:$0xff]
        %v319 = vld [vmem:[%s271 + $0x148] sm:$0xff]
        %v320 = vld [vmem:[%s271 + $0x150] sm:$0xff]
        %v321 = vld [vmem:[%s271 + $0x158] sm:$0xff]
        %v322 = vld [vmem:[%s271 + $0x160] sm:$0xff]
        %v323 = vld [vmem:[%s271 + $0x168] sm:$0xff]
        %v324 = vld [vmem:[%s271 + $0x170] sm:$0xff]
        %v325 = vld [vmem:[%s271 + $0x178] sm:$0xff]
        %v326 = vld [vmem:[%s271 + $0x180] sm:$0xff]
        %v327 = vld [vmem:[%s271 + $0x188] sm:$0xff]
        %v328 = vld [vmem:[%s271 + $0x190] sm:$0xff]
        %v329 = vld [vmem:[%s271 + $0x198] sm:$0xff]
        %v330 = vld [vmem:[%s271 + $0x1a0] sm:$0xff]
        %v331 = vld [vmem:[%s271 + $0x1a8] sm:$0xff]
        %v332 = vld [vmem:[%s271 + $0x1b0] sm:$0xff]
        %v333 = vld [vmem:[%s271 + $0x1b8] sm:$0xff]
        %v334 = vld [vmem:[%s271 + $0x1c0] sm:$0xff]
        %v335 = vld [vmem:[%s271 + $0x1c8] sm:$0xff]
        %v336 = vld [vmem:[%s271 + $0x1d0] sm:$0xff]
        %v337 = vld [vmem:[%s271 + $0x1d8] sm:$0xff]
        %v338 = vld [vmem:[%s271 + $0x1e0] sm:$0xff]
        %v339 = vld [vmem:[%s271 + $0x1e8] sm:$0xff]
        %v340 = vld [vmem:[%s271 + $0x1f0] sm:$0xff]
        %v341 = vld [vmem:[%s271 + $0x1f8] sm:$0xff]
        %v342 = vld [vmem:[%s271 + $0x200] sm:$0xff]
        %v343 = vld [vmem:[%s271 + $0x208] sm:$0xff]
        %v344 = vld [vmem:[%s271 + $0x210] sm:$0xff]
        %v345 = vld [vmem:[%s271 + $0x218] sm:$0xff]
        %v346 = vld [vmem:[%s271 + $0x220] sm:$0xff]
        %v347 = vld [vmem:[%s271 + $0x228] sm:$0xff]
        %v348 = vld [vmem:[%s271 + $0x230] sm:$0xff]
        %v349 = vld [vmem:[%s271 + $0x238] sm:$0xff]
        %v350 = vld [vmem:[%s271 + $0x240] sm:$0xff]
        %v351 = vld [vmem:[%s271 + $0x248] sm:$0xff]
        %v352 = vld [vmem:[%s271 + $0x250] sm:$0xff]
        %v353 = vld [vmem:[%s271 + $0x258] sm:$0xff]
        %v354 = vld [vmem:[%s271 + $0x260] sm:$0xff]
        %v355 = vld [vmem:[%s271 + $0x268] sm:$0xff]
        %v356 = vld [vmem:[%s271 + $0x270] sm:$0xff]
        %v357 = vld [vmem:[%s271 + $0x278] sm:$0xff]
        %v358 = vld [vmem:[%s271 + $0x280] sm:$0xff]
        %v359 = vld [vmem:[%s271 + $0x288] sm:$0xff]
        %v360 = vld [vmem:[%s271 + $0x290] sm:$0xff]
        %v361 = vld [vmem:[%s271 + $0x298] sm:$0xff]
        %v362 = vld [vmem:[%s271 + $0x2a0] sm:$0xff]
        %v363 = vld [vmem:[%s271 + $0x2a8] sm:$0xff]
        %v364 = vld [vmem:[%s271 + $0x2b0] sm:$0xff]
        %v365 = vld [vmem:[%s271 + $0x2b8] sm:$0xff]
        %v366 = vld [vmem:[%s271 + $0x2c0] sm:$0xff]
        %v367 = vld [vmem:[%s271 + $0x2c8] sm:$0xff]
        %v368 = vld [vmem:[%s271 + $0x2d0] sm:$0xff]
        %v369 = vld [vmem:[%s271 + $0x2d8] sm:$0xff]
        %v370 = vld [vmem:[%s271 + $0x2e0] sm:$0xff]
        %v371 = vld [vmem:[%s271 + $0x2e8] sm:$0xff]
        %v372 = vld [vmem:[%s271 + $0x2f0] sm:$0xff]
        %v373 = vld [vmem:[%s271 + $0x2f8] sm:$0xff]
        %v374 = vld [vmem:[%s271 + $0x300] sm:$0xff]
        %v375 = vld [vmem:[%s271 + $0x308] sm:$0xff]
        %v376 = vld [vmem:[%s271 + $0x310] sm:$0xff]
        %v377 = vld [vmem:[%s271 + $0x318] sm:$0xff]
        %v378 = vld [vmem:[%s271 + $0x320] sm:$0xff]
        %v379 = vld [vmem:[%s271 + $0x328] sm:$0xff]
        %v380 = vld [vmem:[%s271 + $0x330] sm:$0xff]
        %v381 = vld [vmem:[%s271 + $0x338] sm:$0xff]
        %v382 = vld [vmem:[%s271 + $0x340] sm:$0xff]
        %v383 = vld [vmem:[%s271 + $0x348] sm:$0xff]
        %v384 = vld [vmem:[%s271 + $0x350] sm:$0xff]
        %v385 = vld [vmem:[%s271 + $0x358] sm:$0xff]
        %v386 = vld [vmem:[%s271 + $0x360] sm:$0xff]
        %v387 = vld [vmem:[%s271 + $0x368] sm:$0xff]
        %v388 = vld [vmem:[%s271 + $0x370] sm:$0xff]
        %v389 = vld [vmem:[%s271 + $0x378] sm:$0xff]
        %v390 = vld [vmem:[%s271 + $0x380] sm:$0xff]
        %v391 = vld [vmem:[%s271 + $0x388] sm:$0xff]
        %v392 = vld [vmem:[%s271 + $0x390] sm:$0xff]
        %v393 = vld [vmem:[%s271 + $0x398] sm:$0xff]
        %v394 = vld [vmem:[%s271 + $0x3a0] sm:$0xff]
        %v395 = vld [vmem:[%s271 + $0x3a8] sm:$0xff]
        %v396 = vld [vmem:[%s271 + $0x3b0] sm:$0xff]
        %v397 = vld [vmem:[%s271 + $0x3b8] sm:$0xff]
        %v398 = vld [vmem:[%s271 + $0x3c0] sm:$0xff]
        %v399 = vld [vmem:[%s271 + $0x3c8] sm:$0xff]
        %v400 = vld [vmem:[%s271 + $0x3d0] sm:$0xff]
        %v401 = vld [vmem:[%s271 + $0x3d8] sm:$0xff]
        %v402 = vld [vmem:[%s271 + $0x3e0] sm:$0xff]
        %v403 = vld [vmem:[%s271 + $0x3e8] sm:$0xff]
        %v404 = vld [vmem:[%s271 + $0x3f0] sm:$0xff]
        %v405 = vld [vmem:[%s271 + $0x3f8] sm:$0xff]
        %v406 = vadd.f32 %v278, %v279
        %v407 = vadd.f32 %v406, %v280
        %v408 = vadd.f32 %v407, %v281
        %v409 = vadd.f32 %v408, %v282
        %v410 = vadd.f32 %v409, %v283
        %v411 = vadd.f32 %v410, %v284
        %v412 = vadd.f32 %v411, %v285
        %v413 = vadd.f32 %v412, %v286
        %v414 = vadd.f32 %v413, %v287
        %v415 = vadd.f32 %v414, %v288
        %v416 = vadd.f32 %v415, %v289
        %v417 = vadd.f32 %v416, %v290
        %v418 = vadd.f32 %v417, %v291
        %v419 = vadd.f32 %v418, %v292
        %v420 = vadd.f32 %v419, %v293
        %v421 = vadd.f32 %v420, %v294
        %v422 = vadd.f32 %v421, %v295
        %v423 = vadd.f32 %v422, %v296
        %v424 = vadd.f32 %v423, %v297
        %v425 = vadd.f32 %v424, %v298
        %v426 = vadd.f32 %v425, %v299
        %v427 = vadd.f32 %v426, %v300
        %v428 = vadd.f32 %v427, %v301
        %v429 = vadd.f32 %v428, %v302
        %v430 = vadd.f32 %v429, %v303
        %v431 = vadd.f32 %v430, %v304
        %v432 = vadd.f32 %v431, %v305
        %v433 = vadd.f32 %v432, %v306
        %v434 = vadd.f32 %v433, %v307
        %v435 = vadd.f32 %v434, %v308
        %v436 = vadd.f32 %v435, %v309
        %v437 = vadd.f32 %v436, %v310
        %v438 = vadd.f32 %v437, %v311
        %v439 = vadd.f32 %v438, %v312
        %v440 = vadd.f32 %v439, %v313
        %v441 = vadd.f32 %v440, %v314
        %v442 = vadd.f32 %v441, %v315
        %v443 = vadd.f32 %v442, %v316
        %v444 = vadd.f32 %v443, %v317
        %v445 = vadd.f32 %v444, %v318
        %v446 = vadd.f32 %v445, %v319
        %v447 = vadd.f32 %v446, %v320
        %v448 = vadd.f32 %v447, %v321
        %v449 = vadd.f32 %v448, %v322
        %v450 = vadd.f32 %v449, %v323
        %v451 = vadd.f32 %v450, %v324
        %v452 = vadd.f32 %v451, %v325
        %v453 = vadd.f32 %v452, %v326
        %v454 = vadd.f32 %v453, %v327
        %v455 = vadd.f32 %v454, %v328
        %v456 = vadd.f32 %v455, %v329
        %v457 = vadd.f32 %v456, %v330
        %v458 = vadd.f32 %v457, %v331
        %v459 = vadd.f32 %v458, %v332
        %v460 = vadd.f32 %v459, %v333
        %v461 = vadd.f32 %v460, %v334
        %v462 = vadd.f32 %v461, %v335
        %v463 = vadd.f32 %v462, %v336
        %v464 = vadd.f32 %v463, %v337
        %v465 = vadd.f32 %v464, %v338
        %v466 = vadd.f32 %v465, %v339
        %v467 = vadd.f32 %v466, %v340
        %v468 = vadd.f32 %v467, %v341
        %v469 = vadd.f32 %v468, %v342
        %v470 = vadd.f32 %v469, %v343
        %v471 = vadd.f32 %v470, %v344
        %v472 = vadd.f32 %v471, %v345
        %v473 = vadd.f32 %v472, %v346
        %v474 = vadd.f32 %v473, %v347
        %v475 = vadd.f32 %v474, %v348
        %v476 = vadd.f32 %v475, %v349
        %v477 = vadd.f32 %v476, %v350
        %v478 = vadd.f32 %v477, %v351
        %v479 = vadd.f32 %v478, %v352
        %v480 = vadd.f32 %v479, %v353
        %v481 = vadd.f32 %v480, %v354
        %v482 = vadd.f32 %v481, %v355
        %v483 = vadd.f32 %v482, %v356
        %v484 = vadd.f32 %v483, %v357
        %v485 = vadd.f32 %v484, %v358
        %v486 = vadd.f32 %v485, %v359
        %v487 = vadd.f32 %v486, %v360
        %v488 = vadd.f32 %v487, %v361
        %v489 = vadd.f32 %v488, %v362
        %v490 = vadd.f32 %v489, %v363
        %v491 = vadd.f32 %v490, %v364
        %v492 = vadd.f32 %v491, %v365
        %v493 = vadd.f32 %v492, %v366
        %v494 = vadd.f32 %v493, %v367
        %v495 = vadd.f32 %v494, %v368
        %v496 = vadd.f32 %v495, %v369
        %v497 = vadd.f32 %v496, %v370
        %v498 = vadd.f32 %v497, %v371
        %v499 = vadd.f32 %v498, %v372
        %v500 = vadd.f32 %v499, %v373
        %v501 = vadd.f32 %v500, %v374
        %v502 = vadd.f32 %v501, %v375
        %v503 = vadd.f32 %v502, %v376
        %v504 = vadd.f32 %v503, %v377
        %v505 = vadd.f32 %v504, %v378
        %v506 = vadd.f32 %v505, %v379
        %v507 = vadd.f32 %v506, %v380
        %v508 = vadd.f32 %v507, %v381
        %v509 = vadd.f32 %v508, %v382
        %v510 = vadd.f32 %v509, %v383
        %v511 = vadd.f32 %v510, %v384
        %v512 = vadd.f32 %v511, %v385
        %v513 = vadd.f32 %v512, %v386
        %v514 = vadd.f32 %v513, %v387
        %v515 = vadd.f32 %v514, %v388
        %v516 = vadd.f32 %v515, %v389
        %v517 = vadd.f32 %v516, %v390
        %v518 = vadd.f32 %v517, %v391
        %v519 = vadd.f32 %v518, %v392
        %v520 = vadd.f32 %v519, %v393
        %v521 = vadd.f32 %v520, %v394
        %v522 = vadd.f32 %v521, %v395
        %v523 = vadd.f32 %v522, %v396
        %v524 = vadd.f32 %v523, %v397
        %v525 = vadd.f32 %v524, %v398
        %v526 = vadd.f32 %v525, %v399
        %v527 = vadd.f32 %v526, %v400
        %v528 = vadd.f32 %v527, %v401
        %v529 = vadd.f32 %v528, %v402
        %v530 = vadd.f32 %v529, %v403
        %v531 = vadd.f32 %v530, %v404
        %v532 = vadd.f32 %v531, %v405
        %v533 = vrot.slane %v532, 4
        %v534 = vadd.f32 %v532, %v533
        %v535 = vrot.slane %v534, 2
        %v536 = vadd.f32 %v534, %v535
        %v537 = vrot.slane %v536, 1
        %v538 = vadd.f32 %v536, %v537
        %v539 = vld [vmem:[%s1] sm:$0xff]
        %v540 = vld [vmem:[%s1 + $0x8] sm:$0xff]
        %v541 = vld [vmem:[%s1 + $0x10] sm:$0xff]
        %v542 = vld [vmem:[%s1 + $0x18] sm:$0xff]
        %v543 = vld [vmem:[%s1 + $0x20] sm:$0xff]
        %v544 = vld [vmem:[%s1 + $0x28] sm:$0xff]
        %v545 = vld [vmem:[%s1 + $0x30] sm:$0xff]
        %v546 = vld [vmem:[%s1 + $0x38] sm:$0xff]
        %v547 = vld [vmem:[%s1 + $0x40] sm:$0xff]
        %v548 = vld [vmem:[%s1 + $0x48] sm:$0xff]
        %v549 = vld [vmem:[%s1 + $0x50] sm:$0xff]
        %v550 = vld [vmem:[%s1 + $0x58] sm:$0xff]
        %v551 = vld [vmem:[%s1 + $0x60] sm:$0xff]
        %v552 = vld [vmem:[%s1 + $0x68] sm:$0xff]
        %v553 = vld [vmem:[%s1 + $0x70] sm:$0xff]
        %v554 = vld [vmem:[%s1 + $0x78] sm:$0xff]
        %555 = vmatprep.subr.mxu0 0.0
        %556 = vmatpush1.msra.mxu0 %v539
        %557 = vmatprep.subr.mxu0 0.0
        %558 = vmatpush1.msra.mxu0 %v540
        %559 = vmatprep.subr.mxu0 0.0
        %560 = vmatpush1.msra.mxu0 %v541
        %561 = vmatprep.subr.mxu0 0.0
        %562 = vmatpush1.msra.mxu0 %v542
        %563 = vmatprep.subr.mxu0 0.0
        %564 = vmatpush1.msra.mxu0 %v543
        %565 = vmatprep.subr.mxu0 0.0
        %566 = vmatpush1.msra.mxu0 %v544
        %567 = vmatprep.subr.mxu0 0.0
        %568 = vmatpush1.msra.mxu0 %v545
        %569 = vmatprep.subr.mxu0 0.0
        %570 = vmatpush1.msra.mxu0 %v546
        %571 = vmatprep.subr.mxu0 0.0
        %572 = vmatpush1.msra.mxu0 %v547
        %573 = vmatprep.subr.mxu0 0.0
        %574 = vmatpush1.msra.mxu0 %v548
        %575 = vmatprep.subr.mxu0 0.0
        %576 = vmatpush1.msra.mxu0 %v549
        %577 = vmatprep.subr.mxu0 0.0
        %578 = vmatpush1.msra.mxu0 %v550
        %579 = vmatprep.subr.mxu0 0.0
        %580 = vmatpush1.msra.mxu0 %v551
        %581 = vmatprep.subr.mxu0 0.0
        %582 = vmatpush1.msra.mxu0 %v552
        %583 = vmatprep.subr.mxu0 0.0
        %584 = vmatpush1.msra.mxu0 %v553
        %585 = vmatprep.subr.mxu0 0.0
        %586 = vmatpush1.msra.mxu0 %v554
        %587 = vmatprep.subr.mxu0 0.0
        %588 = vmatpush1.msra.mxu0 0.0
        %589 = vmatprep.subr.mxu0 0.0
        %590 = vmatpush1.msra.mxu0 0.0
        %591 = vmatprep.subr.mxu0 0.0
        %592 = vmatpush1.msra.mxu0 0.0
        %593 = vmatprep.subr.mxu0 0.0
        %594 = vmatpush1.msra.mxu0 0.0
        %595 = vmatprep.subr.mxu0 0.0
        %596 = vmatpush1.msra.mxu0 0.0
        %597 = vmatprep.subr.mxu0 0.0
        %598 = vmatpush1.msra.mxu0 0.0
        %599 = vmatprep.subr.mxu0 0.0
        %600 = vmatpush1.msra.mxu0 0.0
        %601 = vmatprep.subr.mxu0 0.0
        %602 = vmatpush1.msra.mxu0 0.0
        %603 = vmatprep.subr.mxu0 0.0
        %604 = vmatpush1.msra.mxu0 0.0
        %605 = vmatprep.subr.mxu0 0.0
        %606 = vmatpush1.msra.mxu0 0.0
        %607 = vmatprep.subr.mxu0 0.0
        %608 = vmatpush1.msra.mxu0 0.0
        %609 = vmatprep.subr.mxu0 0.0
        %610 = vmatpush1.msra.mxu0 0.0
        %611 = vmatprep.subr.mxu0 0.0
        %612 = vmatpush1.msra.mxu0 0.0
        %613 = vmatprep.subr.mxu0 0.0
        %614 = vmatpush1.msra.mxu0 0.0
        %615 = vmatprep.subr.mxu0 0.0
        %616 = vmatpush1.msra.mxu0 0.0
        %617 = vmatprep.subr.mxu0 0.0
        %618 = vmatpush1.msra.mxu0 0.0
        %619 = vmatprep.mubr.f32.mxu0 0.0
        %620 = vmatmul.mubr.f32.gmra.mrb[0].mxu0 %v538
        %v621 = vpop.f32.mrb[0].mxu0
        %v622 = vadd.f32 0.0, %v621
        %v623 = vpop.f32.mrb[0].mxu0
        %624 = vdwg.mxu0
        %v625 = vmul.f32 %v622, 6.1035156e-05
        %v626 = vlaneseq
        %v627 = vshrl.u32 %v626, 7
        %v628 = vsub.s32 0, %v627
        %v629 = vrot.slane %v625, %v628
        %v630 = vsub.f32 %v278, %v629
        %v631 = vsub.f32 %v279, %v629
        %v632 = vsub.f32 %v280, %v629
        %v633 = vsub.f32 %v281, %v629
        %v634 = vsub.f32 %v282, %v629
        %v635 = vsub.f32 %v283, %v629
        %v636 = vsub.f32 %v284, %v629
        %v637 = vsub.f32 %v285, %v629
        %v638 = vsub.f32 %v286, %v629
        %v639 = vsub.f32 %v287, %v629
        %v640 = vsub.f32 %v288, %v629
        %v641 = vsub.f32 %v289, %v629
        %v642 = vsub.f32 %v290, %v629
        %v643 = vsub.f32 %v291, %v629
        %v644 = vsub.f32 %v292, %v629
        %v645 = vsub.f32 %v293, %v629
        %v646 = vsub.f32 %v294, %v629
        %v647 = vsub.f32 %v295, %v629
        %v648 = vsub.f32 %v296, %v629
        %v649 = vsub.f32 %v297, %v629
        %v650 = vsub.f32 %v298, %v629
        %v651 = vsub.f32 %v299, %v629
        %v652 = vsub.f32 %v300, %v629
        %v653 = vsub.f32 %v301, %v629
        %v654 = vsub.f32 %v302, %v629
        %v655 = vsub.f32 %v303, %v629
        %v656 = vsub.f32 %v304, %v629
        %v657 = vsub.f32 %v305, %v629
        %v658 = vsub.f32 %v306, %v629
        %v659 = vsub.f32 %v307, %v629
        %v660 = vsub.f32 %v308, %v629
        %v661 = vsub.f32 %v309, %v629
        %v662 = vsub.f32 %v310, %v629
        %v663 = vsub.f32 %v311, %v629
        %v664 = vsub.f32 %v312, %v629
        %v665 = vsub.f32 %v313, %v629
        %v666 = vsub.f32 %v314, %v629
        %v667 = vsub.f32 %v315, %v629
        %v668 = vsub.f32 %v316, %v629
        %v669 = vsub.f32 %v317, %v629
        %v670 = vsub.f32 %v318, %v629
        %v671 = vsub.f32 %v319, %v629
        %v672 = vsub.f32 %v320, %v629
        %v673 = vsub.f32 %v321, %v629
        %v674 = vsub.f32 %v322, %v629
        %v675 = vsub.f32 %v323, %v629
        %v676 = vsub.f32 %v324, %v629
        %v677 = vsub.f32 %v325, %v629
        %v678 = vsub.f32 %v326, %v629
        %v679 = vsub.f32 %v327, %v629
        %v680 = vsub.f32 %v328, %v629
        %v681 = vsub.f32 %v329, %v629
        %v682 = vsub.f32 %v330, %v629
        %v683 = vsub.f32 %v331, %v629
        %v684 = vsub.f32 %v332, %v629
        %v685 = vsub.f32 %v333, %v629
        %v686 = vsub.f32 %v334, %v629
        %v687 = vsub.f32 %v335, %v629
        %v688 = vsub.f32 %v336, %v629
        %v689 = vsub.f32 %v337, %v629
        %v690 = vsub.f32 %v338, %v629
        %v691 = vsub.f32 %v339, %v629
        %v692 = vsub.f32 %v340, %v629
        %v693 = vsub.f32 %v341, %v629
        %v694 = vsub.f32 %v342, %v629
        %v695 = vsub.f32 %v343, %v629
        %v696 = vsub.f32 %v344, %v629
        %v697 = vsub.f32 %v345, %v629
        %v698 = vsub.f32 %v346, %v629
        %v699 = vsub.f32 %v347, %v629
        %v700 = vsub.f32 %v348, %v629
        %v701 = vsub.f32 %v349, %v629
        %v702 = vsub.f32 %v350, %v629
        %v703 = vsub.f32 %v351, %v629
        %v704 = vsub.f32 %v352, %v629
        %v705 = vsub.f32 %v353, %v629
        %v706 = vsub.f32 %v354, %v629
        %v707 = vsub.f32 %v355, %v629
        %v708 = vsub.f32 %v356, %v629
        %v709 = vsub.f32 %v357, %v629
        %v710 = vsub.f32 %v358, %v629
        %v711 = vsub.f32 %v359, %v629
        %v712 = vsub.f32 %v360, %v629
        %v713 = vsub.f32 %v361, %v629
        %v714 = vsub.f32 %v362, %v629
        %v715 = vsub.f32 %v363, %v629
        %v716 = vsub.f32 %v364, %v629
        %v717 = vsub.f32 %v365, %v629
        %v718 = vsub.f32 %v366, %v629
        %v719 = vsub.f32 %v367, %v629
        %v720 = vsub.f32 %v368, %v629
        %v721 = vsub.f32 %v369, %v629
        %v722 = vsub.f32 %v370, %v629
        %v723 = vsub.f32 %v371, %v629
        %v724 = vsub.f32 %v372, %v629
        %v725 = vsub.f32 %v373, %v629
        %v726 = vsub.f32 %v374, %v629
        %v727 = vsub.f32 %v375, %v629
        %v728 = vsub.f32 %v376, %v629
        %v729 = vsub.f32 %v377, %v629
        %v730 = vsub.f32 %v378, %v629
        %v731 = vsub.f32 %v379, %v629
        %v732 = vsub.f32 %v380, %v629
        %v733 = vsub.f32 %v381, %v629
        %v734 = vsub.f32 %v382, %v629
        %v735 = vsub.f32 %v383, %v629
        %v736 = vsub.f32 %v384, %v629
        %v737 = vsub.f32 %v385, %v629
        %v738 = vsub.f32 %v386, %v629
        %v739 = vsub.f32 %v387, %v629
        %v740 = vsub.f32 %v388, %v629
        %v741 = vsub.f32 %v389, %v629
        %v742 = vsub.f32 %v390, %v629
        %v743 = vsub.f32 %v391, %v629
        %v744 = vsub.f32 %v392, %v629
        %v745 = vsub.f32 %v393, %v629
        %v746 = vsub.f32 %v394, %v629
        %v747 = vsub.f32 %v395, %v629
        %v748 = vsub.f32 %v396, %v629
        %v749 = vsub.f32 %v397, %v629
        %v750 = vsub.f32 %v398, %v629
        %v751 = vsub.f32 %v399, %v629
        %v752 = vsub.f32 %v400, %v629
        %v753 = vsub.f32 %v401, %v629
        %v754 = vsub.f32 %v402, %v629
        %v755 = vsub.f32 %v403, %v629
        %v756 = vsub.f32 %v404, %v629
        %v757 = vsub.f32 %v405, %v629
        %v758 = vmul.f32 %v630, %v630
        %v759 = vmul.f32 %v631, %v631
        %v760 = vmul.f32 %v632, %v632
        %v761 = vmul.f32 %v633, %v633
        %v762 = vmul.f32 %v634, %v634
        %v763 = vmul.f32 %v635, %v635
        %v764 = vmul.f32 %v636, %v636
        %v765 = vmul.f32 %v637, %v637
        %v766 = vmul.f32 %v638, %v638
        %v767 = vmul.f32 %v639, %v639
        %v768 = vmul.f32 %v640, %v640
        %v769 = vmul.f32 %v641, %v641
        %v770 = vmul.f32 %v642, %v642
        %v771 = vmul.f32 %v643, %v643
        %v772 = vmul.f32 %v644, %v644
        %v773 = vmul.f32 %v645, %v645
        %v774 = vmul.f32 %v646, %v646
        %v775 = vmul.f32 %v647, %v647
        %v776 = vmul.f32 %v648, %v648
        %v777 = vmul.f32 %v649, %v649
        %v778 = vmul.f32 %v650, %v650
        %v779 = vmul.f32 %v651, %v651
        %v780 = vmul.f32 %v652, %v652
        %v781 = vmul.f32 %v653, %v653
        %v782 = vmul.f32 %v654, %v654
        %v783 = vmul.f32 %v655, %v655
        %v784 = vmul.f32 %v656, %v656
        %v785 = vmul.f32 %v657, %v657
        %v786 = vmul.f32 %v658, %v658
        %v787 = vmul.f32 %v659, %v659
        %v788 = vmul.f32 %v660, %v660
        %v789 = vmul.f32 %v661, %v661
        %v790 = vmul.f32 %v662, %v662
        %v791 = vmul.f32 %v663, %v663
        %v792 = vmul.f32 %v664, %v664
        %v793 = vmul.f32 %v665, %v665
        %v794 = vmul.f32 %v666, %v666
        %v795 = vmul.f32 %v667, %v667
        %v796 = vmul.f32 %v668, %v668
        %v797 = vmul.f32 %v669, %v669
        %v798 = vmul.f32 %v670, %v670
        %v799 = vmul.f32 %v671, %v671
        %v800 = vmul.f32 %v672, %v672
        %v801 = vmul.f32 %v673, %v673
        %v802 = vmul.f32 %v674, %v674
        %v803 = vmul.f32 %v675, %v675
        %v804 = vmul.f32 %v676, %v676
        %v805 = vmul.f32 %v677, %v677
        %v806 = vmul.f32 %v678, %v678
        %v807 = vmul.f32 %v679, %v679
        %v808 = vmul.f32 %v680, %v680
        %v809 = vmul.f32 %v681, %v681
        %v810 = vmul.f32 %v682, %v682
        %v811 = vmul.f32 %v683, %v683
        %v812 = vmul.f32 %v684, %v684
        %v813 = vmul.f32 %v685, %v685
        %v814 = vmul.f32 %v686, %v686
        %v815 = vmul.f32 %v687, %v687
        %v816 = vmul.f32 %v688, %v688
        %v817 = vmul.f32 %v689, %v689
        %v818 = vmul.f32 %v690, %v690
        %v819 = vmul.f32 %v691, %v691
        %v820 = vmul.f32 %v692, %v692
        %v821 = vmul.f32 %v693, %v693
        %v822 = vmul.f32 %v694, %v694
        %v823 = vmul.f32 %v695, %v695
        %v824 = vmul.f32 %v696, %v696
        %v825 = vmul.f32 %v697, %v697
        %v826 = vmul.f32 %v698, %v698
        %v827 = vmul.f32 %v699, %v699
        %v828 = vmul.f32 %v700, %v700
        %v829 = vmul.f32 %v701, %v701
        %v830 = vmul.f32 %v702, %v702
        %v831 = vmul.f32 %v703, %v703
        %v832 = vmul.f32 %v704, %v704
        %v833 = vmul.f32 %v705, %v705
        %v834 = vmul.f32 %v706, %v706
        %v835 = vmul.f32 %v707, %v707
        %v836 = vmul.f32 %v708, %v708
        %v837 = vmul.f32 %v709, %v709
        %v838 = vmul.f32 %v710, %v710
        %v839 = vmul.f32 %v711, %v711
        %v840 = vmul.f32 %v712, %v712
        %v841 = vmul.f32 %v713, %v713
        %v842 = vmul.f32 %v714, %v714
        %v843 = vmul.f32 %v715, %v715
        %v844 = vmul.f32 %v716, %v716
        %v845 = vmul.f32 %v717, %v717
        %v846 = vmul.f32 %v718, %v718
        %v847 = vmul.f32 %v719, %v719
        %v848 = vmul.f32 %v720, %v720
        %v849 = vmul.f32 %v721, %v721
        %v850 = vmul.f32 %v722, %v722
        %v851 = vmul.f32 %v723, %v723
        %v852 = vmul.f32 %v724, %v724
        %v853 = vmul.f32 %v725, %v725
        %v854 = vmul.f32 %v726, %v726
        %v855 = vmul.f32 %v727, %v727
        %v856 = vmul.f32 %v728, %v728
        %v857 = vmul.f32 %v729, %v729
        %v858 = vmul.f32 %v730, %v730
        %v859 = vmul.f32 %v731, %v731
        %v860 = vmul.f32 %v732, %v732
        %v861 = vmul.f32 %v733, %v733
        %v862 = vmul.f32 %v734, %v734
        %v863 = vmul.f32 %v735, %v735
        %v864 = vmul.f32 %v736, %v736
        %v865 = vmul.f32 %v737, %v737
        %v866 = vmul.f32 %v738, %v738
        %v867 = vmul.f32 %v739, %v739
        %v868 = vmul.f32 %v740, %v740
        %v869 = vmul.f32 %v741, %v741
        %v870 = vmul.f32 %v742, %v742
        %v871 = vmul.f32 %v743, %v743
        %v872 = vmul.f32 %v744, %v744
        %v873 = vmul.f32 %v745, %v745
        %v874 = vmul.f32 %v746, %v746
        %v875 = vmul.f32 %v747, %v747
        %v876 = vmul.f32 %v748, %v748
        %v877 = vmul.f32 %v749, %v749
        %v878 = vmul.f32 %v750, %v750
        %v879 = vmul.f32 %v751, %v751
        %v880 = vmul.f32 %v752, %v752
        %v881 = vmul.f32 %v753, %v753
        %v882 = vmul.f32 %v754, %v754
        %v883 = vmul.f32 %v755, %v755
        %v884 = vmul.f32 %v756, %v756
        %v885 = vmul.f32 %v757, %v757
        %v886 = vadd.f32 %v758, %v759
        %v887 = vadd.f32 %v886, %v760
        %v888 = vadd.f32 %v887, %v761
        %v889 = vadd.f32 %v888, %v762
        %v890 = vadd.f32 %v889, %v763
        %v891 = vadd.f32 %v890, %v764
        %v892 = vadd.f32 %v891, %v765
        %v893 = vadd.f32 %v892, %v766
        %v894 = vadd.f32 %v893, %v767
        %v895 = vadd.f32 %v894, %v768
        %v896 = vadd.f32 %v895, %v769
        %v897 = vadd.f32 %v896, %v770
        %v898 = vadd.f32 %v897, %v771
        %v899 = vadd.f32 %v898, %v772
        %v900 = vadd.f32 %v899, %v773
        %v901 = vadd.f32 %v900, %v774
        %v902 = vadd.f32 %v901, %v775
        %v903 = vadd.f32 %v902, %v776
        %v904 = vadd.f32 %v903, %v777
        %v905 = vadd.f32 %v904, %v778
        %v906 = vadd.f32 %v905, %v779
        %v907 = vadd.f32 %v906, %v780
        %v908 = vadd.f32 %v907, %v781
        %v909 = vadd.f32 %v908, %v782
        %v910 = vadd.f32 %v909, %v783
        %v911 = vadd.f32 %v910, %v784
        %v912 = vadd.f32 %v911, %v785
        %v913 = vadd.f32 %v912, %v786
        %v914 = vadd.f32 %v913, %v787
        %v915 = vadd.f32 %v914, %v788
        %v916 = vadd.f32 %v915, %v789
        %v917 = vadd.f32 %v916, %v790
        %v918 = vadd.f32 %v917, %v791
        %v919 = vadd.f32 %v918, %v792
        %v920 = vadd.f32 %v919, %v793
        %v921 = vadd.f32 %v920, %v794
        %v922 = vadd.f32 %v921, %v795
        %v923 = vadd.f32 %v922, %v796
        %v924 = vadd.f32 %v923, %v797
        %v925 = vadd.f32 %v924, %v798
        %v926 = vadd.f32 %v925, %v799
        %v927 = vadd.f32 %v926, %v800
        %v928 = vadd.f32 %v927, %v801
        %v929 = vadd.f32 %v928, %v802
        %v930 = vadd.f32 %v929, %v803
        %v931 = vadd.f32 %v930, %v804
        %v932 = vadd.f32 %v931, %v805
        %v933 = vadd.f32 %v932, %v806
        %v934 = vadd.f32 %v933, %v807
        %v935 = vadd.f32 %v934, %v808
        %v936 = vadd.f32 %v935, %v809
        %v937 = vadd.f32 %v936, %v810
        %v938 = vadd.f32 %v937, %v811
        %v939 = vadd.f32 %v938, %v812
        %v940 = vadd.f32 %v939, %v813
        %v941 = vadd.f32 %v940, %v814
        %v942 = vadd.f32 %v941, %v815
        %v943 = vadd.f32 %v942, %v816
        %v944 = vadd.f32 %v943, %v817
        %v945 = vadd.f32 %v944, %v818
        %v946 = vadd.f32 %v945, %v819
        %v947 = vadd.f32 %v946, %v820
        %v948 = vadd.f32 %v947, %v821
        %v949 = vadd.f32 %v948, %v822
        %v950 = vadd.f32 %v949, %v823
        %v951 = vadd.f32 %v950, %v824
        %v952 = vadd.f32 %v951, %v825
        %v953 = vadd.f32 %v952, %v826
        %v954 = vadd.f32 %v953, %v827
        %v955 = vadd.f32 %v954, %v828
        %v956 = vadd.f32 %v955, %v829
        %v957 = vadd.f32 %v956, %v830
        %v958 = vadd.f32 %v957, %v831
        %v959 = vadd.f32 %v958, %v832
        %v960 = vadd.f32 %v959, %v833
        %v961 = vadd.f32 %v960, %v834
        %v962 = vadd.f32 %v961, %v835
        %v963 = vadd.f32 %v962, %v836
        %v964 = vadd.f32 %v963, %v837
        %v965 = vadd.f32 %v964, %v838
        %v966 = vadd.f32 %v965, %v839
        %v967 = vadd.f32 %v966, %v840
        %v968 = vadd.f32 %v967, %v841
        %v969 = vadd.f32 %v968, %v842
        %v970 = vadd.f32 %v969, %v843
        %v971 = vadd.f32 %v970, %v844
        %v972 = vadd.f32 %v971, %v845
        %v973 = vadd.f32 %v972, %v846
        %v974 = vadd.f32 %v973, %v847
        %v975 = vadd.f32 %v974, %v848
        %v976 = vadd.f32 %v975, %v849
        %v977 = vadd.f32 %v976, %v850
        %v978 = vadd.f32 %v977, %v851
        %v979 = vadd.f32 %v978, %v852
        %v980 = vadd.f32 %v979, %v853
        %v981 = vadd.f32 %v980, %v854
        %v982 = vadd.f32 %v981, %v855
        %v983 = vadd.f32 %v982, %v856
        %v984 = vadd.f32 %v983, %v857
        %v985 = vadd.f32 %v984, %v858
        %v986 = vadd.f32 %v985, %v859
        %v987 = vadd.f32 %v986, %v860
        %v988 = vadd.f32 %v987, %v861
        %v989 = vadd.f32 %v988, %v862
        %v990 = vadd.f32 %v989, %v863
        %v991 = vadd.f32 %v990, %v864
        %v992 = vadd.f32 %v991, %v865
        %v993 = vadd.f32 %v992, %v866
        %v994 = vadd.f32 %v993, %v867
        %v995 = vadd.f32 %v994, %v868
        %v996 = vadd.f32 %v995, %v869
        %v997 = vadd.f32 %v996, %v870
        %v998 = vadd.f32 %v997, %v871
        %v999 = vadd.f32 %v998, %v872
        %v1000 = vadd.f32 %v999, %v873
        %v1001 = vadd.f32 %v1000, %v874
        %v1002 = vadd.f32 %v1001, %v875
        %v1003 = vadd.f32 %v1002, %v876
        %v1004 = vadd.f32 %v1003, %v877
        %v1005 = vadd.f32 %v1004, %v878
        %v1006 = vadd.f32 %v1005, %v879
        %v1007 = vadd.f32 %v1006, %v880
        %v1008 = vadd.f32 %v1007, %v881
        %v1009 = vadd.f32 %v1008, %v882
        %v1010 = vadd.f32 %v1009, %v883
        %v1011 = vadd.f32 %v1010, %v884
        %v1012 = vadd.f32 %v1011, %v885
        %v1013 = vrot.slane %v1012, 4
        %v1014 = vadd.f32 %v1012, %v1013
        %v1015 = vrot.slane %v1014, 2
        %v1016 = vadd.f32 %v1014, %v1015
        %v1017 = vrot.slane %v1016, 1
        %v1018 = vadd.f32 %v1016, %v1017
        %1019 = vmatprep.subr.mxu0 0.0
        %1020 = vmatpush1.msra.mxu0 %v539
        %1021 = vmatprep.subr.mxu0 0.0
        %1022 = vmatpush1.msra.mxu0 %v540
        %1023 = vmatprep.subr.mxu0 0.0
        %1024 = vmatpush1.msra.mxu0 %v541
        %1025 = vmatprep.subr.mxu0 0.0
        %1026 = vmatpush1.msra.mxu0 %v542
        %1027 = vmatprep.subr.mxu0 0.0
        %1028 = vmatpush1.msra.mxu0 %v543
        %1029 = vmatprep.subr.mxu0 0.0
        %1030 = vmatpush1.msra.mxu0 %v544
        %1031 = vmatprep.subr.mxu0 0.0
        %1032 = vmatpush1.msra.mxu0 %v545
        %1033 = vmatprep.subr.mxu0 0.0
        %1034 = vmatpush1.msra.mxu0 %v546
        %1035 = vmatprep.subr.mxu0 0.0
        %1036 = vmatpush1.msra.mxu0 %v547
        %1037 = vmatprep.subr.mxu0 0.0
        %1038 = vmatpush1.msra.mxu0 %v548
        %1039 = vmatprep.subr.mxu0 0.0
        %1040 = vmatpush1.msra.mxu0 %v549
        %1041 = vmatprep.subr.mxu0 0.0
        %1042 = vmatpush1.msra.mxu0 %v550
        %1043 = vmatprep.subr.mxu0 0.0
        %1044 = vmatpush1.msra.mxu0 %v551
        %1045 = vmatprep.subr.mxu0 0.0
        %1046 = vmatpush1.msra.mxu0 %v552
        %1047 = vmatprep.subr.mxu0 0.0
        %1048 = vmatpush1.msra.mxu0 %v553
        %1049 = vmatprep.subr.mxu0 0.0
        %1050 = vmatpush1.msra.mxu0 %v554
        %1051 = vmatprep.subr.mxu0 0.0
        %1052 = vmatpush1.msra.mxu0 0.0
        %1053 = vmatprep.subr.mxu0 0.0
        %1054 = vmatpush1.msra.mxu0 0.0
        %1055 = vmatprep.subr.mxu0 0.0
        %1056 = vmatpush1.msra.mxu0 0.0
        %1057 = vmatprep.subr.mxu0 0.0
        %1058 = vmatpush1.msra.mxu0 0.0
        %1059 = vmatprep.subr.mxu0 0.0
        %1060 = vmatpush1.msra.mxu0 0.0
        %1061 = vmatprep.subr.mxu0 0.0
        %1062 = vmatpush1.msra.mxu0 0.0
        %1063 = vmatprep.subr.mxu0 0.0
        %1064 = vmatpush1.msra.mxu0 0.0
        %1065 = vmatprep.subr.mxu0 0.0
        %1066 = vmatpush1.msra.mxu0 0.0
        %1067 = vmatprep.subr.mxu0 0.0
        %1068 = vmatpush1.msra.mxu0 0.0
        %1069 = vmatprep.subr.mxu0 0.0
        %1070 = vmatpush1.msra.mxu0 0.0
        %1071 = vmatprep.subr.mxu0 0.0
        %1072 = vmatpush1.msra.mxu0 0.0
        %1073 = vmatprep.subr.mxu0 0.0
        %1074 = vmatpush1.msra.mxu0 0.0
        %1075 = vmatprep.subr.mxu0 0.0
        %1076 = vmatpush1.msra.mxu0 0.0
        %1077 = vmatprep.subr.mxu0 0.0
        %1078 = vmatpush1.msra.mxu0 0.0
        %1079 = vmatprep.subr.mxu0 0.0
        %1080 = vmatpush1.msra.mxu0 0.0
        %1081 = vmatprep.subr.mxu0 0.0
        %1082 = vmatpush1.msra.mxu0 0.0
        %1083 = vmatprep.mubr.f32.mxu0 0.0
        %1084 = vmatmul.mubr.f32.gmra.mrb[0].mxu0 %v1018
        %v1085 = vpop.f32.mrb[0].mxu0
        %v1086 = vadd.f32 0.0, %v1085
        %v1087 = vpop.f32.mrb[0].mxu0
        %1088 = vdwg.mxu0
        %v1089 = vmul.f32 %v1086, 6.1035156e-05
        %v1090 = vadd.f32 %v1089, 1e-05
        %v1091 = vrsqrt.pop %v1090
        %v1092 = vld [vmem:[%s2] sm:$0x1]
        %v1093 = vmul.f32 %v1091, %v1092
        %v1094 = vlaneseq
        %v1095 = vshrl.u32 %v1094, 7
        %v1096 = vsub.s32 0, %v1095
        %v1097 = vrot.slane %v1093, %v1096
        %v1098 = vmul.f32 %v630, %v1097
        %v1099 = vmul.f32 %v631, %v1097
        %v1100 = vmul.f32 %v632, %v1097
        %v1101 = vmul.f32 %v633, %v1097
        %v1102 = vmul.f32 %v634, %v1097
        %v1103 = vmul.f32 %v635, %v1097
        %v1104 = vmul.f32 %v636, %v1097
        %v1105 = vmul.f32 %v637, %v1097
        %v1106 = vmul.f32 %v638, %v1097
        %v1107 = vmul.f32 %v639, %v1097
        %v1108 = vmul.f32 %v640, %v1097
        %v1109 = vmul.f32 %v641, %v1097
        %v1110 = vmul.f32 %v642, %v1097
        %v1111 = vmul.f32 %v643, %v1097
        %v1112 = vmul.f32 %v644, %v1097
        %v1113 = vmul.f32 %v645, %v1097
        %v1114 = vmul.f32 %v646, %v1097
        %v1115 = vmul.f32 %v647, %v1097
        %v1116 = vmul.f32 %v648, %v1097
        %v1117 = vmul.f32 %v649, %v1097
        %v1118 = vmul.f32 %v650, %v1097
        %v1119 = vmul.f32 %v651, %v1097
        %v1120 = vmul.f32 %v652, %v1097
        %v1121 = vmul.f32 %v653, %v1097
        %v1122 = vmul.f32 %v654, %v1097
        %v1123 = vmul.f32 %v655, %v1097
        %v1124 = vmul.f32 %v656, %v1097
        %v1125 = vmul.f32 %v657, %v1097
        %v1126 = vmul.f32 %v658, %v1097
        %v1127 = vmul.f32 %v659, %v1097
        %v1128 = vmul.f32 %v660, %v1097
        %v1129 = vmul.f32 %v661, %v1097
        %v1130 = vmul.f32 %v662, %v1097
        %v1131 = vmul.f32 %v663, %v1097
        %v1132 = vmul.f32 %v664, %v1097
        %v1133 = vmul.f32 %v665, %v1097
        %v1134 = vmul.f32 %v666, %v1097
        %v1135 = vmul.f32 %v667, %v1097
        %v1136 = vmul.f32 %v668, %v1097
        %v1137 = vmul.f32 %v669, %v1097
        %v1138 = vmul.f32 %v670, %v1097
        %v1139 = vmul.f32 %v671, %v1097
        %v1140 = vmul.f32 %v672, %v1097
        %v1141 = vmul.f32 %v673, %v1097
        %v1142 = vmul.f32 %v674, %v1097
        %v1143 = vmul.f32 %v675, %v1097
        %v1144 = vmul.f32 %v676, %v1097
        %v1145 = vmul.f32 %v677, %v1097
        %v1146 = vmul.f32 %v678, %v1097
        %v1147 = vmul.f32 %v679, %v1097
        %v1148 = vmul.f32 %v680, %v1097
        %v1149 = vmul.f32 %v681, %v1097
        %v1150 = vmul.f32 %v682, %v1097
        %v1151 = vmul.f32 %v683, %v1097
        %v1152 = vmul.f32 %v684, %v1097
        %v1153 = vmul.f32 %v685, %v1097
        %v1154 = vmul.f32 %v686, %v1097
        %v1155 = vmul.f32 %v687, %v1097
        %v1156 = vmul.f32 %v688, %v1097
        %v1157 = vmul.f32 %v689, %v1097
        %v1158 = vmul.f32 %v690, %v1097
        %v1159 = vmul.f32 %v691, %v1097
        %v1160 = vmul.f32 %v692, %v1097
        %v1161 = vmul.f32 %v693, %v1097
        %v1162 = vmul.f32 %v694, %v1097
        %v1163 = vmul.f32 %v695, %v1097
        %v1164 = vmul.f32 %v696, %v1097
        %v1165 = vmul.f32 %v697, %v1097
        %v1166 = vmul.f32 %v698, %v1097
        %v1167 = vmul.f32 %v699, %v1097
        %v1168 = vmul.f32 %v700, %v1097
        %v1169 = vmul.f32 %v701, %v1097
        %v1170 = vmul.f32 %v702, %v1097
        %v1171 = vmul.f32 %v703, %v1097
        %v1172 = vmul.f32 %v704, %v1097
        %v1173 = vmul.f32 %v705, %v1097
        %v1174 = vmul.f32 %v706, %v1097
        %v1175 = vmul.f32 %v707, %v1097
        %v1176 = vmul.f32 %v708, %v1097
        %v1177 = vmul.f32 %v709, %v1097
        %v1178 = vmul.f32 %v710, %v1097
        %v1179 = vmul.f32 %v711, %v1097
        %v1180 = vmul.f32 %v712, %v1097
        %v1181 = vmul.f32 %v713, %v1097
        %v1182 = vmul.f32 %v714, %v1097
        %v1183 = vmul.f32 %v715, %v1097
        %v1184 = vmul.f32 %v716, %v1097
        %v1185 = vmul.f32 %v717, %v1097
        %v1186 = vmul.f32 %v718, %v1097
        %v1187 = vmul.f32 %v719, %v1097
        %v1188 = vmul.f32 %v720, %v1097
        %v1189 = vmul.f32 %v721, %v1097
        %v1190 = vmul.f32 %v722, %v1097
        %v1191 = vmul.f32 %v723, %v1097
        %v1192 = vmul.f32 %v724, %v1097
        %v1193 = vmul.f32 %v725, %v1097
        %v1194 = vmul.f32 %v726, %v1097
        %v1195 = vmul.f32 %v727, %v1097
        %v1196 = vmul.f32 %v728, %v1097
        %v1197 = vmul.f32 %v729, %v1097
        %v1198 = vmul.f32 %v730, %v1097
        %v1199 = vmul.f32 %v731, %v1097
        %v1200 = vmul.f32 %v732, %v1097
        %v1201 = vmul.f32 %v733, %v1097
        %v1202 = vmul.f32 %v734, %v1097
        %v1203 = vmul.f32 %v735, %v1097
        %v1204 = vmul.f32 %v736, %v1097
        %v1205 = vmul.f32 %v737, %v1097
        %v1206 = vmul.f32 %v738, %v1097
        %v1207 = vmul.f32 %v739, %v1097
        %v1208 = vmul.f32 %v740, %v1097
        %v1209 = vmul.f32 %v741, %v1097
        %v1210 = vmul.f32 %v742, %v1097
        %v1211 = vmul.f32 %v743, %v1097
        %v1212 = vmul.f32 %v744, %v1097
        %v1213 = vmul.f32 %v745, %v1097
        %v1214 = vmul.f32 %v746, %v1097
        %v1215 = vmul.f32 %v747, %v1097
        %v1216 = vmul.f32 %v748, %v1097
        %v1217 = vmul.f32 %v749, %v1097
        %v1218 = vmul.f32 %v750, %v1097
        %v1219 = vmul.f32 %v751, %v1097
        %v1220 = vmul.f32 %v752, %v1097
        %v1221 = vmul.f32 %v753, %v1097
        %v1222 = vmul.f32 %v754, %v1097
        %v1223 = vmul.f32 %v755, %v1097
        %v1224 = vmul.f32 %v756, %v1097
        %v1225 = vmul.f32 %v757, %v1097
        %v1226 = vld [vmem:[%s3] sm:$0x1]
        %v1228 = vlaneseq
        %v1229 = vshrl.u32 %v1228, 7
        %v1230 = vsub.s32 0, %v1229
        %v1231 = vrot.slane %v1226, %v1230
        %v1233 = vadd.f32 %v1098, %v1231
        %v1234 = vadd.f32 %v1099, %v1231
        %v1235 = vadd.f32 %v1100, %v1231
        %v1236 = vadd.f32 %v1101, %v1231
        %v1237 = vadd.f32 %v1102, %v1231
        %v1238 = vadd.f32 %v1103, %v1231
        %v1239 = vadd.f32 %v1104, %v1231
        %v1240 = vadd.f32 %v1105, %v1231
        %v1241 = vadd.f32 %v1106, %v1231
        %v1242 = vadd.f32 %v1107, %v1231
        %v1243 = vadd.f32 %v1108, %v1231
        %v1244 = vadd.f32 %v1109, %v1231
        %v1245 = vadd.f32 %v1110, %v1231
        %v1246 = vadd.f32 %v1111, %v1231
        %v1247 = vadd.f32 %v1112, %v1231
        %v1248 = vadd.f32 %v1113, %v1231
        %v1249 = vadd.f32 %v1114, %v1231
        %v1250 = vadd.f32 %v1115, %v1231
        %v1251 = vadd.f32 %v1116, %v1231
        %v1252 = vadd.f32 %v1117, %v1231
        %v1253 = vadd.f32 %v1118, %v1231
        %v1254 = vadd.f32 %v1119, %v1231
        %v1255 = vadd.f32 %v1120, %v1231
        %v1256 = vadd.f32 %v1121, %v1231
        %v1257 = vadd.f32 %v1122, %v1231
        %v1258 = vadd.f32 %v1123, %v1231
        %v1259 = vadd.f32 %v1124, %v1231
        %v1260 = vadd.f32 %v1125, %v1231
        %v1261 = vadd.f32 %v1126, %v1231
        %v1262 = vadd.f32 %v1127, %v1231
        %v1263 = vadd.f32 %v1128, %v1231
        %v1264 = vadd.f32 %v1129, %v1231
        %v1265 = vadd.f32 %v1130, %v1231
        %v1266 = vadd.f32 %v1131, %v1231
        %v1267 = vadd.f32 %v1132, %v1231
        %v1268 = vadd.f32 %v1133, %v1231
        %v1269 = vadd.f32 %v1134, %v1231
        %v1270 = vadd.f32 %v1135, %v1231
        %v1271 = vadd.f32 %v1136, %v1231
        %v1272 = vadd.f32 %v1137, %v1231
        %v1273 = vadd.f32 %v1138, %v1231
        %v1274 = vadd.f32 %v1139, %v1231
        %v1275 = vadd.f32 %v1140, %v1231
        %v1276 = vadd.f32 %v1141, %v1231
        %v1277 = vadd.f32 %v1142, %v1231
        %v1278 = vadd.f32 %v1143, %v1231
        %v1279 = vadd.f32 %v1144, %v1231
        %v1280 = vadd.f32 %v1145, %v1231
        %v1281 = vadd.f32 %v1146, %v1231
        %v1282 = vadd.f32 %v1147, %v1231
        %v1283 = vadd.f32 %v1148, %v1231
        %v1284 = vadd.f32 %v1149, %v1231
        %v1285 = vadd.f32 %v1150, %v1231
        %v1286 = vadd.f32 %v1151, %v1231
        %v1287 = vadd.f32 %v1152, %v1231
        %v1288 = vadd.f32 %v1153, %v1231
        %v1289 = vadd.f32 %v1154, %v1231
        %v1290 = vadd.f32 %v1155, %v1231
        %v1291 = vadd.f32 %v1156, %v1231
        %v1292 = vadd.f32 %v1157, %v1231
        %v1293 = vadd.f32 %v1158, %v1231
        %v1294 = vadd.f32 %v1159, %v1231
        %v1295 = vadd.f32 %v1160, %v1231
        %v1296 = vadd.f32 %v1161, %v1231
        %v1297 = vadd.f32 %v1162, %v1231
        %v1298 = vadd.f32 %v1163, %v1231
        %v1299 = vadd.f32 %v1164, %v1231
        %v1300 = vadd.f32 %v1165, %v1231
        %v1301 = vadd.f32 %v1166, %v1231
        %v1302 = vadd.f32 %v1167, %v1231
        %v1303 = vadd.f32 %v1168, %v1231
        %v1304 = vadd.f32 %v1169, %v1231
        %v1305 = vadd.f32 %v1170, %v1231
        %v1306 = vadd.f32 %v1171, %v1231
        %v1307 = vadd.f32 %v1172, %v1231
        %v1308 = vadd.f32 %v1173, %v1231
        %v1309 = vadd.f32 %v1174, %v1231
        %v1310 = vadd.f32 %v1175, %v1231
        %v1311 = vadd.f32 %v1176, %v1231
        %v1312 = vadd.f32 %v1177, %v1231
        %v1313 = vadd.f32 %v1178, %v1231
        %v1314 = vadd.f32 %v1179, %v1231
        %v1315 = vadd.f32 %v1180, %v1231
        %v1316 = vadd.f32 %v1181, %v1231
        %v1317 = vadd.f32 %v1182, %v1231
        %v1318 = vadd.f32 %v1183, %v1231
        %v1319 = vadd.f32 %v1184, %v1231
        %v1320 = vadd.f32 %v1185, %v1231
        %v1321 = vadd.f32 %v1186, %v1231
        %v1322 = vadd.f32 %v1187, %v1231
        %v1323 = vadd.f32 %v1188, %v1231
        %v1324 = vadd.f32 %v1189, %v1231
        %v1325 = vadd.f32 %v1190, %v1231
        %v1326 = vadd.f32 %v1191, %v1231
        %v1327 = vadd.f32 %v1192, %v1231
        %v1328 = vadd.f32 %v1193, %v1231
        %v1329 = vadd.f32 %v1194, %v1231
        %v1330 = vadd.f32 %v1195, %v1231
        %v1331 = vadd.f32 %v1196, %v1231
        %v1332 = vadd.f32 %v1197, %v1231
        %v1333 = vadd.f32 %v1198, %v1231
        %v1334 = vadd.f32 %v1199, %v1231
        %v1335 = vadd.f32 %v1200, %v1231
        %v1336 = vadd.f32 %v1201, %v1231
        %v1337 = vadd.f32 %v1202, %v1231
        %v1338 = vadd.f32 %v1203, %v1231
        %v1339 = vadd.f32 %v1204, %v1231
        %v1340 = vadd.f32 %v1205, %v1231
        %v1341 = vadd.f32 %v1206, %v1231
        %v1342 = vadd.f32 %v1207, %v1231
        %v1343 = vadd.f32 %v1208, %v1231
        %v1344 = vadd.f32 %v1209, %v1231
        %v1345 = vadd.f32 %v1210, %v1231
        %v1346 = vadd.f32 %v1211, %v1231
        %v1347 = vadd.f32 %v1212, %v1231
        %v1348 = vadd.f32 %v1213, %v1231
        %v1349 = vadd.f32 %v1214, %v1231
        %v1350 = vadd.f32 %v1215, %v1231
        %v1351 = vadd.f32 %v1216, %v1231
        %v1352 = vadd.f32 %v1217, %v1231
        %v1353 = vadd.f32 %v1218, %v1231
        %v1354 = vadd.f32 %v1219, %v1231
        %v1355 = vadd.f32 %v1220, %v1231
        %v1356 = vadd.f32 %v1221, %v1231
        %v1357 = vadd.f32 %v1222, %v1231
        %v1358 = vadd.f32 %v1223, %v1231
        %v1359 = vadd.f32 %v1224, %v1231
        %v1360 = vadd.f32 %v1225, %v1231
        %v1361 = vld [vmem:[%s274] sm:$0x1]
        %v1362 = vadd.f32 %v1361, 1.0
        %v1364 = vlaneseq
        %v1365 = vshrl.u32 %v1364, 7
        %v1366 = vsub.s32 0, %v1365
        %v1367 = vrot.slane %v1362, %v1366
        %v1369 = vmul.f32 %v1233, %v1367
        %v1370 = vmul.f32 %v1234, %v1367
        %v1371 = vmul.f32 %v1235, %v1367
        %v1372 = vmul.f32 %v1236, %v1367
        %v1373 = vmul.f32 %v1237, %v1367
        %v1374 = vmul.f32 %v1238, %v1367
        %v1375 = vmul.f32 %v1239, %v1367
        %v1376 = vmul.f32 %v1240, %v1367
        %v1377 = vmul.f32 %v1241, %v1367
        %v1378 = vmul.f32 %v1242, %v1367
        %v1379 = vmul.f32 %v1243, %v1367
        %v1380 = vmul.f32 %v1244, %v1367
        %v1381 = vmul.f32 %v1245, %v1367
        %v1382 = vmul.f32 %v1246, %v1367
        %v1383 = vmul.f32 %v1247, %v1367
        %v1384 = vmul.f32 %v1248, %v1367
        %v1385 = vmul.f32 %v1249, %v1367
        %v1386 = vmul.f32 %v1250, %v1367
        %v1387 = vmul.f32 %v1251, %v1367
        %v1388 = vmul.f32 %v1252, %v1367
        %v1389 = vmul.f32 %v1253, %v1367
        %v1390 = vmul.f32 %v1254, %v1367
        %v1391 = vmul.f32 %v1255, %v1367
        %v1392 = vmul.f32 %v1256, %v1367
        %v1393 = vmul.f32 %v1257, %v1367
        %v1394 = vmul.f32 %v1258, %v1367
        %v1395 = vmul.f32 %v1259, %v1367
        %v1396 = vmul.f32 %v1260, %v1367
        %v1397 = vmul.f32 %v1261, %v1367
        %v1398 = vmul.f32 %v1262, %v1367
        %v1399 = vmul.f32 %v1263, %v1367
        %v1400 = vmul.f32 %v1264, %v1367
        %v1401 = vmul.f32 %v1265, %v1367
        %v1402 = vmul.f32 %v1266, %v1367
        %v1403 = vmul.f32 %v1267, %v1367
        %v1404 = vmul.f32 %v1268, %v1367
        %v1405 = vmul.f32 %v1269, %v1367
        %v1406 = vmul.f32 %v1270, %v1367
        %v1407 = vmul.f32 %v1271, %v1367
        %v1408 = vmul.f32 %v1272, %v1367
        %v1409 = vmul.f32 %v1273, %v1367
        %v1410 = vmul.f32 %v1274, %v1367
        %v1411 = vmul.f32 %v1275, %v1367
        %v1412 = vmul.f32 %v1276, %v1367
        %v1413 = vmul.f32 %v1277, %v1367
        %v1414 = vmul.f32 %v1278, %v1367
        %v1415 = vmul.f32 %v1279, %v1367
        %v1416 = vmul.f32 %v1280, %v1367
        %v1417 = vmul.f32 %v1281, %v1367
        %v1418 = vmul.f32 %v1282, %v1367
        %v1419 = vmul.f32 %v1283, %v1367
        %v1420 = vmul.f32 %v1284, %v1367
        %v1421 = vmul.f32 %v1285, %v1367
        %v1422 = vmul.f32 %v1286, %v1367
        %v1423 = vmul.f32 %v1287, %v1367
        %v1424 = vmul.f32 %v1288, %v1367
        %v1425 = vmul.f32 %v1289, %v1367
        %v1426 = vmul.f32 %v1290, %v1367
        %v1427 = vmul.f32 %v1291, %v1367
        %v1428 = vmul.f32 %v1292, %v1367
        %v1429 = vmul.f32 %v1293, %v1367
        %v1430 = vmul.f32 %v1294, %v1367
        %v1431 = vmul.f32 %v1295, %v1367
        %v1432 = vmul.f32 %v1296, %v1367
        %v1433 = vmul.f32 %v1297, %v1367
        %v1434 = vmul.f32 %v1298, %v1367
        %v1435 = vmul.f32 %v1299, %v1367
        %v1436 = vmul.f32 %v1300, %v1367
        %v1437 = vmul.f32 %v1301, %v1367
        %v1438 = vmul.f32 %v1302, %v1367
        %v1439 = vmul.f32 %v1303, %v1367
        %v1440 = vmul.f32 %v1304, %v1367
        %v1441 = vmul.f32 %v1305, %v1367
        %v1442 = vmul.f32 %v1306, %v1367
        %v1443 = vmul.f32 %v1307, %v1367
        %v1444 = vmul.f32 %v1308, %v1367
        %v1445 = vmul.f32 %v1309, %v1367
        %v1446 = vmul.f32 %v1310, %v1367
        %v1447 = vmul.f32 %v1311, %v1367
        %v1448 = vmul.f32 %v1312, %v1367
        %v1449 = vmul.f32 %v1313, %v1367
        %v1450 = vmul.f32 %v1314, %v1367
        %v1451 = vmul.f32 %v1315, %v1367
        %v1452 = vmul.f32 %v1316, %v1367
        %v1453 = vmul.f32 %v1317, %v1367
        %v1454 = vmul.f32 %v1318, %v1367
        %v1455 = vmul.f32 %v1319, %v1367
        %v1456 = vmul.f32 %v1320, %v1367
        %v1457 = vmul.f32 %v1321, %v1367
        %v1458 = vmul.f32 %v1322, %v1367
        %v1459 = vmul.f32 %v1323, %v1367
        %v1460 = vmul.f32 %v1324, %v1367
        %v1461 = vmul.f32 %v1325, %v1367
        %v1462 = vmul.f32 %v1326, %v1367
        %v1463 = vmul.f32 %v1327, %v1367
        %v1464 = vmul.f32 %v1328, %v1367
        %v1465 = vmul.f32 %v1329, %v1367
        %v1466 = vmul.f32 %v1330, %v1367
        %v1467 = vmul.f32 %v1331, %v1367
        %v1468 = vmul.f32 %v1332, %v1367
        %v1469 = vmul.f32 %v1333, %v1367
        %v1470 = vmul.f32 %v1334, %v1367
        %v1471 = vmul.f32 %v1335, %v1367
        %v1472 = vmul.f32 %v1336, %v1367
        %v1473 = vmul.f32 %v1337, %v1367
        %v1474 = vmul.f32 %v1338, %v1367
        %v1475 = vmul.f32 %v1339, %v1367
        %v1476 = vmul.f32 %v1340, %v1367
        %v1477 = vmul.f32 %v1341, %v1367
        %v1478 = vmul.f32 %v1342, %v1367
        %v1479 = vmul.f32 %v1343, %v1367
        %v1480 = vmul.f32 %v1344, %v1367
        %v1481 = vmul.f32 %v1345, %v1367
        %v1482 = vmul.f32 %v1346, %v1367
        %v1483 = vmul.f32 %v1347, %v1367
        %v1484 = vmul.f32 %v1348, %v1367
        %v1485 = vmul.f32 %v1349, %v1367
        %v1486 = vmul.f32 %v1350, %v1367
        %v1487 = vmul.f32 %v1351, %v1367
        %v1488 = vmul.f32 %v1352, %v1367
        %v1489 = vmul.f32 %v1353, %v1367
        %v1490 = vmul.f32 %v1354, %v1367
        %v1491 = vmul.f32 %v1355, %v1367
        %v1492 = vmul.f32 %v1356, %v1367
        %v1493 = vmul.f32 %v1357, %v1367
        %v1494 = vmul.f32 %v1358, %v1367
        %v1495 = vmul.f32 %v1359, %v1367
        %v1496 = vmul.f32 %v1360, %v1367
        %v1497 = vld [vmem:[%s277] sm:$0x1]
        %v1499 = vlaneseq
        %v1500 = vshrl.u32 %v1499, 7
        %v1501 = vsub.s32 0, %v1500
        %v1502 = vrot.slane %v1497, %v1501
        %v1504 = vadd.f32 %v1369, %v1502
        %v1505 = vadd.f32 %v1370, %v1502
        %v1506 = vadd.f32 %v1371, %v1502
        %v1507 = vadd.f32 %v1372, %v1502
        %v1508 = vadd.f32 %v1373, %v1502
        %v1509 = vadd.f32 %v1374, %v1502
        %v1510 = vadd.f32 %v1375, %v1502
        %v1511 = vadd.f32 %v1376, %v1502
        %v1512 = vadd.f32 %v1377, %v1502
        %v1513 = vadd.f32 %v1378, %v1502
        %v1514 = vadd.f32 %v1379, %v1502
        %v1515 = vadd.f32 %v1380, %v1502
        %v1516 = vadd.f32 %v1381, %v1502
        %v1517 = vadd.f32 %v1382, %v1502
        %v1518 = vadd.f32 %v1383, %v1502
        %v1519 = vadd.f32 %v1384, %v1502
        %v1520 = vadd.f32 %v1385, %v1502
        %v1521 = vadd.f32 %v1386, %v1502
        %v1522 = vadd.f32 %v1387, %v1502
        %v1523 = vadd.f32 %v1388, %v1502
        %v1524 = vadd.f32 %v1389, %v1502
        %v1525 = vadd.f32 %v1390, %v1502
        %v1526 = vadd.f32 %v1391, %v1502
        %v1527 = vadd.f32 %v1392, %v1502
        %v1528 = vadd.f32 %v1393, %v1502
        %v1529 = vadd.f32 %v1394, %v1502
        %v1530 = vadd.f32 %v1395, %v1502
        %v1531 = vadd.f32 %v1396, %v1502
        %v1532 = vadd.f32 %v1397, %v1502
        %v1533 = vadd.f32 %v1398, %v1502
        %v1534 = vadd.f32 %v1399, %v1502
        %v1535 = vadd.f32 %v1400, %v1502
        %v1536 = vadd.f32 %v1401, %v1502
        %v1537 = vadd.f32 %v1402, %v1502
        %v1538 = vadd.f32 %v1403, %v1502
        %v1539 = vadd.f32 %v1404, %v1502
        %v1540 = vadd.f32 %v1405, %v1502
        %v1541 = vadd.f32 %v1406, %v1502
        %v1542 = vadd.f32 %v1407, %v1502
        %v1543 = vadd.f32 %v1408, %v1502
        %v1544 = vadd.f32 %v1409, %v1502
        %v1545 = vadd.f32 %v1410, %v1502
        %v1546 = vadd.f32 %v1411, %v1502
        %v1547 = vadd.f32 %v1412, %v1502
        %v1548 = vadd.f32 %v1413, %v1502
        %v1549 = vadd.f32 %v1414, %v1502
        %v1550 = vadd.f32 %v1415, %v1502
        %v1551 = vadd.f32 %v1416, %v1502
        %v1552 = vadd.f32 %v1417, %v1502
        %v1553 = vadd.f32 %v1418, %v1502
        %v1554 = vadd.f32 %v1419, %v1502
        %v1555 = vadd.f32 %v1420, %v1502
        %v1556 = vadd.f32 %v1421, %v1502
        %v1557 = vadd.f32 %v1422, %v1502
        %v1558 = vadd.f32 %v1423, %v1502
        %v1559 = vadd.f32 %v1424, %v1502
        %v1560 = vadd.f32 %v1425, %v1502
        %v1561 = vadd.f32 %v1426, %v1502
        %v1562 = vadd.f32 %v1427, %v1502
        %v1563 = vadd.f32 %v1428, %v1502
        %v1564 = vadd.f32 %v1429, %v1502
        %v1565 = vadd.f32 %v1430, %v1502
        %v1566 = vadd.f32 %v1431, %v1502
        %v1567 = vadd.f32 %v1432, %v1502
        %v1568 = vadd.f32 %v1433, %v1502
        %v1569 = vadd.f32 %v1434, %v1502
        %v1570 = vadd.f32 %v1435, %v1502
        %v1571 = vadd.f32 %v1436, %v1502
        %v1572 = vadd.f32 %v1437, %v1502
        %v1573 = vadd.f32 %v1438, %v1502
        %v1574 = vadd.f32 %v1439, %v1502
        %v1575 = vadd.f32 %v1440, %v1502
        %v1576 = vadd.f32 %v1441, %v1502
        %v1577 = vadd.f32 %v1442, %v1502
        %v1578 = vadd.f32 %v1443, %v1502
        %v1579 = vadd.f32 %v1444, %v1502
        %v1580 = vadd.f32 %v1445, %v1502
        %v1581 = vadd.f32 %v1446, %v1502
        %v1582 = vadd.f32 %v1447, %v1502
        %v1583 = vadd.f32 %v1448, %v1502
        %v1584 = vadd.f32 %v1449, %v1502
        %v1585 = vadd.f32 %v1450, %v1502
        %v1586 = vadd.f32 %v1451, %v1502
        %v1587 = vadd.f32 %v1452, %v1502
        %v1588 = vadd.f32 %v1453, %v1502
        %v1589 = vadd.f32 %v1454, %v1502
        %v1590 = vadd.f32 %v1455, %v1502
        %v1591 = vadd.f32 %v1456, %v1502
        %v1592 = vadd.f32 %v1457, %v1502
        %v1593 = vadd.f32 %v1458, %v1502
        %v1594 = vadd.f32 %v1459, %v1502
        %v1595 = vadd.f32 %v1460, %v1502
        %v1596 = vadd.f32 %v1461, %v1502
        %v1597 = vadd.f32 %v1462, %v1502
        %v1598 = vadd.f32 %v1463, %v1502
        %v1599 = vadd.f32 %v1464, %v1502
        %v1600 = vadd.f32 %v1465, %v1502
        %v1601 = vadd.f32 %v1466, %v1502
        %v1602 = vadd.f32 %v1467, %v1502
        %v1603 = vadd.f32 %v1468, %v1502
        %v1604 = vadd.f32 %v1469, %v1502
        %v1605 = vadd.f32 %v1470, %v1502
        %v1606 = vadd.f32 %v1471, %v1502
        %v1607 = vadd.f32 %v1472, %v1502
        %v1608 = vadd.f32 %v1473, %v1502
        %v1609 = vadd.f32 %v1474, %v1502
        %v1610 = vadd.f32 %v1475, %v1502
        %v1611 = vadd.f32 %v1476, %v1502
        %v1612 = vadd.f32 %v1477, %v1502
        %v1613 = vadd.f32 %v1478, %v1502
        %v1614 = vadd.f32 %v1479, %v1502
        %v1615 = vadd.f32 %v1480, %v1502
        %v1616 = vadd.f32 %v1481, %v1502
        %v1617 = vadd.f32 %v1482, %v1502
        %v1618 = vadd.f32 %v1483, %v1502
        %v1619 = vadd.f32 %v1484, %v1502
        %v1620 = vadd.f32 %v1485, %v1502
        %v1621 = vadd.f32 %v1486, %v1502
        %v1622 = vadd.f32 %v1487, %v1502
        %v1623 = vadd.f32 %v1488, %v1502
        %v1624 = vadd.f32 %v1489, %v1502
        %v1625 = vadd.f32 %v1490, %v1502
        %v1626 = vadd.f32 %v1491, %v1502
        %v1627 = vadd.f32 %v1492, %v1502
        %v1628 = vadd.f32 %v1493, %v1502
        %v1629 = vadd.f32 %v1494, %v1502
        %v1630 = vadd.f32 %v1495, %v1502
        %v1631 = vadd.f32 %v1496, %v1502
        %v1632 = vxor.u32 %v1504, 2147483648
        %v1633 = vxor.u32 %v1505, 2147483648
        %v1634 = vxor.u32 %v1506, 2147483648
        %v1635 = vxor.u32 %v1507, 2147483648
        %v1636 = vxor.u32 %v1508, 2147483648
        %v1637 = vxor.u32 %v1509, 2147483648
        %v1638 = vxor.u32 %v1510, 2147483648
        %v1639 = vxor.u32 %v1511, 2147483648
        %v1640 = vxor.u32 %v1512, 2147483648
        %v1641 = vxor.u32 %v1513, 2147483648
        %v1642 = vxor.u32 %v1514, 2147483648
        %v1643 = vxor.u32 %v1515, 2147483648
        %v1644 = vxor.u32 %v1516, 2147483648
        %v1645 = vxor.u32 %v1517, 2147483648
        %v1646 = vxor.u32 %v1518, 2147483648
        %v1647 = vxor.u32 %v1519, 2147483648
        %v1648 = vxor.u32 %v1520, 2147483648
        %v1649 = vxor.u32 %v1521, 2147483648
        %v1650 = vxor.u32 %v1522, 2147483648
        %v1651 = vxor.u32 %v1523, 2147483648
        %v1652 = vxor.u32 %v1524, 2147483648
        %v1653 = vxor.u32 %v1525, 2147483648
        %v1654 = vxor.u32 %v1526, 2147483648
        %v1655 = vxor.u32 %v1527, 2147483648
        %v1656 = vxor.u32 %v1528, 2147483648
        %v1657 = vxor.u32 %v1529, 2147483648
        %v1658 = vxor.u32 %v1530, 2147483648
        %v1659 = vxor.u32 %v1531, 2147483648
        %v1660 = vxor.u32 %v1532, 2147483648
        %v1661 = vxor.u32 %v1533, 2147483648
        %v1662 = vxor.u32 %v1534, 2147483648
        %v1663 = vxor.u32 %v1535, 2147483648
        %v1664 = vxor.u32 %v1536, 2147483648
        %v1665 = vxor.u32 %v1537, 2147483648
        %v1666 = vxor.u32 %v1538, 2147483648
        %v1667 = vxor.u32 %v1539, 2147483648
        %v1668 = vxor.u32 %v1540, 2147483648
        %v1669 = vxor.u32 %v1541, 2147483648
        %v1670 = vxor.u32 %v1542, 2147483648
        %v1671 = vxor.u32 %v1543, 2147483648
        %v1672 = vxor.u32 %v1544, 2147483648
        %v1673 = vxor.u32 %v1545, 2147483648
        %v1674 = vxor.u32 %v1546, 2147483648
        %v1675 = vxor.u32 %v1547, 2147483648
        %v1676 = vxor.u32 %v1548, 2147483648
        %v1677 = vxor.u32 %v1549, 2147483648
        %v1678 = vxor.u32 %v1550, 2147483648
        %v1679 = vxor.u32 %v1551, 2147483648
        %v1680 = vxor.u32 %v1552, 2147483648
        %v1681 = vxor.u32 %v1553, 2147483648
        %v1682 = vxor.u32 %v1554, 2147483648
        %v1683 = vxor.u32 %v1555, 2147483648
        %v1684 = vxor.u32 %v1556, 2147483648
        %v1685 = vxor.u32 %v1557, 2147483648
        %v1686 = vxor.u32 %v1558, 2147483648
        %v1687 = vxor.u32 %v1559, 2147483648
        %v1688 = vxor.u32 %v1560, 2147483648
        %v1689 = vxor.u32 %v1561, 2147483648
        %v1690 = vxor.u32 %v1562, 2147483648
        %v1691 = vxor.u32 %v1563, 2147483648
        %v1692 = vxor.u32 %v1564, 2147483648
        %v1693 = vxor.u32 %v1565, 2147483648
        %v1694 = vxor.u32 %v1566, 2147483648
        %v1695 = vxor.u32 %v1567, 2147483648
        %v1696 = vxor.u32 %v1568, 2147483648
        %v1697 = vxor.u32 %v1569, 2147483648
        %v1698 = vxor.u32 %v1570, 2147483648
        %v1699 = vxor.u32 %v1571, 2147483648
        %v1700 = vxor.u32 %v1572, 2147483648
        %v1701 = vxor.u32 %v1573, 2147483648
        %v1702 = vxor.u32 %v1574, 2147483648
        %v1703 = vxor.u32 %v1575, 2147483648
        %v1704 = vxor.u32 %v1576, 2147483648
        %v1705 = vxor.u32 %v1577, 2147483648
        %v1706 = vxor.u32 %v1578, 2147483648
        %v1707 = vxor.u32 %v1579, 2147483648
        %v1708 = vxor.u32 %v1580, 2147483648
        %v1709 = vxor.u32 %v1581, 2147483648
        %v1710 = vxor.u32 %v1582, 2147483648
        %v1711 = vxor.u32 %v1583, 2147483648
        %v1712 = vxor.u32 %v1584, 2147483648
        %v1713 = vxor.u32 %v1585, 2147483648
        %v1714 = vxor.u32 %v1586, 2147483648
        %v1715 = vxor.u32 %v1587, 2147483648
        %v1716 = vxor.u32 %v1588, 2147483648
        %v1717 = vxor.u32 %v1589, 2147483648
        %v1718 = vxor.u32 %v1590, 2147483648
        %v1719 = vxor.u32 %v1591, 2147483648
        %v1720 = vxor.u32 %v1592, 2147483648
        %v1721 = vxor.u32 %v1593, 2147483648
        %v1722 = vxor.u32 %v1594, 2147483648
        %v1723 = vxor.u32 %v1595, 2147483648
        %v1724 = vxor.u32 %v1596, 2147483648
        %v1725 = vxor.u32 %v1597, 2147483648
        %v1726 = vxor.u32 %v1598, 2147483648
        %v1727 = vxor.u32 %v1599, 2147483648
        %v1728 = vxor.u32 %v1600, 2147483648
        %v1729 = vxor.u32 %v1601, 2147483648
        %v1730 = vxor.u32 %v1602, 2147483648
        %v1731 = vxor.u32 %v1603, 2147483648
        %v1732 = vxor.u32 %v1604, 2147483648
        %v1733 = vxor.u32 %v1605, 2147483648
        %v1734 = vxor.u32 %v1606, 2147483648
        %v1735 = vxor.u32 %v1607, 2147483648
        %v1736 = vxor.u32 %v1608, 2147483648
        %v1737 = vxor.u32 %v1609, 2147483648
        %v1738 = vxor.u32 %v1610, 2147483648
        %v1739 = vxor.u32 %v1611, 2147483648
        %v1740 = vxor.u32 %v1612, 2147483648
        %v1741 = vxor.u32 %v1613, 2147483648
        %v1742 = vxor.u32 %v1614, 2147483648
        %v1743 = vxor.u32 %v1615, 2147483648
        %v1744 = vxor.u32 %v1616, 2147483648
        %v1745 = vxor.u32 %v1617, 2147483648
        %v1746 = vxor.u32 %v1618, 2147483648
        %v1747 = vxor.u32 %v1619, 2147483648
        %v1748 = vxor.u32 %v1620, 2147483648
        %v1749 = vxor.u32 %v1621, 2147483648
        %v1750 = vxor.u32 %v1622, 2147483648
        %v1751 = vxor.u32 %v1623, 2147483648
        %v1752 = vxor.u32 %v1624, 2147483648
        %v1753 = vxor.u32 %v1625, 2147483648
        %v1754 = vxor.u32 %v1626, 2147483648
        %v1755 = vxor.u32 %v1627, 2147483648
        %v1756 = vxor.u32 %v1628, 2147483648
        %v1757 = vxor.u32 %v1629, 2147483648
        %v1758 = vxor.u32 %v1630, 2147483648
        %v1759 = vxor.u32 %v1631, 2147483648
        %v1760 = vmul.f32 %v1632, 1.442695
        %v1761 = vpow.pop %v1760
        %v1762 = vmul.f32 %v1633, 1.442695
        %v1763 = vpow.pop %v1762
        %v1764 = vmul.f32 %v1634, 1.442695
        %v1765 = vpow.pop %v1764
        %v1766 = vmul.f32 %v1635, 1.442695
        %v1767 = vpow.pop %v1766
        %v1768 = vmul.f32 %v1636, 1.442695
        %v1769 = vpow.pop %v1768
        %v1770 = vmul.f32 %v1637, 1.442695
        %v1771 = vpow.pop %v1770
        %v1772 = vmul.f32 %v1638, 1.442695
        %v1773 = vpow.pop %v1772
        %v1774 = vmul.f32 %v1639, 1.442695
        %v1775 = vpow.pop %v1774
        %v1776 = vmul.f32 %v1640, 1.442695
        %v1777 = vpow.pop %v1776
        %v1778 = vmul.f32 %v1641, 1.442695
        %v1779 = vpow.pop %v1778
        %v1780 = vmul.f32 %v1642, 1.442695
        %v1781 = vpow.pop %v1780
        %v1782 = vmul.f32 %v1643, 1.442695
        %v1783 = vpow.pop %v1782
        %v1784 = vmul.f32 %v1644, 1.442695
        %v1785 = vpow.pop %v1784
        %v1786 = vmul.f32 %v1645, 1.442695
        %v1787 = vpow.pop %v1786
        %v1788 = vmul.f32 %v1646, 1.442695
        %v1789 = vpow.pop %v1788
        %v1790 = vmul.f32 %v1647, 1.442695
        %v1791 = vpow.pop %v1790
        %v1792 = vmul.f32 %v1648, 1.442695
        %v1793 = vpow.pop %v1792
        %v1794 = vmul.f32 %v1649, 1.442695
        %v1795 = vpow.pop %v1794
        %v1796 = vmul.f32 %v1650, 1.442695
        %v1797 = vpow.pop %v1796
        %v1798 = vmul.f32 %v1651, 1.442695
        %v1799 = vpow.pop %v1798
        %v1800 = vmul.f32 %v1652, 1.442695
        %v1801 = vpow.pop %v1800
        %v1802 = vmul.f32 %v1653, 1.442695
        %v1803 = vpow.pop %v1802
        %v1804 = vmul.f32 %v1654, 1.442695
        %v1805 = vpow.pop %v1804
        %v1806 = vmul.f32 %v1655, 1.442695
        %v1807 = vpow.pop %v1806
        %v1808 = vmul.f32 %v1656, 1.442695
        %v1809 = vpow.pop %v1808
        %v1810 = vmul.f32 %v1657, 1.442695
        %v1811 = vpow.pop %v1810
        %v1812 = vmul.f32 %v1658, 1.442695
        %v1813 = vpow.pop %v1812
        %v1814 = vmul.f32 %v1659, 1.442695
        %v1815 = vpow.pop %v1814
        %v1816 = vmul.f32 %v1660, 1.442695
        %v1817 = vpow.pop %v1816
        %v1818 = vmul.f32 %v1661, 1.442695
        %v1819 = vpow.pop %v1818
        %v1820 = vmul.f32 %v1662, 1.442695
        %v1821 = vpow.pop %v1820
        %v1822 = vmul.f32 %v1663, 1.442695
        %v1823 = vpow.pop %v1822
        %v1824 = vmul.f32 %v1664, 1.442695
        %v1825 = vpow.pop %v1824
        %v1826 = vmul.f32 %v1665, 1.442695
        %v1827 = vpow.pop %v1826
        %v1828 = vmul.f32 %v1666, 1.442695
        %v1829 = vpow.pop %v1828
        %v1830 = vmul.f32 %v1667, 1.442695
        %v1831 = vpow.pop %v1830
        %v1832 = vmul.f32 %v1668, 1.442695
        %v1833 = vpow.pop %v1832
        %v1834 = vmul.f32 %v1669, 1.442695
        %v1835 = vpow.pop %v1834
        %v1836 = vmul.f32 %v1670, 1.442695
        %v1837 = vpow.pop %v1836
        %v1838 = vmul.f32 %v1671, 1.442695
        %v1839 = vpow.pop %v1838
        %v1840 = vmul.f32 %v1672, 1.442695
        %v1841 = vpow.pop %v1840
        %v1842 = vmul.f32 %v1673, 1.442695
        %v1843 = vpow.pop %v1842
        %v1844 = vmul.f32 %v1674, 1.442695
        %v1845 = vpow.pop %v1844
        %v1846 = vmul.f32 %v1675, 1.442695
        %v1847 = vpow.pop %v1846
        %v1848 = vmul.f32 %v1676, 1.442695
        %v1849 = vpow.pop %v1848
        %v1850 = vmul.f32 %v1677, 1.442695
        %v1851 = vpow.pop %v1850
        %v1852 = vmul.f32 %v1678, 1.442695
        %v1853 = vpow.pop %v1852
        %v1854 = vmul.f32 %v1679, 1.442695
        %v1855 = vpow.pop %v1854
        %v1856 = vmul.f32 %v1680, 1.442695
        %v1857 = vpow.pop %v1856
        %v1858 = vmul.f32 %v1681, 1.442695
        %v1859 = vpow.pop %v1858
        %v1860 = vmul.f32 %v1682, 1.442695
        %v1861 = vpow.pop %v1860
        %v1862 = vmul.f32 %v1683, 1.442695
        %v1863 = vpow.pop %v1862
        %v1864 = vmul.f32 %v1684, 1.442695
        %v1865 = vpow.pop %v1864
        %v1866 = vmul.f32 %v1685, 1.442695
        %v1867 = vpow.pop %v1866
        %v1868 = vmul.f32 %v1686, 1.442695
        %v1869 = vpow.pop %v1868
        %v1870 = vmul.f32 %v1687, 1.442695
        %v1871 = vpow.pop %v1870
        %v1872 = vmul.f32 %v1688, 1.442695
        %v1873 = vpow.pop %v1872
        %v1874 = vmul.f32 %v1689, 1.442695
        %v1875 = vpow.pop %v1874
        %v1876 = vmul.f32 %v1690, 1.442695
        %v1877 = vpow.pop %v1876
        %v1878 = vmul.f32 %v1691, 1.442695
        %v1879 = vpow.pop %v1878
        %v1880 = vmul.f32 %v1692, 1.442695
        %v1881 = vpow.pop %v1880
        %v1882 = vmul.f32 %v1693, 1.442695
        %v1883 = vpow.pop %v1882
        %v1884 = vmul.f32 %v1694, 1.442695
        %v1885 = vpow.pop %v1884
        %v1886 = vmul.f32 %v1695, 1.442695
        %v1887 = vpow.pop %v1886
        %v1888 = vmul.f32 %v1696, 1.442695
        %v1889 = vpow.pop %v1888
        %v1890 = vmul.f32 %v1697, 1.442695
        %v1891 = vpow.pop %v1890
        %v1892 = vmul.f32 %v1698, 1.442695
        %v1893 = vpow.pop %v1892
        %v1894 = vmul.f32 %v1699, 1.442695
        %v1895 = vpow.pop %v1894
        %v1896 = vmul.f32 %v1700, 1.442695
        %v1897 = vpow.pop %v1896
        %v1898 = vmul.f32 %v1701, 1.442695
        %v1899 = vpow.pop %v1898
        %v1900 = vmul.f32 %v1702, 1.442695
        %v1901 = vpow.pop %v1900
        %v1902 = vmul.f32 %v1703, 1.442695
        %v1903 = vpow.pop %v1902
        %v1904 = vmul.f32 %v1704, 1.442695
        %v1905 = vpow.pop %v1904
        %v1906 = vmul.f32 %v1705, 1.442695
        %v1907 = vpow.pop %v1906
        %v1908 = vmul.f32 %v1706, 1.442695
        %v1909 = vpow.pop %v1908
        %v1910 = vmul.f32 %v1707, 1.442695
        %v1911 = vpow.pop %v1910
        %v1912 = vmul.f32 %v1708, 1.442695
        %v1913 = vpow.pop %v1912
        %v1914 = vmul.f32 %v1709, 1.442695
        %v1915 = vpow.pop %v1914
        %v1916 = vmul.f32 %v1710, 1.442695
        %v1917 = vpow.pop %v1916
        %v1918 = vmul.f32 %v1711, 1.442695
        %v1919 = vpow.pop %v1918
        %v1920 = vmul.f32 %v1712, 1.442695
        %v1921 = vpow.pop %v1920
        %v1922 = vmul.f32 %v1713, 1.442695
        %v1923 = vpow.pop %v1922
        %v1924 = vmul.f32 %v1714, 1.442695
        %v1925 = vpow.pop %v1924
        %v1926 = vmul.f32 %v1715, 1.442695
        %v1927 = vpow.pop %v1926
        %v1928 = vmul.f32 %v1716, 1.442695
        %v1929 = vpow.pop %v1928
        %v1930 = vmul.f32 %v1717, 1.442695
        %v1931 = vpow.pop %v1930
        %v1932 = vmul.f32 %v1718, 1.442695
        %v1933 = vpow.pop %v1932
        %v1934 = vmul.f32 %v1719, 1.442695
        %v1935 = vpow.pop %v1934
        %v1936 = vmul.f32 %v1720, 1.442695
        %v1937 = vpow.pop %v1936
        %v1938 = vmul.f32 %v1721, 1.442695
        %v1939 = vpow.pop %v1938
        %v1940 = vmul.f32 %v1722, 1.442695
        %v1941 = vpow.pop %v1940
        %v1942 = vmul.f32 %v1723, 1.442695
        %v1943 = vpow.pop %v1942
        %v1944 = vmul.f32 %v1724, 1.442695
        %v1945 = vpow.pop %v1944
        %v1946 = vmul.f32 %v1725, 1.442695
        %v1947 = vpow.pop %v1946
        %v1948 = vmul.f32 %v1726, 1.442695
        %v1949 = vpow.pop %v1948
        %v1950 = vmul.f32 %v1727, 1.442695
        %v1951 = vpow.pop %v1950
        %v1952 = vmul.f32 %v1728, 1.442695
        %v1953 = vpow.pop %v1952
        %v1954 = vmul.f32 %v1729, 1.442695
        %v1955 = vpow.pop %v1954
        %v1956 = vmul.f32 %v1730, 1.442695
        %v1957 = vpow.pop %v1956
        %v1958 = vmul.f32 %v1731, 1.442695
        %v1959 = vpow.pop %v1958
        %v1960 = vmul.f32 %v1732, 1.442695
        %v1961 = vpow.pop %v1960
        %v1962 = vmul.f32 %v1733, 1.442695
        %v1963 = vpow.pop %v1962
        %v1964 = vmul.f32 %v1734, 1.442695
        %v1965 = vpow.pop %v1964
        %v1966 = vmul.f32 %v1735, 1.442695
        %v1967 = vpow.pop %v1966
        %v1968 = vmul.f32 %v1736, 1.442695
        %v1969 = vpow.pop %v1968
        %v1970 = vmul.f32 %v1737, 1.442695
        %v1971 = vpow.pop %v1970
        %v1972 = vmul.f32 %v1738, 1.442695
        %v1973 = vpow.pop %v1972
        %v1974 = vmul.f32 %v1739, 1.442695
        %v1975 = vpow.pop %v1974
        %v1976 = vmul.f32 %v1740, 1.442695
        %v1977 = vpow.pop %v1976
        %v1978 = vmul.f32 %v1741, 1.442695
        %v1979 = vpow.pop %v1978
        %v1980 = vmul.f32 %v1742, 1.442695
        %v1981 = vpow.pop %v1980
        %v1982 = vmul.f32 %v1743, 1.442695
        %v1983 = vpow.pop %v1982
        %v1984 = vmul.f32 %v1744, 1.442695
        %v1985 = vpow.pop %v1984
        %v1986 = vmul.f32 %v1745, 1.442695
        %v1987 = vpow.pop %v1986
        %v1988 = vmul.f32 %v1746, 1.442695
        %v1989 = vpow.pop %v1988
        %v1990 = vmul.f32 %v1747, 1.442695
        %v1991 = vpow.pop %v1990
        %v1992 = vmul.f32 %v1748, 1.442695
        %v1993 = vpow.pop %v1992
        %v1994 = vmul.f32 %v1749, 1.442695
        %v1995 = vpow.pop %v1994
        %v1996 = vmul.f32 %v1750, 1.442695
        %v1997 = vpow.pop %v1996
        %v1998 = vmul.f32 %v1751, 1.442695
        %v1999 = vpow.pop %v1998
        %v2000 = vmul.f32 %v1752, 1.442695
        %v2001 = vpow.pop %v2000
        %v2002 = vmul.f32 %v1753, 1.442695
        %v2003 = vpow.pop %v2002
        %v2004 = vmul.f32 %v1754, 1.442695
        %v2005 = vpow.pop %v2004
        %v2006 = vmul.f32 %v1755, 1.442695
        %v2007 = vpow.pop %v2006
        %v2008 = vmul.f32 %v1756, 1.442695
        %v2009 = vpow.pop %v2008
        %v2010 = vmul.f32 %v1757, 1.442695
        %v2011 = vpow.pop %v2010
        %v2012 = vmul.f32 %v1758, 1.442695
        %v2013 = vpow.pop %v2012
        %v2014 = vmul.f32 %v1759, 1.442695
        %v2015 = vpow.pop %v2014
        %v2016 = vadd.f32 %v1761, 1.0
        %v2017 = vadd.f32 %v1763, 1.0
        %v2018 = vadd.f32 %v1765, 1.0
        %v2019 = vadd.f32 %v1767, 1.0
        %v2020 = vadd.f32 %v1769, 1.0
        %v2021 = vadd.f32 %v1771, 1.0
        %v2022 = vadd.f32 %v1773, 1.0
        %v2023 = vadd.f32 %v1775, 1.0
        %v2024 = vadd.f32 %v1777, 1.0
        %v2025 = vadd.f32 %v1779, 1.0
        %v2026 = vadd.f32 %v1781, 1.0
        %v2027 = vadd.f32 %v1783, 1.0
        %v2028 = vadd.f32 %v1785, 1.0
        %v2029 = vadd.f32 %v1787, 1.0
        %v2030 = vadd.f32 %v1789, 1.0
        %v2031 = vadd.f32 %v1791, 1.0
        %v2032 = vadd.f32 %v1793, 1.0
        %v2033 = vadd.f32 %v1795, 1.0
        %v2034 = vadd.f32 %v1797, 1.0
        %v2035 = vadd.f32 %v1799, 1.0
        %v2036 = vadd.f32 %v1801, 1.0
        %v2037 = vadd.f32 %v1803, 1.0
        %v2038 = vadd.f32 %v1805, 1.0
        %v2039 = vadd.f32 %v1807, 1.0
        %v2040 = vadd.f32 %v1809, 1.0
        %v2041 = vadd.f32 %v1811, 1.0
        %v2042 = vadd.f32 %v1813, 1.0
        %v2043 = vadd.f32 %v1815, 1.0
        %v2044 = vadd.f32 %v1817, 1.0
        %v2045 = vadd.f32 %v1819, 1.0
        %v2046 = vadd.f32 %v1821, 1.0
        %v2047 = vadd.f32 %v1823, 1.0
        %v2048 = vadd.f32 %v1825, 1.0
        %v2049 = vadd.f32 %v1827, 1.0
        %v2050 = vadd.f32 %v1829, 1.0
        %v2051 = vadd.f32 %v1831, 1.0
        %v2052 = vadd.f32 %v1833, 1.0
        %v2053 = vadd.f32 %v1835, 1.0
        %v2054 = vadd.f32 %v1837, 1.0
        %v2055 = vadd.f32 %v1839, 1.0
        %v2056 = vadd.f32 %v1841, 1.0
        %v2057 = vadd.f32 %v1843, 1.0
        %v2058 = vadd.f32 %v1845, 1.0
        %v2059 = vadd.f32 %v1847, 1.0
        %v2060 = vadd.f32 %v1849, 1.0
        %v2061 = vadd.f32 %v1851, 1.0
        %v2062 = vadd.f32 %v1853, 1.0
        %v2063 = vadd.f32 %v1855, 1.0
        %v2064 = vadd.f32 %v1857, 1.0
        %v2065 = vadd.f32 %v1859, 1.0
        %v2066 = vadd.f32 %v1861, 1.0
        %v2067 = vadd.f32 %v1863, 1.0
        %v2068 = vadd.f32 %v1865, 1.0
        %v2069 = vadd.f32 %v1867, 1.0
        %v2070 = vadd.f32 %v1869, 1.0
        %v2071 = vadd.f32 %v1871, 1.0
        %v2072 = vadd.f32 %v1873, 1.0
        %v2073 = vadd.f32 %v1875, 1.0
        %v2074 = vadd.f32 %v1877, 1.0
        %v2075 = vadd.f32 %v1879, 1.0
        %v2076 = vadd.f32 %v1881, 1.0
        %v2077 = vadd.f32 %v1883, 1.0
        %v2078 = vadd.f32 %v1885, 1.0
        %v2079 = vadd.f32 %v1887, 1.0
        %v2080 = vadd.f32 %v1889, 1.0
        %v2081 = vadd.f32 %v1891, 1.0
        %v2082 = vadd.f32 %v1893, 1.0
        %v2083 = vadd.f32 %v1895, 1.0
        %v2084 = vadd.f32 %v1897, 1.0
        %v2085 = vadd.f32 %v1899, 1.0
        %v2086 = vadd.f32 %v1901, 1.0
        %v2087 = vadd.f32 %v1903, 1.0
        %v2088 = vadd.f32 %v1905, 1.0
        %v2089 = vadd.f32 %v1907, 1.0
        %v2090 = vadd.f32 %v1909, 1.0
        %v2091 = vadd.f32 %v1911, 1.0
        %v2092 = vadd.f32 %v1913, 1.0
        %v2093 = vadd.f32 %v1915, 1.0
        %v2094 = vadd.f32 %v1917, 1.0
        %v2095 = vadd.f32 %v1919, 1.0
        %v2096 = vadd.f32 %v1921, 1.0
        %v2097 = vadd.f32 %v1923, 1.0
        %v2098 = vadd.f32 %v1925, 1.0
        %v2099 = vadd.f32 %v1927, 1.0
        %v2100 = vadd.f32 %v1929, 1.0
        %v2101 = vadd.f32 %v1931, 1.0
        %v2102 = vadd.f32 %v1933, 1.0
        %v2103 = vadd.f32 %v1935, 1.0
        %v2104 = vadd.f32 %v1937, 1.0
        %v2105 = vadd.f32 %v1939, 1.0
        %v2106 = vadd.f32 %v1941, 1.0
        %v2107 = vadd.f32 %v1943, 1.0
        %v2108 = vadd.f32 %v1945, 1.0
        %v2109 = vadd.f32 %v1947, 1.0
        %v2110 = vadd.f32 %v1949, 1.0
        %v2111 = vadd.f32 %v1951, 1.0
        %v2112 = vadd.f32 %v1953, 1.0
        %v2113 = vadd.f32 %v1955, 1.0
        %v2114 = vadd.f32 %v1957, 1.0
        %v2115 = vadd.f32 %v1959, 1.0
        %v2116 = vadd.f32 %v1961, 1.0
        %v2117 = vadd.f32 %v1963, 1.0
        %v2118 = vadd.f32 %v1965, 1.0
        %v2119 = vadd.f32 %v1967, 1.0
        %v2120 = vadd.f32 %v1969, 1.0
        %v2121 = vadd.f32 %v1971, 1.0
        %v2122 = vadd.f32 %v1973, 1.0
        %v2123 = vadd.f32 %v1975, 1.0
        %v2124 = vadd.f32 %v1977, 1.0
        %v2125 = vadd.f32 %v1979, 1.0
        %v2126 = vadd.f32 %v1981, 1.0
        %v2127 = vadd.f32 %v1983, 1.0
        %v2128 = vadd.f32 %v1985, 1.0
        %v2129 = vadd.f32 %v1987, 1.0
        %v2130 = vadd.f32 %v1989, 1.0
        %v2131 = vadd.f32 %v1991, 1.0
        %v2132 = vadd.f32 %v1993, 1.0
        %v2133 = vadd.f32 %v1995, 1.0
        %v2134 = vadd.f32 %v1997, 1.0
        %v2135 = vadd.f32 %v1999, 1.0
        %v2136 = vadd.f32 %v2001, 1.0
        %v2137 = vadd.f32 %v2003, 1.0
        %v2138 = vadd.f32 %v2005, 1.0
        %v2139 = vadd.f32 %v2007, 1.0
        %v2140 = vadd.f32 %v2009, 1.0
        %v2141 = vadd.f32 %v2011, 1.0
        %v2142 = vadd.f32 %v2013, 1.0
        %v2143 = vadd.f32 %v2015, 1.0
        %v2144 = vrcp.pop %v2016
        %v2145 = vmul.f32 1.0, %v2144
        %v2146 = vrcp.pop %v2017
        %v2147 = vmul.f32 1.0, %v2146
        %v2148 = vrcp.pop %v2018
        %v2149 = vmul.f32 1.0, %v2148
        %v2150 = vrcp.pop %v2019
        %v2151 = vmul.f32 1.0, %v2150
        %v2152 = vrcp.pop %v2020
        %v2153 = vmul.f32 1.0, %v2152
        %v2154 = vrcp.pop %v2021
        %v2155 = vmul.f32 1.0, %v2154
        %v2156 = vrcp.pop %v2022
        %v2157 = vmul.f32 1.0, %v2156
        %v2158 = vrcp.pop %v2023
        %v2159 = vmul.f32 1.0, %v2158
        %v2160 = vrcp.pop %v2024
        %v2161 = vmul.f32 1.0, %v2160
        %v2162 = vrcp.pop %v2025
        %v2163 = vmul.f32 1.0, %v2162
        %v2164 = vrcp.pop %v2026
        %v2165 = vmul.f32 1.0, %v2164
        %v2166 = vrcp.pop %v2027
        %v2167 = vmul.f32 1.0, %v2166
        %v2168 = vrcp.pop %v2028
        %v2169 = vmul.f32 1.0, %v2168
        %v2170 = vrcp.pop %v2029
        %v2171 = vmul.f32 1.0, %v2170
        %v2172 = vrcp.pop %v2030
        %v2173 = vmul.f32 1.0, %v2172
        %v2174 = vrcp.pop %v2031
        %v2175 = vmul.f32 1.0, %v2174
        %v2176 = vrcp.pop %v2032
        %v2177 = vmul.f32 1.0, %v2176
        %v2178 = vrcp.pop %v2033
        %v2179 = vmul.f32 1.0, %v2178
        %v2180 = vrcp.pop %v2034
        %v2181 = vmul.f32 1.0, %v2180
        %v2182 = vrcp.pop %v2035
        %v2183 = vmul.f32 1.0, %v2182
        %v2184 = vrcp.pop %v2036
        %v2185 = vmul.f32 1.0, %v2184
        %v2186 = vrcp.pop %v2037
        %v2187 = vmul.f32 1.0, %v2186
        %v2188 = vrcp.pop %v2038
        %v2189 = vmul.f32 1.0, %v2188
        %v2190 = vrcp.pop %v2039
        %v2191 = vmul.f32 1.0, %v2190
        %v2192 = vrcp.pop %v2040
        %v2193 = vmul.f32 1.0, %v2192
        %v2194 = vrcp.pop %v2041
        %v2195 = vmul.f32 1.0, %v2194
        %v2196 = vrcp.pop %v2042
        %v2197 = vmul.f32 1.0, %v2196
        %v2198 = vrcp.pop %v2043
        %v2199 = vmul.f32 1.0, %v2198
        %v2200 = vrcp.pop %v2044
        %v2201 = vmul.f32 1.0, %v2200
        %v2202 = vrcp.pop %v2045
        %v2203 = vmul.f32 1.0, %v2202
        %v2204 = vrcp.pop %v2046
        %v2205 = vmul.f32 1.0, %v2204
        %v2206 = vrcp.pop %v2047
        %v2207 = vmul.f32 1.0, %v2206
        %v2208 = vrcp.pop %v2048
        %v2209 = vmul.f32 1.0, %v2208
        %v2210 = vrcp.pop %v2049
        %v2211 = vmul.f32 1.0, %v2210
        %v2212 = vrcp.pop %v2050
        %v2213 = vmul.f32 1.0, %v2212
        %v2214 = vrcp.pop %v2051
        %v2215 = vmul.f32 1.0, %v2214
        %v2216 = vrcp.pop %v2052
        %v2217 = vmul.f32 1.0, %v2216
        %v2218 = vrcp.pop %v2053
        %v2219 = vmul.f32 1.0, %v2218
        %v2220 = vrcp.pop %v2054
        %v2221 = vmul.f32 1.0, %v2220
        %v2222 = vrcp.pop %v2055
        %v2223 = vmul.f32 1.0, %v2222
        %v2224 = vrcp.pop %v2056
        %v2225 = vmul.f32 1.0, %v2224
        %v2226 = vrcp.pop %v2057
        %v2227 = vmul.f32 1.0, %v2226
        %v2228 = vrcp.pop %v2058
        %v2229 = vmul.f32 1.0, %v2228
        %v2230 = vrcp.pop %v2059
        %v2231 = vmul.f32 1.0, %v2230
        %v2232 = vrcp.pop %v2060
        %v2233 = vmul.f32 1.0, %v2232
        %v2234 = vrcp.pop %v2061
        %v2235 = vmul.f32 1.0, %v2234
        %v2236 = vrcp.pop %v2062
        %v2237 = vmul.f32 1.0, %v2236
        %v2238 = vrcp.pop %v2063
        %v2239 = vmul.f32 1.0, %v2238
        %v2240 = vrcp.pop %v2064
        %v2241 = vmul.f32 1.0, %v2240
        %v2242 = vrcp.pop %v2065
        %v2243 = vmul.f32 1.0, %v2242
        %v2244 = vrcp.pop %v2066
        %v2245 = vmul.f32 1.0, %v2244
        %v2246 = vrcp.pop %v2067
        %v2247 = vmul.f32 1.0, %v2246
        %v2248 = vrcp.pop %v2068
        %v2249 = vmul.f32 1.0, %v2248
        %v2250 = vrcp.pop %v2069
        %v2251 = vmul.f32 1.0, %v2250
        %v2252 = vrcp.pop %v2070
        %v2253 = vmul.f32 1.0, %v2252
        %v2254 = vrcp.pop %v2071
        %v2255 = vmul.f32 1.0, %v2254
        %v2256 = vrcp.pop %v2072
        %v2257 = vmul.f32 1.0, %v2256
        %v2258 = vrcp.pop %v2073
        %v2259 = vmul.f32 1.0, %v2258
        %v2260 = vrcp.pop %v2074
        %v2261 = vmul.f32 1.0, %v2260
        %v2262 = vrcp.pop %v2075
        %v2263 = vmul.f32 1.0, %v2262
        %v2264 = vrcp.pop %v2076
        %v2265 = vmul.f32 1.0, %v2264
        %v2266 = vrcp.pop %v2077
        %v2267 = vmul.f32 1.0, %v2266
        %v2268 = vrcp.pop %v2078
        %v2269 = vmul.f32 1.0, %v2268
        %v2270 = vrcp.pop %v2079
        %v2271 = vmul.f32 1.0, %v2270
        %v2272 = vrcp.pop %v2080
        %v2273 = vmul.f32 1.0, %v2272
        %v2274 = vrcp.pop %v2081
        %v2275 = vmul.f32 1.0, %v2274
        %v2276 = vrcp.pop %v2082
        %v2277 = vmul.f32 1.0, %v2276
        %v2278 = vrcp.pop %v2083
        %v2279 = vmul.f32 1.0, %v2278
        %v2280 = vrcp.pop %v2084
        %v2281 = vmul.f32 1.0, %v2280
        %v2282 = vrcp.pop %v2085
        %v2283 = vmul.f32 1.0, %v2282
        %v2284 = vrcp.pop %v2086
        %v2285 = vmul.f32 1.0, %v2284
        %v2286 = vrcp.pop %v2087
        %v2287 = vmul.f32 1.0, %v2286
        %v2288 = vrcp.pop %v2088
        %v2289 = vmul.f32 1.0, %v2288
        %v2290 = vrcp.pop %v2089
        %v2291 = vmul.f32 1.0, %v2290
        %v2292 = vrcp.pop %v2090
        %v2293 = vmul.f32 1.0, %v2292
        %v2294 = vrcp.pop %v2091
        %v2295 = vmul.f32 1.0, %v2294
        %v2296 = vrcp.pop %v2092
        %v2297 = vmul.f32 1.0, %v2296
        %v2298 = vrcp.pop %v2093
        %v2299 = vmul.f32 1.0, %v2298
        %v2300 = vrcp.pop %v2094
        %v2301 = vmul.f32 1.0, %v2300
        %v2302 = vrcp.pop %v2095
        %v2303 = vmul.f32 1.0, %v2302
        %v2304 = vrcp.pop %v2096
        %v2305 = vmul.f32 1.0, %v2304
        %v2306 = vrcp.pop %v2097
        %v2307 = vmul.f32 1.0, %v2306
        %v2308 = vrcp.pop %v2098
        %v2309 = vmul.f32 1.0, %v2308
        %v2310 = vrcp.pop %v2099
        %v2311 = vmul.f32 1.0, %v2310
        %v2312 = vrcp.pop %v2100
        %v2313 = vmul.f32 1.0, %v2312
        %v2314 = vrcp.pop %v2101
        %v2315 = vmul.f32 1.0, %v2314
        %v2316 = vrcp.pop %v2102
        %v2317 = vmul.f32 1.0, %v2316
        %v2318 = vrcp.pop %v2103
        %v2319 = vmul.f32 1.0, %v2318
        %v2320 = vrcp.pop %v2104
        %v2321 = vmul.f32 1.0, %v2320
        %v2322 = vrcp.pop %v2105
        %v2323 = vmul.f32 1.0, %v2322
        %v2324 = vrcp.pop %v2106
        %v2325 = vmul.f32 1.0, %v2324
        %v2326 = vrcp.pop %v2107
        %v2327 = vmul.f32 1.0, %v2326
        %v2328 = vrcp.pop %v2108
        %v2329 = vmul.f32 1.0, %v2328
        %v2330 = vrcp.pop %v2109
        %v2331 = vmul.f32 1.0, %v2330
        %v2332 = vrcp.pop %v2110
        %v2333 = vmul.f32 1.0, %v2332
        %v2334 = vrcp.pop %v2111
        %v2335 = vmul.f32 1.0, %v2334
        %v2336 = vrcp.pop %v2112
        %v2337 = vmul.f32 1.0, %v2336
        %v2338 = vrcp.pop %v2113
        %v2339 = vmul.f32 1.0, %v2338
        %v2340 = vrcp.pop %v2114
        %v2341 = vmul.f32 1.0, %v2340
        %v2342 = vrcp.pop %v2115
        %v2343 = vmul.f32 1.0, %v2342
        %v2344 = vrcp.pop %v2116
        %v2345 = vmul.f32 1.0, %v2344
        %v2346 = vrcp.pop %v2117
        %v2347 = vmul.f32 1.0, %v2346
        %v2348 = vrcp.pop %v2118
        %v2349 = vmul.f32 1.0, %v2348
        %v2350 = vrcp.pop %v2119
        %v2351 = vmul.f32 1.0, %v2350
        %v2352 = vrcp.pop %v2120
        %v2353 = vmul.f32 1.0, %v2352
        %v2354 = vrcp.pop %v2121
        %v2355 = vmul.f32 1.0, %v2354
        %v2356 = vrcp.pop %v2122
        %v2357 = vmul.f32 1.0, %v2356
        %v2358 = vrcp.pop %v2123
        %v2359 = vmul.f32 1.0, %v2358
        %v2360 = vrcp.pop %v2124
        %v2361 = vmul.f32 1.0, %v2360
        %v2362 = vrcp.pop %v2125
        %v2363 = vmul.f32 1.0, %v2362
        %v2364 = vrcp.pop %v2126
        %v2365 = vmul.f32 1.0, %v2364
        %v2366 = vrcp.pop %v2127
        %v2367 = vmul.f32 1.0, %v2366
        %v2368 = vrcp.pop %v2128
        %v2369 = vmul.f32 1.0, %v2368
        %v2370 = vrcp.pop %v2129
        %v2371 = vmul.f32 1.0, %v2370
        %v2372 = vrcp.pop %v2130
        %v2373 = vmul.f32 1.0, %v2372
        %v2374 = vrcp.pop %v2131
        %v2375 = vmul.f32 1.0, %v2374
        %v2376 = vrcp.pop %v2132
        %v2377 = vmul.f32 1.0, %v2376
        %v2378 = vrcp.pop %v2133
        %v2379 = vmul.f32 1.0, %v2378
        %v2380 = vrcp.pop %v2134
        %v2381 = vmul.f32 1.0, %v2380
        %v2382 = vrcp.pop %v2135
        %v2383 = vmul.f32 1.0, %v2382
        %v2384 = vrcp.pop %v2136
        %v2385 = vmul.f32 1.0, %v2384
        %v2386 = vrcp.pop %v2137
        %v2387 = vmul.f32 1.0, %v2386
        %v2388 = vrcp.pop %v2138
        %v2389 = vmul.f32 1.0, %v2388
        %v2390 = vrcp.pop %v2139
        %v2391 = vmul.f32 1.0, %v2390
        %v2392 = vrcp.pop %v2140
        %v2393 = vmul.f32 1.0, %v2392
        %v2394 = vrcp.pop %v2141
        %v2395 = vmul.f32 1.0, %v2394
        %v2396 = vrcp.pop %v2142
        %v2397 = vmul.f32 1.0, %v2396
        %v2398 = vrcp.pop %v2143
        %v2399 = vmul.f32 1.0, %v2398
        %v2400 = vmul.f32 %v1504, %v2145
        %v2401 = vmul.f32 %v1505, %v2147
        %v2402 = vmul.f32 %v1506, %v2149
        %v2403 = vmul.f32 %v1507, %v2151
        %v2404 = vmul.f32 %v1508, %v2153
        %v2405 = vmul.f32 %v1509, %v2155
        %v2406 = vmul.f32 %v1510, %v2157
        %v2407 = vmul.f32 %v1511, %v2159
        %v2408 = vmul.f32 %v1512, %v2161
        %v2409 = vmul.f32 %v1513, %v2163
        %v2410 = vmul.f32 %v1514, %v2165
        %v2411 = vmul.f32 %v1515, %v2167
        %v2412 = vmul.f32 %v1516, %v2169
        %v2413 = vmul.f32 %v1517, %v2171
        %v2414 = vmul.f32 %v1518, %v2173
        %v2415 = vmul.f32 %v1519, %v2175
        %v2416 = vmul.f32 %v1520, %v2177
        %v2417 = vmul.f32 %v1521, %v2179
        %v2418 = vmul.f32 %v1522, %v2181
        %v2419 = vmul.f32 %v1523, %v2183
        %v2420 = vmul.f32 %v1524, %v2185
        %v2421 = vmul.f32 %v1525, %v2187
        %v2422 = vmul.f32 %v1526, %v2189
        %v2423 = vmul.f32 %v1527, %v2191
        %v2424 = vmul.f32 %v1528, %v2193
        %v2425 = vmul.f32 %v1529, %v2195
        %v2426 = vmul.f32 %v1530, %v2197
        %v2427 = vmul.f32 %v1531, %v2199
        %v2428 = vmul.f32 %v1532, %v2201
        %v2429 = vmul.f32 %v1533, %v2203
        %v2430 = vmul.f32 %v1534, %v2205
        %v2431 = vmul.f32 %v1535, %v2207
        %v2432 = vmul.f32 %v1536, %v2209
        %v2433 = vmul.f32 %v1537, %v2211
        %v2434 = vmul.f32 %v1538, %v2213
        %v2435 = vmul.f32 %v1539, %v2215
        %v2436 = vmul.f32 %v1540, %v2217
        %v2437 = vmul.f32 %v1541, %v2219
        %v2438 = vmul.f32 %v1542, %v2221
        %v2439 = vmul.f32 %v1543, %v2223
        %v2440 = vmul.f32 %v1544, %v2225
        %v2441 = vmul.f32 %v1545, %v2227
        %v2442 = vmul.f32 %v1546, %v2229
        %v2443 = vmul.f32 %v1547, %v2231
        %v2444 = vmul.f32 %v1548, %v2233
        %v2445 = vmul.f32 %v1549, %v2235
        %v2446 = vmul.f32 %v1550, %v2237
        %v2447 = vmul.f32 %v1551, %v2239
        %v2448 = vmul.f32 %v1552, %v2241
        %v2449 = vmul.f32 %v1553, %v2243
        %v2450 = vmul.f32 %v1554, %v2245
        %v2451 = vmul.f32 %v1555, %v2247
        %v2452 = vmul.f32 %v1556, %v2249
        %v2453 = vmul.f32 %v1557, %v2251
        %v2454 = vmul.f32 %v1558, %v2253
        %v2455 = vmul.f32 %v1559, %v2255
        %v2456 = vmul.f32 %v1560, %v2257
        %v2457 = vmul.f32 %v1561, %v2259
        %v2458 = vmul.f32 %v1562, %v2261
        %v2459 = vmul.f32 %v1563, %v2263
        %v2460 = vmul.f32 %v1564, %v2265
        %v2461 = vmul.f32 %v1565, %v2267
        %v2462 = vmul.f32 %v1566, %v2269
        %v2463 = vmul.f32 %v1567, %v2271
        %v2464 = vmul.f32 %v1568, %v2273
        %v2465 = vmul.f32 %v1569, %v2275
        %v2466 = vmul.f32 %v1570, %v2277
        %v2467 = vmul.f32 %v1571, %v2279
        %v2468 = vmul.f32 %v1572, %v2281
        %v2469 = vmul.f32 %v1573, %v2283
        %v2470 = vmul.f32 %v1574, %v2285
        %v2471 = vmul.f32 %v1575, %v2287
        %v2472 = vmul.f32 %v1576, %v2289
        %v2473 = vmul.f32 %v1577, %v2291
        %v2474 = vmul.f32 %v1578, %v2293
        %v2475 = vmul.f32 %v1579, %v2295
        %v2476 = vmul.f32 %v1580, %v2297
        %v2477 = vmul.f32 %v1581, %v2299
        %v2478 = vmul.f32 %v1582, %v2301
        %v2479 = vmul.f32 %v1583, %v2303
        %v2480 = vmul.f32 %v1584, %v2305
        %v2481 = vmul.f32 %v1585, %v2307
        %v2482 = vmul.f32 %v1586, %v2309
        %v2483 = vmul.f32 %v1587, %v2311
        %v2484 = vmul.f32 %v1588, %v2313
        %v2485 = vmul.f32 %v1589, %v2315
        %v2486 = vmul.f32 %v1590, %v2317
        %v2487 = vmul.f32 %v1591, %v2319
        %v2488 = vmul.f32 %v1592, %v2321
        %v2489 = vmul.f32 %v1593, %v2323
        %v2490 = vmul.f32 %v1594, %v2325
        %v2491 = vmul.f32 %v1595, %v2327
        %v2492 = vmul.f32 %v1596, %v2329
        %v2493 = vmul.f32 %v1597, %v2331
        %v2494 = vmul.f32 %v1598, %v2333
        %v2495 = vmul.f32 %v1599, %v2335
        %v2496 = vmul.f32 %v1600, %v2337
        %v2497 = vmul.f32 %v1601, %v2339
        %v2498 = vmul.f32 %v1602, %v2341
        %v2499 = vmul.f32 %v1603, %v2343
        %v2500 = vmul.f32 %v1604, %v2345
        %v2501 = vmul.f32 %v1605, %v2347
        %v2502 = vmul.f32 %v1606, %v2349
        %v2503 = vmul.f32 %v1607, %v2351
        %v2504 = vmul.f32 %v1608, %v2353
        %v2505 = vmul.f32 %v1609, %v2355
        %v2506 = vmul.f32 %v1610, %v2357
        %v2507 = vmul.f32 %v1611, %v2359
        %v2508 = vmul.f32 %v1612, %v2361
        %v2509 = vmul.f32 %v1613, %v2363
        %v2510 = vmul.f32 %v1614, %v2365
        %v2511 = vmul.f32 %v1615, %v2367
        %v2512 = vmul.f32 %v1616, %v2369
        %v2513 = vmul.f32 %v1617, %v2371
        %v2514 = vmul.f32 %v1618, %v2373
        %v2515 = vmul.f32 %v1619, %v2375
        %v2516 = vmul.f32 %v1620, %v2377
        %v2517 = vmul.f32 %v1621, %v2379
        %v2518 = vmul.f32 %v1622, %v2381
        %v2519 = vmul.f32 %v1623, %v2383
        %v2520 = vmul.f32 %v1624, %v2385
        %v2521 = vmul.f32 %v1625, %v2387
        %v2522 = vmul.f32 %v1626, %v2389
        %v2523 = vmul.f32 %v1627, %v2391
        %v2524 = vmul.f32 %v1628, %v2393
        %v2525 = vmul.f32 %v1629, %v2395
        %v2526 = vmul.f32 %v1630, %v2397
        %v2527 = vmul.f32 %v1631, %v2399
        %2528 = vst [vmem:[%s266] sm:$0xff] %v2400
        %2529 = vst [vmem:[%s266 + $0x8] sm:$0xff] %v2401
        %2530 = vst [vmem:[%s266 + $0x10] sm:$0xff] %v2402
        %2531 = vst [vmem:[%s266 + $0x18] sm:$0xff] %v2403
        %2532 = vst [vmem:[%s266 + $0x20] sm:$0xff] %v2404
        %2533 = vst [vmem:[%s266 + $0x28] sm:$0xff] %v2405
        %2534 = vst [vmem:[%s266 + $0x30] sm:$0xff] %v2406
        %2535 = vst [vmem:[%s266 + $0x38] sm:$0xff] %v2407
        %2536 = vst [vmem:[%s266 + $0x40] sm:$0xff] %v2408
        %2537 = vst [vmem:[%s266 + $0x48] sm:$0xff] %v2409
        %2538 = vst [vmem:[%s266 + $0x50] sm:$0xff] %v2410
        %2539 = vst [vmem:[%s266 + $0x58] sm:$0xff] %v2411
        %2540 = vst [vmem:[%s266 + $0x60] sm:$0xff] %v2412
        %2541 = vst [vmem:[%s266 + $0x68] sm:$0xff] %v2413
        %2542 = vst [vmem:[%s266 + $0x70] sm:$0xff] %v2414
        %2543 = vst [vmem:[%s266 + $0x78] sm:$0xff] %v2415
        %2544 = vst [vmem:[%s266 + $0x80] sm:$0xff] %v2416
        %2545 = vst [vmem:[%s266 + $0x88] sm:$0xff] %v2417
        %2546 = vst [vmem:[%s266 + $0x90] sm:$0xff] %v2418
        %2547 = vst [vmem:[%s266 + $0x98] sm:$0xff] %v2419
        %2548 = vst [vmem:[%s266 + $0xa0] sm:$0xff] %v2420
        %2549 = vst [vmem:[%s266 + $0xa8] sm:$0xff] %v2421
        %2550 = vst [vmem:[%s266 + $0xb0] sm:$0xff] %v2422
        %2551 = vst [vmem:[%s266 + $0xb8] sm:$0xff] %v2423
        %2552 = vst [vmem:[%s266 + $0xc0] sm:$0xff] %v2424
        %2553 = vst [vmem:[%s266 + $0xc8] sm:$0xff] %v2425
        %2554 = vst [vmem:[%s266 + $0xd0] sm:$0xff] %v2426
        %2555 = vst [vmem:[%s266 + $0xd8] sm:$0xff] %v2427
        %2556 = vst [vmem:[%s266 + $0xe0] sm:$0xff] %v2428
        %2557 = vst [vmem:[%s266 + $0xe8] sm:$0xff] %v2429
        %2558 = vst [vmem:[%s266 + $0xf0] sm:$0xff] %v2430
        %2559 = vst [vmem:[%s266 + $0xf8] sm:$0xff] %v2431
        %2560 = vst [vmem:[%s266 + $0x100] sm:$0xff] %v2432
        %2561 = vst [vmem:[%s266 + $0x108] sm:$0xff] %v2433
        %2562 = vst [vmem:[%s266 + $0x110] sm:$0xff] %v2434
        %2563 = vst [vmem:[%s266 + $0x118] sm:$0xff] %v2435
        %2564 = vst [vmem:[%s266 + $0x120] sm:$0xff] %v2436
        %2565 = vst [vmem:[%s266 + $0x128] sm:$0xff] %v2437
        %2566 = vst [vmem:[%s266 + $0x130] sm:$0xff] %v2438
        %2567 = vst [vmem:[%s266 + $0x138] sm:$0xff] %v2439
        %2568 = vst [vmem:[%s266 + $0x140] sm:$0xff] %v2440
        %2569 = vst [vmem:[%s266 + $0x148] sm:$0xff] %v2441
        %2570 = vst [vmem:[%s266 + $0x150] sm:$0xff] %v2442
        %2571 = vst [vmem:[%s266 + $0x158] sm:$0xff] %v2443
        %2572 = vst [vmem:[%s266 + $0x160] sm:$0xff] %v2444
        %2573 = vst [vmem:[%s266 + $0x168] sm:$0xff] %v2445
        %2574 = vst [vmem:[%s266 + $0x170] sm:$0xff] %v2446
        %2575 = vst [vmem:[%s266 + $0x178] sm:$0xff] %v2447
        %2576 = vst [vmem:[%s266 + $0x180] sm:$0xff] %v2448
        %2577 = vst [vmem:[%s266 + $0x188] sm:$0xff] %v2449
        %2578 = vst [vmem:[%s266 + $0x190] sm:$0xff] %v2450
        %2579 = vst [vmem:[%s266 + $0x198] sm:$0xff] %v2451
        %2580 = vst [vmem:[%s266 + $0x1a0] sm:$0xff] %v2452
        %2581 = vst [vmem:[%s266 + $0x1a8] sm:$0xff] %v2453
        %2582 = vst [vmem:[%s266 + $0x1b0] sm:$0xff] %v2454
        %2583 = vst [vmem:[%s266 + $0x1b8] sm:$0xff] %v2455
        %2584 = vst [vmem:[%s266 + $0x1c0] sm:$0xff] %v2456
        %2585 = vst [vmem:[%s266 + $0x1c8] sm:$0xff] %v2457
        %2586 = vst [vmem:[%s266 + $0x1d0] sm:$0xff] %v2458
        %2587 = vst [vmem:[%s266 + $0x1d8] sm:$0xff] %v2459
        %2588 = vst [vmem:[%s266 + $0x1e0] sm:$0xff] %v2460
        %2589 = vst [vmem:[%s266 + $0x1e8] sm:$0xff] %v2461
        %2590 = vst [vmem:[%s266 + $0x1f0] sm:$0xff] %v2462
        %2591 = vst [vmem:[%s266 + $0x1f8] sm:$0xff] %v2463
        %2592 = vst [vmem:[%s266 + $0x200] sm:$0xff] %v2464
        %2593 = vst [vmem:[%s266 + $0x208] sm:$0xff] %v2465
        %2594 = vst [vmem:[%s266 + $0x210] sm:$0xff] %v2466
        %2595 = vst [vmem:[%s266 + $0x218] sm:$0xff] %v2467
        %2596 = vst [vmem:[%s266 + $0x220] sm:$0xff] %v2468
        %2597 = vst [vmem:[%s266 + $0x228] sm:$0xff] %v2469
        %2598 = vst [vmem:[%s266 + $0x230] sm:$0xff] %v2470
        %2599 = vst [vmem:[%s266 + $0x238] sm:$0xff] %v2471
        %2600 = vst [vmem:[%s266 + $0x240] sm:$0xff] %v2472
        %2601 = vst [vmem:[%s266 + $0x248] sm:$0xff] %v2473
        %2602 = vst [vmem:[%s266 + $0x250] sm:$0xff] %v2474
        %2603 = vst [vmem:[%s266 + $0x258] sm:$0xff] %v2475
        %2604 = vst [vmem:[%s266 + $0x260] sm:$0xff] %v2476
        %2605 = vst [vmem:[%s266 + $0x268] sm:$0xff] %v2477
        %2606 = vst [vmem:[%s266 + $0x270] sm:$0xff] %v2478
        %2607 = vst [vmem:[%s266 + $0x278] sm:$0xff] %v2479
        %2608 = vst [vmem:[%s266 + $0x280] sm:$0xff] %v2480
        %2609 = vst [vmem:[%s266 + $0x288] sm:$0xff] %v2481
        %2610 = vst [vmem:[%s266 + $0x290] sm:$0xff] %v2482
        %2611 = vst [vmem:[%s266 + $0x298] sm:$0xff] %v2483
        %2612 = vst [vmem:[%s266 + $0x2a0] sm:$0xff] %v2484
        %2613 = vst [vmem:[%s266 + $0x2a8] sm:$0xff] %v2485
        %2614 = vst [vmem:[%s266 + $0x2b0] sm:$0xff] %v2486
        %2615 = vst [vmem:[%s266 + $0x2b8] sm:$0xff] %v2487
        %2616 = vst [vmem:[%s266 + $0x2c0] sm:$0xff] %v2488
        %2617 = vst [vmem:[%s266 + $0x2c8] sm:$0xff] %v2489
        %2618 = vst [vmem:[%s266 + $0x2d0] sm:$0xff] %v2490
        %2619 = vst [vmem:[%s266 + $0x2d8] sm:$0xff] %v2491
        %2620 = vst [vmem:[%s266 + $0x2e0] sm:$0xff] %v2492
        %2621 = vst [vmem:[%s266 + $0x2e8] sm:$0xff] %v2493
        %2622 = vst [vmem:[%s266 + $0x2f0] sm:$0xff] %v2494
        %2623 = vst [vmem:[%s266 + $0x2f8] sm:$0xff] %v2495
        %2624 = vst [vmem:[%s266 + $0x300] sm:$0xff] %v2496
        %2625 = vst [vmem:[%s266 + $0x308] sm:$0xff] %v2497
        %2626 = vst [vmem:[%s266 + $0x310] sm:$0xff] %v2498
        %2627 = vst [vmem:[%s266 + $0x318] sm:$0xff] %v2499
        %2628 = vst [vmem:[%s266 + $0x320] sm:$0xff] %v2500
        %2629 = vst [vmem:[%s266 + $0x328] sm:$0xff] %v2501
        %2630 = vst [vmem:[%s266 + $0x330] sm:$0xff] %v2502
        %2631 = vst [vmem:[%s266 + $0x338] sm:$0xff] %v2503
        %2632 = vst [vmem:[%s266 + $0x340] sm:$0xff] %v2504
        %2633 = vst [vmem:[%s266 + $0x348] sm:$0xff] %v2505
        %2634 = vst [vmem:[%s266 + $0x350] sm:$0xff] %v2506
        %2635 = vst [vmem:[%s266 + $0x358] sm:$0xff] %v2507
        %2636 = vst [vmem:[%s266 + $0x360] sm:$0xff] %v2508
        %2637 = vst [vmem:[%s266 + $0x368] sm:$0xff] %v2509
        %2638 = vst [vmem:[%s266 + $0x370] sm:$0xff] %v2510
        %2639 = vst [vmem:[%s266 + $0x378] sm:$0xff] %v2511
        %2640 = vst [vmem:[%s266 + $0x380] sm:$0xff] %v2512
        %2641 = vst [vmem:[%s266 + $0x388] sm:$0xff] %v2513
        %2642 = vst [vmem:[%s266 + $0x390] sm:$0xff] %v2514
        %2643 = vst [vmem:[%s266 + $0x398] sm:$0xff] %v2515
        %2644 = vst [vmem:[%s266 + $0x3a0] sm:$0xff] %v2516
        %2645 = vst [vmem:[%s266 + $0x3a8] sm:$0xff] %v2517
        %2646 = vst [vmem:[%s266 + $0x3b0] sm:$0xff] %v2518
        %2647 = vst [vmem:[%s266 + $0x3b8] sm:$0xff] %v2519
        %2648 = vst [vmem:[%s266 + $0x3c0] sm:$0xff] %v2520
        %2649 = vst [vmem:[%s266 + $0x3c8] sm:$0xff] %v2521
        %2650 = vst [vmem:[%s266 + $0x3d0] sm:$0xff] %v2522
        %2651 = vst [vmem:[%s266 + $0x3d8] sm:$0xff] %v2523
        %2652 = vst [vmem:[%s266 + $0x3e0] sm:$0xff] %v2524
        %2653 = vst [vmem:[%s266 + $0x3e8] sm:$0xff] %v2525
        %2654 = vst [vmem:[%s266 + $0x3f0] sm:$0xff] %v2526
        %2655 = vst [vmem:[%s266 + $0x3f8] sm:$0xff] %v2527
        %s2656 = sand.u32 %s169, 1
        %s2657 = scalar_lea.sflag [#allocation3], %s2656
        %s2658 = sand.u32 %s169, 1
        %s2659 = smul.addr %s2658, 1024
        %s2660 = scalar_lea.vmem [#allocation2], %s2659
        // Predicated region
        $region45: #{block_forward.3} parent=43 // pred_check
          %p2661 = pneg %p179
        $region46: #{block_forward.3} parent=43 // pred_check_branch
          %2663 = sbr.rel (%p2661) target = $region48
        $region47: #{block_forward.3} parent=43 // pred_region
          %s2665 = ssub.s32 16384, 16384
          %2666 = vsyncadd %s2657, %s2665
          %s2667 = smul.addr %s20, 128
          %s2668 = smul.addr %s2667, 128
          %s2669 = scalar_lea.hbm %s6, %s2668
          %s2670 = sshll.u32 %s2660, 4
          %s2671 = int_to_ptr.vmem [resolvable:$true] %s2670
          %2676 = dma.vmem_to_hbm [thread:$0]  %s2671, 16384, %s2669, %s2657, 128, 128, 8
        $region48: #{block_forward.3} parent=43 // pred_fallthru
          _
      $region44: #{block_forward.3} parent=5 // pred_fallthru
        _
      %p2677 = scmp.le.s32.totalorder 2, %s15
      // Predicated region
      $region49: #{block_forward.3} parent=5 // pred_check
        %p2678 = pneg %p2677
      $region50: #{block_forward.3} parent=5 // pred_check_branch
        %2680 = sbr.rel (%p2678) target = $region52
      $region51: #{block_forward.3} parent=5 // pred_region
        %s2681 = ssub.s32 %s15, 2
        // Predicated region
        $region53: #{block_forward.3} parent=51 // pred_check
          %p2682 = pneg %p185
        $region54: #{block_forward.3} parent=51 // pred_check_branch
          %2684 = sbr.rel (%p2682) target = $region56
        $region55: #{block_forward.3} parent=51 // pred_region
          %s2685 = sand.u32 %s170, 1
          %s2686 = scalar_lea.sflag [#allocation3], %s2685
          %s2687 = sand.u32 %s170, 1
          %s2688 = smul.addr %s2687, 1024
          %s2689 = scalar_lea.vmem [#allocation2], %s2688
          %2690 = dma.done %s2686, 16384
        $region56: #{block_forward.3} parent=51 // pred_fallthru
          _
      $region52: #{block_forward.3} parent=5 // pred_fallthru
        _
    $region6: #{block_forward.3} parent=1 // loop_footer
      %s19 = sadd.s32 1, %s15
    $region7: #{block_forward.3} parent=1 // loop_footer_branch
      %14 = sbr.rel target = $region3
    $region8: #{block_forward.3} parent=1 // loop_exit
      _
    %2691 = vsyncpa [#allocation3], 1
    %s2692 = scalar_lea.sflag [#allocation3], 1
    %2693 = vsyncpa %s2692, 1

</llo_original>
